<compile_context>
chip_gen: v7x
topology: tpu7x:2x2x1
jax: 0.10.0
libtpu: 0.0.40
codegen_flags: <defaults>
</compile_context>

<pallas_src>
import math

import jax
import jax.numpy as jnp
from jax import lax
from jax.experimental import pallas as pl
from jax.experimental.pallas import tpu as pltpu

# ----------------------------- config (small) --------------------------------
BATCH = 2
SEQ = 8
N_ROWS = BATCH * SEQ
HIDDEN = 32
NUM_HEADS = 4
HEAD_DIM = HIDDEN // NUM_HEADS
INTERMEDIATE = 64
NUM_LAYERS = 3              # encoded_layers[2] requires >= 3 layers
VOCAB = 50
VOCAB_PAD = 64              # vocab rows padded to a sublane multiple
LN_EPS = 1e-12
_ATTN_SCALE = 1.0 / math.sqrt(HEAD_DIM)


# ------------------------------ in-kernel math --------------------------------
def _layernorm(x, gamma, beta):
    mu = jnp.mean(x, axis=-1, keepdims=True)
    var = jnp.mean((x - mu) ** 2, axis=-1, keepdims=True)
    return (x - mu) * lax.rsqrt(var + LN_EPS) * gamma + beta


def _gelu(x):
    # BERT-style tanh-approximation GELU.
    # TODO(synk): some BertModel impls use erf-based nn.GELU (~1e-3 delta).
    return 0.5 * x * (1.0 + jnp.tanh(0.7978845608028654 * (x + 0.044715 * x * x * x)))


# ------------------------------- fused kernel ----------------------------------
# Weight slab layout per layer  (w_ref[l] is 64 x 128, exact tiling, no waste):
#   rows  0:32, cols  0:96  -> fused  [wq | wk | wv]        (32, 96)
#   rows 32:64, cols  0:32  -> wo                           (32, 32)
#   rows 32:64, cols 32:96  -> w1  (FFN up)                 (32, 64)
#   rows  0:64, cols 96:128 -> w2  (FFN down)               (64, 32)
# Bias slab layout per layer  (b_ref[l] is 8 x 128):
#   row 0: [bq|bk|bv] (96)   row 1: bo        row 2: ln1 gamma   row 3: ln1 beta
#   row 4: fb1 (64)          row 5: fb2       row 6: ln2 gamma   row 7: ln2 beta
# misc slab (40 x 128):
#   rows 0:32 : classifier weight (real logit in lane 0, rest zero-padded)
#   row 32    : embedding LN gamma (cols 0:32)
#   row 33    : embedding LN beta  (cols 0:32)
#   row 34    : classifier bias    (lane 0)
def bert_forward_kernel(ids_ref, pos_ref, emb_tab_ref, misc_ref, w_ref, b_ref,
                        out_ref):
    ids = ids_ref[...]                                              # (B, S) int32

    # ---- embedding lookup as a one-hot matmul (in-kernel "gather") ----
    iota = lax.broadcasted_iota(jnp.int32, (BATCH, SEQ, VOCAB_PAD), 2)
    onehot = (iota == ids[:, :, None]).astype(jnp.float32)          # (B, S, Vp)
    onehot2 = onehot.reshape(N_ROWS, VOCAB_PAD)                     # (16, 64)
    x = jnp.dot(onehot2, emb_tab_ref[...],
                preferred_element_type=jnp.float32) + pos_ref[...]  # (16, 32)
    x = _layernorm(x, misc_ref[32:33, 0:HIDDEN], misc_ref[33:34, 0:HIDDEN])

    # additive key mask, (B, 1, S): 0 for valid tokens, -10000 for padding (id == 0)
    mask_add = jnp.where(ids > 0, 0.0, -10000.0)[:, None, :]

    # ---- 3 post-LN transformer encoder layers (static unrolled loop) ----
    for l in range(NUM_LAYERS):
        # fused QKV projection: one (16,32) @ (32,96) MXU push
        qkv = jnp.dot(x, w_ref[l, 0:HIDDEN, 0:3 * HIDDEN],
                      preferred_element_type=jnp.float32)
        qkv = qkv + b_ref[l, 0:1, 0:3 * HIDDEN]                     # (16, 96)

        ctx_heads = []
        for h in range(NUM_HEADS):                                  # static 4 iters
            c0 = h * HEAD_DIM
            qh = qkv[:, c0:c0 + HEAD_DIM].reshape(BATCH, SEQ, HEAD_DIM)
            kh = qkv[:, HIDDEN + c0:HIDDEN + c0 + HEAD_DIM].reshape(BATCH, SEQ, HEAD_DIM)
            vh = qkv[:, 2 * HIDDEN + c0:2 * HIDDEN + c0 + HEAD_DIM].reshape(
                BATCH, SEQ, HEAD_DIM)

            # whole batch in one batched NT matmul: (B, S_q, S_k)
            s = jnp.einsum('bqd,bkd->bqk', qh, kh,
                           preferred_element_type=jnp.float32) * _ATTN_SCALE
            s = s + mask_add
            # no max-subtraction: scores are O(1); masked -1e4 underflows exp to 0
            p = jnp.exp(s)
            p = p * pl.reciprocal(jnp.sum(p, axis=-1, keepdims=True), approx=True)
            ch = jnp.einsum('bqk,bkd->bqd', p, vh,
                            preferred_element_type=jnp.float32)     # (B, S, HD)
            ctx_heads.append(ch)

        ctx = jnp.concatenate(ctx_heads, axis=-1).reshape(N_ROWS, HIDDEN)

        attn_out = jnp.dot(ctx, w_ref[l, HIDDEN:2 * HIDDEN, 0:HIDDEN],
                           preferred_element_type=jnp.float32)
        attn_out = attn_out + b_ref[l, 1:2, 0:HIDDEN]
        x1 = _layernorm(x + attn_out,
                        b_ref[l, 2:3, 0:HIDDEN], b_ref[l, 3:4, 0:HIDDEN])

        ff1 = jnp.dot(x1, w_ref[l, HIDDEN:2 * HIDDEN, HIDDEN:HIDDEN + INTERMEDIATE],
                      preferred_element_type=jnp.float32)
        ff1 = _gelu(ff1 + b_ref[l, 4:5, 0:INTERMEDIATE])
        ff2 = jnp.dot(ff1, w_ref[l, 0:INTERMEDIATE, 96:128],
                      preferred_element_type=jnp.float32)
        ff2 = ff2 + b_ref[l, 5:6, 0:HIDDEN]
        x = _layernorm(x1 + ff2,
                       b_ref[l, 6:7, 0:HIDDEN], b_ref[l, 7:8, 0:HIDDEN])

    # ---- lane-dense classifier head: compute all rows, wrapper slices [CLS]/lane 0 ----
    logits = jnp.dot(x, misc_ref[0:HIDDEN, :],
                     preferred_element_type=jnp.float32) + misc_ref[34:35, :]
    out_ref[...] = 1.0 / (1.0 + jnp.exp(-logits))                   # exact sigmoid


# ------------------------------- model forward ----------------------------------
@jax.jit
def bert_sentiment_forward(text_input, positional_enc, params):
    emb_tab, misc, w_slab, b_slab = params

    ids = text_input.astype(jnp.int32)                              # (B, S)
    pos_flat = positional_enc.reshape(N_ROWS, HIDDEN).astype(jnp.float32)

    vmem = pl.BlockSpec(memory_space=pltpu.MemorySpace.VMEM)
    probs = pl.pallas_call(
        bert_forward_kernel,
        out_shape=jax.ShapeDtypeStruct((N_ROWS, 128), jnp.float32),
        in_specs=[vmem] * 6,
        out_specs=vmem,
        cost_estimate=pl.CostEstimate(flops=1_200_000,
                                      transcendentals=8_000,
                                      bytes_accessed=150_000),
    )(ids, pos_flat, emb_tab, misc, w_slab, b_slab)

    # rows 0, SEQ, 2*SEQ, ... are the [CLS] tokens; lane 0 holds the real logit.
    return probs[::SEQ, 0:1]                                        # (B, 1)


# ------------------------------- param init -------------------------------------
def init_params(key):
    keys = jax.random.split(key, NUM_LAYERS + 2)

    word_emb = 0.02 * jax.random.normal(keys[0], (VOCAB, HIDDEN), jnp.float32)
    emb_tab = jnp.zeros((VOCAB_PAD, HIDDEN), jnp.float32).at[:VOCAB, :].set(word_emb)

    head_w = 0.02 * jax.random.normal(keys[1], (HIDDEN, 1), jnp.float32)
    misc = jnp.zeros((40, 128), jnp.float32)
    misc = misc.at[0:HIDDEN, 0:1].set(head_w)          # classifier weight, lane 0
    misc = misc.at[32, 0:HIDDEN].set(1.0)              # embedding LN gamma
    # row 33: embedding LN beta = 0 ; row 34 lane 0: classifier bias = 0

    w_slab = jnp.zeros((NUM_LAYERS, 2 * HIDDEN, 128), jnp.float32)
    b_slab = jnp.zeros((NUM_LAYERS, 8, 128), jnp.float32)
    for l in range(NUM_LAYERS):
        lk = jax.random.split(keys[2 + l], 6)
        wq = 0.02 * jax.random.normal(lk[0], (HIDDEN, HIDDEN), jnp.float32)
        wk = 0.02 * jax.random.normal(lk[1], (HIDDEN, HIDDEN), jnp.float32)
        wv = 0.02 * jax.random.normal(lk[2], (HIDDEN, HIDDEN), jnp.float32)
        wo = 0.02 * jax.random.normal(lk[3], (HIDDEN, HIDDEN), jnp.float32)
        w1 = 0.02 * jax.random.normal(lk[4], (HIDDEN, INTERMEDIATE), jnp.float32)
        w2 = 0.02 * jax.random.normal(lk[5], (INTERMEDIATE, HIDDEN), jnp.float32)

        w_slab = w_slab.at[l, 0:HIDDEN, 0:HIDDEN].set(wq)
        w_slab = w_slab.at[l, 0:HIDDEN, HIDDEN:2 * HIDDEN].set(wk)
        w_slab = w_slab.at[l, 0:HIDDEN, 2 * HIDDEN:3 * HIDDEN].set(wv)
        w_slab = w_slab.at[l, HIDDEN:2 * HIDDEN, 0:HIDDEN].set(wo)
        w_slab = w_slab.at[l, HIDDEN:2 * HIDDEN, HIDDEN:HIDDEN + INTERMEDIATE].set(w1)
        w_slab = w_slab.at[l, 0:INTERMEDIATE, 96:128].set(w2)

        # all linear / LN biases zero; LN gammas one:
        b_slab = b_slab.at[l, 2, 0:HIDDEN].set(1.0)    # ln1 gamma
        b_slab = b_slab.at[l, 6, 0:HIDDEN].set(1.0)    # ln2 gamma

    return (emb_tab, misc, w_slab, b_slab)


# ----------------------------------- main ----------------------------------------
if __name__ == "__main__":
    key = jax.random.PRNGKey(0)
    pkey, tkey = jax.random.split(key)

    params = init_params(pkey)

    # token ids (0 = padding) and sinusoidal positional encoding
    text_input = jax.random.randint(tkey, (BATCH, SEQ), 1, VOCAB, dtype=jnp.int32)
    text_input = text_input.at[1, -2:].set(0)           # some padding in example 2

    pos = jnp.arange(SEQ, dtype=jnp.float32)[:, None]
    dim = jnp.arange(HIDDEN, dtype=jnp.float32)[None, :]
    angle = pos / jnp.power(10000.0, (2.0 * jnp.floor(dim / 2.0)) / HIDDEN)
    pe = jnp.where(dim % 2 == 0, jnp.sin(angle), jnp.cos(angle)).astype(jnp.float32)
    positional_enc = jnp.broadcast_to(pe[None], (BATCH, SEQ, HIDDEN))

    preds = bert_sentiment_forward(text_input, positional_enc, params)
    preds = jax.block_until_ready(preds)

    assert preds.shape == (BATCH, 1)
    assert bool(jnp.all(jnp.isfinite(preds)))
    assert bool(jnp.all((preds >= 0.0) & (preds <= 1.0)))
    # TODO(synk): compute_loss (BCE) path not exercised — forward called with labels=None.
    print("KERNEL_OK")
</pallas_src>

<mosaic_0001>
module attributes {stable_mosaic.version = 11 : i64} {
  func.func @bert_forward_kernel(%arg0: memref<2x8xi32, #tpu.memory_space<vmem>>, %arg1: memref<16x32xf32, #tpu.memory_space<vmem>>, %arg2: memref<64x32xf32, #tpu.memory_space<vmem>>, %arg3: memref<40x128xf32, #tpu.memory_space<vmem>>, %arg4: memref<3x64x128xf32, #tpu.memory_space<vmem>>, %arg5: memref<3x8x128xf32, #tpu.memory_space<vmem>>, %arg6: memref<16x128xf32, #tpu.memory_space<vmem>>) attributes {dimension_semantics = [], scalar_prefetch = 0 : i64, scratch_operands = 0 : i64, tpu.core_type = #tpu.core_type<tc>} {
    %c0 = arith.constant 0 : index
    %c0_0 = arith.constant 0 : index
    %0 = vector.load %arg0[%c0, %c0_0] : memref<2x8xi32, #tpu.memory_space<vmem>>, vector<2x8xi32>
    %1 = tpu.iota {dimensions = array<i32: 2>} : vector<2x8x64xi32>
    %2 = vector.shape_cast %0 : vector<2x8xi32> to vector<2x8x1xi32>
    %3 = vector.broadcast %2 : vector<2x8x1xi32> to vector<2x8x64xi32>
    %4 = arith.cmpi eq, %1, %3 : vector<2x8x64xi32>
    %5 = arith.extui %4 : vector<2x8x64xi1> to vector<2x8x64xi32>
    %6 = arith.sitofp %5 : vector<2x8x64xi32> to vector<2x8x64xf32>
    %7 = vector.shape_cast %6 : vector<2x8x64xf32> to vector<16x64xf32>
    %c0_1 = arith.constant 0 : index
    %c0_2 = arith.constant 0 : index
    %8 = vector.load %arg2[%c0_1, %c0_2] : memref<64x32xf32, #tpu.memory_space<vmem>>, vector<64x32xf32>
    %cst = arith.constant dense<0.000000e+00> : vector<16x32xf32>
    %9 = tpu.matmul %7, %8, %cst {dimension_numbers = #tpu.dot_dimension_numbers<[1], [0], [0], [1], [0, 0, 1, 1], [], []>} : vector<16x64xf32>, vector<64x32xf32>, vector<16x32xf32> -> vector<16x32xf32>
    %c0_3 = arith.constant 0 : index
    %c0_4 = arith.constant 0 : index
    %10 = vector.load %arg1[%c0_3, %c0_4] : memref<16x32xf32, #tpu.memory_space<vmem>>, vector<16x32xf32>
    %11 = arith.addf %9, %10 : vector<16x32xf32>
    %c32 = arith.constant 32 : index
    %c0_5 = arith.constant 0 : index
    %12 = vector.load %arg3[%c32, %c0_5] : memref<40x128xf32, #tpu.memory_space<vmem>>, vector<1x32xf32>
    %c33 = arith.constant 33 : index
    %c0_6 = arith.constant 0 : index
    %13 = vector.load %arg3[%c33, %c0_6] : memref<40x128xf32, #tpu.memory_space<vmem>>, vector<1x32xf32>
    %cst_7 = arith.constant dense<0.000000e+00> : vector<16xf32>
    %14 = vector.multi_reduction <add>, %11, %cst_7 [1] : vector<16x32xf32> to vector<16xf32>
    %15 = vector.shape_cast %14 : vector<16xf32> to vector<16x1xf32>
    %cst_8 = arith.constant 3.200000e+01 : f32
    %16 = vector.broadcast %cst_8 : f32 to vector<16x1xf32>
    %17 = arith.divf %15, %16 : vector<16x1xf32>
    %18 = vector.broadcast %17 : vector<16x1xf32> to vector<16x32xf32>
    %19 = arith.subf %11, %18 : vector<16x32xf32>
    %20 = arith.mulf %19, %19 : vector<16x32xf32>
    %cst_9 = arith.constant dense<0.000000e+00> : vector<16xf32>
    %21 = vector.multi_reduction <add>, %20, %cst_9 [1] : vector<16x32xf32> to vector<16xf32>
    %22 = vector.shape_cast %21 : vector<16xf32> to vector<16x1xf32>
    %cst_10 = arith.constant 3.200000e+01 : f32
    %23 = vector.broadcast %cst_10 : f32 to vector<16x1xf32>
    %24 = arith.divf %22, %23 : vector<16x1xf32>
    %25 = vector.broadcast %17 : vector<16x1xf32> to vector<16x32xf32>
    %26 = arith.subf %11, %25 : vector<16x32xf32>
    %cst_11 = arith.constant 9.99999996E-13 : f32
    %27 = vector.broadcast %cst_11 : f32 to vector<16x1xf32>
    %28 = arith.addf %24, %27 : vector<16x1xf32>
    %29 = math.rsqrt %28 : vector<16x1xf32>
    %30 = vector.broadcast %29 : vector<16x1xf32> to vector<16x32xf32>
    %31 = arith.mulf %26, %30 : vector<16x32xf32>
    %32 = vector.broadcast %12 : vector<1x32xf32> to vector<16x32xf32>
    %33 = arith.mulf %31, %32 : vector<16x32xf32>
    %34 = vector.broadcast %13 : vector<1x32xf32> to vector<16x32xf32>
    %35 = arith.addf %33, %34 : vector<16x32xf32>
    %c0_i32 = arith.constant 0 : i32
    %36 = vector.broadcast %c0_i32 : i32 to vector<2x8xi32>
    %37 = arith.cmpi sgt, %0, %36 : vector<2x8xi32>
    %cst_12 = arith.constant 0.000000e+00 : f32
    %cst_13 = arith.constant -1.000000e+04 : f32
    %38 = vector.broadcast %cst_12 : f32 to vector<2x8xf32>
    %39 = vector.broadcast %cst_13 : f32 to vector<2x8xf32>
    %40 = arith.select %37, %38, %39 : vector<2x8xi1>, vector<2x8xf32>
    %41 = vector.shape_cast %40 : vector<2x8xf32> to vector<2x1x8xf32>
    %c0_14 = arith.constant 0 : index
    %c0_15 = arith.constant 0 : index
    %c0_16 = arith.constant 0 : index
    %42 = vector.load %arg4[%c0_14, %c0_15, %c0_16] : memref<3x64x128xf32, #tpu.memory_space<vmem>>, vector<1x32x96xf32>
    %43 = vector.shape_cast %42 : vector<1x32x96xf32> to vector<32x96xf32>
    %cst_17 = arith.constant dense<0.000000e+00> : vector<16x96xf32>
    %44 = tpu.matmul %35, %43, %cst_17 {dimension_numbers = #tpu.dot_dimension_numbers<[1], [0], [0], [1], [0, 0, 1, 1], [], []>} : vector<16x32xf32>, vector<32x96xf32>, vector<16x96xf32> -> vector<16x96xf32>
    %c0_18 = arith.constant 0 : index
    %c0_19 = arith.constant 0 : index
    %c0_20 = arith.constant 0 : index
    %45 = vector.load %arg5[%c0_18, %c0_19, %c0_20] : memref<3x8x128xf32, #tpu.memory_space<vmem>>, vector<1x1x96xf32>
    %46 = vector.shape_cast %45 : vector<1x1x96xf32> to vector<1x96xf32>
    %47 = vector.broadcast %46 : vector<1x96xf32> to vector<16x96xf32>
    %48 = arith.addf %44, %47 : vector<16x96xf32>
    %49 = vector.extract_strided_slice %48 {offsets = [0, 0], sizes = [16, 8], strides = [1, 1]} : vector<16x96xf32> to vector<16x8xf32>
    %50 = vector.shape_cast %49 : vector<16x8xf32> to vector<2x8x8xf32>
    %51 = vector.extract_strided_slice %48 {offsets = [0, 32], sizes = [16, 8], strides = [1, 1]} : vector<16x96xf32> to vector<16x8xf32>
    %52 = vector.shape_cast %51 : vector<16x8xf32> to vector<2x8x8xf32>
    %53 = vector.extract_strided_slice %48 {offsets = [0, 64], sizes = [16, 8], strides = [1, 1]} : vector<16x96xf32> to vector<16x8xf32>
    %54 = vector.shape_cast %53 : vector<16x8xf32> to vector<2x8x8xf32>
    "tpu.trace_start"() <{level = 10 : i32, message = "bqd,bkd->bqk"}> : () -> ()
    %cst_21 = arith.constant dense<0.000000e+00> : vector<2x8x8xf32>
    %55 = tpu.matmul %50, %52, %cst_21 {dimension_numbers = #tpu.dot_dimension_numbers<[2], [2], [1], [1], [0, 0, 0, 1, 1, 1], [0], [0]>} : vector<2x8x8xf32>, vector<2x8x8xf32>, vector<2x8x8xf32> -> vector<2x8x8xf32>
    "tpu.trace_stop"() : () -> ()
    %cst_22 = arith.constant 0.353553385 : f32
    %56 = vector.broadcast %cst_22 : f32 to vector<2x8x8xf32>
    %57 = arith.mulf %55, %56 : vector<2x8x8xf32>
    %58 = vector.broadcast %41 : vector<2x1x8xf32> to vector<2x8x8xf32>
    %59 = arith.addf %57, %58 : vector<2x8x8xf32>
    %60 = math.exp %59 : vector<2x8x8xf32>
    %cst_23 = arith.constant dense<0.000000e+00> : vector<2x8xf32>
    %61 = vector.multi_reduction <add>, %60, %cst_23 [2] : vector<2x8x8xf32> to vector<2x8xf32>
    %62 = vector.shape_cast %61 : vector<2x8xf32> to vector<2x8x1xf32>
    %63 = tpu.reciprocal %62 {approx = true} : vector<2x8x1xf32> -> vector<2x8x1xf32>
    %64 = vector.broadcast %63 : vector<2x8x1xf32> to vector<2x8x8xf32>
    %65 = arith.mulf %60, %64 : vector<2x8x8xf32>
    "tpu.trace_start"() <{level = 10 : i32, message = "bqk,bkd->bqd"}> : () -> ()
    %cst_24 = arith.constant dense<0.000000e+00> : vector<2x8x8xf32>
    %66 = tpu.matmul %65, %54, %cst_24 {dimension_numbers = #tpu.dot_dimension_numbers<[2], [1], [1], [2], [0, 0, 0, 1, 1, 2], [0], [0]>} : vector<2x8x8xf32>, vector<2x8x8xf32>, vector<2x8x8xf32> -> vector<2x8x8xf32>
    "tpu.trace_stop"() : () -> ()
    %67 = vector.extract_strided_slice %48 {offsets = [0, 8], sizes = [16, 8], strides = [1, 1]} : vector<16x96xf32> to vector<16x8xf32>
    %68 = vector.shape_cast %67 : vector<16x8xf32> to vector<2x8x8xf32>
    %69 = vector.extract_strided_slice %48 {offsets = [0, 40], sizes = [16, 8], strides = [1, 1]} : vector<16x96xf32> to vector<16x8xf32>
    %70 = vector.shape_cast %69 : vector<16x8xf32> to vector<2x8x8xf32>
    %71 = vector.extract_strided_slice %48 {offsets = [0, 72], sizes = [16, 8], strides = [1, 1]} : vector<16x96xf32> to vector<16x8xf32>
    %72 = vector.shape_cast %71 : vector<16x8xf32> to vector<2x8x8xf32>
    "tpu.trace_start"() <{level = 10 : i32, message = "bqd,bkd->bqk"}> : () -> ()
    %cst_25 = arith.constant dense<0.000000e+00> : vector<2x8x8xf32>
    %73 = tpu.matmul %68, %70, %cst_25 {dimension_numbers = #tpu.dot_dimension_numbers<[2], [2], [1], [1], [0, 0, 0, 1, 1, 1], [0], [0]>} : vector<2x8x8xf32>, vector<2x8x8xf32>, vector<2x8x8xf32> -> vector<2x8x8xf32>
    "tpu.trace_stop"() : () -> ()
    %cst_26 = arith.constant 0.353553385 : f32
    %74 = vector.broadcast %cst_26 : f32 to vector<2x8x8xf32>
    %75 = arith.mulf %73, %74 : vector<2x8x8xf32>
    %76 = vector.broadcast %41 : vector<2x1x8xf32> to vector<2x8x8xf32>
    %77 = arith.addf %75, %76 : vector<2x8x8xf32>
    %78 = math.exp %77 : vector<2x8x8xf32>
    %cst_27 = arith.constant dense<0.000000e+00> : vector<2x8xf32>
    %79 = vector.multi_reduction <add>, %78, %cst_27 [2] : vector<2x8x8xf32> to vector<2x8xf32>
    %80 = vector.shape_cast %79 : vector<2x8xf32> to vector<2x8x1xf32>
    %81 = tpu.reciprocal %80 {approx = true} : vector<2x8x1xf32> -> vector<2x8x1xf32>
    %82 = vector.broadcast %81 : vector<2x8x1xf32> to vector<2x8x8xf32>
    %83 = arith.mulf %78, %82 : vector<2x8x8xf32>
    "tpu.trace_start"() <{level = 10 : i32, message = "bqk,bkd->bqd"}> : () -> ()
    %cst_28 = arith.constant dense<0.000000e+00> : vector<2x8x8xf32>
    %84 = tpu.matmul %83, %72, %cst_28 {dimension_numbers = #tpu.dot_dimension_numbers<[2], [1], [1], [2], [0, 0, 0, 1, 1, 2], [0], [0]>} : vector<2x8x8xf32>, vector<2x8x8xf32>, vector<2x8x8xf32> -> vector<2x8x8xf32>
    "tpu.trace_stop"() : () -> ()
    %85 = vector.extract_strided_slice %48 {offsets = [0, 16], sizes = [16, 8], strides = [1, 1]} : vector<16x96xf32> to vector<16x8xf32>
    %86 = vector.shape_cast %85 : vector<16x8xf32> to vector<2x8x8xf32>
    %87 = vector.extract_strided_slice %48 {offsets = [0, 48], sizes = [16, 8], strides = [1, 1]} : vector<16x96xf32> to vector<16x8xf32>
    %88 = vector.shape_cast %87 : vector<16x8xf32> to vector<2x8x8xf32>
    %89 = vector.extract_strided_slice %48 {offsets = [0, 80], sizes = [16, 8], strides = [1, 1]} : vector<16x96xf32> to vector<16x8xf32>
    %90 = vector.shape_cast %89 : vector<16x8xf32> to vector<2x8x8xf32>
    "tpu.trace_start"() <{level = 10 : i32, message = "bqd,bkd->bqk"}> : () -> ()
    %cst_29 = arith.constant dense<0.000000e+00> : vector<2x8x8xf32>
    %91 = tpu.matmul %86, %88, %cst_29 {dimension_numbers = #tpu.dot_dimension_numbers<[2], [2], [1], [1], [0, 0, 0, 1, 1, 1], [0], [0]>} : vector<2x8x8xf32>, vector<2x8x8xf32>, vector<2x8x8xf32> -> vector<2x8x8xf32>
    "tpu.trace_stop"() : () -> ()
    %cst_30 = arith.constant 0.353553385 : f32
    %92 = vector.broadcast %cst_30 : f32 to vector<2x8x8xf32>
    %93 = arith.mulf %91, %92 : vector<2x8x8xf32>
    %94 = vector.broadcast %41 : vector<2x1x8xf32> to vector<2x8x8xf32>
    %95 = arith.addf %93, %94 : vector<2x8x8xf32>
    %96 = math.exp %95 : vector<2x8x8xf32>
    %cst_31 = arith.constant dense<0.000000e+00> : vector<2x8xf32>
    %97 = vector.multi_reduction <add>, %96, %cst_31 [2] : vector<2x8x8xf32> to vector<2x8xf32>
    %98 = vector.shape_cast %97 : vector<2x8xf32> to vector<2x8x1xf32>
    %99 = tpu.reciprocal %98 {approx = true} : vector<2x8x1xf32> -> vector<2x8x1xf32>
    %100 = vector.broadcast %99 : vector<2x8x1xf32> to vector<2x8x8xf32>
    %101 = arith.mulf %96, %100 : vector<2x8x8xf32>
    "tpu.trace_start"() <{level = 10 : i32, message = "bqk,bkd->bqd"}> : () -> ()
    %cst_32 = arith.constant dense<0.000000e+00> : vector<2x8x8xf32>
    %102 = tpu.matmul %101, %90, %cst_32 {dimension_numbers = #tpu.dot_dimension_numbers<[2], [1], [1], [2], [0, 0, 0, 1, 1, 2], [0], [0]>} : vector<2x8x8xf32>, vector<2x8x8xf32>, vector<2x8x8xf32> -> vector<2x8x8xf32>
    "tpu.trace_stop"() : () -> ()
    %103 = vector.extract_strided_slice %48 {offsets = [0, 24], sizes = [16, 8], strides = [1, 1]} : vector<16x96xf32> to vector<16x8xf32>
    %104 = vector.shape_cast %103 : vector<16x8xf32> to vector<2x8x8xf32>
    %105 = vector.extract_strided_slice %48 {offsets = [0, 56], sizes = [16, 8], strides = [1, 1]} : vector<16x96xf32> to vector<16x8xf32>
    %106 = vector.shape_cast %105 : vector<16x8xf32> to vector<2x8x8xf32>
    %107 = vector.extract_strided_slice %48 {offsets = [0, 88], sizes = [16, 8], strides = [1, 1]} : vector<16x96xf32> to vector<16x8xf32>
    %108 = vector.shape_cast %107 : vector<16x8xf32> to vector<2x8x8xf32>
    "tpu.trace_start"() <{level = 10 : i32, message = "bqd,bkd->bqk"}> : () -> ()
    %cst_33 = arith.constant dense<0.000000e+00> : vector<2x8x8xf32>
    %109 = tpu.matmul %104, %106, %cst_33 {dimension_numbers = #tpu.dot_dimension_numbers<[2], [2], [1], [1], [0, 0, 0, 1, 1, 1], [0], [0]>} : vector<2x8x8xf32>, vector<2x8x8xf32>, vector<2x8x8xf32> -> vector<2x8x8xf32>
    "tpu.trace_stop"() : () -> ()
    %cst_34 = arith.constant 0.353553385 : f32
    %110 = vector.broadcast %cst_34 : f32 to vector<2x8x8xf32>
    %111 = arith.mulf %109, %110 : vector<2x8x8xf32>
    %112 = vector.broadcast %41 : vector<2x1x8xf32> to vector<2x8x8xf32>
    %113 = arith.addf %111, %112 : vector<2x8x8xf32>
    %114 = math.exp %113 : vector<2x8x8xf32>
    %cst_35 = arith.constant dense<0.000000e+00> : vector<2x8xf32>
    %115 = vector.multi_reduction <add>, %114, %cst_35 [2] : vector<2x8x8xf32> to vector<2x8xf32>
    %116 = vector.shape_cast %115 : vector<2x8xf32> to vector<2x8x1xf32>
    %117 = tpu.reciprocal %116 {approx = true} : vector<2x8x1xf32> -> vector<2x8x1xf32>
    %118 = vector.broadcast %117 : vector<2x8x1xf32> to vector<2x8x8xf32>
    %119 = arith.mulf %114, %118 : vector<2x8x8xf32>
    "tpu.trace_start"() <{level = 10 : i32, message = "bqk,bkd->bqd"}> : () -> ()
    %cst_36 = arith.constant dense<0.000000e+00> : vector<2x8x8xf32>
    %120 = tpu.matmul %119, %108, %cst_36 {dimension_numbers = #tpu.dot_dimension_numbers<[2], [1], [1], [2], [0, 0, 0, 1, 1, 2], [0], [0]>} : vector<2x8x8xf32>, vector<2x8x8xf32>, vector<2x8x8xf32> -> vector<2x8x8xf32>
    "tpu.trace_stop"() : () -> ()
    %121 = tpu.concatenate %66, %84, %102, %120 in 2 : vector<2x8x8xf32>, vector<2x8x8xf32>, vector<2x8x8xf32>, vector<2x8x8xf32> -> vector<2x8x32xf32>
    %122 = vector.shape_cast %121 : vector<2x8x32xf32> to vector<16x32xf32>
    %c0_37 = arith.constant 0 : index
    %c32_38 = arith.constant 32 : index
    %c0_39 = arith.constant 0 : index
    %123 = vector.load %arg4[%c0_37, %c32_38, %c0_39] : memref<3x64x128xf32, #tpu.memory_space<vmem>>, vector<1x32x32xf32>
    %124 = vector.shape_cast %123 : vector<1x32x32xf32> to vector<32x32xf32>
    %cst_40 = arith.constant dense<0.000000e+00> : vector<16x32xf32>
    %125 = tpu.matmul %122, %124, %cst_40 {dimension_numbers = #tpu.dot_dimension_numbers<[1], [0], [0], [1], [0, 0, 1, 1], [], []>} : vector<16x32xf32>, vector<32x32xf32>, vector<16x32xf32> -> vector<16x32xf32>
    %c0_41 = arith.constant 0 : index
    %c1 = arith.constant 1 : index
    %c0_42 = arith.constant 0 : index
    %126 = vector.load %arg5[%c0_41, %c1, %c0_42] : memref<3x8x128xf32, #tpu.memory_space<vmem>>, vector<1x1x32xf32>
    %127 = vector.shape_cast %126 : vector<1x1x32xf32> to vector<1x32xf32>
    %128 = vector.broadcast %127 : vector<1x32xf32> to vector<16x32xf32>
    %129 = arith.addf %125, %128 : vector<16x32xf32>
    %130 = arith.addf %35, %129 : vector<16x32xf32>
    %c0_43 = arith.constant 0 : index
    %c2 = arith.constant 2 : index
    %c0_44 = arith.constant 0 : index
    %131 = vector.load %arg5[%c0_43, %c2, %c0_44] : memref<3x8x128xf32, #tpu.memory_space<vmem>>, vector<1x1x32xf32>
    %132 = vector.shape_cast %131 : vector<1x1x32xf32> to vector<1x32xf32>
    %c0_45 = arith.constant 0 : index
    %c3 = arith.constant 3 : index
    %c0_46 = arith.constant 0 : index
    %133 = vector.load %arg5[%c0_45, %c3, %c0_46] : memref<3x8x128xf32, #tpu.memory_space<vmem>>, vector<1x1x32xf32>
    %134 = vector.shape_cast %133 : vector<1x1x32xf32> to vector<1x32xf32>
    %cst_47 = arith.constant dense<0.000000e+00> : vector<16xf32>
    %135 = vector.multi_reduction <add>, %130, %cst_47 [1] : vector<16x32xf32> to vector<16xf32>
    %136 = vector.shape_cast %135 : vector<16xf32> to vector<16x1xf32>
    %cst_48 = arith.constant 3.200000e+01 : f32
    %137 = vector.broadcast %cst_48 : f32 to vector<16x1xf32>
    %138 = arith.divf %136, %137 : vector<16x1xf32>
    %139 = vector.broadcast %138 : vector<16x1xf32> to vector<16x32xf32>
    %140 = arith.subf %130, %139 : vector<16x32xf32>
    %141 = arith.mulf %140, %140 : vector<16x32xf32>
    %cst_49 = arith.constant dense<0.000000e+00> : vector<16xf32>
    %142 = vector.multi_reduction <add>, %141, %cst_49 [1] : vector<16x32xf32> to vector<16xf32>
    %143 = vector.shape_cast %142 : vector<16xf32> to vector<16x1xf32>
    %cst_50 = arith.constant 3.200000e+01 : f32
    %144 = vector.broadcast %cst_50 : f32 to vector<16x1xf32>
    %145 = arith.divf %143, %144 : vector<16x1xf32>
    %146 = vector.broadcast %138 : vector<16x1xf32> to vector<16x32xf32>
    %147 = arith.subf %130, %146 : vector<16x32xf32>
    %cst_51 = arith.constant 9.99999996E-13 : f32
    %148 = vector.broadcast %cst_51 : f32 to vector<16x1xf32>
    %149 = arith.addf %145, %148 : vector<16x1xf32>
    %150 = math.rsqrt %149 : vector<16x1xf32>
    %151 = vector.broadcast %150 : vector<16x1xf32> to vector<16x32xf32>
    %152 = arith.mulf %147, %151 : vector<16x32xf32>
    %153 = vector.broadcast %132 : vector<1x32xf32> to vector<16x32xf32>
    %154 = arith.mulf %152, %153 : vector<16x32xf32>
    %155 = vector.broadcast %134 : vector<1x32xf32> to vector<16x32xf32>
    %156 = arith.addf %154, %155 : vector<16x32xf32>
    %c0_52 = arith.constant 0 : index
    %c32_53 = arith.constant 32 : index
    %c32_54 = arith.constant 32 : index
    %157 = vector.load %arg4[%c0_52, %c32_53, %c32_54] : memref<3x64x128xf32, #tpu.memory_space<vmem>>, vector<1x32x64xf32>
    %158 = vector.shape_cast %157 : vector<1x32x64xf32> to vector<32x64xf32>
    %cst_55 = arith.constant dense<0.000000e+00> : vector<16x64xf32>
    %159 = tpu.matmul %156, %158, %cst_55 {dimension_numbers = #tpu.dot_dimension_numbers<[1], [0], [0], [1], [0, 0, 1, 1], [], []>} : vector<16x32xf32>, vector<32x64xf32>, vector<16x64xf32> -> vector<16x64xf32>
    %c0_56 = arith.constant 0 : index
    %c4 = arith.constant 4 : index
    %c0_57 = arith.constant 0 : index
    %160 = vector.load %arg5[%c0_56, %c4, %c0_57] : memref<3x8x128xf32, #tpu.memory_space<vmem>>, vector<1x1x64xf32>
    %161 = vector.shape_cast %160 : vector<1x1x64xf32> to vector<1x64xf32>
    %162 = vector.broadcast %161 : vector<1x64xf32> to vector<16x64xf32>
    %163 = arith.addf %159, %162 : vector<16x64xf32>
    %cst_58 = arith.constant 5.000000e-01 : f32
    %164 = vector.broadcast %cst_58 : f32 to vector<16x64xf32>
    %165 = arith.mulf %164, %163 : vector<16x64xf32>
    %cst_59 = arith.constant 4.471500e-02 : f32
    %166 = vector.broadcast %cst_59 : f32 to vector<16x64xf32>
    %167 = arith.mulf %166, %163 : vector<16x64xf32>
    %168 = arith.mulf %167, %163 : vector<16x64xf32>
    %169 = arith.mulf %168, %163 : vector<16x64xf32>
    %170 = arith.addf %163, %169 : vector<16x64xf32>
    %cst_60 = arith.constant 0.797884583 : f32
    %171 = vector.broadcast %cst_60 : f32 to vector<16x64xf32>
    %172 = arith.mulf %171, %170 : vector<16x64xf32>
    %173 = math.tanh %172 : vector<16x64xf32>
    %cst_61 = arith.constant 1.000000e+00 : f32
    %174 = vector.broadcast %cst_61 : f32 to vector<16x64xf32>
    %175 = arith.addf %174, %173 : vector<16x64xf32>
    %176 = arith.mulf %165, %175 : vector<16x64xf32>
    %c0_62 = arith.constant 0 : index
    %c0_63 = arith.constant 0 : index
    %c96 = arith.constant 96 : index
    %177 = vector.load %arg4[%c0_62, %c0_63, %c96] : memref<3x64x128xf32, #tpu.memory_space<vmem>>, vector<1x64x32xf32>
    %178 = vector.shape_cast %177 : vector<1x64x32xf32> to vector<64x32xf32>
    %cst_64 = arith.constant dense<0.000000e+00> : vector<16x32xf32>
    %179 = tpu.matmul %176, %178, %cst_64 {dimension_numbers = #tpu.dot_dimension_numbers<[1], [0], [0], [1], [0, 0, 1, 1], [], []>} : vector<16x64xf32>, vector<64x32xf32>, vector<16x32xf32> -> vector<16x32xf32>
    %c0_65 = arith.constant 0 : index
    %c5 = arith.constant 5 : index
    %c0_66 = arith.constant 0 : index
    %180 = vector.load %arg5[%c0_65, %c5, %c0_66] : memref<3x8x128xf32, #tpu.memory_space<vmem>>, vector<1x1x32xf32>
    %181 = vector.shape_cast %180 : vector<1x1x32xf32> to vector<1x32xf32>
    %182 = vector.broadcast %181 : vector<1x32xf32> to vector<16x32xf32>
    %183 = arith.addf %179, %182 : vector<16x32xf32>
    %184 = arith.addf %156, %183 : vector<16x32xf32>
    %c0_67 = arith.constant 0 : index
    %c6 = arith.constant 6 : index
    %c0_68 = arith.constant 0 : index
    %185 = vector.load %arg5[%c0_67, %c6, %c0_68] : memref<3x8x128xf32, #tpu.memory_space<vmem>>, vector<1x1x32xf32>
    %186 = vector.shape_cast %185 : vector<1x1x32xf32> to vector<1x32xf32>
    %c0_69 = arith.constant 0 : index
    %c7 = arith.constant 7 : index
    %c0_70 = arith.constant 0 : index
    %187 = vector.load %arg5[%c0_69, %c7, %c0_70] : memref<3x8x128xf32, #tpu.memory_space<vmem>>, vector<1x1x32xf32>
    %188 = vector.shape_cast %187 : vector<1x1x32xf32> to vector<1x32xf32>
    %cst_71 = arith.constant dense<0.000000e+00> : vector<16xf32>
    %189 = vector.multi_reduction <add>, %184, %cst_71 [1] : vector<16x32xf32> to vector<16xf32>
    %190 = vector.shape_cast %189 : vector<16xf32> to vector<16x1xf32>
    %cst_72 = arith.constant 3.200000e+01 : f32
    %191 = vector.broadcast %cst_72 : f32 to vector<16x1xf32>
    %192 = arith.divf %190, %191 : vector<16x1xf32>
    %193 = vector.broadcast %192 : vector<16x1xf32> to vector<16x32xf32>
    %194 = arith.subf %184, %193 : vector<16x32xf32>
    %195 = arith.mulf %194, %194 : vector<16x32xf32>
    %cst_73 = arith.constant dense<0.000000e+00> : vector<16xf32>
    %196 = vector.multi_reduction <add>, %195, %cst_73 [1] : vector<16x32xf32> to vector<16xf32>
    %197 = vector.shape_cast %196 : vector<16xf32> to vector<16x1xf32>
    %cst_74 = arith.constant 3.200000e+01 : f32
    %198 = vector.broadcast %cst_74 : f32 to vector<16x1xf32>
    %199 = arith.divf %197, %198 : vector<16x1xf32>
    %200 = vector.broadcast %192 : vector<16x1xf32> to vector<16x32xf32>
    %201 = arith.subf %184, %200 : vector<16x32xf32>
    %cst_75 = arith.constant 9.99999996E-13 : f32
    %202 = vector.broadcast %cst_75 : f32 to vector<16x1xf32>
    %203 = arith.addf %199, %202 : vector<16x1xf32>
    %204 = math.rsqrt %203 : vector<16x1xf32>
    %205 = vector.broadcast %204 : vector<16x1xf32> to vector<16x32xf32>
    %206 = arith.mulf %201, %205 : vector<16x32xf32>
    %207 = vector.broadcast %186 : vector<1x32xf32> to vector<16x32xf32>
    %208 = arith.mulf %206, %207 : vector<16x32xf32>
    %209 = vector.broadcast %188 : vector<1x32xf32> to vector<16x32xf32>
    %210 = arith.addf %208, %209 : vector<16x32xf32>
    %c1_76 = arith.constant 1 : index
    %c0_77 = arith.constant 0 : index
    %c0_78 = arith.constant 0 : index
    %211 = vector.load %arg4[%c1_76, %c0_77, %c0_78] : memref<3x64x128xf32, #tpu.memory_space<vmem>>, vector<1x32x96xf32>
    %212 = vector.shape_cast %211 : vector<1x32x96xf32> to vector<32x96xf32>
    %cst_79 = arith.constant dense<0.000000e+00> : vector<16x96xf32>
    %213 = tpu.matmul %210, %212, %cst_79 {dimension_numbers = #tpu.dot_dimension_numbers<[1], [0], [0], [1], [0, 0, 1, 1], [], []>} : vector<16x32xf32>, vector<32x96xf32>, vector<16x96xf32> -> vector<16x96xf32>
    %c1_80 = arith.constant 1 : index
    %c0_81 = arith.constant 0 : index
    %c0_82 = arith.constant 0 : index
    %214 = vector.load %arg5[%c1_80, %c0_81, %c0_82] : memref<3x8x128xf32, #tpu.memory_space<vmem>>, vector<1x1x96xf32>
    %215 = vector.shape_cast %214 : vector<1x1x96xf32> to vector<1x96xf32>
    %216 = vector.broadcast %215 : vector<1x96xf32> to vector<16x96xf32>
    %217 = arith.addf %213, %216 : vector<16x96xf32>
    %218 = vector.extract_strided_slice %217 {offsets = [0, 0], sizes = [16, 8], strides = [1, 1]} : vector<16x96xf32> to vector<16x8xf32>
    %219 = vector.shape_cast %218 : vector<16x8xf32> to vector<2x8x8xf32>
    %220 = vector.extract_strided_slice %217 {offsets = [0, 32], sizes = [16, 8], strides = [1, 1]} : vector<16x96xf32> to vector<16x8xf32>
    %221 = vector.shape_cast %220 : vector<16x8xf32> to vector<2x8x8xf32>
    %222 = vector.extract_strided_slice %217 {offsets = [0, 64], sizes = [16, 8], strides = [1, 1]} : vector<16x96xf32> to vector<16x8xf32>
    %223 = vector.shape_cast %222 : vector<16x8xf32> to vector<2x8x8xf32>
    "tpu.trace_start"() <{level = 10 : i32, message = "bqd,bkd->bqk"}> : () -> ()
    %cst_83 = arith.constant dense<0.000000e+00> : vector<2x8x8xf32>
    %224 = tpu.matmul %219, %221, %cst_83 {dimension_numbers = #tpu.dot_dimension_numbers<[2], [2], [1], [1], [0, 0, 0, 1, 1, 1], [0], [0]>} : vector<2x8x8xf32>, vector<2x8x8xf32>, vector<2x8x8xf32> -> vector<2x8x8xf32>
    "tpu.trace_stop"() : () -> ()
    %cst_84 = arith.constant 0.353553385 : f32
    %225 = vector.broadcast %cst_84 : f32 to vector<2x8x8xf32>
    %226 = arith.mulf %224, %225 : vector<2x8x8xf32>
    %227 = vector.broadcast %41 : vector<2x1x8xf32> to vector<2x8x8xf32>
    %228 = arith.addf %226, %227 : vector<2x8x8xf32>
    %229 = math.exp %228 : vector<2x8x8xf32>
    %cst_85 = arith.constant dense<0.000000e+00> : vector<2x8xf32>
    %230 = vector.multi_reduction <add>, %229, %cst_85 [2] : vector<2x8x8xf32> to vector<2x8xf32>
    %231 = vector.shape_cast %230 : vector<2x8xf32> to vector<2x8x1xf32>
    %232 = tpu.reciprocal %231 {approx = true} : vector<2x8x1xf32> -> vector<2x8x1xf32>
    %233 = vector.broadcast %232 : vector<2x8x1xf32> to vector<2x8x8xf32>
    %234 = arith.mulf %229, %233 : vector<2x8x8xf32>
    "tpu.trace_start"() <{level = 10 : i32, message = "bqk,bkd->bqd"}> : () -> ()
    %cst_86 = arith.constant dense<0.000000e+00> : vector<2x8x8xf32>
    %235 = tpu.matmul %234, %223, %cst_86 {dimension_numbers = #tpu.dot_dimension_numbers<[2], [1], [1], [2], [0, 0, 0, 1, 1, 2], [0], [0]>} : vector<2x8x8xf32>, vector<2x8x8xf32>, vector<2x8x8xf32> -> vector<2x8x8xf32>
    "tpu.trace_stop"() : () -> ()
    %236 = vector.extract_strided_slice %217 {offsets = [0, 8], sizes = [16, 8], strides = [1, 1]} : vector<16x96xf32> to vector<16x8xf32>
    %237 = vector.shape_cast %236 : vector<16x8xf32> to vector<2x8x8xf32>
    %238 = vector.extract_strided_slice %217 {offsets = [0, 40], sizes = [16, 8], strides = [1, 1]} : vector<16x96xf32> to vector<16x8xf32>
    %239 = vector.shape_cast %238 : vector<16x8xf32> to vector<2x8x8xf32>
    %240 = vector.extract_strided_slice %217 {offsets = [0, 72], sizes = [16, 8], strides = [1, 1]} : vector<16x96xf32> to vector<16x8xf32>
    %241 = vector.shape_cast %240 : vector<16x8xf32> to vector<2x8x8xf32>
    "tpu.trace_start"() <{level = 10 : i32, message = "bqd,bkd->bqk"}> : () -> ()
    %cst_87 = arith.constant dense<0.000000e+00> : vector<2x8x8xf32>
    %242 = tpu.matmul %237, %239, %cst_87 {dimension_numbers = #tpu.dot_dimension_numbers<[2], [2], [1], [1], [0, 0, 0, 1, 1, 1], [0], [0]>} : vector<2x8x8xf32>, vector<2x8x8xf32>, vector<2x8x8xf32> -> vector<2x8x8xf32>
    "tpu.trace_stop"() : () -> ()
    %cst_88 = arith.constant 0.353553385 : f32
    %243 = vector.broadcast %cst_88 : f32 to vector<2x8x8xf32>
    %244 = arith.mulf %242, %243 : vector<2x8x8xf32>
    %245 = vector.broadcast %41 : vector<2x1x8xf32> to vector<2x8x8xf32>
    %246 = arith.addf %244, %245 : vector<2x8x8xf32>
    %247 = math.exp %246 : vector<2x8x8xf32>
    %cst_89 = arith.constant dense<0.000000e+00> : vector<2x8xf32>
    %248 = vector.multi_reduction <add>, %247, %cst_89 [2] : vector<2x8x8xf32> to vector<2x8xf32>
    %249 = vector.shape_cast %248 : vector<2x8xf32> to vector<2x8x1xf32>
    %250 = tpu.reciprocal %249 {approx = true} : vector<2x8x1xf32> -> vector<2x8x1xf32>
    %251 = vector.broadcast %250 : vector<2x8x1xf32> to vector<2x8x8xf32>
    %252 = arith.mulf %247, %251 : vector<2x8x8xf32>
    "tpu.trace_start"() <{level = 10 : i32, message = "bqk,bkd->bqd"}> : () -> ()
    %cst_90 = arith.constant dense<0.000000e+00> : vector<2x8x8xf32>
    %253 = tpu.matmul %252, %241, %cst_90 {dimension_numbers = #tpu.dot_dimension_numbers<[2], [1], [1], [2], [0, 0, 0, 1, 1, 2], [0], [0]>} : vector<2x8x8xf32>, vector<2x8x8xf32>, vector<2x8x8xf32> -> vector<2x8x8xf32>
    "tpu.trace_stop"() : () -> ()
    %254 = vector.extract_strided_slice %217 {offsets = [0, 16], sizes = [16, 8], strides = [1, 1]} : vector<16x96xf32> to vector<16x8xf32>
    %255 = vector.shape_cast %254 : vector<16x8xf32> to vector<2x8x8xf32>
    %256 = vector.extract_strided_slice %217 {offsets = [0, 48], sizes = [16, 8], strides = [1, 1]} : vector<16x96xf32> to vector<16x8xf32>
    %257 = vector.shape_cast %256 : vector<16x8xf32> to vector<2x8x8xf32>
    %258 = vector.extract_strided_slice %217 {offsets = [0, 80], sizes = [16, 8], strides = [1, 1]} : vector<16x96xf32> to vector<16x8xf32>
    %259 = vector.shape_cast %258 : vector<16x8xf32> to vector<2x8x8xf32>
    "tpu.trace_start"() <{level = 10 : i32, message = "bqd,bkd->bqk"}> : () -> ()
    %cst_91 = arith.constant dense<0.000000e+00> : vector<2x8x8xf32>
    %260 = tpu.matmul %255, %257, %cst_91 {dimension_numbers = #tpu.dot_dimension_numbers<[2], [2], [1], [1], [0, 0, 0, 1, 1, 1], [0], [0]>} : vector<2x8x8xf32>, vector<2x8x8xf32>, vector<2x8x8xf32> -> vector<2x8x8xf32>
    "tpu.trace_stop"() : () -> ()
    %cst_92 = arith.constant 0.353553385 : f32
    %261 = vector.broadcast %cst_92 : f32 to vector<2x8x8xf32>
    %262 = arith.mulf %260, %261 : vector<2x8x8xf32>
    %263 = vector.broadcast %41 : vector<2x1x8xf32> to vector<2x8x8xf32>
    %264 = arith.addf %262, %263 : vector<2x8x8xf32>
    %265 = math.exp %264 : vector<2x8x8xf32>
    %cst_93 = arith.constant dense<0.000000e+00> : vector<2x8xf32>
    %266 = vector.multi_reduction <add>, %265, %cst_93 [2] : vector<2x8x8xf32> to vector<2x8xf32>
    %267 = vector.shape_cast %266 : vector<2x8xf32> to vector<2x8x1xf32>
    %268 = tpu.reciprocal %267 {approx = true} : vector<2x8x1xf32> -> vector<2x8x1xf32>
    %269 = vector.broadcast %268 : vector<2x8x1xf32> to vector<2x8x8xf32>
    %270 = arith.mulf %265, %269 : vector<2x8x8xf32>
    "tpu.trace_start"() <{level = 10 : i32, message = "bqk,bkd->bqd"}> : () -> ()
    %cst_94 = arith.constant dense<0.000000e+00> : vector<2x8x8xf32>
    %271 = tpu.matmul %270, %259, %cst_94 {dimension_numbers = #tpu.dot_dimension_numbers<[2], [1], [1], [2], [0, 0, 0, 1, 1, 2], [0], [0]>} : vector<2x8x8xf32>, vector<2x8x8xf32>, vector<2x8x8xf32> -> vector<2x8x8xf32>
    "tpu.trace_stop"() : () -> ()
    %272 = vector.extract_strided_slice %217 {offsets = [0, 24], sizes = [16, 8], strides = [1, 1]} : vector<16x96xf32> to vector<16x8xf32>
    %273 = vector.shape_cast %272 : vector<16x8xf32> to vector<2x8x8xf32>
    %274 = vector.extract_strided_slice %217 {offsets = [0, 56], sizes = [16, 8], strides = [1, 1]} : vector<16x96xf32> to vector<16x8xf32>
    %275 = vector.shape_cast %274 : vector<16x8xf32> to vector<2x8x8xf32>
    %276 = vector.extract_strided_slice %217 {offsets = [0, 88], sizes = [16, 8], strides = [1, 1]} : vector<16x96xf32> to vector<16x8xf32>
    %277 = vector.shape_cast %276 : vector<16x8xf32> to vector<2x8x8xf32>
    "tpu.trace_start"() <{level = 10 : i32, message = "bqd,bkd->bqk"}> : () -> ()
    %cst_95 = arith.constant dense<0.000000e+00> : vector<2x8x8xf32>
    %278 = tpu.matmul %273, %275, %cst_95 {dimension_numbers = #tpu.dot_dimension_numbers<[2], [2], [1], [1], [0, 0, 0, 1, 1, 1], [0], [0]>} : vector<2x8x8xf32>, vector<2x8x8xf32>, vector<2x8x8xf32> -> vector<2x8x8xf32>
    "tpu.trace_stop"() : () -> ()
    %cst_96 = arith.constant 0.353553385 : f32
    %279 = vector.broadcast %cst_96 : f32 to vector<2x8x8xf32>
    %280 = arith.mulf %278, %279 : vector<2x8x8xf32>
    %281 = vector.broadcast %41 : vector<2x1x8xf32> to vector<2x8x8xf32>
    %282 = arith.addf %280, %281 : vector<2x8x8xf32>
    %283 = math.exp %282 : vector<2x8x8xf32>
    %cst_97 = arith.constant dense<0.000000e+00> : vector<2x8xf32>
    %284 = vector.multi_reduction <add>, %283, %cst_97 [2] : vector<2x8x8xf32> to vector<2x8xf32>
    %285 = vector.shape_cast %284 : vector<2x8xf32> to vector<2x8x1xf32>
    %286 = tpu.reciprocal %285 {approx = true} : vector<2x8x1xf32> -> vector<2x8x1xf32>
    %287 = vector.broadcast %286 : vector<2x8x1xf32> to vector<2x8x8xf32>
    %288 = arith.mulf %283, %287 : vector<2x8x8xf32>
    "tpu.trace_start"() <{level = 10 : i32, message = "bqk,bkd->bqd"}> : () -> ()
    %cst_98 = arith.constant dense<0.000000e+00> : vector<2x8x8xf32>
    %289 = tpu.matmul %288, %277, %cst_98 {dimension_numbers = #tpu.dot_dimension_numbers<[2], [1], [1], [2], [0, 0, 0, 1, 1, 2], [0], [0]>} : vector<2x8x8xf32>, vector<2x8x8xf32>, vector<2x8x8xf32> -> vector<2x8x8xf32>
    "tpu.trace_stop"() : () -> ()
    %290 = tpu.concatenate %235, %253, %271, %289 in 2 : vector<2x8x8xf32>, vector<2x8x8xf32>, vector<2x8x8xf32>, vector<2x8x8xf32> -> vector<2x8x32xf32>
    %291 = vector.shape_cast %290 : vector<2x8x32xf32> to vector<16x32xf32>
    %c1_99 = arith.constant 1 : index
    %c32_100 = arith.constant 32 : index
    %c0_101 = arith.constant 0 : index
    %292 = vector.load %arg4[%c1_99, %c32_100, %c0_101] : memref<3x64x128xf32, #tpu.memory_space<vmem>>, vector<1x32x32xf32>
    %293 = vector.shape_cast %292 : vector<1x32x32xf32> to vector<32x32xf32>
    %cst_102 = arith.constant dense<0.000000e+00> : vector<16x32xf32>
    %294 = tpu.matmul %291, %293, %cst_102 {dimension_numbers = #tpu.dot_dimension_numbers<[1], [0], [0], [1], [0, 0, 1, 1], [], []>} : vector<16x32xf32>, vector<32x32xf32>, vector<16x32xf32> -> vector<16x32xf32>
    %c1_103 = arith.constant 1 : index
    %c1_104 = arith.constant 1 : index
    %c0_105 = arith.constant 0 : index
    %295 = vector.load %arg5[%c1_103, %c1_104, %c0_105] : memref<3x8x128xf32, #tpu.memory_space<vmem>>, vector<1x1x32xf32>
    %296 = vector.shape_cast %295 : vector<1x1x32xf32> to vector<1x32xf32>
    %297 = vector.broadcast %296 : vector<1x32xf32> to vector<16x32xf32>
    %298 = arith.addf %294, %297 : vector<16x32xf32>
    %299 = arith.addf %210, %298 : vector<16x32xf32>
    %c1_106 = arith.constant 1 : index
    %c2_107 = arith.constant 2 : index
    %c0_108 = arith.constant 0 : index
    %300 = vector.load %arg5[%c1_106, %c2_107, %c0_108] : memref<3x8x128xf32, #tpu.memory_space<vmem>>, vector<1x1x32xf32>
    %301 = vector.shape_cast %300 : vector<1x1x32xf32> to vector<1x32xf32>
    %c1_109 = arith.constant 1 : index
    %c3_110 = arith.constant 3 : index
    %c0_111 = arith.constant 0 : index
    %302 = vector.load %arg5[%c1_109, %c3_110, %c0_111] : memref<3x8x128xf32, #tpu.memory_space<vmem>>, vector<1x1x32xf32>
    %303 = vector.shape_cast %302 : vector<1x1x32xf32> to vector<1x32xf32>
    %cst_112 = arith.constant dense<0.000000e+00> : vector<16xf32>
    %304 = vector.multi_reduction <add>, %299, %cst_112 [1] : vector<16x32xf32> to vector<16xf32>
    %305 = vector.shape_cast %304 : vector<16xf32> to vector<16x1xf32>
    %cst_113 = arith.constant 3.200000e+01 : f32
    %306 = vector.broadcast %cst_113 : f32 to vector<16x1xf32>
    %307 = arith.divf %305, %306 : vector<16x1xf32>
    %308 = vector.broadcast %307 : vector<16x1xf32> to vector<16x32xf32>
    %309 = arith.subf %299, %308 : vector<16x32xf32>
    %310 = arith.mulf %309, %309 : vector<16x32xf32>
    %cst_114 = arith.constant dense<0.000000e+00> : vector<16xf32>
    %311 = vector.multi_reduction <add>, %310, %cst_114 [1] : vector<16x32xf32> to vector<16xf32>
    %312 = vector.shape_cast %311 : vector<16xf32> to vector<16x1xf32>
    %cst_115 = arith.constant 3.200000e+01 : f32
    %313 = vector.broadcast %cst_115 : f32 to vector<16x1xf32>
    %314 = arith.divf %312, %313 : vector<16x1xf32>
    %315 = vector.broadcast %307 : vector<16x1xf32> to vector<16x32xf32>
    %316 = arith.subf %299, %315 : vector<16x32xf32>
    %cst_116 = arith.constant 9.99999996E-13 : f32
    %317 = vector.broadcast %cst_116 : f32 to vector<16x1xf32>
    %318 = arith.addf %314, %317 : vector<16x1xf32>
    %319 = math.rsqrt %318 : vector<16x1xf32>
    %320 = vector.broadcast %319 : vector<16x1xf32> to vector<16x32xf32>
    %321 = arith.mulf %316, %320 : vector<16x32xf32>
    %322 = vector.broadcast %301 : vector<1x32xf32> to vector<16x32xf32>
    %323 = arith.mulf %321, %322 : vector<16x32xf32>
    %324 = vector.broadcast %303 : vector<1x32xf32> to vector<16x32xf32>
    %325 = arith.addf %323, %324 : vector<16x32xf32>
    %c1_117 = arith.constant 1 : index
    %c32_118 = arith.constant 32 : index
    %c32_119 = arith.constant 32 : index
    %326 = vector.load %arg4[%c1_117, %c32_118, %c32_119] : memref<3x64x128xf32, #tpu.memory_space<vmem>>, vector<1x32x64xf32>
    %327 = vector.shape_cast %326 : vector<1x32x64xf32> to vector<32x64xf32>
    %cst_120 = arith.constant dense<0.000000e+00> : vector<16x64xf32>
    %328 = tpu.matmul %325, %327, %cst_120 {dimension_numbers = #tpu.dot_dimension_numbers<[1], [0], [0], [1], [0, 0, 1, 1], [], []>} : vector<16x32xf32>, vector<32x64xf32>, vector<16x64xf32> -> vector<16x64xf32>
    %c1_121 = arith.constant 1 : index
    %c4_122 = arith.constant 4 : index
    %c0_123 = arith.constant 0 : index
    %329 = vector.load %arg5[%c1_121, %c4_122, %c0_123] : memref<3x8x128xf32, #tpu.memory_space<vmem>>, vector<1x1x64xf32>
    %330 = vector.shape_cast %329 : vector<1x1x64xf32> to vector<1x64xf32>
    %331 = vector.broadcast %330 : vector<1x64xf32> to vector<16x64xf32>
    %332 = arith.addf %328, %331 : vector<16x64xf32>
    %cst_124 = arith.constant 5.000000e-01 : f32
    %333 = vector.broadcast %cst_124 : f32 to vector<16x64xf32>
    %334 = arith.mulf %333, %332 : vector<16x64xf32>
    %cst_125 = arith.constant 4.471500e-02 : f32
    %335 = vector.broadcast %cst_125 : f32 to vector<16x64xf32>
    %336 = arith.mulf %335, %332 : vector<16x64xf32>
    %337 = arith.mulf %336, %332 : vector<16x64xf32>
    %338 = arith.mulf %337, %332 : vector<16x64xf32>
    %339 = arith.addf %332, %338 : vector<16x64xf32>
    %cst_126 = arith.constant 0.797884583 : f32
    %340 = vector.broadcast %cst_126 : f32 to vector<16x64xf32>
    %341 = arith.mulf %340, %339 : vector<16x64xf32>
    %342 = math.tanh %341 : vector<16x64xf32>
    %cst_127 = arith.constant 1.000000e+00 : f32
    %343 = vector.broadcast %cst_127 : f32 to vector<16x64xf32>
    %344 = arith.addf %343, %342 : vector<16x64xf32>
    %345 = arith.mulf %334, %344 : vector<16x64xf32>
    %c1_128 = arith.constant 1 : index
    %c0_129 = arith.constant 0 : index
    %c96_130 = arith.constant 96 : index
    %346 = vector.load %arg4[%c1_128, %c0_129, %c96_130] : memref<3x64x128xf32, #tpu.memory_space<vmem>>, vector<1x64x32xf32>
    %347 = vector.shape_cast %346 : vector<1x64x32xf32> to vector<64x32xf32>
    %cst_131 = arith.constant dense<0.000000e+00> : vector<16x32xf32>
    %348 = tpu.matmul %345, %347, %cst_131 {dimension_numbers = #tpu.dot_dimension_numbers<[1], [0], [0], [1], [0, 0, 1, 1], [], []>} : vector<16x64xf32>, vector<64x32xf32>, vector<16x32xf32> -> vector<16x32xf32>
    %c1_132 = arith.constant 1 : index
    %c5_133 = arith.constant 5 : index
    %c0_134 = arith.constant 0 : index
    %349 = vector.load %arg5[%c1_132, %c5_133, %c0_134] : memref<3x8x128xf32, #tpu.memory_space<vmem>>, vector<1x1x32xf32>
    %350 = vector.shape_cast %349 : vector<1x1x32xf32> to vector<1x32xf32>
    %351 = vector.broadcast %350 : vector<1x32xf32> to vector<16x32xf32>
    %352 = arith.addf %348, %351 : vector<16x32xf32>
    %353 = arith.addf %325, %352 : vector<16x32xf32>
    %c1_135 = arith.constant 1 : index
    %c6_136 = arith.constant 6 : index
    %c0_137 = arith.constant 0 : index
    %354 = vector.load %arg5[%c1_135, %c6_136, %c0_137] : memref<3x8x128xf32, #tpu.memory_space<vmem>>, vector<1x1x32xf32>
    %355 = vector.shape_cast %354 : vector<1x1x32xf32> to vector<1x32xf32>
    %c1_138 = arith.constant 1 : index
    %c7_139 = arith.constant 7 : index
    %c0_140 = arith.constant 0 : index
    %356 = vector.load %arg5[%c1_138, %c7_139, %c0_140] : memref<3x8x128xf32, #tpu.memory_space<vmem>>, vector<1x1x32xf32>
    %357 = vector.shape_cast %356 : vector<1x1x32xf32> to vector<1x32xf32>
    %cst_141 = arith.constant dense<0.000000e+00> : vector<16xf32>
    %358 = vector.multi_reduction <add>, %353, %cst_141 [1] : vector<16x32xf32> to vector<16xf32>
    %359 = vector.shape_cast %358 : vector<16xf32> to vector<16x1xf32>
    %cst_142 = arith.constant 3.200000e+01 : f32
    %360 = vector.broadcast %cst_142 : f32 to vector<16x1xf32>
    %361 = arith.divf %359, %360 : vector<16x1xf32>
    %362 = vector.broadcast %361 : vector<16x1xf32> to vector<16x32xf32>
    %363 = arith.subf %353, %362 : vector<16x32xf32>
    %364 = arith.mulf %363, %363 : vector<16x32xf32>
    %cst_143 = arith.constant dense<0.000000e+00> : vector<16xf32>
    %365 = vector.multi_reduction <add>, %364, %cst_143 [1] : vector<16x32xf32> to vector<16xf32>
    %366 = vector.shape_cast %365 : vector<16xf32> to vector<16x1xf32>
    %cst_144 = arith.constant 3.200000e+01 : f32
    %367 = vector.broadcast %cst_144 : f32 to vector<16x1xf32>
    %368 = arith.divf %366, %367 : vector<16x1xf32>
    %369 = vector.broadcast %361 : vector<16x1xf32> to vector<16x32xf32>
    %370 = arith.subf %353, %369 : vector<16x32xf32>
    %cst_145 = arith.constant 9.99999996E-13 : f32
    %371 = vector.broadcast %cst_145 : f32 to vector<16x1xf32>
    %372 = arith.addf %368, %371 : vector<16x1xf32>
    %373 = math.rsqrt %372 : vector<16x1xf32>
    %374 = vector.broadcast %373 : vector<16x1xf32> to vector<16x32xf32>
    %375 = arith.mulf %370, %374 : vector<16x32xf32>
    %376 = vector.broadcast %355 : vector<1x32xf32> to vector<16x32xf32>
    %377 = arith.mulf %375, %376 : vector<16x32xf32>
    %378 = vector.broadcast %357 : vector<1x32xf32> to vector<16x32xf32>
    %379 = arith.addf %377, %378 : vector<16x32xf32>
    %c2_146 = arith.constant 2 : index
    %c0_147 = arith.constant 0 : index
    %c0_148 = arith.constant 0 : index
    %380 = vector.load %arg4[%c2_146, %c0_147, %c0_148] : memref<3x64x128xf32, #tpu.memory_space<vmem>>, vector<1x32x96xf32>
    %381 = vector.shape_cast %380 : vector<1x32x96xf32> to vector<32x96xf32>
    %cst_149 = arith.constant dense<0.000000e+00> : vector<16x96xf32>
    %382 = tpu.matmul %379, %381, %cst_149 {dimension_numbers = #tpu.dot_dimension_numbers<[1], [0], [0], [1], [0, 0, 1, 1], [], []>} : vector<16x32xf32>, vector<32x96xf32>, vector<16x96xf32> -> vector<16x96xf32>
    %c2_150 = arith.constant 2 : index
    %c0_151 = arith.constant 0 : index
    %c0_152 = arith.constant 0 : index
    %383 = vector.load %arg5[%c2_150, %c0_151, %c0_152] : memref<3x8x128xf32, #tpu.memory_space<vmem>>, vector<1x1x96xf32>
    %384 = vector.shape_cast %383 : vector<1x1x96xf32> to vector<1x96xf32>
    %385 = vector.broadcast %384 : vector<1x96xf32> to vector<16x96xf32>
    %386 = arith.addf %382, %385 : vector<16x96xf32>
    %387 = vector.extract_strided_slice %386 {offsets = [0, 0], sizes = [16, 8], strides = [1, 1]} : vector<16x96xf32> to vector<16x8xf32>
    %388 = vector.shape_cast %387 : vector<16x8xf32> to vector<2x8x8xf32>
    %389 = vector.extract_strided_slice %386 {offsets = [0, 32], sizes = [16, 8], strides = [1, 1]} : vector<16x96xf32> to vector<16x8xf32>
    %390 = vector.shape_cast %389 : vector<16x8xf32> to vector<2x8x8xf32>
    %391 = vector.extract_strided_slice %386 {offsets = [0, 64], sizes = [16, 8], strides = [1, 1]} : vector<16x96xf32> to vector<16x8xf32>
    %392 = vector.shape_cast %391 : vector<16x8xf32> to vector<2x8x8xf32>
    "tpu.trace_start"() <{level = 10 : i32, message = "bqd,bkd->bqk"}> : () -> ()
    %cst_153 = arith.constant dense<0.000000e+00> : vector<2x8x8xf32>
    %393 = tpu.matmul %388, %390, %cst_153 {dimension_numbers = #tpu.dot_dimension_numbers<[2], [2], [1], [1], [0, 0, 0, 1, 1, 1], [0], [0]>} : vector<2x8x8xf32>, vector<2x8x8xf32>, vector<2x8x8xf32> -> vector<2x8x8xf32>
    "tpu.trace_stop"() : () -> ()
    %cst_154 = arith.constant 0.353553385 : f32
    %394 = vector.broadcast %cst_154 : f32 to vector<2x8x8xf32>
    %395 = arith.mulf %393, %394 : vector<2x8x8xf32>
    %396 = vector.broadcast %41 : vector<2x1x8xf32> to vector<2x8x8xf32>
    %397 = arith.addf %395, %396 : vector<2x8x8xf32>
    %398 = math.exp %397 : vector<2x8x8xf32>
    %cst_155 = arith.constant dense<0.000000e+00> : vector<2x8xf32>
    %399 = vector.multi_reduction <add>, %398, %cst_155 [2] : vector<2x8x8xf32> to vector<2x8xf32>
    %400 = vector.shape_cast %399 : vector<2x8xf32> to vector<2x8x1xf32>
    %401 = tpu.reciprocal %400 {approx = true} : vector<2x8x1xf32> -> vector<2x8x1xf32>
    %402 = vector.broadcast %401 : vector<2x8x1xf32> to vector<2x8x8xf32>
    %403 = arith.mulf %398, %402 : vector<2x8x8xf32>
    "tpu.trace_start"() <{level = 10 : i32, message = "bqk,bkd->bqd"}> : () -> ()
    %cst_156 = arith.constant dense<0.000000e+00> : vector<2x8x8xf32>
    %404 = tpu.matmul %403, %392, %cst_156 {dimension_numbers = #tpu.dot_dimension_numbers<[2], [1], [1], [2], [0, 0, 0, 1, 1, 2], [0], [0]>} : vector<2x8x8xf32>, vector<2x8x8xf32>, vector<2x8x8xf32> -> vector<2x8x8xf32>
    "tpu.trace_stop"() : () -> ()
    %405 = vector.extract_strided_slice %386 {offsets = [0, 8], sizes = [16, 8], strides = [1, 1]} : vector<16x96xf32> to vector<16x8xf32>
    %406 = vector.shape_cast %405 : vector<16x8xf32> to vector<2x8x8xf32>
    %407 = vector.extract_strided_slice %386 {offsets = [0, 40], sizes = [16, 8], strides = [1, 1]} : vector<16x96xf32> to vector<16x8xf32>
    %408 = vector.shape_cast %407 : vector<16x8xf32> to vector<2x8x8xf32>
    %409 = vector.extract_strided_slice %386 {offsets = [0, 72], sizes = [16, 8], strides = [1, 1]} : vector<16x96xf32> to vector<16x8xf32>
    %410 = vector.shape_cast %409 : vector<16x8xf32> to vector<2x8x8xf32>
    "tpu.trace_start"() <{level = 10 : i32, message = "bqd,bkd->bqk"}> : () -> ()
    %cst_157 = arith.constant dense<0.000000e+00> : vector<2x8x8xf32>
    %411 = tpu.matmul %406, %408, %cst_157 {dimension_numbers = #tpu.dot_dimension_numbers<[2], [2], [1], [1], [0, 0, 0, 1, 1, 1], [0], [0]>} : vector<2x8x8xf32>, vector<2x8x8xf32>, vector<2x8x8xf32> -> vector<2x8x8xf32>
    "tpu.trace_stop"() : () -> ()
    %cst_158 = arith.constant 0.353553385 : f32
    %412 = vector.broadcast %cst_158 : f32 to vector<2x8x8xf32>
    %413 = arith.mulf %411, %412 : vector<2x8x8xf32>
    %414 = vector.broadcast %41 : vector<2x1x8xf32> to vector<2x8x8xf32>
    %415 = arith.addf %413, %414 : vector<2x8x8xf32>
    %416 = math.exp %415 : vector<2x8x8xf32>
    %cst_159 = arith.constant dense<0.000000e+00> : vector<2x8xf32>
    %417 = vector.multi_reduction <add>, %416, %cst_159 [2] : vector<2x8x8xf32> to vector<2x8xf32>
    %418 = vector.shape_cast %417 : vector<2x8xf32> to vector<2x8x1xf32>
    %419 = tpu.reciprocal %418 {approx = true} : vector<2x8x1xf32> -> vector<2x8x1xf32>
    %420 = vector.broadcast %419 : vector<2x8x1xf32> to vector<2x8x8xf32>
    %421 = arith.mulf %416, %420 : vector<2x8x8xf32>
    "tpu.trace_start"() <{level = 10 : i32, message = "bqk,bkd->bqd"}> : () -> ()
    %cst_160 = arith.constant dense<0.000000e+00> : vector<2x8x8xf32>
    %422 = tpu.matmul %421, %410, %cst_160 {dimension_numbers = #tpu.dot_dimension_numbers<[2], [1], [1], [2], [0, 0, 0, 1, 1, 2], [0], [0]>} : vector<2x8x8xf32>, vector<2x8x8xf32>, vector<2x8x8xf32> -> vector<2x8x8xf32>
    "tpu.trace_stop"() : () -> ()
    %423 = vector.extract_strided_slice %386 {offsets = [0, 16], sizes = [16, 8], strides = [1, 1]} : vector<16x96xf32> to vector<16x8xf32>
    %424 = vector.shape_cast %423 : vector<16x8xf32> to vector<2x8x8xf32>
    %425 = vector.extract_strided_slice %386 {offsets = [0, 48], sizes = [16, 8], strides = [1, 1]} : vector<16x96xf32> to vector<16x8xf32>
    %426 = vector.shape_cast %425 : vector<16x8xf32> to vector<2x8x8xf32>
    %427 = vector.extract_strided_slice %386 {offsets = [0, 80], sizes = [16, 8], strides = [1, 1]} : vector<16x96xf32> to vector<16x8xf32>
    %428 = vector.shape_cast %427 : vector<16x8xf32> to vector<2x8x8xf32>
    "tpu.trace_start"() <{level = 10 : i32, message = "bqd,bkd->bqk"}> : () -> ()
    %cst_161 = arith.constant dense<0.000000e+00> : vector<2x8x8xf32>
    %429 = tpu.matmul %424, %426, %cst_161 {dimension_numbers = #tpu.dot_dimension_numbers<[2], [2], [1], [1], [0, 0, 0, 1, 1, 1], [0], [0]>} : vector<2x8x8xf32>, vector<2x8x8xf32>, vector<2x8x8xf32> -> vector<2x8x8xf32>
    "tpu.trace_stop"() : () -> ()
    %cst_162 = arith.constant 0.353553385 : f32
    %430 = vector.broadcast %cst_162 : f32 to vector<2x8x8xf32>
    %431 = arith.mulf %429, %430 : vector<2x8x8xf32>
    %432 = vector.broadcast %41 : vector<2x1x8xf32> to vector<2x8x8xf32>
    %433 = arith.addf %431, %432 : vector<2x8x8xf32>
    %434 = math.exp %433 : vector<2x8x8xf32>
    %cst_163 = arith.constant dense<0.000000e+00> : vector<2x8xf32>
    %435 = vector.multi_reduction <add>, %434, %cst_163 [2] : vector<2x8x8xf32> to vector<2x8xf32>
    %436 = vector.shape_cast %435 : vector<2x8xf32> to vector<2x8x1xf32>
    %437 = tpu.reciprocal %436 {approx = true} : vector<2x8x1xf32> -> vector<2x8x1xf32>
    %438 = vector.broadcast %437 : vector<2x8x1xf32> to vector<2x8x8xf32>
    %439 = arith.mulf %434, %438 : vector<2x8x8xf32>
    "tpu.trace_start"() <{level = 10 : i32, message = "bqk,bkd->bqd"}> : () -> ()
    %cst_164 = arith.constant dense<0.000000e+00> : vector<2x8x8xf32>
    %440 = tpu.matmul %439, %428, %cst_164 {dimension_numbers = #tpu.dot_dimension_numbers<[2], [1], [1], [2], [0, 0, 0, 1, 1, 2], [0], [0]>} : vector<2x8x8xf32>, vector<2x8x8xf32>, vector<2x8x8xf32> -> vector<2x8x8xf32>
    "tpu.trace_stop"() : () -> ()
    %441 = vector.extract_strided_slice %386 {offsets = [0, 24], sizes = [16, 8], strides = [1, 1]} : vector<16x96xf32> to vector<16x8xf32>
    %442 = vector.shape_cast %441 : vector<16x8xf32> to vector<2x8x8xf32>
    %443 = vector.extract_strided_slice %386 {offsets = [0, 56], sizes = [16, 8], strides = [1, 1]} : vector<16x96xf32> to vector<16x8xf32>
    %444 = vector.shape_cast %443 : vector<16x8xf32> to vector<2x8x8xf32>
    %445 = vector.extract_strided_slice %386 {offsets = [0, 88], sizes = [16, 8], strides = [1, 1]} : vector<16x96xf32> to vector<16x8xf32>
    %446 = vector.shape_cast %445 : vector<16x8xf32> to vector<2x8x8xf32>
    "tpu.trace_start"() <{level = 10 : i32, message = "bqd,bkd->bqk"}> : () -> ()
    %cst_165 = arith.constant dense<0.000000e+00> : vector<2x8x8xf32>
    %447 = tpu.matmul %442, %444, %cst_165 {dimension_numbers = #tpu.dot_dimension_numbers<[2], [2], [1], [1], [0, 0, 0, 1, 1, 1], [0], [0]>} : vector<2x8x8xf32>, vector<2x8x8xf32>, vector<2x8x8xf32> -> vector<2x8x8xf32>
    "tpu.trace_stop"() : () -> ()
    %cst_166 = arith.constant 0.353553385 : f32
    %448 = vector.broadcast %cst_166 : f32 to vector<2x8x8xf32>
    %449 = arith.mulf %447, %448 : vector<2x8x8xf32>
    %450 = vector.broadcast %41 : vector<2x1x8xf32> to vector<2x8x8xf32>
    %451 = arith.addf %449, %450 : vector<2x8x8xf32>
    %452 = math.exp %451 : vector<2x8x8xf32>
    %cst_167 = arith.constant dense<0.000000e+00> : vector<2x8xf32>
    %453 = vector.multi_reduction <add>, %452, %cst_167 [2] : vector<2x8x8xf32> to vector<2x8xf32>
    %454 = vector.shape_cast %453 : vector<2x8xf32> to vector<2x8x1xf32>
    %455 = tpu.reciprocal %454 {approx = true} : vector<2x8x1xf32> -> vector<2x8x1xf32>
    %456 = vector.broadcast %455 : vector<2x8x1xf32> to vector<2x8x8xf32>
    %457 = arith.mulf %452, %456 : vector<2x8x8xf32>
    "tpu.trace_start"() <{level = 10 : i32, message = "bqk,bkd->bqd"}> : () -> ()
    %cst_168 = arith.constant dense<0.000000e+00> : vector<2x8x8xf32>
    %458 = tpu.matmul %457, %446, %cst_168 {dimension_numbers = #tpu.dot_dimension_numbers<[2], [1], [1], [2], [0, 0, 0, 1, 1, 2], [0], [0]>} : vector<2x8x8xf32>, vector<2x8x8xf32>, vector<2x8x8xf32> -> vector<2x8x8xf32>
    "tpu.trace_stop"() : () -> ()
    %459 = tpu.concatenate %404, %422, %440, %458 in 2 : vector<2x8x8xf32>, vector<2x8x8xf32>, vector<2x8x8xf32>, vector<2x8x8xf32> -> vector<2x8x32xf32>
    %460 = vector.shape_cast %459 : vector<2x8x32xf32> to vector<16x32xf32>
    %c2_169 = arith.constant 2 : index
    %c32_170 = arith.constant 32 : index
    %c0_171 = arith.constant 0 : index
    %461 = vector.load %arg4[%c2_169, %c32_170, %c0_171] : memref<3x64x128xf32, #tpu.memory_space<vmem>>, vector<1x32x32xf32>
    %462 = vector.shape_cast %461 : vector<1x32x32xf32> to vector<32x32xf32>
    %cst_172 = arith.constant dense<0.000000e+00> : vector<16x32xf32>
    %463 = tpu.matmul %460, %462, %cst_172 {dimension_numbers = #tpu.dot_dimension_numbers<[1], [0], [0], [1], [0, 0, 1, 1], [], []>} : vector<16x32xf32>, vector<32x32xf32>, vector<16x32xf32> -> vector<16x32xf32>
    %c2_173 = arith.constant 2 : index
    %c1_174 = arith.constant 1 : index
    %c0_175 = arith.constant 0 : index
    %464 = vector.load %arg5[%c2_173, %c1_174, %c0_175] : memref<3x8x128xf32, #tpu.memory_space<vmem>>, vector<1x1x32xf32>
    %465 = vector.shape_cast %464 : vector<1x1x32xf32> to vector<1x32xf32>
    %466 = vector.broadcast %465 : vector<1x32xf32> to vector<16x32xf32>
    %467 = arith.addf %463, %466 : vector<16x32xf32>
    %468 = arith.addf %379, %467 : vector<16x32xf32>
    %c2_176 = arith.constant 2 : index
    %c2_177 = arith.constant 2 : index
    %c0_178 = arith.constant 0 : index
    %469 = vector.load %arg5[%c2_176, %c2_177, %c0_178] : memref<3x8x128xf32, #tpu.memory_space<vmem>>, vector<1x1x32xf32>
    %470 = vector.shape_cast %469 : vector<1x1x32xf32> to vector<1x32xf32>
    %c2_179 = arith.constant 2 : index
    %c3_180 = arith.constant 3 : index
    %c0_181 = arith.constant 0 : index
    %471 = vector.load %arg5[%c2_179, %c3_180, %c0_181] : memref<3x8x128xf32, #tpu.memory_space<vmem>>, vector<1x1x32xf32>
    %472 = vector.shape_cast %471 : vector<1x1x32xf32> to vector<1x32xf32>
    %cst_182 = arith.constant dense<0.000000e+00> : vector<16xf32>
    %473 = vector.multi_reduction <add>, %468, %cst_182 [1] : vector<16x32xf32> to vector<16xf32>
    %474 = vector.shape_cast %473 : vector<16xf32> to vector<16x1xf32>
    %cst_183 = arith.constant 3.200000e+01 : f32
    %475 = vector.broadcast %cst_183 : f32 to vector<16x1xf32>
    %476 = arith.divf %474, %475 : vector<16x1xf32>
    %477 = vector.broadcast %476 : vector<16x1xf32> to vector<16x32xf32>
    %478 = arith.subf %468, %477 : vector<16x32xf32>
    %479 = arith.mulf %478, %478 : vector<16x32xf32>
    %cst_184 = arith.constant dense<0.000000e+00> : vector<16xf32>
    %480 = vector.multi_reduction <add>, %479, %cst_184 [1] : vector<16x32xf32> to vector<16xf32>
    %481 = vector.shape_cast %480 : vector<16xf32> to vector<16x1xf32>
    %cst_185 = arith.constant 3.200000e+01 : f32
    %482 = vector.broadcast %cst_185 : f32 to vector<16x1xf32>
    %483 = arith.divf %481, %482 : vector<16x1xf32>
    %484 = vector.broadcast %476 : vector<16x1xf32> to vector<16x32xf32>
    %485 = arith.subf %468, %484 : vector<16x32xf32>
    %cst_186 = arith.constant 9.99999996E-13 : f32
    %486 = vector.broadcast %cst_186 : f32 to vector<16x1xf32>
    %487 = arith.addf %483, %486 : vector<16x1xf32>
    %488 = math.rsqrt %487 : vector<16x1xf32>
    %489 = vector.broadcast %488 : vector<16x1xf32> to vector<16x32xf32>
    %490 = arith.mulf %485, %489 : vector<16x32xf32>
    %491 = vector.broadcast %470 : vector<1x32xf32> to vector<16x32xf32>
    %492 = arith.mulf %490, %491 : vector<16x32xf32>
    %493 = vector.broadcast %472 : vector<1x32xf32> to vector<16x32xf32>
    %494 = arith.addf %492, %493 : vector<16x32xf32>
    %c2_187 = arith.constant 2 : index
    %c32_188 = arith.constant 32 : index
    %c32_189 = arith.constant 32 : index
    %495 = vector.load %arg4[%c2_187, %c32_188, %c32_189] : memref<3x64x128xf32, #tpu.memory_space<vmem>>, vector<1x32x64xf32>
    %496 = vector.shape_cast %495 : vector<1x32x64xf32> to vector<32x64xf32>
    %cst_190 = arith.constant dense<0.000000e+00> : vector<16x64xf32>
    %497 = tpu.matmul %494, %496, %cst_190 {dimension_numbers = #tpu.dot_dimension_numbers<[1], [0], [0], [1], [0, 0, 1, 1], [], []>} : vector<16x32xf32>, vector<32x64xf32>, vector<16x64xf32> -> vector<16x64xf32>
    %c2_191 = arith.constant 2 : index
    %c4_192 = arith.constant 4 : index
    %c0_193 = arith.constant 0 : index
    %498 = vector.load %arg5[%c2_191, %c4_192, %c0_193] : memref<3x8x128xf32, #tpu.memory_space<vmem>>, vector<1x1x64xf32>
    %499 = vector.shape_cast %498 : vector<1x1x64xf32> to vector<1x64xf32>
    %500 = vector.broadcast %499 : vector<1x64xf32> to vector<16x64xf32>
    %501 = arith.addf %497, %500 : vector<16x64xf32>
    %cst_194 = arith.constant 5.000000e-01 : f32
    %502 = vector.broadcast %cst_194 : f32 to vector<16x64xf32>
    %503 = arith.mulf %502, %501 : vector<16x64xf32>
    %cst_195 = arith.constant 4.471500e-02 : f32
    %504 = vector.broadcast %cst_195 : f32 to vector<16x64xf32>
    %505 = arith.mulf %504, %501 : vector<16x64xf32>
    %506 = arith.mulf %505, %501 : vector<16x64xf32>
    %507 = arith.mulf %506, %501 : vector<16x64xf32>
    %508 = arith.addf %501, %507 : vector<16x64xf32>
    %cst_196 = arith.constant 0.797884583 : f32
    %509 = vector.broadcast %cst_196 : f32 to vector<16x64xf32>
    %510 = arith.mulf %509, %508 : vector<16x64xf32>
    %511 = math.tanh %510 : vector<16x64xf32>
    %cst_197 = arith.constant 1.000000e+00 : f32
    %512 = vector.broadcast %cst_197 : f32 to vector<16x64xf32>
    %513 = arith.addf %512, %511 : vector<16x64xf32>
    %514 = arith.mulf %503, %513 : vector<16x64xf32>
    %c2_198 = arith.constant 2 : index
    %c0_199 = arith.constant 0 : index
    %c96_200 = arith.constant 96 : index
    %515 = vector.load %arg4[%c2_198, %c0_199, %c96_200] : memref<3x64x128xf32, #tpu.memory_space<vmem>>, vector<1x64x32xf32>
    %516 = vector.shape_cast %515 : vector<1x64x32xf32> to vector<64x32xf32>
    %cst_201 = arith.constant dense<0.000000e+00> : vector<16x32xf32>
    %517 = tpu.matmul %514, %516, %cst_201 {dimension_numbers = #tpu.dot_dimension_numbers<[1], [0], [0], [1], [0, 0, 1, 1], [], []>} : vector<16x64xf32>, vector<64x32xf32>, vector<16x32xf32> -> vector<16x32xf32>
    %c2_202 = arith.constant 2 : index
    %c5_203 = arith.constant 5 : index
    %c0_204 = arith.constant 0 : index
    %518 = vector.load %arg5[%c2_202, %c5_203, %c0_204] : memref<3x8x128xf32, #tpu.memory_space<vmem>>, vector<1x1x32xf32>
    %519 = vector.shape_cast %518 : vector<1x1x32xf32> to vector<1x32xf32>
    %520 = vector.broadcast %519 : vector<1x32xf32> to vector<16x32xf32>
    %521 = arith.addf %517, %520 : vector<16x32xf32>
    %522 = arith.addf %494, %521 : vector<16x32xf32>
    %c2_205 = arith.constant 2 : index
    %c6_206 = arith.constant 6 : index
    %c0_207 = arith.constant 0 : index
    %523 = vector.load %arg5[%c2_205, %c6_206, %c0_207] : memref<3x8x128xf32, #tpu.memory_space<vmem>>, vector<1x1x32xf32>
    %524 = vector.shape_cast %523 : vector<1x1x32xf32> to vector<1x32xf32>
    %c2_208 = arith.constant 2 : index
    %c7_209 = arith.constant 7 : index
    %c0_210 = arith.constant 0 : index
    %525 = vector.load %arg5[%c2_208, %c7_209, %c0_210] : memref<3x8x128xf32, #tpu.memory_space<vmem>>, vector<1x1x32xf32>
    %526 = vector.shape_cast %525 : vector<1x1x32xf32> to vector<1x32xf32>
    %cst_211 = arith.constant dense<0.000000e+00> : vector<16xf32>
    %527 = vector.multi_reduction <add>, %522, %cst_211 [1] : vector<16x32xf32> to vector<16xf32>
    %528 = vector.shape_cast %527 : vector<16xf32> to vector<16x1xf32>
    %cst_212 = arith.constant 3.200000e+01 : f32
    %529 = vector.broadcast %cst_212 : f32 to vector<16x1xf32>
    %530 = arith.divf %528, %529 : vector<16x1xf32>
    %531 = vector.broadcast %530 : vector<16x1xf32> to vector<16x32xf32>
    %532 = arith.subf %522, %531 : vector<16x32xf32>
    %533 = arith.mulf %532, %532 : vector<16x32xf32>
    %cst_213 = arith.constant dense<0.000000e+00> : vector<16xf32>
    %534 = vector.multi_reduction <add>, %533, %cst_213 [1] : vector<16x32xf32> to vector<16xf32>
    %535 = vector.shape_cast %534 : vector<16xf32> to vector<16x1xf32>
    %cst_214 = arith.constant 3.200000e+01 : f32
    %536 = vector.broadcast %cst_214 : f32 to vector<16x1xf32>
    %537 = arith.divf %535, %536 : vector<16x1xf32>
    %538 = vector.broadcast %530 : vector<16x1xf32> to vector<16x32xf32>
    %539 = arith.subf %522, %538 : vector<16x32xf32>
    %cst_215 = arith.constant 9.99999996E-13 : f32
    %540 = vector.broadcast %cst_215 : f32 to vector<16x1xf32>
    %541 = arith.addf %537, %540 : vector<16x1xf32>
    %542 = math.rsqrt %541 : vector<16x1xf32>
    %543 = vector.broadcast %542 : vector<16x1xf32> to vector<16x32xf32>
    %544 = arith.mulf %539, %543 : vector<16x32xf32>
    %545 = vector.broadcast %524 : vector<1x32xf32> to vector<16x32xf32>
    %546 = arith.mulf %544, %545 : vector<16x32xf32>
    %547 = vector.broadcast %526 : vector<1x32xf32> to vector<16x32xf32>
    %548 = arith.addf %546, %547 : vector<16x32xf32>
    %c0_216 = arith.constant 0 : index
    %c0_217 = arith.constant 0 : index
    %549 = vector.load %arg3[%c0_216, %c0_217] : memref<40x128xf32, #tpu.memory_space<vmem>>, vector<32x128xf32>
    %cst_218 = arith.constant dense<0.000000e+00> : vector<16x128xf32>
    %550 = tpu.matmul %548, %549, %cst_218 {dimension_numbers = #tpu.dot_dimension_numbers<[1], [0], [0], [1], [0, 0, 1, 1], [], []>} : vector<16x32xf32>, vector<32x128xf32>, vector<16x128xf32> -> vector<16x128xf32>
    %c34 = arith.constant 34 : index
    %c0_219 = arith.constant 0 : index
    %551 = vector.load %arg3[%c34, %c0_219] : memref<40x128xf32, #tpu.memory_space<vmem>>, vector<1x128xf32>
    %552 = vector.broadcast %551 : vector<1x128xf32> to vector<16x128xf32>
    %553 = arith.addf %550, %552 : vector<16x128xf32>
    %cst_220 = arith.constant 0.000000e+00 : f32
    %554 = vector.broadcast %cst_220 : f32 to vector<16x128xf32>
    %555 = arith.subf %554, %553 : vector<16x128xf32>
    %556 = math.exp %555 : vector<16x128xf32>
    %cst_221 = arith.constant 1.000000e+00 : f32
    %557 = vector.broadcast %cst_221 : f32 to vector<16x128xf32>
    %558 = arith.addf %557, %556 : vector<16x128xf32>
    %cst_222 = arith.constant 1.000000e+00 : f32
    %559 = vector.broadcast %cst_222 : f32 to vector<16x128xf32>
    %560 = arith.divf %559, %558 : vector<16x128xf32>
    %c0_223 = arith.constant 0 : index
    %c0_224 = arith.constant 0 : index
    %561 = vector.load %arg6[%c0_223, %c0_224] : memref<16x128xf32, #tpu.memory_space<vmem>>, vector<16x128xf32>
    tpu.vector_store %arg6[%c0_223, %c0_224], %560 {strides = array<i32>} : memref<16x128xf32, #tpu.memory_space<vmem>>, vector<16x128xf32>,
    return
  }
}

</mosaic_0001>

<llo_original>
// kernel: bert_sentiment_forward.1
$region0: #{bert_sentiment_forward.1}
  #allocation0 [shape = 'u32[]', space=smem, size = 0x4, offset = 0x4, fixed_abs, tag = 'smem constant byte address 0x4 - core index']
  #allocation1 [shape = 'u32[144,128]{1,0:T(1,128)}', space=vmem, size = 0x12000, scoped, tag = 'internal scratch']
  %s0 = inlined_call_operand.vmem [shape: s32[2,8], index: 0, kind: input, shape index: {}]
  %s1 = inlined_call_operand.vmem [shape: f32[16,32], index: 1, kind: input, shape index: {}]
  %s2 = inlined_call_operand.vmem [shape: f32[64,32], index: 2, kind: input, shape index: {}]
  %s3 = inlined_call_operand.vmem [shape: f32[40,128], index: 3, kind: input, shape index: {}]
  %s4 = inlined_call_operand.hbm [shape: f32[3,64,128], index: 4, kind: input, shape index: {}]
  %s5 = inlined_call_operand.vmem [shape: f32[3,8,128], index: 5, kind: input, shape index: {}]
  %s6 = inlined_call_operand.vmem [shape: f32[16,128], index: 6, kind: output, shape index: {}]
  %s7 = sld [smem:[#allocation0]]
  $region38: #{bert_sentiment_forward.1} parent=0
    _
  %s9 = ssub.s32 1, %s7
  %s10 = scalar_select 0, %s9, %s7
  $region1: #{bert_sentiment_forward.1} parent=0
    #allocation2 [shape = 'u8[98304]{0}', space=vmem, size = 0x18000, scoped, tag = 'input window, operand 4, single buffered']
    #allocation3 [shape = 's32[1]{0}', space=sflag, size = 0x4, scoped, tag = 'scoped memory for bert_sentiment_forward.1']
    %11 = vsyncpa [#allocation3], 0
    // Predicated region
    $region2: #{bert_sentiment_forward.1} parent=1 // pred_check
      _
    $region3: #{bert_sentiment_forward.1} parent=1 // pred_check_branch
      %13 = sbr.rel (0) target = $region5
    $region4: #{bert_sentiment_forward.1} parent=1 // pred_region
      _
    $region5: #{bert_sentiment_forward.1} parent=1 // pred_fallthru
      _
    // Predicated region
    $region6: #{bert_sentiment_forward.1} parent=1 // pred_check
      _
    $region7: #{bert_sentiment_forward.1} parent=1 // pred_check_branch
      %15 = sbr.rel (0) target = $region9
    $region8: #{bert_sentiment_forward.1} parent=1 // pred_region
      _
    $region9: #{bert_sentiment_forward.1} parent=1 // pred_fallthru
      _
    // Predicated region
    $region10: #{bert_sentiment_forward.1} parent=1 // pred_check
      _
    $region11: #{bert_sentiment_forward.1} parent=1 // pred_check_branch
      %17 = sbr.rel (0) target = $region13
    $region12: #{bert_sentiment_forward.1} parent=1 // pred_region
      _
    $region13: #{bert_sentiment_forward.1} parent=1 // pred_fallthru
      _
    // Predicated region
    $region14: #{bert_sentiment_forward.1} parent=1 // pred_check
      _
    $region15: #{bert_sentiment_forward.1} parent=1 // pred_check_branch
      %19 = sbr.rel (0) target = $region17
    $region16: #{bert_sentiment_forward.1} parent=1 // pred_region
      _
    $region17: #{bert_sentiment_forward.1} parent=1 // pred_fallthru
      _
    // Predicated region
    $region18: #{bert_sentiment_forward.1} parent=1 // pred_check
      _
    $region19: #{bert_sentiment_forward.1} parent=1 // pred_check_branch
      %21 = sbr.rel (0) target = $region21
    $region20: #{bert_sentiment_forward.1} parent=1 // pred_region
      %s23 = ssub.s32 3072, 3072
      %24 = vsyncadd [#allocation3], %s23
      %s25 = sshll.u32 [#allocation2], 4
      %s26 = int_to_ptr.vmem [resolvable:$true] %s25
      %31 = dma.hbm_to_vmem [thread:$0]  %s4, 3072, %s26, [#allocation3], 128, 128, 8
    $region21: #{bert_sentiment_forward.1} parent=1 // pred_fallthru
      _
    // Predicated region
    $region22: #{bert_sentiment_forward.1} parent=1 // pred_check
      _
    $region23: #{bert_sentiment_forward.1} parent=1 // pred_check_branch
      %33 = sbr.rel (0) target = $region25
    $region24: #{bert_sentiment_forward.1} parent=1 // pred_region
      _
    $region25: #{bert_sentiment_forward.1} parent=1 // pred_fallthru
      _
    // Predicated region
    $region26: #{bert_sentiment_forward.1} parent=1 // pred_check
      _
    $region27: #{bert_sentiment_forward.1} parent=1 // pred_check_branch
      %35 = sbr.rel (0) target = $region29
    $region28: #{bert_sentiment_forward.1} parent=1 // pred_region
      %36 = dma.done [#allocation3], 3072
    $region29: #{bert_sentiment_forward.1} parent=1 // pred_fallthru
      _
    %v37 = vld [vmem:[%s0] sm:$0x3]
    %v38 = vlaneseq
    %v39 = vand.u32 %v38, 127
    %v40 = vlaneseq
    %v41 = vshrl.u32 %v40, 7
    %v42 = vsub.s32 0, %v41
    %v43 = vrot.slane %v37, %v42
    %45 = vbcast.lane.b32.xlu0 %v43, 256
    %v46 = vpop.permute.xlu0 %45
    %v47 = vlaneseq
    %v48 = vshrl.u32 %v47, 7
    %v49 = vsub.s32 1, %v48
    %v50 = vrot.slane %v37, %v49
    %52 = vbcast.lane.b32.xlu0 %v50, 256
    %v53 = vpop.permute.xlu0 %52
    %vm54 = vcmp.eq.s32.totalorder %v39, %v46
    %vm55 = vcmp.eq.s32.totalorder %v39, %v53
    %v56 = vsel %vm54, 1, 0
    %v57 = vsel %vm55, 1, 0
    %v58 = vcvt.s32.f32 %v56
    %v59 = vcvt.s32.f32 %v57
    %v60 = vld [vmem:[%s2] sm:$0xff]
    %v61 = vld [vmem:[%s2 + $0x8] sm:$0xff]
    %v62 = vld [vmem:[%s2 + $0x10] sm:$0xff]
    %v63 = vld [vmem:[%s2 + $0x18] sm:$0xff]
    %v64 = vld [vmem:[%s2 + $0x20] sm:$0xff]
    %v65 = vld [vmem:[%s2 + $0x28] sm:$0xff]
    %v66 = vld [vmem:[%s2 + $0x30] sm:$0xff]
    %v67 = vld [vmem:[%s2 + $0x38] sm:$0xff]
    %v68 = vld [vmem:[%s1] sm:$0xff]
    %v69 = vld [vmem:[%s1 + $0x8] sm:$0xff]
    %vm70 = vcmask 523264
    %v72 = vsel %vm70, %v58, 0
    %v75 = vsel %vm70, %v59, 0
    %77 = vmatprep.subr.mxu0 0.0
    %78 = vmatpush1.msra.mxu0 %v60
    %79 = vmatprep.subr.mxu0 0.0
    %80 = vmatpush1.msra.mxu0 %v61
    %81 = vmatprep.subr.mxu0 0.0
    %82 = vmatpush1.msra.mxu0 %v62
    %83 = vmatprep.subr.mxu0 0.0
    %84 = vmatpush1.msra.mxu0 %v63
    %85 = vmatprep.subr.mxu0 0.0
    %86 = vmatpush1.msra.mxu0 %v64
    %87 = vmatprep.subr.mxu0 0.0
    %88 = vmatpush1.msra.mxu0 %v65
    %89 = vmatprep.subr.mxu0 0.0
    %90 = vmatpush1.msra.mxu0 %v66
    %91 = vmatprep.subr.mxu0 0.0
    %92 = vmatpush1.msra.mxu0 %v67
    %93 = vmatprep.subr.mxu0 0.0
    %94 = vmatpush1.msra.mxu0 0.0
    %95 = vmatprep.subr.mxu0 0.0
    %96 = vmatpush1.msra.mxu0 0.0
    %97 = vmatprep.subr.mxu0 0.0
    %98 = vmatpush1.msra.mxu0 0.0
    %99 = vmatprep.subr.mxu0 0.0
    %100 = vmatpush1.msra.mxu0 0.0
    %101 = vmatprep.subr.mxu0 0.0
    %102 = vmatpush1.msra.mxu0 0.0
    %103 = vmatprep.subr.mxu0 0.0
    %104 = vmatpush1.msra.mxu0 0.0
    %105 = vmatprep.subr.mxu0 0.0
    %106 = vmatpush1.msra.mxu0 0.0
    %107 = vmatprep.subr.mxu0 0.0
    %108 = vmatpush1.msra.mxu0 0.0
    %109 = vmatprep.subr.mxu0 0.0
    %110 = vmatpush1.msra.mxu0 0.0
    %111 = vmatprep.subr.mxu0 0.0
    %112 = vmatpush1.msra.mxu0 0.0
    %113 = vmatprep.subr.mxu0 0.0
    %114 = vmatpush1.msra.mxu0 0.0
    %115 = vmatprep.subr.mxu0 0.0
    %116 = vmatpush1.msra.mxu0 0.0
    %117 = vmatprep.subr.mxu0 0.0
    %118 = vmatpush1.msra.mxu0 0.0
    %119 = vmatprep.subr.mxu0 0.0
    %120 = vmatpush1.msra.mxu0 0.0
    %121 = vmatprep.subr.mxu0 0.0
    %122 = vmatpush1.msra.mxu0 0.0
    %123 = vmatprep.subr.mxu0 0.0
    %124 = vmatpush1.msra.mxu0 0.0
    %125 = vmatprep.subr.mxu0 0.0
    %126 = vmatpush1.msra.mxu0 0.0
    %127 = vmatprep.subr.mxu0 0.0
    %128 = vmatpush1.msra.mxu0 0.0
    %129 = vmatprep.subr.mxu0 0.0
    %130 = vmatpush1.msra.mxu0 0.0
    %131 = vmatprep.subr.mxu0 0.0
    %132 = vmatpush1.msra.mxu0 0.0
    %133 = vmatprep.subr.mxu0 0.0
    %134 = vmatpush1.msra.mxu0 0.0
    %135 = vmatprep.subr.mxu0 0.0
    %136 = vmatpush1.msra.mxu0 0.0
    %137 = vmatprep.subr.mxu0 0.0
    %138 = vmatpush1.msra.mxu0 0.0
    %139 = vmatprep.subr.mxu0 0.0
    %140 = vmatpush1.msra.mxu0 0.0
    %141 = vmatprep.mubr.f32.mxu0 0.0
    %142 = vmatmul.mubr.f32.gmra.mrb[0].mxu0 %v72
    %v143 = vpop.f32.mrb[0].mxu0
    %v144 = vadd.f32 %v68, %v143
    %v145 = vpop.f32.mrb[0].mxu0
    %146 = vmatprep.mubr.f32.mxu0 0.0
    %147 = vmatmul.mubr.f32.gmra.mrb[0].mxu0 %v75
    %v148 = vpop.f32.mrb[0].mxu0
    %v149 = vadd.f32 %v69, %v148
    %v150 = vpop.f32.mrb[0].mxu0
    %151 = vdwg.mxu0
    %v152 = vld [vmem:[%s3 + $0x20] sm:$0x1]
    %v153 = vld [vmem:[%s3 + $0x21] sm:$0x1]
    %vm154 = vcmask 261120
    %v155 = vsel %vm154, %v144, 0.0
    %156 = vadd.xlane.f32.xlu0 %v155
    %v157 = vpop.xlane.xlu0 %156
    %v158 = vsel %vm154, %v149, 0.0
    %159 = vadd.xlane.f32.xlu0 %v158
    %v160 = vpop.xlane.xlu0 %159
    %v161 = vrcp.pop 32.0
    %v162 = vmul.f32 %v157, %v161
    %v163 = vmul.f32 %v160, %v161
    %v164 = vsub.f32 %v144, %v162
    %v165 = vsub.f32 %v149, %v163
    %v166 = vmul.f32 %v164, %v164
    %v167 = vmul.f32 %v165, %v165
    %v168 = vsel %vm154, %v166, 0.0
    %169 = vadd.xlane.f32.xlu0 %v168
    %v170 = vpop.xlane.xlu0 %169
    %v171 = vsel %vm154, %v167, 0.0
    %172 = vadd.xlane.f32.xlu0 %v171
    %v173 = vpop.xlane.xlu0 %172
    %v174 = vmul.f32 %v170, %v161
    %v175 = vmul.f32 %v173, %v161
    %v176 = vadd.f32 %v174, 1e-12
    %v177 = vadd.f32 %v175, 1e-12
    %v178 = vrsqrt.pop %v176
    %v179 = vrsqrt.pop %v177
    %v180 = vmul.f32 %v164, %v178
    %v181 = vmul.f32 %v165, %v179
    %v182 = vlaneseq
    %v183 = vshrl.u32 %v182, 7
    %v184 = vsub.s32 0, %v183
    %v185 = vrot.slane %v152, %v184
    %v186 = vmul.f32 %v180, %v185
    %v187 = vmul.f32 %v181, %v185
    %v188 = vlaneseq
    %v189 = vshrl.u32 %v188, 7
    %v190 = vsub.s32 0, %v189
    %v191 = vrot.slane %v153, %v190
    %v192 = vadd.f32 %v186, %v191
    %v193 = vadd.f32 %v187, %v191
    %vm194 = vcmp.gt.s32.totalorder %v37, 0
    %v195 = vsel %vm194, 0.0, -10000.0
    %v198 = vunpack.c.l.s4 1966171168
    %v199 = vunpack.c.0.s8 %v198
    %v200 = vlaneseq
    %v201 = vshrl.u32 %v200, 7
    %v202 = vsub.s32 %v199, %v201
    %v203 = vrot.slane %v195, %v202
    %v204 = vcombine.high %v203, %v203
    %v206 = vunpack.c.l.s4 1966171168
    %v207 = vunpack.c.0.s8 %v206
    %v208 = vlaneseq
    %v209 = vshrl.u32 %v208, 7
    %v210 = vsub.s32 %v207, %v209
    %v211 = vrot.slane %v203, %v210
    %v213 = vunpack.c.l.s4 1966171168
    %v214 = vunpack.c.0.s8 %v213
    %v215 = vlaneseq
    %v216 = vshrl.u32 %v215, 7
    %v217 = vsub.s32 %v214, %v216
    %v218 = vrot.slane %v204, %v217
    %v219 = vld [vmem:[#allocation2] sm:$0xff]
    %v220 = vld [vmem:[#allocation2 + $0x8] sm:$0xff]
    %v221 = vld [vmem:[#allocation2 + $0x10] sm:$0xff]
    %v222 = vld [vmem:[#allocation2 + $0x18] sm:$0xff]
    %v223 = vld [vmem:[%s5] sm:$0x1]
    %v224 = vlaneseq
    %v225 = vshrl.u32 %v224, 7
    %v226 = vsub.s32 0, %v225
    %v227 = vrot.slane %v223, %v226
    %v229 = vsel %vm154, %v192, 0
    %v232 = vsel %vm154, %v193, 0
    %234 = vmatprep.subr.mxu0 0.0
    %235 = vmatpush1.msra.mxu0 %v219
    %236 = vmatprep.subr.mxu0 0.0
    %237 = vmatpush1.msra.mxu0 %v220
    %238 = vmatprep.subr.mxu0 0.0
    %239 = vmatpush1.msra.mxu0 %v221
    %240 = vmatprep.subr.mxu0 0.0
    %241 = vmatpush1.msra.mxu0 %v222
    %242 = vmatprep.subr.mxu0 0.0
    %243 = vmatpush1.msra.mxu0 0.0
    %244 = vmatprep.subr.mxu0 0.0
    %245 = vmatpush1.msra.mxu0 0.0
    %246 = vmatprep.subr.mxu0 0.0
    %247 = vmatpush1.msra.mxu0 0.0
    %248 = vmatprep.subr.mxu0 0.0
    %249 = vmatpush1.msra.mxu0 0.0
    %250 = vmatprep.subr.mxu0 0.0
    %251 = vmatpush1.msra.mxu0 0.0
    %252 = vmatprep.subr.mxu0 0.0
    %253 = vmatpush1.msra.mxu0 0.0
    %254 = vmatprep.subr.mxu0 0.0
    %255 = vmatpush1.msra.mxu0 0.0
    %256 = vmatprep.subr.mxu0 0.0
    %257 = vmatpush1.msra.mxu0 0.0
    %258 = vmatprep.subr.mxu0 0.0
    %259 = vmatpush1.msra.mxu0 0.0
    %260 = vmatprep.subr.mxu0 0.0
    %261 = vmatpush1.msra.mxu0 0.0
    %262 = vmatprep.subr.mxu0 0.0
    %263 = vmatpush1.msra.mxu0 0.0
    %264 = vmatprep.subr.mxu0 0.0
    %265 = vmatpush1.msra.mxu0 0.0
    %266 = vmatprep.subr.mxu0 0.0
    %267 = vmatpush1.msra.mxu0 0.0
    %268 = vmatprep.subr.mxu0 0.0
    %269 = vmatpush1.msra.mxu0 0.0
    %270 = vmatprep.subr.mxu0 0.0
    %271 = vmatpush1.msra.mxu0 0.0
    %272 = vmatprep.subr.mxu0 0.0
    %273 = vmatpush1.msra.mxu0 0.0
    %274 = vmatprep.subr.mxu0 0.0
    %275 = vmatpush1.msra.mxu0 0.0
    %276 = vmatprep.subr.mxu0 0.0
    %277 = vmatpush1.msra.mxu0 0.0
    %278 = vmatprep.subr.mxu0 0.0
    %279 = vmatpush1.msra.mxu0 0.0
    %280 = vmatprep.subr.mxu0 0.0
    %281 = vmatpush1.msra.mxu0 0.0
    %282 = vmatprep.subr.mxu0 0.0
    %283 = vmatpush1.msra.mxu0 0.0
    %284 = vmatprep.subr.mxu0 0.0
    %285 = vmatpush1.msra.mxu0 0.0
    %286 = vmatprep.subr.mxu0 0.0
    %287 = vmatpush1.msra.mxu0 0.0
    %288 = vmatprep.subr.mxu0 0.0
    %289 = vmatpush1.msra.mxu0 0.0
    %290 = vmatprep.subr.mxu0 0.0
    %291 = vmatpush1.msra.mxu0 0.0
    %292 = vmatprep.subr.mxu0 0.0
    %293 = vmatpush1.msra.mxu0 0.0
    %294 = vmatprep.subr.mxu0 0.0
    %295 = vmatpush1.msra.mxu0 0.0
    %296 = vmatprep.subr.mxu0 0.0
    %297 = vmatpush1.msra.mxu0 0.0
    %298 = vmatprep.mubr.f32.mxu0 0.0
    %299 = vmatmul.mubr.f32.gmra.mrb[0].mxu0 %v229
    %v300 = vpop.f32.mrb[0].mxu0
    %v301 = vadd.f32 %v227, %v300
    %v302 = vpop.f32.mrb[0].mxu0
    %303 = vmatprep.mubr.f32.mxu0 0.0
    %304 = vmatmul.mubr.f32.gmra.mrb[0].mxu0 %v232
    %v305 = vpop.f32.mrb[0].mxu0
    %v306 = vadd.f32 %v227, %v305
    %v307 = vpop.f32.mrb[0].mxu0
    %308 = vdwg.mxu0
    %310 = vrot.lane.b32.xlu0 %v301, 96
    %v311 = vpop.permute.xlu0 %310
    %vm312 = vcmask 64512
    %v313 = vsel %vm312, %v301, 0
    %v315 = vsel %vm312, %v311, 0
    %317 = vmatprep.subr.mxu0 0.0
    %318 = vmatpush1.xpose.msra.mxu0 %v315
    %319 = vmatprep.subr.mxu0 0.0
    %320 = vmatpush1.xpose.msra.mxu0 0.0
    %321 = vmatprep.subr.mxu0 0.0
    %322 = vmatpush1.xpose.msra.mxu0 0.0
    %323 = vmatprep.subr.mxu0 0.0
    %324 = vmatpush1.xpose.msra.mxu0 0.0
    %325 = vmatprep.subr.mxu0 0.0
    %326 = vmatpush1.xpose.msra.mxu0 0.0
    %327 = vmatprep.subr.mxu0 0.0
    %328 = vmatpush1.xpose.msra.mxu0 0.0
    %329 = vmatprep.subr.mxu0 0.0
    %330 = vmatpush1.xpose.msra.mxu0 0.0
    %331 = vmatprep.subr.mxu0 0.0
    %332 = vmatpush1.xpose.msra.mxu0 0.0
    %333 = vmatprep.subr.mxu0 0.0
    %334 = vmatpush1.xpose.msra.mxu0 0.0
    %335 = vmatprep.subr.mxu0 0.0
    %336 = vmatpush1.xpose.msra.mxu0 0.0
    %337 = vmatprep.subr.mxu0 0.0
    %338 = vmatpush1.xpose.msra.mxu0 0.0
    %339 = vmatprep.subr.mxu0 0.0
    %340 = vmatpush1.xpose.msra.mxu0 0.0
    %341 = vmatprep.subr.mxu0 0.0
    %342 = vmatpush1.xpose.msra.mxu0 0.0
    %343 = vmatprep.subr.mxu0 0.0
    %344 = vmatpush1.xpose.msra.mxu0 0.0
    %345 = vmatprep.subr.mxu0 0.0
    %346 = vmatpush1.xpose.msra.mxu0 0.0
    %347 = vmatprep.subr.mxu0 0.0
    %348 = vmatpush1.xpose.msra.mxu0 0.0
    %349 = vmatprep.subr.mxu0 0.0
    %350 = vmatpush1.xpose.msra.mxu0 0.0
    %351 = vmatprep.subr.mxu0 0.0
    %352 = vmatpush1.xpose.msra.mxu0 0.0
    %353 = vmatprep.subr.mxu0 0.0
    %354 = vmatpush1.xpose.msra.mxu0 0.0
    %355 = vmatprep.subr.mxu0 0.0
    %356 = vmatpush1.xpose.msra.mxu0 0.0
    %357 = vmatprep.subr.mxu0 0.0
    %358 = vmatpush1.xpose.msra.mxu0 0.0
    %359 = vmatprep.subr.mxu0 0.0
    %360 = vmatpush1.xpose.msra.mxu0 0.0
    %361 = vmatprep.subr.mxu0 0.0
    %362 = vmatpush1.xpose.msra.mxu0 0.0
    %363 = vmatprep.subr.mxu0 0.0
    %364 = vmatpush1.xpose.msra.mxu0 0.0
    %365 = vmatprep.subr.mxu0 0.0
    %366 = vmatpush1.xpose.msra.mxu0 0.0
    %367 = vmatprep.subr.mxu0 0.0
    %368 = vmatpush1.xpose.msra.mxu0 0.0
    %369 = vmatprep.subr.mxu0 0.0
    %370 = vmatpush1.xpose.msra.mxu0 0.0
    %371 = vmatprep.subr.mxu0 0.0
    %372 = vmatpush1.xpose.msra.mxu0 0.0
    %373 = vmatprep.subr.mxu0 0.0
    %374 = vmatpush1.xpose.msra.mxu0 0.0
    %375 = vmatprep.subr.mxu0 0.0
    %376 = vmatpush1.xpose.msra.mxu0 0.0
    %377 = vmatprep.subr.mxu0 0.0
    %378 = vmatpush1.xpose.msra.mxu0 0.0
    %379 = vmatprep.subr.mxu0 0.0
    %380 = vmatpush1.xpose.msra.mxu0 0.0
    %381 = vmatprep.mubr.f32.mxu0 0.0
    %382 = vmatmul.mubr.f32.gmra.mrb[0].mxu0 %v313
    %v383 = vpop.f32.mrb[0].mxu0
    %v384 = vadd.f32 0.0, %v383
    %v385 = vpop.f32.mrb[0].mxu0
    %386 = vdwg.mxu0
    %388 = vrot.lane.b32.xlu0 %v306, 96
    %v389 = vpop.permute.xlu0 %388
    %v390 = vsel %vm312, %v306, 0
    %v392 = vsel %vm312, %v389, 0
    %394 = vmatprep.subr.mxu0 0.0
    %395 = vmatpush1.xpose.msra.mxu0 %v392
    %396 = vmatprep.subr.mxu0 0.0
    %397 = vmatpush1.xpose.msra.mxu0 0.0
    %398 = vmatprep.subr.mxu0 0.0
    %399 = vmatpush1.xpose.msra.mxu0 0.0
    %400 = vmatprep.subr.mxu0 0.0
    %401 = vmatpush1.xpose.msra.mxu0 0.0
    %402 = vmatprep.subr.mxu0 0.0
    %403 = vmatpush1.xpose.msra.mxu0 0.0
    %404 = vmatprep.subr.mxu0 0.0
    %405 = vmatpush1.xpose.msra.mxu0 0.0
    %406 = vmatprep.subr.mxu0 0.0
    %407 = vmatpush1.xpose.msra.mxu0 0.0
    %408 = vmatprep.subr.mxu0 0.0
    %409 = vmatpush1.xpose.msra.mxu0 0.0
    %410 = vmatprep.subr.mxu0 0.0
    %411 = vmatpush1.xpose.msra.mxu0 0.0
    %412 = vmatprep.subr.mxu0 0.0
    %413 = vmatpush1.xpose.msra.mxu0 0.0
    %414 = vmatprep.subr.mxu0 0.0
    %415 = vmatpush1.xpose.msra.mxu0 0.0
    %416 = vmatprep.subr.mxu0 0.0
    %417 = vmatpush1.xpose.msra.mxu0 0.0
    %418 = vmatprep.subr.mxu0 0.0
    %419 = vmatpush1.xpose.msra.mxu0 0.0
    %420 = vmatprep.subr.mxu0 0.0
    %421 = vmatpush1.xpose.msra.mxu0 0.0
    %422 = vmatprep.subr.mxu0 0.0
    %423 = vmatpush1.xpose.msra.mxu0 0.0
    %424 = vmatprep.subr.mxu0 0.0
    %425 = vmatpush1.xpose.msra.mxu0 0.0
    %426 = vmatprep.subr.mxu0 0.0
    %427 = vmatpush1.xpose.msra.mxu0 0.0
    %428 = vmatprep.subr.mxu0 0.0
    %429 = vmatpush1.xpose.msra.mxu0 0.0
    %430 = vmatprep.subr.mxu0 0.0
    %431 = vmatpush1.xpose.msra.mxu0 0.0
    %432 = vmatprep.subr.mxu0 0.0
    %433 = vmatpush1.xpose.msra.mxu0 0.0
    %434 = vmatprep.subr.mxu0 0.0
    %435 = vmatpush1.xpose.msra.mxu0 0.0
    %436 = vmatprep.subr.mxu0 0.0
    %437 = vmatpush1.xpose.msra.mxu0 0.0
    %438 = vmatprep.subr.mxu0 0.0
    %439 = vmatpush1.xpose.msra.mxu0 0.0
    %440 = vmatprep.subr.mxu0 0.0
    %441 = vmatpush1.xpose.msra.mxu0 0.0
    %442 = vmatprep.subr.mxu0 0.0
    %443 = vmatpush1.xpose.msra.mxu0 0.0
    %444 = vmatprep.subr.mxu0 0.0
    %445 = vmatpush1.xpose.msra.mxu0 0.0
    %446 = vmatprep.subr.mxu0 0.0
    %447 = vmatpush1.xpose.msra.mxu0 0.0
    %448 = vmatprep.subr.mxu0 0.0
    %449 = vmatpush1.xpose.msra.mxu0 0.0
    %450 = vmatprep.subr.mxu0 0.0
    %451 = vmatpush1.xpose.msra.mxu0 0.0
    %452 = vmatprep.subr.mxu0 0.0
    %453 = vmatpush1.xpose.msra.mxu0 0.0
    %454 = vmatprep.subr.mxu0 0.0
    %455 = vmatpush1.xpose.msra.mxu0 0.0
    %456 = vmatprep.subr.mxu0 0.0
    %457 = vmatpush1.xpose.msra.mxu0 0.0
    %458 = vmatprep.mubr.f32.mxu0 0.0
    %459 = vmatmul.mubr.f32.gmra.mrb[0].mxu0 %v390
    %v460 = vpop.f32.mrb[0].mxu0
    %v461 = vadd.f32 0.0, %v460
    %v462 = vpop.f32.mrb[0].mxu0
    %463 = vdwg.mxu0
    %v464 = vmul.f32 %v384, 0.35355338
    %v465 = vmul.f32 %v461, 0.35355338
    %v466 = vlaneseq
    %v467 = vshrl.u32 %v466, 7
    %v468 = vsub.s32 0, %v467
    %v469 = vrot.slane %v211, %v468
    %v470 = vlaneseq
    %v471 = vshrl.u32 %v470, 7
    %v472 = vsub.s32 0, %v471
    %v473 = vrot.slane %v218, %v472
    %v476 = vadd.f32 %v464, %v469
    %v477 = vadd.f32 %v465, %v473
    %v478 = vmul.f32 %v476, 1.442695
    %v479 = vpow.pop %v478
    %v480 = vmul.f32 %v477, 1.442695
    %v481 = vpow.pop %v480
    %v482 = vsel %vm312, %v479, 0.0
    %483 = vadd.xlane.f32.xlu0 %v482
    %v484 = vpop.xlane.xlu0 %483
    %v485 = vsel %vm312, %v481, 0.0
    %486 = vadd.xlane.f32.xlu0 %v485
    %v487 = vpop.xlane.xlu0 %486
    %v488 = vrcp.pop %v484
    %v489 = vrcp.pop %v487
    %v490 = vmul.f32 %v479, %v488
    %v491 = vmul.f32 %v481, %v489
    %492 = vrot.lane.b32.xlu0 %v301, 64
    %v493 = vpop.permute.xlu0 %492
    %v496 = vsel %vm312, %v490, 0
    %498 = vmatprep.subr.mxu0 0.0
    %499 = vmatpush1.msra.mxu0 %v493
    %500 = vmatprep.subr.mxu0 0.0
    %501 = vmatpush1.msra.mxu0 0.0
    %502 = vmatprep.subr.mxu0 0.0
    %503 = vmatpush1.msra.mxu0 0.0
    %504 = vmatprep.subr.mxu0 0.0
    %505 = vmatpush1.msra.mxu0 0.0
    %506 = vmatprep.subr.mxu0 0.0
    %507 = vmatpush1.msra.mxu0 0.0
    %508 = vmatprep.subr.mxu0 0.0
    %509 = vmatpush1.msra.mxu0 0.0
    %510 = vmatprep.subr.mxu0 0.0
    %511 = vmatpush1.msra.mxu0 0.0
    %512 = vmatprep.subr.mxu0 0.0
    %513 = vmatpush1.msra.mxu0 0.0
    %514 = vmatprep.subr.mxu0 0.0
    %515 = vmatpush1.msra.mxu0 0.0
    %516 = vmatprep.subr.mxu0 0.0
    %517 = vmatpush1.msra.mxu0 0.0
    %518 = vmatprep.subr.mxu0 0.0
    %519 = vmatpush1.msra.mxu0 0.0
    %520 = vmatprep.subr.mxu0 0.0
    %521 = vmatpush1.msra.mxu0 0.0
    %522 = vmatprep.subr.mxu0 0.0
    %523 = vmatpush1.msra.mxu0 0.0
    %524 = vmatprep.subr.mxu0 0.0
    %525 = vmatpush1.msra.mxu0 0.0
    %526 = vmatprep.subr.mxu0 0.0
    %527 = vmatpush1.msra.mxu0 0.0
    %528 = vmatprep.subr.mxu0 0.0
    %529 = vmatpush1.msra.mxu0 0.0
    %530 = vmatprep.subr.mxu0 0.0
    %531 = vmatpush1.msra.mxu0 0.0
    %532 = vmatprep.subr.mxu0 0.0
    %533 = vmatpush1.msra.mxu0 0.0
    %534 = vmatprep.subr.mxu0 0.0
    %535 = vmatpush1.msra.mxu0 0.0
    %536 = vmatprep.subr.mxu0 0.0
    %537 = vmatpush1.msra.mxu0 0.0
    %538 = vmatprep.subr.mxu0 0.0
    %539 = vmatpush1.msra.mxu0 0.0
    %540 = vmatprep.subr.mxu0 0.0
    %541 = vmatpush1.msra.mxu0 0.0
    %542 = vmatprep.subr.mxu0 0.0
    %543 = vmatpush1.msra.mxu0 0.0
    %544 = vmatprep.subr.mxu0 0.0
    %545 = vmatpush1.msra.mxu0 0.0
    %546 = vmatprep.subr.mxu0 0.0
    %547 = vmatpush1.msra.mxu0 0.0
    %548 = vmatprep.subr.mxu0 0.0
    %549 = vmatpush1.msra.mxu0 0.0
    %550 = vmatprep.subr.mxu0 0.0
    %551 = vmatpush1.msra.mxu0 0.0
    %552 = vmatprep.subr.mxu0 0.0
    %553 = vmatpush1.msra.mxu0 0.0
    %554 = vmatprep.subr.mxu0 0.0
    %555 = vmatpush1.msra.mxu0 0.0
    %556 = vmatprep.subr.mxu0 0.0
    %557 = vmatpush1.msra.mxu0 0.0
    %558 = vmatprep.subr.mxu0 0.0
    %559 = vmatpush1.msra.mxu0 0.0
    %560 = vmatprep.subr.mxu0 0.0
    %561 = vmatpush1.msra.mxu0 0.0
    %562 = vmatprep.mubr.f32.mxu0 0.0
    %563 = vmatmul.mubr.f32.gmra.mrb[0].mxu0 %v496
    %v564 = vpop.f32.mrb[0].mxu0
    %v565 = vadd.f32 0.0, %v564
    %v566 = vpop.f32.mrb[0].mxu0
    %567 = vdwg.mxu0
    %568 = vrot.lane.b32.xlu0 %v306, 64
    %v569 = vpop.permute.xlu0 %568
    %v572 = vsel %vm312, %v491, 0
    %574 = vmatprep.subr.mxu0 0.0
    %575 = vmatpush1.msra.mxu0 %v569
    %576 = vmatprep.subr.mxu0 0.0
    %577 = vmatpush1.msra.mxu0 0.0
    %578 = vmatprep.subr.mxu0 0.0
    %579 = vmatpush1.msra.mxu0 0.0
    %580 = vmatprep.subr.mxu0 0.0
    %581 = vmatpush1.msra.mxu0 0.0
    %582 = vmatprep.subr.mxu0 0.0
    %583 = vmatpush1.msra.mxu0 0.0
    %584 = vmatprep.subr.mxu0 0.0
    %585 = vmatpush1.msra.mxu0 0.0
    %586 = vmatprep.subr.mxu0 0.0
    %587 = vmatpush1.msra.mxu0 0.0
    %588 = vmatprep.subr.mxu0 0.0
    %589 = vmatpush1.msra.mxu0 0.0
    %590 = vmatprep.subr.mxu0 0.0
    %591 = vmatpush1.msra.mxu0 0.0
    %592 = vmatprep.subr.mxu0 0.0
    %593 = vmatpush1.msra.mxu0 0.0
    %594 = vmatprep.subr.mxu0 0.0
    %595 = vmatpush1.msra.mxu0 0.0
    %596 = vmatprep.subr.mxu0 0.0
    %597 = vmatpush1.msra.mxu0 0.0
    %598 = vmatprep.subr.mxu0 0.0
    %599 = vmatpush1.msra.mxu0 0.0
    %600 = vmatprep.subr.mxu0 0.0
    %601 = vmatpush1.msra.mxu0 0.0
    %602 = vmatprep.subr.mxu0 0.0
    %603 = vmatpush1.msra.mxu0 0.0
    %604 = vmatprep.subr.mxu0 0.0
    %605 = vmatpush1.msra.mxu0 0.0
    %606 = vmatprep.subr.mxu0 0.0
    %607 = vmatpush1.msra.mxu0 0.0
    %608 = vmatprep.subr.mxu0 0.0
    %609 = vmatpush1.msra.mxu0 0.0
    %610 = vmatprep.subr.mxu0 0.0
    %611 = vmatpush1.msra.mxu0 0.0
    %612 = vmatprep.subr.mxu0 0.0
    %613 = vmatpush1.msra.mxu0 0.0
    %614 = vmatprep.subr.mxu0 0.0
    %615 = vmatpush1.msra.mxu0 0.0
    %616 = vmatprep.subr.mxu0 0.0
    %617 = vmatpush1.msra.mxu0 0.0
    %618 = vmatprep.subr.mxu0 0.0
    %619 = vmatpush1.msra.mxu0 0.0
    %620 = vmatprep.subr.mxu0 0.0
    %621 = vmatpush1.msra.mxu0 0.0
    %622 = vmatprep.subr.mxu0 0.0
    %623 = vmatpush1.msra.mxu0 0.0
    %624 = vmatprep.subr.mxu0 0.0
    %625 = vmatpush1.msra.mxu0 0.0
    %626 = vmatprep.subr.mxu0 0.0
    %627 = vmatpush1.msra.mxu0 0.0
    %628 = vmatprep.subr.mxu0 0.0
    %629 = vmatpush1.msra.mxu0 0.0
    %630 = vmatprep.subr.mxu0 0.0
    %631 = vmatpush1.msra.mxu0 0.0
    %632 = vmatprep.subr.mxu0 0.0
    %633 = vmatpush1.msra.mxu0 0.0
    %634 = vmatprep.subr.mxu0 0.0
    %635 = vmatpush1.msra.mxu0 0.0
    %636 = vmatprep.subr.mxu0 0.0
    %637 = vmatpush1.msra.mxu0 0.0
    %638 = vmatprep.mubr.f32.mxu0 0.0
    %639 = vmatmul.mubr.f32.gmra.mrb[0].mxu0 %v572
    %v640 = vpop.f32.mrb[0].mxu0
    %v641 = vadd.f32 0.0, %v640
    %v642 = vpop.f32.mrb[0].mxu0
    %643 = vdwg.mxu0
    %644 = vrot.lane.b32.xlu0 %v301, 120
    %v645 = vpop.permute.xlu0 %644
    %646 = vrot.lane.b32.xlu0 %v301, 88
    %v647 = vpop.permute.xlu0 %646
    %v648 = vsel %vm312, %v645, 0
    %v650 = vsel %vm312, %v647, 0
    %652 = vmatprep.subr.mxu0 0.0
    %653 = vmatpush1.xpose.msra.mxu0 %v650
    %654 = vmatprep.subr.mxu0 0.0
    %655 = vmatpush1.xpose.msra.mxu0 0.0
    %656 = vmatprep.subr.mxu0 0.0
    %657 = vmatpush1.xpose.msra.mxu0 0.0
    %658 = vmatprep.subr.mxu0 0.0
    %659 = vmatpush1.xpose.msra.mxu0 0.0
    %660 = vmatprep.subr.mxu0 0.0
    %661 = vmatpush1.xpose.msra.mxu0 0.0
    %662 = vmatprep.subr.mxu0 0.0
    %663 = vmatpush1.xpose.msra.mxu0 0.0
    %664 = vmatprep.subr.mxu0 0.0
    %665 = vmatpush1.xpose.msra.mxu0 0.0
    %666 = vmatprep.subr.mxu0 0.0
    %667 = vmatpush1.xpose.msra.mxu0 0.0
    %668 = vmatprep.subr.mxu0 0.0
    %669 = vmatpush1.xpose.msra.mxu0 0.0
    %670 = vmatprep.subr.mxu0 0.0
    %671 = vmatpush1.xpose.msra.mxu0 0.0
    %672 = vmatprep.subr.mxu0 0.0
    %673 = vmatpush1.xpose.msra.mxu0 0.0
    %674 = vmatprep.subr.mxu0 0.0
    %675 = vmatpush1.xpose.msra.mxu0 0.0
    %676 = vmatprep.subr.mxu0 0.0
    %677 = vmatpush1.xpose.msra.mxu0 0.0
    %678 = vmatprep.subr.mxu0 0.0
    %679 = vmatpush1.xpose.msra.mxu0 0.0
    %680 = vmatprep.subr.mxu0 0.0
    %681 = vmatpush1.xpose.msra.mxu0 0.0
    %682 = vmatprep.subr.mxu0 0.0
    %683 = vmatpush1.xpose.msra.mxu0 0.0
    %684 = vmatprep.subr.mxu0 0.0
    %685 = vmatpush1.xpose.msra.mxu0 0.0
    %686 = vmatprep.subr.mxu0 0.0
    %687 = vmatpush1.xpose.msra.mxu0 0.0
    %688 = vmatprep.subr.mxu0 0.0
    %689 = vmatpush1.xpose.msra.mxu0 0.0
    %690 = vmatprep.subr.mxu0 0.0
    %691 = vmatpush1.xpose.msra.mxu0 0.0
    %692 = vmatprep.subr.mxu0 0.0
    %693 = vmatpush1.xpose.msra.mxu0 0.0
    %694 = vmatprep.subr.mxu0 0.0
    %695 = vmatpush1.xpose.msra.mxu0 0.0
    %696 = vmatprep.subr.mxu0 0.0
    %697 = vmatpush1.xpose.msra.mxu0 0.0
    %698 = vmatprep.subr.mxu0 0.0
    %699 = vmatpush1.xpose.msra.mxu0 0.0
    %700 = vmatprep.subr.mxu0 0.0
    %701 = vmatpush1.xpose.msra.mxu0 0.0
    %702 = vmatprep.subr.mxu0 0.0
    %703 = vmatpush1.xpose.msra.mxu0 0.0
    %704 = vmatprep.subr.mxu0 0.0
    %705 = vmatpush1.xpose.msra.mxu0 0.0
    %706 = vmatprep.subr.mxu0 0.0
    %707 = vmatpush1.xpose.msra.mxu0 0.0
    %708 = vmatprep.subr.mxu0 0.0
    %709 = vmatpush1.xpose.msra.mxu0 0.0
    %710 = vmatprep.subr.mxu0 0.0
    %711 = vmatpush1.xpose.msra.mxu0 0.0
    %712 = vmatprep.subr.mxu0 0.0
    %713 = vmatpush1.xpose.msra.mxu0 0.0
    %714 = vmatprep.subr.mxu0 0.0
    %715 = vmatpush1.xpose.msra.mxu0 0.0
    %716 = vmatprep.mubr.f32.mxu0 0.0
    %717 = vmatmul.mubr.f32.gmra.mrb[0].mxu0 %v648
    %v718 = vpop.f32.mrb[0].mxu0
    %v719 = vadd.f32 0.0, %v718
    %v720 = vpop.f32.mrb[0].mxu0
    %721 = vdwg.mxu0
    %722 = vrot.lane.b32.xlu0 %v306, 120
    %v723 = vpop.permute.xlu0 %722
    %724 = vrot.lane.b32.xlu0 %v306, 88
    %v725 = vpop.permute.xlu0 %724
    %v726 = vsel %vm312, %v723, 0
    %v728 = vsel %vm312, %v725, 0
    %730 = vmatprep.subr.mxu0 0.0
    %731 = vmatpush1.xpose.msra.mxu0 %v728
    %732 = vmatprep.subr.mxu0 0.0
    %733 = vmatpush1.xpose.msra.mxu0 0.0
    %734 = vmatprep.subr.mxu0 0.0
    %735 = vmatpush1.xpose.msra.mxu0 0.0
    %736 = vmatprep.subr.mxu0 0.0
    %737 = vmatpush1.xpose.msra.mxu0 0.0
    %738 = vmatprep.subr.mxu0 0.0
    %739 = vmatpush1.xpose.msra.mxu0 0.0
    %740 = vmatprep.subr.mxu0 0.0
    %741 = vmatpush1.xpose.msra.mxu0 0.0
    %742 = vmatprep.subr.mxu0 0.0
    %743 = vmatpush1.xpose.msra.mxu0 0.0
    %744 = vmatprep.subr.mxu0 0.0
    %745 = vmatpush1.xpose.msra.mxu0 0.0
    %746 = vmatprep.subr.mxu0 0.0
    %747 = vmatpush1.xpose.msra.mxu0 0.0
    %748 = vmatprep.subr.mxu0 0.0
    %749 = vmatpush1.xpose.msra.mxu0 0.0
    %750 = vmatprep.subr.mxu0 0.0
    %751 = vmatpush1.xpose.msra.mxu0 0.0
    %752 = vmatprep.subr.mxu0 0.0
    %753 = vmatpush1.xpose.msra.mxu0 0.0
    %754 = vmatprep.subr.mxu0 0.0
    %755 = vmatpush1.xpose.msra.mxu0 0.0
    %756 = vmatprep.subr.mxu0 0.0
    %757 = vmatpush1.xpose.msra.mxu0 0.0
    %758 = vmatprep.subr.mxu0 0.0
    %759 = vmatpush1.xpose.msra.mxu0 0.0
    %760 = vmatprep.subr.mxu0 0.0
    %761 = vmatpush1.xpose.msra.mxu0 0.0
    %762 = vmatprep.subr.mxu0 0.0
    %763 = vmatpush1.xpose.msra.mxu0 0.0
    %764 = vmatprep.subr.mxu0 0.0
    %765 = vmatpush1.xpose.msra.mxu0 0.0
    %766 = vmatprep.subr.mxu0 0.0
    %767 = vmatpush1.xpose.msra.mxu0 0.0
    %768 = vmatprep.subr.mxu0 0.0
    %769 = vmatpush1.xpose.msra.mxu0 0.0
    %770 = vmatprep.subr.mxu0 0.0
    %771 = vmatpush1.xpose.msra.mxu0 0.0
    %772 = vmatprep.subr.mxu0 0.0
    %773 = vmatpush1.xpose.msra.mxu0 0.0
    %774 = vmatprep.subr.mxu0 0.0
    %775 = vmatpush1.xpose.msra.mxu0 0.0
    %776 = vmatprep.subr.mxu0 0.0
    %777 = vmatpush1.xpose.msra.mxu0 0.0
    %778 = vmatprep.subr.mxu0 0.0
    %779 = vmatpush1.xpose.msra.mxu0 0.0
    %780 = vmatprep.subr.mxu0 0.0
    %781 = vmatpush1.xpose.msra.mxu0 0.0
    %782 = vmatprep.subr.mxu0 0.0
    %783 = vmatpush1.xpose.msra.mxu0 0.0
    %784 = vmatprep.subr.mxu0 0.0
    %785 = vmatpush1.xpose.msra.mxu0 0.0
    %786 = vmatprep.subr.mxu0 0.0
    %787 = vmatpush1.xpose.msra.mxu0 0.0
    %788 = vmatprep.subr.mxu0 0.0
    %789 = vmatpush1.xpose.msra.mxu0 0.0
    %790 = vmatprep.subr.mxu0 0.0
    %791 = vmatpush1.xpose.msra.mxu0 0.0
    %792 = vmatprep.subr.mxu0 0.0
    %793 = vmatpush1.xpose.msra.mxu0 0.0
    %794 = vmatprep.mubr.f32.mxu0 0.0
    %795 = vmatmul.mubr.f32.gmra.mrb[0].mxu0 %v726
    %v796 = vpop.f32.mrb[0].mxu0
    %v797 = vadd.f32 0.0, %v796
    %v798 = vpop.f32.mrb[0].mxu0
    %799 = vdwg.mxu0
    %v800 = vmul.f32 %v719, 0.35355338
    %v801 = vmul.f32 %v797, 0.35355338
    %v802 = vadd.f32 %v800, %v469
    %v803 = vadd.f32 %v801, %v473
    %v804 = vmul.f32 %v802, 1.442695
    %v805 = vpow.pop %v804
    %v806 = vmul.f32 %v803, 1.442695
    %v807 = vpow.pop %v806
    %v808 = vsel %vm312, %v805, 0.0
    %809 = vadd.xlane.f32.xlu0 %v808
    %v810 = vpop.xlane.xlu0 %809
    %v811 = vsel %vm312, %v807, 0.0
    %812 = vadd.xlane.f32.xlu0 %v811
    %v813 = vpop.xlane.xlu0 %812
    %v814 = vrcp.pop %v810
    %v815 = vrcp.pop %v813
    %v816 = vmul.f32 %v805, %v814
    %v817 = vmul.f32 %v807, %v815
    %818 = vrot.lane.b32.xlu0 %v301, 56
    %v819 = vpop.permute.xlu0 %818
    %v822 = vsel %vm312, %v816, 0
    %824 = vmatprep.subr.mxu0 0.0
    %825 = vmatpush1.msra.mxu0 %v819
    %826 = vmatprep.subr.mxu0 0.0
    %827 = vmatpush1.msra.mxu0 0.0
    %828 = vmatprep.subr.mxu0 0.0
    %829 = vmatpush1.msra.mxu0 0.0
    %830 = vmatprep.subr.mxu0 0.0
    %831 = vmatpush1.msra.mxu0 0.0
    %832 = vmatprep.subr.mxu0 0.0
    %833 = vmatpush1.msra.mxu0 0.0
    %834 = vmatprep.subr.mxu0 0.0
    %835 = vmatpush1.msra.mxu0 0.0
    %836 = vmatprep.subr.mxu0 0.0
    %837 = vmatpush1.msra.mxu0 0.0
    %838 = vmatprep.subr.mxu0 0.0
    %839 = vmatpush1.msra.mxu0 0.0
    %840 = vmatprep.subr.mxu0 0.0
    %841 = vmatpush1.msra.mxu0 0.0
    %842 = vmatprep.subr.mxu0 0.0
    %843 = vmatpush1.msra.mxu0 0.0
    %844 = vmatprep.subr.mxu0 0.0
    %845 = vmatpush1.msra.mxu0 0.0
    %846 = vmatprep.subr.mxu0 0.0
    %847 = vmatpush1.msra.mxu0 0.0
    %848 = vmatprep.subr.mxu0 0.0
    %849 = vmatpush1.msra.mxu0 0.0
    %850 = vmatprep.subr.mxu0 0.0
    %851 = vmatpush1.msra.mxu0 0.0
    %852 = vmatprep.subr.mxu0 0.0
    %853 = vmatpush1.msra.mxu0 0.0
    %854 = vmatprep.subr.mxu0 0.0
    %855 = vmatpush1.msra.mxu0 0.0
    %856 = vmatprep.subr.mxu0 0.0
    %857 = vmatpush1.msra.mxu0 0.0
    %858 = vmatprep.subr.mxu0 0.0
    %859 = vmatpush1.msra.mxu0 0.0
    %860 = vmatprep.subr.mxu0 0.0
    %861 = vmatpush1.msra.mxu0 0.0
    %862 = vmatprep.subr.mxu0 0.0
    %863 = vmatpush1.msra.mxu0 0.0
    %864 = vmatprep.subr.mxu0 0.0
    %865 = vmatpush1.msra.mxu0 0.0
    %866 = vmatprep.subr.mxu0 0.0
    %867 = vmatpush1.msra.mxu0 0.0
    %868 = vmatprep.subr.mxu0 0.0
    %869 = vmatpush1.msra.mxu0 0.0
    %870 = vmatprep.subr.mxu0 0.0
    %871 = vmatpush1.msra.mxu0 0.0
    %872 = vmatprep.subr.mxu0 0.0
    %873 = vmatpush1.msra.mxu0 0.0
    %874 = vmatprep.subr.mxu0 0.0
    %875 = vmatpush1.msra.mxu0 0.0
    %876 = vmatprep.subr.mxu0 0.0
    %877 = vmatpush1.msra.mxu0 0.0
    %878 = vmatprep.subr.mxu0 0.0
    %879 = vmatpush1.msra.mxu0 0.0
    %880 = vmatprep.subr.mxu0 0.0
    %881 = vmatpush1.msra.mxu0 0.0
    %882 = vmatprep.subr.mxu0 0.0
    %883 = vmatpush1.msra.mxu0 0.0
    %884 = vmatprep.subr.mxu0 0.0
    %885 = vmatpush1.msra.mxu0 0.0
    %886 = vmatprep.subr.mxu0 0.0
    %887 = vmatpush1.msra.mxu0 0.0
    %888 = vmatprep.mubr.f32.mxu0 0.0
    %889 = vmatmul.mubr.f32.gmra.mrb[0].mxu0 %v822
    %v890 = vpop.f32.mrb[0].mxu0
    %v891 = vadd.f32 0.0, %v890
    %v892 = vpop.f32.mrb[0].mxu0
    %893 = vdwg.mxu0
    %894 = vrot.lane.b32.xlu0 %v306, 56
    %v895 = vpop.permute.xlu0 %894
    %v898 = vsel %vm312, %v817, 0
    %900 = vmatprep.subr.mxu0 0.0
    %901 = vmatpush1.msra.mxu0 %v895
    %902 = vmatprep.subr.mxu0 0.0
    %903 = vmatpush1.msra.mxu0 0.0
    %904 = vmatprep.subr.mxu0 0.0
    %905 = vmatpush1.msra.mxu0 0.0
    %906 = vmatprep.subr.mxu0 0.0
    %907 = vmatpush1.msra.mxu0 0.0
    %908 = vmatprep.subr.mxu0 0.0
    %909 = vmatpush1.msra.mxu0 0.0
    %910 = vmatprep.subr.mxu0 0.0
    %911 = vmatpush1.msra.mxu0 0.0
    %912 = vmatprep.subr.mxu0 0.0
    %913 = vmatpush1.msra.mxu0 0.0
    %914 = vmatprep.subr.mxu0 0.0
    %915 = vmatpush1.msra.mxu0 0.0
    %916 = vmatprep.subr.mxu0 0.0
    %917 = vmatpush1.msra.mxu0 0.0
    %918 = vmatprep.subr.mxu0 0.0
    %919 = vmatpush1.msra.mxu0 0.0
    %920 = vmatprep.subr.mxu0 0.0
    %921 = vmatpush1.msra.mxu0 0.0
    %922 = vmatprep.subr.mxu0 0.0
    %923 = vmatpush1.msra.mxu0 0.0
    %924 = vmatprep.subr.mxu0 0.0
    %925 = vmatpush1.msra.mxu0 0.0
    %926 = vmatprep.subr.mxu0 0.0
    %927 = vmatpush1.msra.mxu0 0.0
    %928 = vmatprep.subr.mxu0 0.0
    %929 = vmatpush1.msra.mxu0 0.0
    %930 = vmatprep.subr.mxu0 0.0
    %931 = vmatpush1.msra.mxu0 0.0
    %932 = vmatprep.subr.mxu0 0.0
    %933 = vmatpush1.msra.mxu0 0.0
    %934 = vmatprep.subr.mxu0 0.0
    %935 = vmatpush1.msra.mxu0 0.0
    %936 = vmatprep.subr.mxu0 0.0
    %937 = vmatpush1.msra.mxu0 0.0
    %938 = vmatprep.subr.mxu0 0.0
    %939 = vmatpush1.msra.mxu0 0.0
    %940 = vmatprep.subr.mxu0 0.0
    %941 = vmatpush1.msra.mxu0 0.0
    %942 = vmatprep.subr.mxu0 0.0
    %943 = vmatpush1.msra.mxu0 0.0
    %944 = vmatprep.subr.mxu0 0.0
    %945 = vmatpush1.msra.mxu0 0.0
    %946 = vmatprep.subr.mxu0 0.0
    %947 = vmatpush1.msra.mxu0 0.0
    %948 = vmatprep.subr.mxu0 0.0
    %949 = vmatpush1.msra.mxu0 0.0
    %950 = vmatprep.subr.mxu0 0.0
    %951 = vmatpush1.msra.mxu0 0.0
    %952 = vmatprep.subr.mxu0 0.0
    %953 = vmatpush1.msra.mxu0 0.0
    %954 = vmatprep.subr.mxu0 0.0
    %955 = vmatpush1.msra.mxu0 0.0
    %956 = vmatprep.subr.mxu0 0.0
    %957 = vmatpush1.msra.mxu0 0.0
    %958 = vmatprep.subr.mxu0 0.0
    %959 = vmatpush1.msra.mxu0 0.0
    %960 = vmatprep.subr.mxu0 0.0
    %961 = vmatpush1.msra.mxu0 0.0
    %962 = vmatprep.subr.mxu0 0.0
    %963 = vmatpush1.msra.mxu0 0.0
    %964 = vmatprep.mubr.f32.mxu0 0.0
    %965 = vmatmul.mubr.f32.gmra.mrb[0].mxu0 %v898
    %v966 = vpop.f32.mrb[0].mxu0
    %v967 = vadd.f32 0.0, %v966
    %v968 = vpop.f32.mrb[0].mxu0
    %969 = vdwg.mxu0
    %970 = vrot.lane.b32.xlu0 %v301, 112
    %v971 = vpop.permute.xlu0 %970
    %972 = vrot.lane.b32.xlu0 %v301, 80
    %v973 = vpop.permute.xlu0 %972
    %v974 = vsel %vm312, %v971, 0
    %v976 = vsel %vm312, %v973, 0
    %978 = vmatprep.subr.mxu0 0.0
    %979 = vmatpush1.xpose.msra.mxu0 %v976
    %980 = vmatprep.subr.mxu0 0.0
    %981 = vmatpush1.xpose.msra.mxu0 0.0
    %982 = vmatprep.subr.mxu0 0.0
    %983 = vmatpush1.xpose.msra.mxu0 0.0
    %984 = vmatprep.subr.mxu0 0.0
    %985 = vmatpush1.xpose.msra.mxu0 0.0
    %986 = vmatprep.subr.mxu0 0.0
    %987 = vmatpush1.xpose.msra.mxu0 0.0
    %988 = vmatprep.subr.mxu0 0.0
    %989 = vmatpush1.xpose.msra.mxu0 0.0
    %990 = vmatprep.subr.mxu0 0.0
    %991 = vmatpush1.xpose.msra.mxu0 0.0
    %992 = vmatprep.subr.mxu0 0.0
    %993 = vmatpush1.xpose.msra.mxu0 0.0
    %994 = vmatprep.subr.mxu0 0.0
    %995 = vmatpush1.xpose.msra.mxu0 0.0
    %996 = vmatprep.subr.mxu0 0.0
    %997 = vmatpush1.xpose.msra.mxu0 0.0
    %998 = vmatprep.subr.mxu0 0.0
    %999 = vmatpush1.xpose.msra.mxu0 0.0
    %1000 = vmatprep.subr.mxu0 0.0
    %1001 = vmatpush1.xpose.msra.mxu0 0.0
    %1002 = vmatprep.subr.mxu0 0.0
    %1003 = vmatpush1.xpose.msra.mxu0 0.0
    %1004 = vmatprep.subr.mxu0 0.0
    %1005 = vmatpush1.xpose.msra.mxu0 0.0
    %1006 = vmatprep.subr.mxu0 0.0
    %1007 = vmatpush1.xpose.msra.mxu0 0.0
    %1008 = vmatprep.subr.mxu0 0.0
    %1009 = vmatpush1.xpose.msra.mxu0 0.0
    %1010 = vmatprep.subr.mxu0 0.0
    %1011 = vmatpush1.xpose.msra.mxu0 0.0
    %1012 = vmatprep.subr.mxu0 0.0
    %1013 = vmatpush1.xpose.msra.mxu0 0.0
    %1014 = vmatprep.subr.mxu0 0.0
    %1015 = vmatpush1.xpose.msra.mxu0 0.0
    %1016 = vmatprep.subr.mxu0 0.0
    %1017 = vmatpush1.xpose.msra.mxu0 0.0
    %1018 = vmatprep.subr.mxu0 0.0
    %1019 = vmatpush1.xpose.msra.mxu0 0.0
    %1020 = vmatprep.subr.mxu0 0.0
    %1021 = vmatpush1.xpose.msra.mxu0 0.0
    %1022 = vmatprep.subr.mxu0 0.0
    %1023 = vmatpush1.xpose.msra.mxu0 0.0
    %1024 = vmatprep.subr.mxu0 0.0
    %1025 = vmatpush1.xpose.msra.mxu0 0.0
    %1026 = vmatprep.subr.mxu0 0.0
    %1027 = vmatpush1.xpose.msra.mxu0 0.0
    %1028 = vmatprep.subr.mxu0 0.0
    %1029 = vmatpush1.xpose.msra.mxu0 0.0
    %1030 = vmatprep.subr.mxu0 0.0
    %1031 = vmatpush1.xpose.msra.mxu0 0.0
    %1032 = vmatprep.subr.mxu0 0.0
    %1033 = vmatpush1.xpose.msra.mxu0 0.0
    %1034 = vmatprep.subr.mxu0 0.0
    %1035 = vmatpush1.xpose.msra.mxu0 0.0
    %1036 = vmatprep.subr.mxu0 0.0
    %1037 = vmatpush1.xpose.msra.mxu0 0.0
    %1038 = vmatprep.subr.mxu0 0.0
    %1039 = vmatpush1.xpose.msra.mxu0 0.0
    %1040 = vmatprep.subr.mxu0 0.0
    %1041 = vmatpush1.xpose.msra.mxu0 0.0
    %1042 = vmatprep.mubr.f32.mxu0 0.0
    %1043 = vmatmul.mubr.f32.gmra.mrb[0].mxu0 %v974
    %v1044 = vpop.f32.mrb[0].mxu0
    %v1045 = vadd.f32 0.0, %v1044
    %v1046 = vpop.f32.mrb[0].mxu0
    %1047 = vdwg.mxu0
    %1048 = vrot.lane.b32.xlu0 %v306, 112
    %v1049 = vpop.permute.xlu0 %1048
    %1050 = vrot.lane.b32.xlu0 %v306, 80
    %v1051 = vpop.permute.xlu0 %1050
    %v1052 = vsel %vm312, %v1049, 0
    %v1054 = vsel %vm312, %v1051, 0
    %1056 = vmatprep.subr.mxu0 0.0
    %1057 = vmatpush1.xpose.msra.mxu0 %v1054
    %1058 = vmatprep.subr.mxu0 0.0
    %1059 = vmatpush1.xpose.msra.mxu0 0.0
    %1060 = vmatprep.subr.mxu0 0.0
    %1061 = vmatpush1.xpose.msra.mxu0 0.0
    %1062 = vmatprep.subr.mxu0 0.0
    %1063 = vmatpush1.xpose.msra.mxu0 0.0
    %1064 = vmatprep.subr.mxu0 0.0
    %1065 = vmatpush1.xpose.msra.mxu0 0.0
    %1066 = vmatprep.subr.mxu0 0.0
    %1067 = vmatpush1.xpose.msra.mxu0 0.0
    %1068 = vmatprep.subr.mxu0 0.0
    %1069 = vmatpush1.xpose.msra.mxu0 0.0
    %1070 = vmatprep.subr.mxu0 0.0
    %1071 = vmatpush1.xpose.msra.mxu0 0.0
    %1072 = vmatprep.subr.mxu0 0.0
    %1073 = vmatpush1.xpose.msra.mxu0 0.0
    %1074 = vmatprep.subr.mxu0 0.0
    %1075 = vmatpush1.xpose.msra.mxu0 0.0
    %1076 = vmatprep.subr.mxu0 0.0
    %1077 = vmatpush1.xpose.msra.mxu0 0.0
    %1078 = vmatprep.subr.mxu0 0.0
    %1079 = vmatpush1.xpose.msra.mxu0 0.0
    %1080 = vmatprep.subr.mxu0 0.0
    %1081 = vmatpush1.xpose.msra.mxu0 0.0
    %1082 = vmatprep.subr.mxu0 0.0
    %1083 = vmatpush1.xpose.msra.mxu0 0.0
    %1084 = vmatprep.subr.mxu0 0.0
    %1085 = vmatpush1.xpose.msra.mxu0 0.0
    %1086 = vmatprep.subr.mxu0 0.0
    %1087 = vmatpush1.xpose.msra.mxu0 0.0
    %1088 = vmatprep.subr.mxu0 0.0
    %1089 = vmatpush1.xpose.msra.mxu0 0.0
    %1090 = vmatprep.subr.mxu0 0.0
    %1091 = vmatpush1.xpose.msra.mxu0 0.0
    %1092 = vmatprep.subr.mxu0 0.0
    %1093 = vmatpush1.xpose.msra.mxu0 0.0
    %1094 = vmatprep.subr.mxu0 0.0
    %1095 = vmatpush1.xpose.msra.mxu0 0.0
    %1096 = vmatprep.subr.mxu0 0.0
    %1097 = vmatpush1.xpose.msra.mxu0 0.0
    %1098 = vmatprep.subr.mxu0 0.0
    %1099 = vmatpush1.xpose.msra.mxu0 0.0
    %1100 = vmatprep.subr.mxu0 0.0
    %1101 = vmatpush1.xpose.msra.mxu0 0.0
    %1102 = vmatprep.subr.mxu0 0.0
    %1103 = vmatpush1.xpose.msra.mxu0 0.0
    %1104 = vmatprep.subr.mxu0 0.0
    %1105 = vmatpush1.xpose.msra.mxu0 0.0
    %1106 = vmatprep.subr.mxu0 0.0
    %1107 = vmatpush1.xpose.msra.mxu0 0.0
    %1108 = vmatprep.subr.mxu0 0.0
    %1109 = vmatpush1.xpose.msra.mxu0 0.0
    %1110 = vmatprep.subr.mxu0 0.0
    %1111 = vmatpush1.xpose.msra.mxu0 0.0
    %1112 = vmatprep.subr.mxu0 0.0
    %1113 = vmatpush1.xpose.msra.mxu0 0.0
    %1114 = vmatprep.subr.mxu0 0.0
    %1115 = vmatpush1.xpose.msra.mxu0 0.0
    %1116 = vmatprep.subr.mxu0 0.0
    %1117 = vmatpush1.xpose.msra.mxu0 0.0
    %1118 = vmatprep.subr.mxu0 0.0
    %1119 = vmatpush1.xpose.msra.mxu0 0.0
    %1120 = vmatprep.mubr.f32.mxu0 0.0
    %1121 = vmatmul.mubr.f32.gmra.mrb[0].mxu0 %v1052
    %v1122 = vpop.f32.mrb[0].mxu0
    %v1123 = vadd.f32 0.0, %v1122
    %v1124 = vpop.f32.mrb[0].mxu0
    %1125 = vdwg.mxu0
    %v1126 = vmul.f32 %v1045, 0.35355338
    %v1127 = vmul.f32 %v1123, 0.35355338
    %v1128 = vadd.f32 %v1126, %v469
    %v1129 = vadd.f32 %v1127, %v473
    %v1130 = vmul.f32 %v1128, 1.442695
    %v1131 = vpow.pop %v1130
    %v1132 = vmul.f32 %v1129, 1.442695
    %v1133 = vpow.pop %v1132
    %v1134 = vsel %vm312, %v1131, 0.0
    %1135 = vadd.xlane.f32.xlu0 %v1134
    %v1136 = vpop.xlane.xlu0 %1135
    %v1137 = vsel %vm312, %v1133, 0.0
    %1138 = vadd.xlane.f32.xlu0 %v1137
    %v1139 = vpop.xlane.xlu0 %1138
    %v1140 = vrcp.pop %v1136
    %v1141 = vrcp.pop %v1139
    %v1142 = vmul.f32 %v1131, %v1140
    %v1143 = vmul.f32 %v1133, %v1141
    %1144 = vrot.lane.b32.xlu0 %v301, 48
    %v1145 = vpop.permute.xlu0 %1144
    %v1148 = vsel %vm312, %v1142, 0
    %1150 = vmatprep.subr.mxu0 0.0
    %1151 = vmatpush1.msra.mxu0 %v1145
    %1152 = vmatprep.subr.mxu0 0.0
    %1153 = vmatpush1.msra.mxu0 0.0
    %1154 = vmatprep.subr.mxu0 0.0
    %1155 = vmatpush1.msra.mxu0 0.0
    %1156 = vmatprep.subr.mxu0 0.0
    %1157 = vmatpush1.msra.mxu0 0.0
    %1158 = vmatprep.subr.mxu0 0.0
    %1159 = vmatpush1.msra.mxu0 0.0
    %1160 = vmatprep.subr.mxu0 0.0
    %1161 = vmatpush1.msra.mxu0 0.0
    %1162 = vmatprep.subr.mxu0 0.0
    %1163 = vmatpush1.msra.mxu0 0.0
    %1164 = vmatprep.subr.mxu0 0.0
    %1165 = vmatpush1.msra.mxu0 0.0
    %1166 = vmatprep.subr.mxu0 0.0
    %1167 = vmatpush1.msra.mxu0 0.0
    %1168 = vmatprep.subr.mxu0 0.0
    %1169 = vmatpush1.msra.mxu0 0.0
    %1170 = vmatprep.subr.mxu0 0.0
    %1171 = vmatpush1.msra.mxu0 0.0
    %1172 = vmatprep.subr.mxu0 0.0
    %1173 = vmatpush1.msra.mxu0 0.0
    %1174 = vmatprep.subr.mxu0 0.0
    %1175 = vmatpush1.msra.mxu0 0.0
    %1176 = vmatprep.subr.mxu0 0.0
    %1177 = vmatpush1.msra.mxu0 0.0
    %1178 = vmatprep.subr.mxu0 0.0
    %1179 = vmatpush1.msra.mxu0 0.0
    %1180 = vmatprep.subr.mxu0 0.0
    %1181 = vmatpush1.msra.mxu0 0.0
    %1182 = vmatprep.subr.mxu0 0.0
    %1183 = vmatpush1.msra.mxu0 0.0
    %1184 = vmatprep.subr.mxu0 0.0
    %1185 = vmatpush1.msra.mxu0 0.0
    %1186 = vmatprep.subr.mxu0 0.0
    %1187 = vmatpush1.msra.mxu0 0.0
    %1188 = vmatprep.subr.mxu0 0.0
    %1189 = vmatpush1.msra.mxu0 0.0
    %1190 = vmatprep.subr.mxu0 0.0
    %1191 = vmatpush1.msra.mxu0 0.0
    %1192 = vmatprep.subr.mxu0 0.0
    %1193 = vmatpush1.msra.mxu0 0.0
    %1194 = vmatprep.subr.mxu0 0.0
    %1195 = vmatpush1.msra.mxu0 0.0
    %1196 = vmatprep.subr.mxu0 0.0
    %1197 = vmatpush1.msra.mxu0 0.0
    %1198 = vmatprep.subr.mxu0 0.0
    %1199 = vmatpush1.msra.mxu0 0.0
    %1200 = vmatprep.subr.mxu0 0.0
    %1201 = vmatpush1.msra.mxu0 0.0
    %1202 = vmatprep.subr.mxu0 0.0
    %1203 = vmatpush1.msra.mxu0 0.0
    %1204 = vmatprep.subr.mxu0 0.0
    %1205 = vmatpush1.msra.mxu0 0.0
    %1206 = vmatprep.subr.mxu0 0.0
    %1207 = vmatpush1.msra.mxu0 0.0
    %1208 = vmatprep.subr.mxu0 0.0
    %1209 = vmatpush1.msra.mxu0 0.0
    %1210 = vmatprep.subr.mxu0 0.0
    %1211 = vmatpush1.msra.mxu0 0.0
    %1212 = vmatprep.subr.mxu0 0.0
    %1213 = vmatpush1.msra.mxu0 0.0
    %1214 = vmatprep.mubr.f32.mxu0 0.0
    %1215 = vmatmul.mubr.f32.gmra.mrb[0].mxu0 %v1148
    %v1216 = vpop.f32.mrb[0].mxu0
    %v1217 = vadd.f32 0.0, %v1216
    %v1218 = vpop.f32.mrb[0].mxu0
    %1219 = vdwg.mxu0
    %1220 = vrot.lane.b32.xlu0 %v306, 48
    %v1221 = vpop.permute.xlu0 %1220
    %v1224 = vsel %vm312, %v1143, 0
    %1226 = vmatprep.subr.mxu0 0.0
    %1227 = vmatpush1.msra.mxu0 %v1221
    %1228 = vmatprep.subr.mxu0 0.0
    %1229 = vmatpush1.msra.mxu0 0.0
    %1230 = vmatprep.subr.mxu0 0.0
    %1231 = vmatpush1.msra.mxu0 0.0
    %1232 = vmatprep.subr.mxu0 0.0
    %1233 = vmatpush1.msra.mxu0 0.0
    %1234 = vmatprep.subr.mxu0 0.0
    %1235 = vmatpush1.msra.mxu0 0.0
    %1236 = vmatprep.subr.mxu0 0.0
    %1237 = vmatpush1.msra.mxu0 0.0
    %1238 = vmatprep.subr.mxu0 0.0
    %1239 = vmatpush1.msra.mxu0 0.0
    %1240 = vmatprep.subr.mxu0 0.0
    %1241 = vmatpush1.msra.mxu0 0.0
    %1242 = vmatprep.subr.mxu0 0.0
    %1243 = vmatpush1.msra.mxu0 0.0
    %1244 = vmatprep.subr.mxu0 0.0
    %1245 = vmatpush1.msra.mxu0 0.0
    %1246 = vmatprep.subr.mxu0 0.0
    %1247 = vmatpush1.msra.mxu0 0.0
    %1248 = vmatprep.subr.mxu0 0.0
    %1249 = vmatpush1.msra.mxu0 0.0
    %1250 = vmatprep.subr.mxu0 0.0
    %1251 = vmatpush1.msra.mxu0 0.0
    %1252 = vmatprep.subr.mxu0 0.0
    %1253 = vmatpush1.msra.mxu0 0.0
    %1254 = vmatprep.subr.mxu0 0.0
    %1255 = vmatpush1.msra.mxu0 0.0
    %1256 = vmatprep.subr.mxu0 0.0
    %1257 = vmatpush1.msra.mxu0 0.0
    %1258 = vmatprep.subr.mxu0 0.0
    %1259 = vmatpush1.msra.mxu0 0.0
    %1260 = vmatprep.subr.mxu0 0.0
    %1261 = vmatpush1.msra.mxu0 0.0
    %1262 = vmatprep.subr.mxu0 0.0
    %1263 = vmatpush1.msra.mxu0 0.0
    %1264 = vmatprep.subr.mxu0 0.0
    %1265 = vmatpush1.msra.mxu0 0.0
    %1266 = vmatprep.subr.mxu0 0.0
    %1267 = vmatpush1.msra.mxu0 0.0
    %1268 = vmatprep.subr.mxu0 0.0
    %1269 = vmatpush1.msra.mxu0 0.0
    %1270 = vmatprep.subr.mxu0 0.0
    %1271 = vmatpush1.msra.mxu0 0.0
    %1272 = vmatprep.subr.mxu0 0.0
    %1273 = vmatpush1.msra.mxu0 0.0
    %1274 = vmatprep.subr.mxu0 0.0
    %1275 = vmatpush1.msra.mxu0 0.0
    %1276 = vmatprep.subr.mxu0 0.0
    %1277 = vmatpush1.msra.mxu0 0.0
    %1278 = vmatprep.subr.mxu0 0.0
    %1279 = vmatpush1.msra.mxu0 0.0
    %1280 = vmatprep.subr.mxu0 0.0
    %1281 = vmatpush1.msra.mxu0 0.0
    %1282 = vmatprep.subr.mxu0 0.0
    %1283 = vmatpush1.msra.mxu0 0.0
    %1284 = vmatprep.subr.mxu0 0.0
    %1285 = vmatpush1.msra.mxu0 0.0
    %1286 = vmatprep.subr.mxu0 0.0
    %1287 = vmatpush1.msra.mxu0 0.0
    %1288 = vmatprep.subr.mxu0 0.0
    %1289 = vmatpush1.msra.mxu0 0.0
    %1290 = vmatprep.mubr.f32.mxu0 0.0
    %1291 = vmatmul.mubr.f32.gmra.mrb[0].mxu0 %v1224
    %v1292 = vpop.f32.mrb[0].mxu0
    %v1293 = vadd.f32 0.0, %v1292
    %v1294 = vpop.f32.mrb[0].mxu0
    %1295 = vdwg.mxu0
    %1296 = vrot.lane.b32.xlu0 %v301, 104
    %v1297 = vpop.permute.xlu0 %1296
    %1298 = vrot.lane.b32.xlu0 %v301, 72
    %v1299 = vpop.permute.xlu0 %1298
    %v1300 = vsel %vm312, %v1297, 0
    %v1302 = vsel %vm312, %v1299, 0
    %1304 = vmatprep.subr.mxu0 0.0
    %1305 = vmatpush1.xpose.msra.mxu0 %v1302
    %1306 = vmatprep.subr.mxu0 0.0
    %1307 = vmatpush1.xpose.msra.mxu0 0.0
    %1308 = vmatprep.subr.mxu0 0.0
    %1309 = vmatpush1.xpose.msra.mxu0 0.0
    %1310 = vmatprep.subr.mxu0 0.0
    %1311 = vmatpush1.xpose.msra.mxu0 0.0
    %1312 = vmatprep.subr.mxu0 0.0
    %1313 = vmatpush1.xpose.msra.mxu0 0.0
    %1314 = vmatprep.subr.mxu0 0.0
    %1315 = vmatpush1.xpose.msra.mxu0 0.0
    %1316 = vmatprep.subr.mxu0 0.0
    %1317 = vmatpush1.xpose.msra.mxu0 0.0
    %1318 = vmatprep.subr.mxu0 0.0
    %1319 = vmatpush1.xpose.msra.mxu0 0.0
    %1320 = vmatprep.subr.mxu0 0.0
    %1321 = vmatpush1.xpose.msra.mxu0 0.0
    %1322 = vmatprep.subr.mxu0 0.0
    %1323 = vmatpush1.xpose.msra.mxu0 0.0
    %1324 = vmatprep.subr.mxu0 0.0
    %1325 = vmatpush1.xpose.msra.mxu0 0.0
    %1326 = vmatprep.subr.mxu0 0.0
    %1327 = vmatpush1.xpose.msra.mxu0 0.0
    %1328 = vmatprep.subr.mxu0 0.0
    %1329 = vmatpush1.xpose.msra.mxu0 0.0
    %1330 = vmatprep.subr.mxu0 0.0
    %1331 = vmatpush1.xpose.msra.mxu0 0.0
    %1332 = vmatprep.subr.mxu0 0.0
    %1333 = vmatpush1.xpose.msra.mxu0 0.0
    %1334 = vmatprep.subr.mxu0 0.0
    %1335 = vmatpush1.xpose.msra.mxu0 0.0
    %1336 = vmatprep.subr.mxu0 0.0
    %1337 = vmatpush1.xpose.msra.mxu0 0.0
    %1338 = vmatprep.subr.mxu0 0.0
    %1339 = vmatpush1.xpose.msra.mxu0 0.0
    %1340 = vmatprep.subr.mxu0 0.0
    %1341 = vmatpush1.xpose.msra.mxu0 0.0
    %1342 = vmatprep.subr.mxu0 0.0
    %1343 = vmatpush1.xpose.msra.mxu0 0.0
    %1344 = vmatprep.subr.mxu0 0.0
    %1345 = vmatpush1.xpose.msra.mxu0 0.0
    %1346 = vmatprep.subr.mxu0 0.0
    %1347 = vmatpush1.xpose.msra.mxu0 0.0
    %1348 = vmatprep.subr.mxu0 0.0
    %1349 = vmatpush1.xpose.msra.mxu0 0.0
    %1350 = vmatprep.subr.mxu0 0.0
    %1351 = vmatpush1.xpose.msra.mxu0 0.0
    %1352 = vmatprep.subr.mxu0 0.0
    %1353 = vmatpush1.xpose.msra.mxu0 0.0
    %1354 = vmatprep.subr.mxu0 0.0
    %1355 = vmatpush1.xpose.msra.mxu0 0.0
    %1356 = vmatprep.subr.mxu0 0.0
    %1357 = vmatpush1.xpose.msra.mxu0 0.0
    %1358 = vmatprep.subr.mxu0 0.0
    %1359 = vmatpush1.xpose.msra.mxu0 0.0
    %1360 = vmatprep.subr.mxu0 0.0
    %1361 = vmatpush1.xpose.msra.mxu0 0.0
    %1362 = vmatprep.subr.mxu0 0.0
    %1363 = vmatpush1.xpose.msra.mxu0 0.0
    %1364 = vmatprep.subr.mxu0 0.0
    %1365 = vmatpush1.xpose.msra.mxu0 0.0
    %1366 = vmatprep.subr.mxu0 0.0
    %1367 = vmatpush1.xpose.msra.mxu0 0.0
    %1368 = vmatprep.mubr.f32.mxu0 0.0
    %1369 = vmatmul.mubr.f32.gmra.mrb[0].mxu0 %v1300
    %v1370 = vpop.f32.mrb[0].mxu0
    %v1371 = vadd.f32 0.0, %v1370
    %v1372 = vpop.f32.mrb[0].mxu0
    %1373 = vdwg.mxu0
    %1374 = vrot.lane.b32.xlu0 %v306, 104
    %v1375 = vpop.permute.xlu0 %1374
    %1376 = vrot.lane.b32.xlu0 %v306, 72
    %v1377 = vpop.permute.xlu0 %1376
    %v1378 = vsel %vm312, %v1375, 0
    %v1380 = vsel %vm312, %v1377, 0
    %1382 = vmatprep.subr.mxu0 0.0
    %1383 = vmatpush1.xpose.msra.mxu0 %v1380
    %1384 = vmatprep.subr.mxu0 0.0
    %1385 = vmatpush1.xpose.msra.mxu0 0.0
    %1386 = vmatprep.subr.mxu0 0.0
    %1387 = vmatpush1.xpose.msra.mxu0 0.0
    %1388 = vmatprep.subr.mxu0 0.0
    %1389 = vmatpush1.xpose.msra.mxu0 0.0
    %1390 = vmatprep.subr.mxu0 0.0
    %1391 = vmatpush1.xpose.msra.mxu0 0.0
    %1392 = vmatprep.subr.mxu0 0.0
    %1393 = vmatpush1.xpose.msra.mxu0 0.0
    %1394 = vmatprep.subr.mxu0 0.0
    %1395 = vmatpush1.xpose.msra.mxu0 0.0
    %1396 = vmatprep.subr.mxu0 0.0
    %1397 = vmatpush1.xpose.msra.mxu0 0.0
    %1398 = vmatprep.subr.mxu0 0.0
    %1399 = vmatpush1.xpose.msra.mxu0 0.0
    %1400 = vmatprep.subr.mxu0 0.0
    %1401 = vmatpush1.xpose.msra.mxu0 0.0
    %1402 = vmatprep.subr.mxu0 0.0
    %1403 = vmatpush1.xpose.msra.mxu0 0.0
    %1404 = vmatprep.subr.mxu0 0.0
    %1405 = vmatpush1.xpose.msra.mxu0 0.0
    %1406 = vmatprep.subr.mxu0 0.0
    %1407 = vmatpush1.xpose.msra.mxu0 0.0
    %1408 = vmatprep.subr.mxu0 0.0
    %1409 = vmatpush1.xpose.msra.mxu0 0.0
    %1410 = vmatprep.subr.mxu0 0.0
    %1411 = vmatpush1.xpose.msra.mxu0 0.0
    %1412 = vmatprep.subr.mxu0 0.0
    %1413 = vmatpush1.xpose.msra.mxu0 0.0
    %1414 = vmatprep.subr.mxu0 0.0
    %1415 = vmatpush1.xpose.msra.mxu0 0.0
    %1416 = vmatprep.subr.mxu0 0.0
    %1417 = vmatpush1.xpose.msra.mxu0 0.0
    %1418 = vmatprep.subr.mxu0 0.0
    %1419 = vmatpush1.xpose.msra.mxu0 0.0
    %1420 = vmatprep.subr.mxu0 0.0
    %1421 = vmatpush1.xpose.msra.mxu0 0.0
    %1422 = vmatprep.subr.mxu0 0.0
    %1423 = vmatpush1.xpose.msra.mxu0 0.0
    %1424 = vmatprep.subr.mxu0 0.0
    %1425 = vmatpush1.xpose.msra.mxu0 0.0
    %1426 = vmatprep.subr.mxu0 0.0
    %1427 = vmatpush1.xpose.msra.mxu0 0.0
    %1428 = vmatprep.subr.mxu0 0.0
    %1429 = vmatpush1.xpose.msra.mxu0 0.0
    %1430 = vmatprep.subr.mxu0 0.0
    %1431 = vmatpush1.xpose.msra.mxu0 0.0
    %1432 = vmatprep.subr.mxu0 0.0
    %1433 = vmatpush1.xpose.msra.mxu0 0.0
    %1434 = vmatprep.subr.mxu0 0.0
    %1435 = vmatpush1.xpose.msra.mxu0 0.0
    %1436 = vmatprep.subr.mxu0 0.0
    %1437 = vmatpush1.xpose.msra.mxu0 0.0
    %1438 = vmatprep.subr.mxu0 0.0
    %1439 = vmatpush1.xpose.msra.mxu0 0.0
    %1440 = vmatprep.subr.mxu0 0.0
    %1441 = vmatpush1.xpose.msra.mxu0 0.0
    %1442 = vmatprep.subr.mxu0 0.0
    %1443 = vmatpush1.xpose.msra.mxu0 0.0
    %1444 = vmatprep.subr.mxu0 0.0
    %1445 = vmatpush1.xpose.msra.mxu0 0.0
    %1446 = vmatprep.mubr.f32.mxu0 0.0
    %1447 = vmatmul.mubr.f32.gmra.mrb[0].mxu0 %v1378
    %v1448 = vpop.f32.mrb[0].mxu0
    %v1449 = vadd.f32 0.0, %v1448
    %v1450 = vpop.f32.mrb[0].mxu0
    %1451 = vdwg.mxu0
    %v1452 = vmul.f32 %v1371, 0.35355338
    %v1453 = vmul.f32 %v1449, 0.35355338
    %v1454 = vadd.f32 %v1452, %v469
    %v1455 = vadd.f32 %v1453, %v473
    %v1456 = vmul.f32 %v1454, 1.442695
    %v1457 = vpow.pop %v1456
    %v1458 = vmul.f32 %v1455, 1.442695
    %v1459 = vpow.pop %v1458
    %v1460 = vsel %vm312, %v1457, 0.0
    %1461 = vadd.xlane.f32.xlu0 %v1460
    %v1462 = vpop.xlane.xlu0 %1461
    %v1463 = vsel %vm312, %v1459, 0.0
    %1464 = vadd.xlane.f32.xlu0 %v1463
    %v1465 = vpop.xlane.xlu0 %1464
    %v1466 = vrcp.pop %v1462
    %v1467 = vrcp.pop %v1465
    %v1468 = vmul.f32 %v1457, %v1466
    %v1469 = vmul.f32 %v1459, %v1467
    %1470 = vrot.lane.b32.xlu0 %v301, 40
    %v1471 = vpop.permute.xlu0 %1470
    %v1474 = vsel %vm312, %v1468, 0
    %1476 = vmatprep.subr.mxu0 0.0
    %1477 = vmatpush1.msra.mxu0 %v1471
    %1478 = vmatprep.subr.mxu0 0.0
    %1479 = vmatpush1.msra.mxu0 0.0
    %1480 = vmatprep.subr.mxu0 0.0
    %1481 = vmatpush1.msra.mxu0 0.0
    %1482 = vmatprep.subr.mxu0 0.0
    %1483 = vmatpush1.msra.mxu0 0.0
    %1484 = vmatprep.subr.mxu0 0.0
    %1485 = vmatpush1.msra.mxu0 0.0
    %1486 = vmatprep.subr.mxu0 0.0
    %1487 = vmatpush1.msra.mxu0 0.0
    %1488 = vmatprep.subr.mxu0 0.0
    %1489 = vmatpush1.msra.mxu0 0.0
    %1490 = vmatprep.subr.mxu0 0.0
    %1491 = vmatpush1.msra.mxu0 0.0
    %1492 = vmatprep.subr.mxu0 0.0
    %1493 = vmatpush1.msra.mxu0 0.0
    %1494 = vmatprep.subr.mxu0 0.0
    %1495 = vmatpush1.msra.mxu0 0.0
    %1496 = vmatprep.subr.mxu0 0.0
    %1497 = vmatpush1.msra.mxu0 0.0
    %1498 = vmatprep.subr.mxu0 0.0
    %1499 = vmatpush1.msra.mxu0 0.0
    %1500 = vmatprep.subr.mxu0 0.0
    %1501 = vmatpush1.msra.mxu0 0.0
    %1502 = vmatprep.subr.mxu0 0.0
    %1503 = vmatpush1.msra.mxu0 0.0
    %1504 = vmatprep.subr.mxu0 0.0
    %1505 = vmatpush1.msra.mxu0 0.0
    %1506 = vmatprep.subr.mxu0 0.0
    %1507 = vmatpush1.msra.mxu0 0.0
    %1508 = vmatprep.subr.mxu0 0.0
    %1509 = vmatpush1.msra.mxu0 0.0
    %1510 = vmatprep.subr.mxu0 0.0
    %1511 = vmatpush1.msra.mxu0 0.0
    %1512 = vmatprep.subr.mxu0 0.0
    %1513 = vmatpush1.msra.mxu0 0.0
    %1514 = vmatprep.subr.mxu0 0.0
    %1515 = vmatpush1.msra.mxu0 0.0
    %1516 = vmatprep.subr.mxu0 0.0
    %1517 = vmatpush1.msra.mxu0 0.0
    %1518 = vmatprep.subr.mxu0 0.0
    %1519 = vmatpush1.msra.mxu0 0.0
    %1520 = vmatprep.subr.mxu0 0.0
    %1521 = vmatpush1.msra.mxu0 0.0
    %1522 = vmatprep.subr.mxu0 0.0
    %1523 = vmatpush1.msra.mxu0 0.0
    %1524 = vmatprep.subr.mxu0 0.0
    %1525 = vmatpush1.msra.mxu0 0.0
    %1526 = vmatprep.subr.mxu0 0.0
    %1527 = vmatpush1.msra.mxu0 0.0
    %1528 = vmatprep.subr.mxu0 0.0
    %1529 = vmatpush1.msra.mxu0 0.0
    %1530 = vmatprep.subr.mxu0 0.0
    %1531 = vmatpush1.msra.mxu0 0.0
    %1532 = vmatprep.subr.mxu0 0.0
    %1533 = vmatpush1.msra.mxu0 0.0
    %1534 = vmatprep.subr.mxu0 0.0
    %1535 = vmatpush1.msra.mxu0 0.0
    %1536 = vmatprep.subr.mxu0 0.0
    %1537 = vmatpush1.msra.mxu0 0.0
    %1538 = vmatprep.subr.mxu0 0.0
    %1539 = vmatpush1.msra.mxu0 0.0
    %1540 = vmatprep.mubr.f32.mxu0 0.0
    %1541 = vmatmul.mubr.f32.gmra.mrb[0].mxu0 %v1474
    %v1542 = vpop.f32.mrb[0].mxu0
    %v1543 = vadd.f32 0.0, %v1542
    %v1544 = vpop.f32.mrb[0].mxu0
    %1545 = vdwg.mxu0
    %1546 = vrot.lane.b32.xlu0 %v306, 40
    %v1547 = vpop.permute.xlu0 %1546
    %v1550 = vsel %vm312, %v1469, 0
    %1552 = vmatprep.subr.mxu0 0.0
    %1553 = vmatpush1.msra.mxu0 %v1547
    %1554 = vmatprep.subr.mxu0 0.0
    %1555 = vmatpush1.msra.mxu0 0.0
    %1556 = vmatprep.subr.mxu0 0.0
    %1557 = vmatpush1.msra.mxu0 0.0
    %1558 = vmatprep.subr.mxu0 0.0
    %1559 = vmatpush1.msra.mxu0 0.0
    %1560 = vmatprep.subr.mxu0 0.0
    %1561 = vmatpush1.msra.mxu0 0.0
    %1562 = vmatprep.subr.mxu0 0.0
    %1563 = vmatpush1.msra.mxu0 0.0
    %1564 = vmatprep.subr.mxu0 0.0
    %1565 = vmatpush1.msra.mxu0 0.0
    %1566 = vmatprep.subr.mxu0 0.0
    %1567 = vmatpush1.msra.mxu0 0.0
    %1568 = vmatprep.subr.mxu0 0.0
    %1569 = vmatpush1.msra.mxu0 0.0
    %1570 = vmatprep.subr.mxu0 0.0
    %1571 = vmatpush1.msra.mxu0 0.0
    %1572 = vmatprep.subr.mxu0 0.0
    %1573 = vmatpush1.msra.mxu0 0.0
    %1574 = vmatprep.subr.mxu0 0.0
    %1575 = vmatpush1.msra.mxu0 0.0
    %1576 = vmatprep.subr.mxu0 0.0
    %1577 = vmatpush1.msra.mxu0 0.0
    %1578 = vmatprep.subr.mxu0 0.0
    %1579 = vmatpush1.msra.mxu0 0.0
    %1580 = vmatprep.subr.mxu0 0.0
    %1581 = vmatpush1.msra.mxu0 0.0
    %1582 = vmatprep.subr.mxu0 0.0
    %1583 = vmatpush1.msra.mxu0 0.0
    %1584 = vmatprep.subr.mxu0 0.0
    %1585 = vmatpush1.msra.mxu0 0.0
    %1586 = vmatprep.subr.mxu0 0.0
    %1587 = vmatpush1.msra.mxu0 0.0
    %1588 = vmatprep.subr.mxu0 0.0
    %1589 = vmatpush1.msra.mxu0 0.0
    %1590 = vmatprep.subr.mxu0 0.0
    %1591 = vmatpush1.msra.mxu0 0.0
    %1592 = vmatprep.subr.mxu0 0.0
    %1593 = vmatpush1.msra.mxu0 0.0
    %1594 = vmatprep.subr.mxu0 0.0
    %1595 = vmatpush1.msra.mxu0 0.0
    %1596 = vmatprep.subr.mxu0 0.0
    %1597 = vmatpush1.msra.mxu0 0.0
    %1598 = vmatprep.subr.mxu0 0.0
    %1599 = vmatpush1.msra.mxu0 0.0
    %1600 = vmatprep.subr.mxu0 0.0
    %1601 = vmatpush1.msra.mxu0 0.0
    %1602 = vmatprep.subr.mxu0 0.0
    %1603 = vmatpush1.msra.mxu0 0.0
    %1604 = vmatprep.subr.mxu0 0.0
    %1605 = vmatpush1.msra.mxu0 0.0
    %1606 = vmatprep.subr.mxu0 0.0
    %1607 = vmatpush1.msra.mxu0 0.0
    %1608 = vmatprep.subr.mxu0 0.0
    %1609 = vmatpush1.msra.mxu0 0.0
    %1610 = vmatprep.subr.mxu0 0.0
    %1611 = vmatpush1.msra.mxu0 0.0
    %1612 = vmatprep.subr.mxu0 0.0
    %1613 = vmatpush1.msra.mxu0 0.0
    %1614 = vmatprep.subr.mxu0 0.0
    %1615 = vmatpush1.msra.mxu0 0.0
    %1616 = vmatprep.mubr.f32.mxu0 0.0
    %1617 = vmatmul.mubr.f32.gmra.mrb[0].mxu0 %v1550
    %v1618 = vpop.f32.mrb[0].mxu0
    %v1619 = vadd.f32 0.0, %v1618
    %v1620 = vpop.f32.mrb[0].mxu0
    %1621 = vdwg.mxu0
    %1624 = vrot.lane.b32.xlu0 %v891, 8
    %v1625 = vpop.permute.xlu0 %1624
    %1626 = vrot.lane.b32.xlu0 %v967, 8
    %v1627 = vpop.permute.xlu0 %1626
    %1632 = vrot.lane.b32.xlu0 %v1217, 16
    %v1633 = vpop.permute.xlu0 %1632
    %1634 = vrot.lane.b32.xlu0 %v1293, 16
    %v1635 = vpop.permute.xlu0 %1634
    %1640 = vrot.lane.b32.xlu0 %v1543, 24
    %v1641 = vpop.permute.xlu0 %1640
    %1642 = vrot.lane.b32.xlu0 %v1619, 24
    %v1643 = vpop.permute.xlu0 %1642
    %v1646 = vsel %vm312, %v565, %v1625
    %v1647 = vsel %vm312, %v641, %v1627
    %vm1648 = vcmask 130048
    %v1649 = vsel %vm1648, %v1646, %v1633
    %v1650 = vsel %vm1648, %v1647, %v1635
    %vm1651 = vcmask 195584
    %v1652 = vsel %vm1651, %v1649, %v1641
    %v1653 = vsel %vm1651, %v1650, %v1643
    %v1654 = vld [vmem:[#allocation2 + $0x20] sm:$0xff]
    %v1655 = vld [vmem:[#allocation2 + $0x28] sm:$0xff]
    %v1656 = vld [vmem:[#allocation2 + $0x30] sm:$0xff]
    %v1657 = vld [vmem:[#allocation2 + $0x38] sm:$0xff]
    %v1658 = vld [vmem:[%s5 + $0x1] sm:$0x1]
    %v1659 = vlaneseq
    %v1660 = vshrl.u32 %v1659, 7
    %v1661 = vsub.s32 0, %v1660
    %v1662 = vrot.slane %v1658, %v1661
    %v1664 = vsel %vm154, %v1652, 0
    %v1667 = vsel %vm154, %v1653, 0
    %1669 = vmatprep.subr.mxu0 0.0
    %1670 = vmatpush1.msra.mxu0 %v1654
    %1671 = vmatprep.subr.mxu0 0.0
    %1672 = vmatpush1.msra.mxu0 %v1655
    %1673 = vmatprep.subr.mxu0 0.0
    %1674 = vmatpush1.msra.mxu0 %v1656
    %1675 = vmatprep.subr.mxu0 0.0
    %1676 = vmatpush1.msra.mxu0 %v1657
    %1677 = vmatprep.subr.mxu0 0.0
    %1678 = vmatpush1.msra.mxu0 0.0
    %1679 = vmatprep.subr.mxu0 0.0
    %1680 = vmatpush1.msra.mxu0 0.0
    %1681 = vmatprep.subr.mxu0 0.0
    %1682 = vmatpush1.msra.mxu0 0.0
    %1683 = vmatprep.subr.mxu0 0.0
    %1684 = vmatpush1.msra.mxu0 0.0
    %1685 = vmatprep.subr.mxu0 0.0
    %1686 = vmatpush1.msra.mxu0 0.0
    %1687 = vmatprep.subr.mxu0 0.0
    %1688 = vmatpush1.msra.mxu0 0.0
    %1689 = vmatprep.subr.mxu0 0.0
    %1690 = vmatpush1.msra.mxu0 0.0
    %1691 = vmatprep.subr.mxu0 0.0
    %1692 = vmatpush1.msra.mxu0 0.0
    %1693 = vmatprep.subr.mxu0 0.0
    %1694 = vmatpush1.msra.mxu0 0.0
    %1695 = vmatprep.subr.mxu0 0.0
    %1696 = vmatpush1.msra.mxu0 0.0
    %1697 = vmatprep.subr.mxu0 0.0
    %1698 = vmatpush1.msra.mxu0 0.0
    %1699 = vmatprep.subr.mxu0 0.0
    %1700 = vmatpush1.msra.mxu0 0.0
    %1701 = vmatprep.subr.mxu0 0.0
    %1702 = vmatpush1.msra.mxu0 0.0
    %1703 = vmatprep.subr.mxu0 0.0
    %1704 = vmatpush1.msra.mxu0 0.0
    %1705 = vmatprep.subr.mxu0 0.0
    %1706 = vmatpush1.msra.mxu0 0.0
    %1707 = vmatprep.subr.mxu0 0.0
    %1708 = vmatpush1.msra.mxu0 0.0
    %1709 = vmatprep.subr.mxu0 0.0
    %1710 = vmatpush1.msra.mxu0 0.0
    %1711 = vmatprep.subr.mxu0 0.0
    %1712 = vmatpush1.msra.mxu0 0.0
    %1713 = vmatprep.subr.mxu0 0.0
    %1714 = vmatpush1.msra.mxu0 0.0
    %1715 = vmatprep.subr.mxu0 0.0
    %1716 = vmatpush1.msra.mxu0 0.0
    %1717 = vmatprep.subr.mxu0 0.0
    %1718 = vmatpush1.msra.mxu0 0.0
    %1719 = vmatprep.subr.mxu0 0.0
    %1720 = vmatpush1.msra.mxu0 0.0
    %1721 = vmatprep.subr.mxu0 0.0
    %1722 = vmatpush1.msra.mxu0 0.0
    %1723 = vmatprep.subr.mxu0 0.0
    %1724 = vmatpush1.msra.mxu0 0.0
    %1725 = vmatprep.subr.mxu0 0.0
    %1726 = vmatpush1.msra.mxu0 0.0
    %1727 = vmatprep.subr.mxu0 0.0
    %1728 = vmatpush1.msra.mxu0 0.0
    %1729 = vmatprep.subr.mxu0 0.0
    %1730 = vmatpush1.msra.mxu0 0.0
    %1731 = vmatprep.subr.mxu0 0.0
    %1732 = vmatpush1.msra.mxu0 0.0
    %1733 = vmatprep.mubr.f32.mxu0 0.0
    %1734 = vmatmul.mubr.f32.gmra.mrb[0].mxu0 %v1664
    %v1735 = vpop.f32.mrb[0].mxu0
    %v1736 = vadd.f32 %v1662, %v1735
    %v1737 = vpop.f32.mrb[0].mxu0
    %1738 = vmatprep.mubr.f32.mxu0 0.0
    %1739 = vmatmul.mubr.f32.gmra.mrb[0].mxu0 %v1667
    %v1740 = vpop.f32.mrb[0].mxu0
    %v1741 = vadd.f32 %v1662, %v1740
    %v1742 = vpop.f32.mrb[0].mxu0
    %1743 = vdwg.mxu0
    %v1744 = vadd.f32 %v192, %v1736
    %v1745 = vadd.f32 %v193, %v1741
    %v1746 = vld [vmem:[%s5 + $0x2] sm:$0x1]
    %v1747 = vld [vmem:[%s5 + $0x3] sm:$0x1]
    %v1748 = vsel %vm154, %v1744, 0.0
    %1749 = vadd.xlane.f32.xlu0 %v1748
    %v1750 = vpop.xlane.xlu0 %1749
    %v1751 = vsel %vm154, %v1745, 0.0
    %1752 = vadd.xlane.f32.xlu0 %v1751
    %v1753 = vpop.xlane.xlu0 %1752
    %v1754 = vmul.f32 %v1750, %v161
    %v1755 = vmul.f32 %v1753, %v161
    %v1756 = vsub.f32 %v1744, %v1754
    %v1757 = vsub.f32 %v1745, %v1755
    %v1758 = vmul.f32 %v1756, %v1756
    %v1759 = vmul.f32 %v1757, %v1757
    %v1760 = vsel %vm154, %v1758, 0.0
    %1761 = vadd.xlane.f32.xlu0 %v1760
    %v1762 = vpop.xlane.xlu0 %1761
    %v1763 = vsel %vm154, %v1759, 0.0
    %1764 = vadd.xlane.f32.xlu0 %v1763
    %v1765 = vpop.xlane.xlu0 %1764
    %v1766 = vmul.f32 %v1762, %v161
    %v1767 = vmul.f32 %v1765, %v161
    %v1768 = vadd.f32 %v1766, 1e-12
    %v1769 = vadd.f32 %v1767, 1e-12
    %v1770 = vrsqrt.pop %v1768
    %v1771 = vrsqrt.pop %v1769
    %v1772 = vmul.f32 %v1756, %v1770
    %v1773 = vmul.f32 %v1757, %v1771
    %v1774 = vlaneseq
    %v1775 = vshrl.u32 %v1774, 7
    %v1776 = vsub.s32 0, %v1775
    %v1777 = vrot.slane %v1746, %v1776
    %v1778 = vmul.f32 %v1772, %v1777
    %v1779 = vmul.f32 %v1773, %v1777
    %v1780 = vlaneseq
    %v1781 = vshrl.u32 %v1780, 7
    %v1782 = vsub.s32 0, %v1781
    %v1783 = vrot.slane %v1747, %v1782
    %v1784 = vadd.f32 %v1778, %v1783
    %v1785 = vadd.f32 %v1779, %v1783
    %v1786 = vld [vmem:[%s5 + $0x4] sm:$0x1]
    %v1787 = vlaneseq
    %v1788 = vshrl.u32 %v1787, 7
    %v1789 = vsub.s32 0, %v1788
    %v1790 = vrot.slane %v1786, %v1789
    %1795 = vrot.lane.b32.xlu0 %v1654, 96
    %v1796 = vpop.permute.xlu0 %1795
    %1797 = vrot.lane.b32.xlu0 %v1655, 96
    %v1798 = vpop.permute.xlu0 %1797
    %1799 = vrot.lane.b32.xlu0 %v1656, 96
    %v1800 = vpop.permute.xlu0 %1799
    %1801 = vrot.lane.b32.xlu0 %v1657, 96
    %v1802 = vpop.permute.xlu0 %1801
    %v1808 = vsel %vm154, %v1784, 0
    %v1811 = vsel %vm154, %v1785, 0
    %1813 = vmatprep.subr.mxu0 0.0
    %1814 = vmatpush1.msra.mxu0 %v1796
    %1815 = vmatprep.subr.mxu0 0.0
    %1816 = vmatpush1.msra.mxu0 %v1798
    %1817 = vmatprep.subr.mxu0 0.0
    %1818 = vmatpush1.msra.mxu0 %v1800
    %1819 = vmatprep.subr.mxu0 0.0
    %1820 = vmatpush1.msra.mxu0 %v1802
    %1821 = vmatprep.subr.mxu0 0.0
    %1822 = vmatpush1.msra.mxu0 0.0
    %1823 = vmatprep.subr.mxu0 0.0
    %1824 = vmatpush1.msra.mxu0 0.0
    %1825 = vmatprep.subr.mxu0 0.0
    %1826 = vmatpush1.msra.mxu0 0.0
    %1827 = vmatprep.subr.mxu0 0.0
    %1828 = vmatpush1.msra.mxu0 0.0
    %1829 = vmatprep.subr.mxu0 0.0
    %1830 = vmatpush1.msra.mxu0 0.0
    %1831 = vmatprep.subr.mxu0 0.0
    %1832 = vmatpush1.msra.mxu0 0.0
    %1833 = vmatprep.subr.mxu0 0.0
    %1834 = vmatpush1.msra.mxu0 0.0
    %1835 = vmatprep.subr.mxu0 0.0
    %1836 = vmatpush1.msra.mxu0 0.0
    %1837 = vmatprep.subr.mxu0 0.0
    %1838 = vmatpush1.msra.mxu0 0.0
    %1839 = vmatprep.subr.mxu0 0.0
    %1840 = vmatpush1.msra.mxu0 0.0
    %1841 = vmatprep.subr.mxu0 0.0
    %1842 = vmatpush1.msra.mxu0 0.0
    %1843 = vmatprep.subr.mxu0 0.0
    %1844 = vmatpush1.msra.mxu0 0.0
    %1845 = vmatprep.subr.mxu0 0.0
    %1846 = vmatpush1.msra.mxu0 0.0
    %1847 = vmatprep.subr.mxu0 0.0
    %1848 = vmatpush1.msra.mxu0 0.0
    %1849 = vmatprep.subr.mxu0 0.0
    %1850 = vmatpush1.msra.mxu0 0.0
    %1851 = vmatprep.subr.mxu0 0.0
    %1852 = vmatpush1.msra.mxu0 0.0
    %1853 = vmatprep.subr.mxu0 0.0
    %1854 = vmatpush1.msra.mxu0 0.0
    %1855 = vmatprep.subr.mxu0 0.0
    %1856 = vmatpush1.msra.mxu0 0.0
    %1857 = vmatprep.subr.mxu0 0.0
    %1858 = vmatpush1.msra.mxu0 0.0
    %1859 = vmatprep.subr.mxu0 0.0
    %1860 = vmatpush1.msra.mxu0 0.0
    %1861 = vmatprep.subr.mxu0 0.0
    %1862 = vmatpush1.msra.mxu0 0.0
    %1863 = vmatprep.subr.mxu0 0.0
    %1864 = vmatpush1.msra.mxu0 0.0
    %1865 = vmatprep.subr.mxu0 0.0
    %1866 = vmatpush1.msra.mxu0 0.0
    %1867 = vmatprep.subr.mxu0 0.0
    %1868 = vmatpush1.msra.mxu0 0.0
    %1869 = vmatprep.subr.mxu0 0.0
    %1870 = vmatpush1.msra.mxu0 0.0
    %1871 = vmatprep.subr.mxu0 0.0
    %1872 = vmatpush1.msra.mxu0 0.0
    %1873 = vmatprep.subr.mxu0 0.0
    %1874 = vmatpush1.msra.mxu0 0.0
    %1875 = vmatprep.subr.mxu0 0.0
    %1876 = vmatpush1.msra.mxu0 0.0
    %1877 = vmatprep.mubr.f32.mxu0 0.0
    %1878 = vmatmul.mubr.f32.gmra.mrb[0].mxu0 %v1808
    %v1879 = vpop.f32.mrb[0].mxu0
    %v1880 = vadd.f32 %v1790, %v1879
    %v1881 = vpop.f32.mrb[0].mxu0
    %1882 = vmatprep.mubr.f32.mxu0 0.0
    %1883 = vmatmul.mubr.f32.gmra.mrb[0].mxu0 %v1811
    %v1884 = vpop.f32.mrb[0].mxu0
    %v1885 = vadd.f32 %v1790, %v1884
    %v1886 = vpop.f32.mrb[0].mxu0
    %1887 = vdwg.mxu0
    %v1888 = vmul.f32 %v1880, 0.5
    %v1889 = vmul.f32 %v1885, 0.5
    %v1890 = vmul.f32 %v1880, 0.044715
    %v1891 = vmul.f32 %v1885, 0.044715
    %v1892 = vmul.f32 %v1890, %v1880
    %v1893 = vmul.f32 %v1891, %v1885
    %v1894 = vmul.f32 %v1892, %v1880
    %v1895 = vmul.f32 %v1893, %v1885
    %v1896 = vadd.f32 %v1880, %v1894
    %v1897 = vadd.f32 %v1885, %v1895
    %v1898 = vmul.f32 %v1896, 0.7978846
    %v1899 = vmul.f32 %v1897, 0.7978846
    %v1900 = vtanh.pop %v1898
    %v1901 = vtanh.pop %v1899
    %v1902 = vadd.f32 %v1900, 1.0
    %v1903 = vadd.f32 %v1901, 1.0
    %v1904 = vmul.f32 %v1888, %v1902
    %v1905 = vmul.f32 %v1889, %v1903
    %v1906 = vld [vmem:[#allocation2] sm:$0xff]
    %v1907 = vld [vmem:[#allocation2 + $0x8] sm:$0xff]
    %v1908 = vld [vmem:[#allocation2 + $0x10] sm:$0xff]
    %v1909 = vld [vmem:[#allocation2 + $0x18] sm:$0xff]
    %v1910 = vld [vmem:[%s5 + $0x5] sm:$0x1]
    %v1911 = vlaneseq
    %v1912 = vshrl.u32 %v1911, 7
    %v1913 = vsub.s32 0, %v1912
    %v1914 = vrot.slane %v1910, %v1913
    %1919 = vrot.lane.b32.xlu0 %v1906, 32
    %v1920 = vpop.permute.xlu0 %1919
    %1921 = vrot.lane.b32.xlu0 %v1907, 32
    %v1922 = vpop.permute.xlu0 %1921
    %1923 = vrot.lane.b32.xlu0 %v1908, 32
    %v1924 = vpop.permute.xlu0 %1923
    %1925 = vrot.lane.b32.xlu0 %v1909, 32
    %v1926 = vpop.permute.xlu0 %1925
    %1927 = vrot.lane.b32.xlu0 %v1654, 32
    %v1928 = vpop.permute.xlu0 %1927
    %1929 = vrot.lane.b32.xlu0 %v1655, 32
    %v1930 = vpop.permute.xlu0 %1929
    %1931 = vrot.lane.b32.xlu0 %v1656, 32
    %v1932 = vpop.permute.xlu0 %1931
    %1933 = vrot.lane.b32.xlu0 %v1657, 32
    %v1934 = vpop.permute.xlu0 %1933
    %v1944 = vsel %vm70, %v1904, 0
    %v1947 = vsel %vm70, %v1905, 0
    %1949 = vmatprep.subr.mxu0 0.0
    %1950 = vmatpush1.msra.mxu0 %v1920
    %1951 = vmatprep.subr.mxu0 0.0
    %1952 = vmatpush1.msra.mxu0 %v1922
    %1953 = vmatprep.subr.mxu0 0.0
    %1954 = vmatpush1.msra.mxu0 %v1924
    %1955 = vmatprep.subr.mxu0 0.0
    %1956 = vmatpush1.msra.mxu0 %v1926
    %1957 = vmatprep.subr.mxu0 0.0
    %1958 = vmatpush1.msra.mxu0 %v1928
    %1959 = vmatprep.subr.mxu0 0.0
    %1960 = vmatpush1.msra.mxu0 %v1930
    %1961 = vmatprep.subr.mxu0 0.0
    %1962 = vmatpush1.msra.mxu0 %v1932
    %1963 = vmatprep.subr.mxu0 0.0
    %1964 = vmatpush1.msra.mxu0 %v1934
    %1965 = vmatprep.subr.mxu0 0.0
    %1966 = vmatpush1.msra.mxu0 0.0
    %1967 = vmatprep.subr.mxu0 0.0
    %1968 = vmatpush1.msra.mxu0 0.0
    %1969 = vmatprep.subr.mxu0 0.0
    %1970 = vmatpush1.msra.mxu0 0.0
    %1971 = vmatprep.subr.mxu0 0.0
    %1972 = vmatpush1.msra.mxu0 0.0
    %1973 = vmatprep.subr.mxu0 0.0
    %1974 = vmatpush1.msra.mxu0 0.0
    %1975 = vmatprep.subr.mxu0 0.0
    %1976 = vmatpush1.msra.mxu0 0.0
    %1977 = vmatprep.subr.mxu0 0.0
    %1978 = vmatpush1.msra.mxu0 0.0
    %1979 = vmatprep.subr.mxu0 0.0
    %1980 = vmatpush1.msra.mxu0 0.0
    %1981 = vmatprep.subr.mxu0 0.0
    %1982 = vmatpush1.msra.mxu0 0.0
    %1983 = vmatprep.subr.mxu0 0.0
    %1984 = vmatpush1.msra.mxu0 0.0
    %1985 = vmatprep.subr.mxu0 0.0
    %1986 = vmatpush1.msra.mxu0 0.0
    %1987 = vmatprep.subr.mxu0 0.0
    %1988 = vmatpush1.msra.mxu0 0.0
    %1989 = vmatprep.subr.mxu0 0.0
    %1990 = vmatpush1.msra.mxu0 0.0
    %1991 = vmatprep.subr.mxu0 0.0
    %1992 = vmatpush1.msra.mxu0 0.0
    %1993 = vmatprep.subr.mxu0 0.0
    %1994 = vmatpush1.msra.mxu0 0.0
    %1995 = vmatprep.subr.mxu0 0.0
    %1996 = vmatpush1.msra.mxu0 0.0
    %1997 = vmatprep.subr.mxu0 0.0
    %1998 = vmatpush1.msra.mxu0 0.0
    %1999 = vmatprep.subr.mxu0 0.0
    %2000 = vmatpush1.msra.mxu0 0.0
    %2001 = vmatprep.subr.mxu0 0.0
    %2002 = vmatpush1.msra.mxu0 0.0
    %2003 = vmatprep.subr.mxu0 0.0
    %2004 = vmatpush1.msra.mxu0 0.0
    %2005 = vmatprep.subr.mxu0 0.0
    %2006 = vmatpush1.msra.mxu0 0.0
    %2007 = vmatprep.subr.mxu0 0.0
    %2008 = vmatpush1.msra.mxu0 0.0
    %2009 = vmatprep.subr.mxu0 0.0
    %2010 = vmatpush1.msra.mxu0 0.0
    %2011 = vmatprep.subr.mxu0 0.0
    %2012 = vmatpush1.msra.mxu0 0.0
    %2013 = vmatprep.mubr.f32.mxu0 0.0
    %2014 = vmatmul.mubr.f32.gmra.mrb[0].mxu0 %v1944
    %v2015 = vpop.f32.mrb[0].mxu0
    %v2016 = vadd.f32 %v1914, %v2015
    %v2017 = vpop.f32.mrb[0].mxu0
    %2018 = vmatprep.mubr.f32.mxu0 0.0
    %2019 = vmatmul.mubr.f32.gmra.mrb[0].mxu0 %v1947
    %v2020 = vpop.f32.mrb[0].mxu0
    %v2021 = vadd.f32 %v1914, %v2020
    %v2022 = vpop.f32.mrb[0].mxu0
    %2023 = vdwg.mxu0
    %v2024 = vadd.f32 %v1784, %v2016
    %v2025 = vadd.f32 %v1785, %v2021
    %v2026 = vld [vmem:[%s5 + $0x6] sm:$0x1]
    %v2027 = vld [vmem:[%s5 + $0x7] sm:$0x1]
    %v2028 = vsel %vm154, %v2024, 0.0
    %2029 = vadd.xlane.f32.xlu0 %v2028
    %v2030 = vpop.xlane.xlu0 %2029
    %v2031 = vsel %vm154, %v2025, 0.0
    %2032 = vadd.xlane.f32.xlu0 %v2031
    %v2033 = vpop.xlane.xlu0 %2032
    %v2034 = vmul.f32 %v2030, %v161
    %v2035 = vmul.f32 %v2033, %v161
    %v2036 = vsub.f32 %v2024, %v2034
    %v2037 = vsub.f32 %v2025, %v2035
    %v2038 = vmul.f32 %v2036, %v2036
    %v2039 = vmul.f32 %v2037, %v2037
    %v2040 = vsel %vm154, %v2038, 0.0
    %2041 = vadd.xlane.f32.xlu0 %v2040
    %v2042 = vpop.xlane.xlu0 %2041
    %v2043 = vsel %vm154, %v2039, 0.0
    %2044 = vadd.xlane.f32.xlu0 %v2043
    %v2045 = vpop.xlane.xlu0 %2044
    %v2046 = vmul.f32 %v2042, %v161
    %v2047 = vmul.f32 %v2045, %v161
    %v2048 = vadd.f32 %v2046, 1e-12
    %v2049 = vadd.f32 %v2047, 1e-12
    %v2050 = vrsqrt.pop %v2048
    %v2051 = vrsqrt.pop %v2049
    %v2052 = vmul.f32 %v2036, %v2050
    %v2053 = vmul.f32 %v2037, %v2051
    %v2054 = vlaneseq
    %v2055 = vshrl.u32 %v2054, 7
    %v2056 = vsub.s32 0, %v2055
    %v2057 = vrot.slane %v2026, %v2056
    %v2058 = vmul.f32 %v2052, %v2057
    %v2059 = vmul.f32 %v2053, %v2057
    %v2060 = vlaneseq
    %v2061 = vshrl.u32 %v2060, 7
    %v2062 = vsub.s32 0, %v2061
    %v2063 = vrot.slane %v2027, %v2062
    %v2064 = vadd.f32 %v2058, %v2063
    %v2065 = vadd.f32 %v2059, %v2063
    %s2066 = scalar_lea.vmem [#allocation2], 64
    %v2067 = vld [vmem:[%s2066] sm:$0xff]
    %v2068 = vld [vmem:[%s2066 + $0x8] sm:$0xff]
    %v2069 = vld [vmem:[%s2066 + $0x10] sm:$0xff]
    %v2070 = vld [vmem:[%s2066 + $0x18] sm:$0xff]
    %s2071 = scalar_lea.vmem %s5, 8
    %v2072 = vld [vmem:[%s2071] sm:$0x1]
    %v2073 = vlaneseq
    %v2074 = vshrl.u32 %v2073, 7
    %v2075 = vsub.s32 0, %v2074
    %v2076 = vrot.slane %v2072, %v2075
    %v2078 = vsel %vm154, %v2064, 0
    %v2081 = vsel %vm154, %v2065, 0
    %2083 = vmatprep.subr.mxu0 0.0
    %2084 = vmatpush1.msra.mxu0 %v2067
    %2085 = vmatprep.subr.mxu0 0.0
    %2086 = vmatpush1.msra.mxu0 %v2068
    %2087 = vmatprep.subr.mxu0 0.0
    %2088 = vmatpush1.msra.mxu0 %v2069
    %2089 = vmatprep.subr.mxu0 0.0
    %2090 = vmatpush1.msra.mxu0 %v2070
    %2091 = vmatprep.subr.mxu0 0.0
    %2092 = vmatpush1.msra.mxu0 0.0
    %2093 = vmatprep.subr.mxu0 0.0
    %2094 = vmatpush1.msra.mxu0 0.0
    %2095 = vmatprep.subr.mxu0 0.0
    %2096 = vmatpush1.msra.mxu0 0.0
    %2097 = vmatprep.subr.mxu0 0.0
    %2098 = vmatpush1.msra.mxu0 0.0
    %2099 = vmatprep.subr.mxu0 0.0
    %2100 = vmatpush1.msra.mxu0 0.0
    %2101 = vmatprep.subr.mxu0 0.0
    %2102 = vmatpush1.msra.mxu0 0.0
    %2103 = vmatprep.subr.mxu0 0.0
    %2104 = vmatpush1.msra.mxu0 0.0
    %2105 = vmatprep.subr.mxu0 0.0
    %2106 = vmatpush1.msra.mxu0 0.0
    %2107 = vmatprep.subr.mxu0 0.0
    %2108 = vmatpush1.msra.mxu0 0.0
    %2109 = vmatprep.subr.mxu0 0.0
    %2110 = vmatpush1.msra.mxu0 0.0
    %2111 = vmatprep.subr.mxu0 0.0
    %2112 = vmatpush1.msra.mxu0 0.0
    %2113 = vmatprep.subr.mxu0 0.0
    %2114 = vmatpush1.msra.mxu0 0.0
    %2115 = vmatprep.subr.mxu0 0.0
    %2116 = vmatpush1.msra.mxu0 0.0
    %2117 = vmatprep.subr.mxu0 0.0
    %2118 = vmatpush1.msra.mxu0 0.0
    %2119 = vmatprep.subr.mxu0 0.0
    %2120 = vmatpush1.msra.mxu0 0.0
    %2121 = vmatprep.subr.mxu0 0.0
    %2122 = vmatpush1.msra.mxu0 0.0
    %2123 = vmatprep.subr.mxu0 0.0
    %2124 = vmatpush1.msra.mxu0 0.0
    %2125 = vmatprep.subr.mxu0 0.0
    %2126 = vmatpush1.msra.mxu0 0.0
    %2127 = vmatprep.subr.mxu0 0.0
    %2128 = vmatpush1.msra.mxu0 0.0
    %2129 = vmatprep.subr.mxu0 0.0
    %2130 = vmatpush1.msra.mxu0 0.0
    %2131 = vmatprep.subr.mxu0 0.0
    %2132 = vmatpush1.msra.mxu0 0.0
    %2133 = vmatprep.subr.mxu0 0.0
    %2134 = vmatpush1.msra.mxu0 0.0
    %2135 = vmatprep.subr.mxu0 0.0
    %2136 = vmatpush1.msra.mxu0 0.0
    %2137 = vmatprep.subr.mxu0 0.0
    %2138 = vmatpush1.msra.mxu0 0.0
    %2139 = vmatprep.subr.mxu0 0.0
    %2140 = vmatpush1.msra.mxu0 0.0
    %2141 = vmatprep.subr.mxu0 0.0
    %2142 = vmatpush1.msra.mxu0 0.0
    %2143 = vmatprep.subr.mxu0 0.0
    %2144 = vmatpush1.msra.mxu0 0.0
    %2145 = vmatprep.subr.mxu0 0.0
    %2146 = vmatpush1.msra.mxu0 0.0
    %2147 = vmatprep.mubr.f32.mxu0 0.0
    %2148 = vmatmul.mubr.f32.gmra.mrb[0].mxu0 %v2078
    %v2149 = vpop.f32.mrb[0].mxu0
    %v2150 = vadd.f32 %v2076, %v2149
    %v2151 = vpop.f32.mrb[0].mxu0
    %2152 = vmatprep.mubr.f32.mxu0 0.0
    %2153 = vmatmul.mubr.f32.gmra.mrb[0].mxu0 %v2081
    %v2154 = vpop.f32.mrb[0].mxu0
    %v2155 = vadd.f32 %v2076, %v2154
    %v2156 = vpop.f32.mrb[0].mxu0
    %2157 = vdwg.mxu0
    %2159 = vrot.lane.b32.xlu0 %v2150, 96
    %v2160 = vpop.permute.xlu0 %2159
    %v2161 = vsel %vm312, %v2150, 0
    %v2163 = vsel %vm312, %v2160, 0
    %2165 = vmatprep.subr.mxu0 0.0
    %2166 = vmatpush1.xpose.msra.mxu0 %v2163
    %2167 = vmatprep.subr.mxu0 0.0
    %2168 = vmatpush1.xpose.msra.mxu0 0.0
    %2169 = vmatprep.subr.mxu0 0.0
    %2170 = vmatpush1.xpose.msra.mxu0 0.0
    %2171 = vmatprep.subr.mxu0 0.0
    %2172 = vmatpush1.xpose.msra.mxu0 0.0
    %2173 = vmatprep.subr.mxu0 0.0
    %2174 = vmatpush1.xpose.msra.mxu0 0.0
    %2175 = vmatprep.subr.mxu0 0.0
    %2176 = vmatpush1.xpose.msra.mxu0 0.0
    %2177 = vmatprep.subr.mxu0 0.0
    %2178 = vmatpush1.xpose.msra.mxu0 0.0
    %2179 = vmatprep.subr.mxu0 0.0
    %2180 = vmatpush1.xpose.msra.mxu0 0.0
    %2181 = vmatprep.subr.mxu0 0.0
    %2182 = vmatpush1.xpose.msra.mxu0 0.0
    %2183 = vmatprep.subr.mxu0 0.0
    %2184 = vmatpush1.xpose.msra.mxu0 0.0
    %2185 = vmatprep.subr.mxu0 0.0
    %2186 = vmatpush1.xpose.msra.mxu0 0.0
    %2187 = vmatprep.subr.mxu0 0.0
    %2188 = vmatpush1.xpose.msra.mxu0 0.0
    %2189 = vmatprep.subr.mxu0 0.0
    %2190 = vmatpush1.xpose.msra.mxu0 0.0
    %2191 = vmatprep.subr.mxu0 0.0
    %2192 = vmatpush1.xpose.msra.mxu0 0.0
    %2193 = vmatprep.subr.mxu0 0.0
    %2194 = vmatpush1.xpose.msra.mxu0 0.0
    %2195 = vmatprep.subr.mxu0 0.0
    %2196 = vmatpush1.xpose.msra.mxu0 0.0
    %2197 = vmatprep.subr.mxu0 0.0
    %2198 = vmatpush1.xpose.msra.mxu0 0.0
    %2199 = vmatprep.subr.mxu0 0.0
    %2200 = vmatpush1.xpose.msra.mxu0 0.0
    %2201 = vmatprep.subr.mxu0 0.0
    %2202 = vmatpush1.xpose.msra.mxu0 0.0
    %2203 = vmatprep.subr.mxu0 0.0
    %2204 = vmatpush1.xpose.msra.mxu0 0.0
    %2205 = vmatprep.subr.mxu0 0.0
    %2206 = vmatpush1.xpose.msra.mxu0 0.0
    %2207 = vmatprep.subr.mxu0 0.0
    %2208 = vmatpush1.xpose.msra.mxu0 0.0
    %2209 = vmatprep.subr.mxu0 0.0
    %2210 = vmatpush1.xpose.msra.mxu0 0.0
    %2211 = vmatprep.subr.mxu0 0.0
    %2212 = vmatpush1.xpose.msra.mxu0 0.0
    %2213 = vmatprep.subr.mxu0 0.0
    %2214 = vmatpush1.xpose.msra.mxu0 0.0
    %2215 = vmatprep.subr.mxu0 0.0
    %2216 = vmatpush1.xpose.msra.mxu0 0.0
    %2217 = vmatprep.subr.mxu0 0.0
    %2218 = vmatpush1.xpose.msra.mxu0 0.0
    %2219 = vmatprep.subr.mxu0 0.0
    %2220 = vmatpush1.xpose.msra.mxu0 0.0
    %2221 = vmatprep.subr.mxu0 0.0
    %2222 = vmatpush1.xpose.msra.mxu0 0.0
    %2223 = vmatprep.subr.mxu0 0.0
    %2224 = vmatpush1.xpose.msra.mxu0 0.0
    %2225 = vmatprep.subr.mxu0 0.0
    %2226 = vmatpush1.xpose.msra.mxu0 0.0
    %2227 = vmatprep.subr.mxu0 0.0
    %2228 = vmatpush1.xpose.msra.mxu0 0.0
    %2229 = vmatprep.mubr.f32.mxu0 0.0
    %2230 = vmatmul.mubr.f32.gmra.mrb[0].mxu0 %v2161
    %v2231 = vpop.f32.mrb[0].mxu0
    %v2232 = vadd.f32 0.0, %v2231
    %v2233 = vpop.f32.mrb[0].mxu0
    %2234 = vdwg.mxu0
    %2236 = vrot.lane.b32.xlu0 %v2155, 96
    %v2237 = vpop.permute.xlu0 %2236
    %v2238 = vsel %vm312, %v2155, 0
    %v2240 = vsel %vm312, %v2237, 0
    %2242 = vmatprep.subr.mxu0 0.0
    %2243 = vmatpush1.xpose.msra.mxu0 %v2240
    %2244 = vmatprep.subr.mxu0 0.0
    %2245 = vmatpush1.xpose.msra.mxu0 0.0
    %2246 = vmatprep.subr.mxu0 0.0
    %2247 = vmatpush1.xpose.msra.mxu0 0.0
    %2248 = vmatprep.subr.mxu0 0.0
    %2249 = vmatpush1.xpose.msra.mxu0 0.0
    %2250 = vmatprep.subr.mxu0 0.0
    %2251 = vmatpush1.xpose.msra.mxu0 0.0
    %2252 = vmatprep.subr.mxu0 0.0
    %2253 = vmatpush1.xpose.msra.mxu0 0.0
    %2254 = vmatprep.subr.mxu0 0.0
    %2255 = vmatpush1.xpose.msra.mxu0 0.0
    %2256 = vmatprep.subr.mxu0 0.0
    %2257 = vmatpush1.xpose.msra.mxu0 0.0
    %2258 = vmatprep.subr.mxu0 0.0
    %2259 = vmatpush1.xpose.msra.mxu0 0.0
    %2260 = vmatprep.subr.mxu0 0.0
    %2261 = vmatpush1.xpose.msra.mxu0 0.0
    %2262 = vmatprep.subr.mxu0 0.0
    %2263 = vmatpush1.xpose.msra.mxu0 0.0
    %2264 = vmatprep.subr.mxu0 0.0
    %2265 = vmatpush1.xpose.msra.mxu0 0.0
    %2266 = vmatprep.subr.mxu0 0.0
    %2267 = vmatpush1.xpose.msra.mxu0 0.0
    %2268 = vmatprep.subr.mxu0 0.0
    %2269 = vmatpush1.xpose.msra.mxu0 0.0
    %2270 = vmatprep.subr.mxu0 0.0
    %2271 = vmatpush1.xpose.msra.mxu0 0.0
    %2272 = vmatprep.subr.mxu0 0.0
    %2273 = vmatpush1.xpose.msra.mxu0 0.0
    %2274 = vmatprep.subr.mxu0 0.0
    %2275 = vmatpush1.xpose.msra.mxu0 0.0
    %2276 = vmatprep.subr.mxu0 0.0
    %2277 = vmatpush1.xpose.msra.mxu0 0.0
    %2278 = vmatprep.subr.mxu0 0.0
    %2279 = vmatpush1.xpose.msra.mxu0 0.0
    %2280 = vmatprep.subr.mxu0 0.0
    %2281 = vmatpush1.xpose.msra.mxu0 0.0
    %2282 = vmatprep.subr.mxu0 0.0
    %2283 = vmatpush1.xpose.msra.mxu0 0.0
    %2284 = vmatprep.subr.mxu0 0.0
    %2285 = vmatpush1.xpose.msra.mxu0 0.0
    %2286 = vmatprep.subr.mxu0 0.0
    %2287 = vmatpush1.xpose.msra.mxu0 0.0
    %2288 = vmatprep.subr.mxu0 0.0
    %2289 = vmatpush1.xpose.msra.mxu0 0.0
    %2290 = vmatprep.subr.mxu0 0.0
    %2291 = vmatpush1.xpose.msra.mxu0 0.0
    %2292 = vmatprep.subr.mxu0 0.0
    %2293 = vmatpush1.xpose.msra.mxu0 0.0
    %2294 = vmatprep.subr.mxu0 0.0
    %2295 = vmatpush1.xpose.msra.mxu0 0.0
    %2296 = vmatprep.subr.mxu0 0.0
    %2297 = vmatpush1.xpose.msra.mxu0 0.0
    %2298 = vmatprep.subr.mxu0 0.0
    %2299 = vmatpush1.xpose.msra.mxu0 0.0
    %2300 = vmatprep.subr.mxu0 0.0
    %2301 = vmatpush1.xpose.msra.mxu0 0.0
    %2302 = vmatprep.subr.mxu0 0.0
    %2303 = vmatpush1.xpose.msra.mxu0 0.0
    %2304 = vmatprep.subr.mxu0 0.0
    %2305 = vmatpush1.xpose.msra.mxu0 0.0
    %2306 = vmatprep.mubr.f32.mxu0 0.0
    %2307 = vmatmul.mubr.f32.gmra.mrb[0].mxu0 %v2238
    %v2308 = vpop.f32.mrb[0].mxu0
    %v2309 = vadd.f32 0.0, %v2308
    %v2310 = vpop.f32.mrb[0].mxu0
    %2311 = vdwg.mxu0
    %v2312 = vmul.f32 %v2232, 0.35355338
    %v2313 = vmul.f32 %v2309, 0.35355338
    %v2314 = vadd.f32 %v2312, %v469
    %v2315 = vadd.f32 %v2313, %v473
    %v2316 = vmul.f32 %v2314, 1.442695
    %v2317 = vpow.pop %v2316
    %v2318 = vmul.f32 %v2315, 1.442695
    %v2319 = vpow.pop %v2318
    %v2320 = vsel %vm312, %v2317, 0.0
    %2321 = vadd.xlane.f32.xlu0 %v2320
    %v2322 = vpop.xlane.xlu0 %2321
    %v2323 = vsel %vm312, %v2319, 0.0
    %2324 = vadd.xlane.f32.xlu0 %v2323
    %v2325 = vpop.xlane.xlu0 %2324
    %v2326 = vrcp.pop %v2322
    %v2327 = vrcp.pop %v2325
    %v2328 = vmul.f32 %v2317, %v2326
    %v2329 = vmul.f32 %v2319, %v2327
    %2330 = vrot.lane.b32.xlu0 %v2150, 64
    %v2331 = vpop.permute.xlu0 %2330
    %v2334 = vsel %vm312, %v2328, 0
    %2336 = vmatprep.subr.mxu0 0.0
    %2337 = vmatpush1.msra.mxu0 %v2331
    %2338 = vmatprep.subr.mxu0 0.0
    %2339 = vmatpush1.msra.mxu0 0.0
    %2340 = vmatprep.subr.mxu0 0.0
    %2341 = vmatpush1.msra.mxu0 0.0
    %2342 = vmatprep.subr.mxu0 0.0
    %2343 = vmatpush1.msra.mxu0 0.0
    %2344 = vmatprep.subr.mxu0 0.0
    %2345 = vmatpush1.msra.mxu0 0.0
    %2346 = vmatprep.subr.mxu0 0.0
    %2347 = vmatpush1.msra.mxu0 0.0
    %2348 = vmatprep.subr.mxu0 0.0
    %2349 = vmatpush1.msra.mxu0 0.0
    %2350 = vmatprep.subr.mxu0 0.0
    %2351 = vmatpush1.msra.mxu0 0.0
    %2352 = vmatprep.subr.mxu0 0.0
    %2353 = vmatpush1.msra.mxu0 0.0
    %2354 = vmatprep.subr.mxu0 0.0
    %2355 = vmatpush1.msra.mxu0 0.0
    %2356 = vmatprep.subr.mxu0 0.0
    %2357 = vmatpush1.msra.mxu0 0.0
    %2358 = vmatprep.subr.mxu0 0.0
    %2359 = vmatpush1.msra.mxu0 0.0
    %2360 = vmatprep.subr.mxu0 0.0
    %2361 = vmatpush1.msra.mxu0 0.0
    %2362 = vmatprep.subr.mxu0 0.0
    %2363 = vmatpush1.msra.mxu0 0.0
    %2364 = vmatprep.subr.mxu0 0.0
    %2365 = vmatpush1.msra.mxu0 0.0
    %2366 = vmatprep.subr.mxu0 0.0
    %2367 = vmatpush1.msra.mxu0 0.0
    %2368 = vmatprep.subr.mxu0 0.0
    %2369 = vmatpush1.msra.mxu0 0.0
    %2370 = vmatprep.subr.mxu0 0.0
    %2371 = vmatpush1.msra.mxu0 0.0
    %2372 = vmatprep.subr.mxu0 0.0
    %2373 = vmatpush1.msra.mxu0 0.0
    %2374 = vmatprep.subr.mxu0 0.0
    %2375 = vmatpush1.msra.mxu0 0.0
    %2376 = vmatprep.subr.mxu0 0.0
    %2377 = vmatpush1.msra.mxu0 0.0
    %2378 = vmatprep.subr.mxu0 0.0
    %2379 = vmatpush1.msra.mxu0 0.0
    %2380 = vmatprep.subr.mxu0 0.0
    %2381 = vmatpush1.msra.mxu0 0.0
    %2382 = vmatprep.subr.mxu0 0.0
    %2383 = vmatpush1.msra.mxu0 0.0
    %2384 = vmatprep.subr.mxu0 0.0
    %2385 = vmatpush1.msra.mxu0 0.0
    %2386 = vmatprep.subr.mxu0 0.0
    %2387 = vmatpush1.msra.mxu0 0.0
    %2388 = vmatprep.subr.mxu0 0.0
    %2389 = vmatpush1.msra.mxu0 0.0
    %2390 = vmatprep.subr.mxu0 0.0
    %2391 = vmatpush1.msra.mxu0 0.0
    %2392 = vmatprep.subr.mxu0 0.0
    %2393 = vmatpush1.msra.mxu0 0.0
    %2394 = vmatprep.subr.mxu0 0.0
    %2395 = vmatpush1.msra.mxu0 0.0
    %2396 = vmatprep.subr.mxu0 0.0
    %2397 = vmatpush1.msra.mxu0 0.0
    %2398 = vmatprep.subr.mxu0 0.0
    %2399 = vmatpush1.msra.mxu0 0.0
    %2400 = vmatprep.mubr.f32.mxu0 0.0
    %2401 = vmatmul.mubr.f32.gmra.mrb[0].mxu0 %v2334
    %v2402 = vpop.f32.mrb[0].mxu0
    %v2403 = vadd.f32 0.0, %v2402
    %v2404 = vpop.f32.mrb[0].mxu0
    %2405 = vdwg.mxu0
    %2406 = vrot.lane.b32.xlu0 %v2155, 64
    %v2407 = vpop.permute.xlu0 %2406
    %v2410 = vsel %vm312, %v2329, 0
    %2412 = vmatprep.subr.mxu0 0.0
    %2413 = vmatpush1.msra.mxu0 %v2407
    %2414 = vmatprep.subr.mxu0 0.0
    %2415 = vmatpush1.msra.mxu0 0.0
    %2416 = vmatprep.subr.mxu0 0.0
    %2417 = vmatpush1.msra.mxu0 0.0
    %2418 = vmatprep.subr.mxu0 0.0
    %2419 = vmatpush1.msra.mxu0 0.0
    %2420 = vmatprep.subr.mxu0 0.0
    %2421 = vmatpush1.msra.mxu0 0.0
    %2422 = vmatprep.subr.mxu0 0.0
    %2423 = vmatpush1.msra.mxu0 0.0
    %2424 = vmatprep.subr.mxu0 0.0
    %2425 = vmatpush1.msra.mxu0 0.0
    %2426 = vmatprep.subr.mxu0 0.0
    %2427 = vmatpush1.msra.mxu0 0.0
    %2428 = vmatprep.subr.mxu0 0.0
    %2429 = vmatpush1.msra.mxu0 0.0
    %2430 = vmatprep.subr.mxu0 0.0
    %2431 = vmatpush1.msra.mxu0 0.0
    %2432 = vmatprep.subr.mxu0 0.0
    %2433 = vmatpush1.msra.mxu0 0.0
    %2434 = vmatprep.subr.mxu0 0.0
    %2435 = vmatpush1.msra.mxu0 0.0
    %2436 = vmatprep.subr.mxu0 0.0
    %2437 = vmatpush1.msra.mxu0 0.0
    %2438 = vmatprep.subr.mxu0 0.0
    %2439 = vmatpush1.msra.mxu0 0.0
    %2440 = vmatprep.subr.mxu0 0.0
    %2441 = vmatpush1.msra.mxu0 0.0
    %2442 = vmatprep.subr.mxu0 0.0
    %2443 = vmatpush1.msra.mxu0 0.0
    %2444 = vmatprep.subr.mxu0 0.0
    %2445 = vmatpush1.msra.mxu0 0.0
    %2446 = vmatprep.subr.mxu0 0.0
    %2447 = vmatpush1.msra.mxu0 0.0
    %2448 = vmatprep.subr.mxu0 0.0
    %2449 = vmatpush1.msra.mxu0 0.0
    %2450 = vmatprep.subr.mxu0 0.0
    %2451 = vmatpush1.msra.mxu0 0.0
    %2452 = vmatprep.subr.mxu0 0.0
    %2453 = vmatpush1.msra.mxu0 0.0
    %2454 = vmatprep.subr.mxu0 0.0
    %2455 = vmatpush1.msra.mxu0 0.0
    %2456 = vmatprep.subr.mxu0 0.0
    %2457 = vmatpush1.msra.mxu0 0.0
    %2458 = vmatprep.subr.mxu0 0.0
    %2459 = vmatpush1.msra.mxu0 0.0
    %2460 = vmatprep.subr.mxu0 0.0
    %2461 = vmatpush1.msra.mxu0 0.0
    %2462 = vmatprep.subr.mxu0 0.0
    %2463 = vmatpush1.msra.mxu0 0.0
    %2464 = vmatprep.subr.mxu0 0.0
    %2465 = vmatpush1.msra.mxu0 0.0
    %2466 = vmatprep.subr.mxu0 0.0
    %2467 = vmatpush1.msra.mxu0 0.0
    %2468 = vmatprep.subr.mxu0 0.0
    %2469 = vmatpush1.msra.mxu0 0.0
    %2470 = vmatprep.subr.mxu0 0.0
    %2471 = vmatpush1.msra.mxu0 0.0
    %2472 = vmatprep.subr.mxu0 0.0
    %2473 = vmatpush1.msra.mxu0 0.0
    %2474 = vmatprep.subr.mxu0 0.0
    %2475 = vmatpush1.msra.mxu0 0.0
    %2476 = vmatprep.mubr.f32.mxu0 0.0
    %2477 = vmatmul.mubr.f32.gmra.mrb[0].mxu0 %v2410
    %v2478 = vpop.f32.mrb[0].mxu0
    %v2479 = vadd.f32 0.0, %v2478
    %v2480 = vpop.f32.mrb[0].mxu0
    %2481 = vdwg.mxu0
    %2482 = vrot.lane.b32.xlu0 %v2150, 120
    %v2483 = vpop.permute.xlu0 %2482
    %2484 = vrot.lane.b32.xlu0 %v2150, 88
    %v2485 = vpop.permute.xlu0 %2484
    %v2486 = vsel %vm312, %v2483, 0
    %v2488 = vsel %vm312, %v2485, 0
    %2490 = vmatprep.subr.mxu0 0.0
    %2491 = vmatpush1.xpose.msra.mxu0 %v2488
    %2492 = vmatprep.subr.mxu0 0.0
    %2493 = vmatpush1.xpose.msra.mxu0 0.0
    %2494 = vmatprep.subr.mxu0 0.0
    %2495 = vmatpush1.xpose.msra.mxu0 0.0
    %2496 = vmatprep.subr.mxu0 0.0
    %2497 = vmatpush1.xpose.msra.mxu0 0.0
    %2498 = vmatprep.subr.mxu0 0.0
    %2499 = vmatpush1.xpose.msra.mxu0 0.0
    %2500 = vmatprep.subr.mxu0 0.0
    %2501 = vmatpush1.xpose.msra.mxu0 0.0
    %2502 = vmatprep.subr.mxu0 0.0
    %2503 = vmatpush1.xpose.msra.mxu0 0.0
    %2504 = vmatprep.subr.mxu0 0.0
    %2505 = vmatpush1.xpose.msra.mxu0 0.0
    %2506 = vmatprep.subr.mxu0 0.0
    %2507 = vmatpush1.xpose.msra.mxu0 0.0
    %2508 = vmatprep.subr.mxu0 0.0
    %2509 = vmatpush1.xpose.msra.mxu0 0.0
    %2510 = vmatprep.subr.mxu0 0.0
    %2511 = vmatpush1.xpose.msra.mxu0 0.0
    %2512 = vmatprep.subr.mxu0 0.0
    %2513 = vmatpush1.xpose.msra.mxu0 0.0
    %2514 = vmatprep.subr.mxu0 0.0
    %2515 = vmatpush1.xpose.msra.mxu0 0.0
    %2516 = vmatprep.subr.mxu0 0.0
    %2517 = vmatpush1.xpose.msra.mxu0 0.0
    %2518 = vmatprep.subr.mxu0 0.0
    %2519 = vmatpush1.xpose.msra.mxu0 0.0
    %2520 = vmatprep.subr.mxu0 0.0
    %2521 = vmatpush1.xpose.msra.mxu0 0.0
    %2522 = vmatprep.subr.mxu0 0.0
    %2523 = vmatpush1.xpose.msra.mxu0 0.0
    %2524 = vmatprep.subr.mxu0 0.0
    %2525 = vmatpush1.xpose.msra.mxu0 0.0
    %2526 = vmatprep.subr.mxu0 0.0
    %2527 = vmatpush1.xpose.msra.mxu0 0.0
    %2528 = vmatprep.subr.mxu0 0.0
    %2529 = vmatpush1.xpose.msra.mxu0 0.0
    %2530 = vmatprep.subr.mxu0 0.0
    %2531 = vmatpush1.xpose.msra.mxu0 0.0
    %2532 = vmatprep.subr.mxu0 0.0
    %2533 = vmatpush1.xpose.msra.mxu0 0.0
    %2534 = vmatprep.subr.mxu0 0.0
    %2535 = vmatpush1.xpose.msra.mxu0 0.0
    %2536 = vmatprep.subr.mxu0 0.0
    %2537 = vmatpush1.xpose.msra.mxu0 0.0
    %2538 = vmatprep.subr.mxu0 0.0
    %2539 = vmatpush1.xpose.msra.mxu0 0.0
    %2540 = vmatprep.subr.mxu0 0.0
    %2541 = vmatpush1.xpose.msra.mxu0 0.0
    %2542 = vmatprep.subr.mxu0 0.0
    %2543 = vmatpush1.xpose.msra.mxu0 0.0
    %2544 = vmatprep.subr.mxu0 0.0
    %2545 = vmatpush1.xpose.msra.mxu0 0.0
    %2546 = vmatprep.subr.mxu0 0.0
    %2547 = vmatpush1.xpose.msra.mxu0 0.0
    %2548 = vmatprep.subr.mxu0 0.0
    %2549 = vmatpush1.xpose.msra.mxu0 0.0
    %2550 = vmatprep.subr.mxu0 0.0
    %2551 = vmatpush1.xpose.msra.mxu0 0.0
    %2552 = vmatprep.subr.mxu0 0.0
    %2553 = vmatpush1.xpose.msra.mxu0 0.0
    %2554 = vmatprep.mubr.f32.mxu0 0.0
    %2555 = vmatmul.mubr.f32.gmra.mrb[0].mxu0 %v2486
    %v2556 = vpop.f32.mrb[0].mxu0
    %v2557 = vadd.f32 0.0, %v2556
    %v2558 = vpop.f32.mrb[0].mxu0
    %2559 = vdwg.mxu0
    %2560 = vrot.lane.b32.xlu0 %v2155, 120
    %v2561 = vpop.permute.xlu0 %2560
    %2562 = vrot.lane.b32.xlu0 %v2155, 88
    %v2563 = vpop.permute.xlu0 %2562
    %v2564 = vsel %vm312, %v2561, 0
    %v2566 = vsel %vm312, %v2563, 0
    %2568 = vmatprep.subr.mxu0 0.0
    %2569 = vmatpush1.xpose.msra.mxu0 %v2566
    %2570 = vmatprep.subr.mxu0 0.0
    %2571 = vmatpush1.xpose.msra.mxu0 0.0
    %2572 = vmatprep.subr.mxu0 0.0
    %2573 = vmatpush1.xpose.msra.mxu0 0.0
    %2574 = vmatprep.subr.mxu0 0.0
    %2575 = vmatpush1.xpose.msra.mxu0 0.0
    %2576 = vmatprep.subr.mxu0 0.0
    %2577 = vmatpush1.xpose.msra.mxu0 0.0
    %2578 = vmatprep.subr.mxu0 0.0
    %2579 = vmatpush1.xpose.msra.mxu0 0.0
    %2580 = vmatprep.subr.mxu0 0.0
    %2581 = vmatpush1.xpose.msra.mxu0 0.0
    %2582 = vmatprep.subr.mxu0 0.0
    %2583 = vmatpush1.xpose.msra.mxu0 0.0
    %2584 = vmatprep.subr.mxu0 0.0
    %2585 = vmatpush1.xpose.msra.mxu0 0.0
    %2586 = vmatprep.subr.mxu0 0.0
    %2587 = vmatpush1.xpose.msra.mxu0 0.0
    %2588 = vmatprep.subr.mxu0 0.0
    %2589 = vmatpush1.xpose.msra.mxu0 0.0
    %2590 = vmatprep.subr.mxu0 0.0
    %2591 = vmatpush1.xpose.msra.mxu0 0.0
    %2592 = vmatprep.subr.mxu0 0.0
    %2593 = vmatpush1.xpose.msra.mxu0 0.0
    %2594 = vmatprep.subr.mxu0 0.0
    %2595 = vmatpush1.xpose.msra.mxu0 0.0
    %2596 = vmatprep.subr.mxu0 0.0
    %2597 = vmatpush1.xpose.msra.mxu0 0.0
    %2598 = vmatprep.subr.mxu0 0.0
    %2599 = vmatpush1.xpose.msra.mxu0 0.0
    %2600 = vmatprep.subr.mxu0 0.0
    %2601 = vmatpush1.xpose.msra.mxu0 0.0
    %2602 = vmatprep.subr.mxu0 0.0
    %2603 = vmatpush1.xpose.msra.mxu0 0.0
    %2604 = vmatprep.subr.mxu0 0.0
    %2605 = vmatpush1.xpose.msra.mxu0 0.0
    %2606 = vmatprep.subr.mxu0 0.0
    %2607 = vmatpush1.xpose.msra.mxu0 0.0
    %2608 = vmatprep.subr.mxu0 0.0
    %2609 = vmatpush1.xpose.msra.mxu0 0.0
    %2610 = vmatprep.subr.mxu0 0.0
    %2611 = vmatpush1.xpose.msra.mxu0 0.0
    %2612 = vmatprep.subr.mxu0 0.0
    %2613 = vmatpush1.xpose.msra.mxu0 0.0
    %2614 = vmatprep.subr.mxu0 0.0
    %2615 = vmatpush1.xpose.msra.mxu0 0.0
    %2616 = vmatprep.subr.mxu0 0.0
    %2617 = vmatpush1.xpose.msra.mxu0 0.0
    %2618 = vmatprep.subr.mxu0 0.0
    %2619 = vmatpush1.xpose.msra.mxu0 0.0
    %2620 = vmatprep.subr.mxu0 0.0
    %2621 = vmatpush1.xpose.msra.mxu0 0.0
    %2622 = vmatprep.subr.mxu0 0.0
    %2623 = vmatpush1.xpose.msra.mxu0 0.0
    %2624 = vmatprep.subr.mxu0 0.0
    %2625 = vmatpush1.xpose.msra.mxu0 0.0
    %2626 = vmatprep.subr.mxu0 0.0
    %2627 = vmatpush1.xpose.msra.mxu0 0.0
    %2628 = vmatprep.subr.mxu0 0.0
    %2629 = vmatpush1.xpose.msra.mxu0 0.0
    %2630 = vmatprep.subr.mxu0 0.0
    %2631 = vmatpush1.xpose.msra.mxu0 0.0
    %2632 = vmatprep.mubr.f32.mxu0 0.0
    %2633 = vmatmul.mubr.f32.gmra.mrb[0].mxu0 %v2564
    %v2634 = vpop.f32.mrb[0].mxu0
    %v2635 = vadd.f32 0.0, %v2634
    %v2636 = vpop.f32.mrb[0].mxu0
    %2637 = vdwg.mxu0
    %v2638 = vmul.f32 %v2557, 0.35355338
    %v2639 = vmul.f32 %v2635, 0.35355338
    %v2640 = vadd.f32 %v2638, %v469
    %v2641 = vadd.f32 %v2639, %v473
    %v2642 = vmul.f32 %v2640, 1.442695
    %v2643 = vpow.pop %v2642
    %v2644 = vmul.f32 %v2641, 1.442695
    %v2645 = vpow.pop %v2644
    %v2646 = vsel %vm312, %v2643, 0.0
    %2647 = vadd.xlane.f32.xlu0 %v2646
    %v2648 = vpop.xlane.xlu0 %2647
    %v2649 = vsel %vm312, %v2645, 0.0
    %2650 = vadd.xlane.f32.xlu0 %v2649
    %v2651 = vpop.xlane.xlu0 %2650
    %v2652 = vrcp.pop %v2648
    %v2653 = vrcp.pop %v2651
    %v2654 = vmul.f32 %v2643, %v2652
    %v2655 = vmul.f32 %v2645, %v2653
    %2656 = vrot.lane.b32.xlu0 %v2150, 56
    %v2657 = vpop.permute.xlu0 %2656
    %v2660 = vsel %vm312, %v2654, 0
    %2662 = vmatprep.subr.mxu0 0.0
    %2663 = vmatpush1.msra.mxu0 %v2657
    %2664 = vmatprep.subr.mxu0 0.0
    %2665 = vmatpush1.msra.mxu0 0.0
    %2666 = vmatprep.subr.mxu0 0.0
    %2667 = vmatpush1.msra.mxu0 0.0
    %2668 = vmatprep.subr.mxu0 0.0
    %2669 = vmatpush1.msra.mxu0 0.0
    %2670 = vmatprep.subr.mxu0 0.0
    %2671 = vmatpush1.msra.mxu0 0.0
    %2672 = vmatprep.subr.mxu0 0.0
    %2673 = vmatpush1.msra.mxu0 0.0
    %2674 = vmatprep.subr.mxu0 0.0
    %2675 = vmatpush1.msra.mxu0 0.0
    %2676 = vmatprep.subr.mxu0 0.0
    %2677 = vmatpush1.msra.mxu0 0.0
    %2678 = vmatprep.subr.mxu0 0.0
    %2679 = vmatpush1.msra.mxu0 0.0
    %2680 = vmatprep.subr.mxu0 0.0
    %2681 = vmatpush1.msra.mxu0 0.0
    %2682 = vmatprep.subr.mxu0 0.0
    %2683 = vmatpush1.msra.mxu0 0.0
    %2684 = vmatprep.subr.mxu0 0.0
    %2685 = vmatpush1.msra.mxu0 0.0
    %2686 = vmatprep.subr.mxu0 0.0
    %2687 = vmatpush1.msra.mxu0 0.0
    %2688 = vmatprep.subr.mxu0 0.0
    %2689 = vmatpush1.msra.mxu0 0.0
    %2690 = vmatprep.subr.mxu0 0.0
    %2691 = vmatpush1.msra.mxu0 0.0
    %2692 = vmatprep.subr.mxu0 0.0
    %2693 = vmatpush1.msra.mxu0 0.0
    %2694 = vmatprep.subr.mxu0 0.0
    %2695 = vmatpush1.msra.mxu0 0.0
    %2696 = vmatprep.subr.mxu0 0.0
    %2697 = vmatpush1.msra.mxu0 0.0
    %2698 = vmatprep.subr.mxu0 0.0
    %2699 = vmatpush1.msra.mxu0 0.0
    %2700 = vmatprep.subr.mxu0 0.0
    %2701 = vmatpush1.msra.mxu0 0.0
    %2702 = vmatprep.subr.mxu0 0.0
    %2703 = vmatpush1.msra.mxu0 0.0
    %2704 = vmatprep.subr.mxu0 0.0
    %2705 = vmatpush1.msra.mxu0 0.0
    %2706 = vmatprep.subr.mxu0 0.0
    %2707 = vmatpush1.msra.mxu0 0.0
    %2708 = vmatprep.subr.mxu0 0.0
    %2709 = vmatpush1.msra.mxu0 0.0
    %2710 = vmatprep.subr.mxu0 0.0
    %2711 = vmatpush1.msra.mxu0 0.0
    %2712 = vmatprep.subr.mxu0 0.0
    %2713 = vmatpush1.msra.mxu0 0.0
    %2714 = vmatprep.subr.mxu0 0.0
    %2715 = vmatpush1.msra.mxu0 0.0
    %2716 = vmatprep.subr.mxu0 0.0
    %2717 = vmatpush1.msra.mxu0 0.0
    %2718 = vmatprep.subr.mxu0 0.0
    %2719 = vmatpush1.msra.mxu0 0.0
    %2720 = vmatprep.subr.mxu0 0.0
    %2721 = vmatpush1.msra.mxu0 0.0
    %2722 = vmatprep.subr.mxu0 0.0
    %2723 = vmatpush1.msra.mxu0 0.0
    %2724 = vmatprep.subr.mxu0 0.0
    %2725 = vmatpush1.msra.mxu0 0.0
    %2726 = vmatprep.mubr.f32.mxu0 0.0
    %2727 = vmatmul.mubr.f32.gmra.mrb[0].mxu0 %v2660
    %v2728 = vpop.f32.mrb[0].mxu0
    %v2729 = vadd.f32 0.0, %v2728
    %v2730 = vpop.f32.mrb[0].mxu0
    %2731 = vdwg.mxu0
    %2732 = vrot.lane.b32.xlu0 %v2155, 56
    %v2733 = vpop.permute.xlu0 %2732
    %v2736 = vsel %vm312, %v2655, 0
    %2738 = vmatprep.subr.mxu0 0.0
    %2739 = vmatpush1.msra.mxu0 %v2733
    %2740 = vmatprep.subr.mxu0 0.0
    %2741 = vmatpush1.msra.mxu0 0.0
    %2742 = vmatprep.subr.mxu0 0.0
    %2743 = vmatpush1.msra.mxu0 0.0
    %2744 = vmatprep.subr.mxu0 0.0
    %2745 = vmatpush1.msra.mxu0 0.0
    %2746 = vmatprep.subr.mxu0 0.0
    %2747 = vmatpush1.msra.mxu0 0.0
    %2748 = vmatprep.subr.mxu0 0.0
    %2749 = vmatpush1.msra.mxu0 0.0
    %2750 = vmatprep.subr.mxu0 0.0
    %2751 = vmatpush1.msra.mxu0 0.0
    %2752 = vmatprep.subr.mxu0 0.0
    %2753 = vmatpush1.msra.mxu0 0.0
    %2754 = vmatprep.subr.mxu0 0.0
    %2755 = vmatpush1.msra.mxu0 0.0
    %2756 = vmatprep.subr.mxu0 0.0
    %2757 = vmatpush1.msra.mxu0 0.0
    %2758 = vmatprep.subr.mxu0 0.0
    %2759 = vmatpush1.msra.mxu0 0.0
    %2760 = vmatprep.subr.mxu0 0.0
    %2761 = vmatpush1.msra.mxu0 0.0
    %2762 = vmatprep.subr.mxu0 0.0
    %2763 = vmatpush1.msra.mxu0 0.0
    %2764 = vmatprep.subr.mxu0 0.0
    %2765 = vmatpush1.msra.mxu0 0.0
    %2766 = vmatprep.subr.mxu0 0.0
    %2767 = vmatpush1.msra.mxu0 0.0
    %2768 = vmatprep.subr.mxu0 0.0
    %2769 = vmatpush1.msra.mxu0 0.0
    %2770 = vmatprep.subr.mxu0 0.0
    %2771 = vmatpush1.msra.mxu0 0.0
    %2772 = vmatprep.subr.mxu0 0.0
    %2773 = vmatpush1.msra.mxu0 0.0
    %2774 = vmatprep.subr.mxu0 0.0
    %2775 = vmatpush1.msra.mxu0 0.0
    %2776 = vmatprep.subr.mxu0 0.0
    %2777 = vmatpush1.msra.mxu0 0.0
    %2778 = vmatprep.subr.mxu0 0.0
    %2779 = vmatpush1.msra.mxu0 0.0
    %2780 = vmatprep.subr.mxu0 0.0
    %2781 = vmatpush1.msra.mxu0 0.0
    %2782 = vmatprep.subr.mxu0 0.0
    %2783 = vmatpush1.msra.mxu0 0.0
    %2784 = vmatprep.subr.mxu0 0.0
    %2785 = vmatpush1.msra.mxu0 0.0
    %2786 = vmatprep.subr.mxu0 0.0
    %2787 = vmatpush1.msra.mxu0 0.0
    %2788 = vmatprep.subr.mxu0 0.0
    %2789 = vmatpush1.msra.mxu0 0.0
    %2790 = vmatprep.subr.mxu0 0.0
    %2791 = vmatpush1.msra.mxu0 0.0
    %2792 = vmatprep.subr.mxu0 0.0
    %2793 = vmatpush1.msra.mxu0 0.0
    %2794 = vmatprep.subr.mxu0 0.0
    %2795 = vmatpush1.msra.mxu0 0.0
    %2796 = vmatprep.subr.mxu0 0.0
    %2797 = vmatpush1.msra.mxu0 0.0
    %2798 = vmatprep.subr.mxu0 0.0
    %2799 = vmatpush1.msra.mxu0 0.0
    %2800 = vmatprep.subr.mxu0 0.0
    %2801 = vmatpush1.msra.mxu0 0.0
    %2802 = vmatprep.mubr.f32.mxu0 0.0
    %2803 = vmatmul.mubr.f32.gmra.mrb[0].mxu0 %v2736
    %v2804 = vpop.f32.mrb[0].mxu0
    %v2805 = vadd.f32 0.0, %v2804
    %v2806 = vpop.f32.mrb[0].mxu0
    %2807 = vdwg.mxu0
    %2808 = vrot.lane.b32.xlu0 %v2150, 112
    %v2809 = vpop.permute.xlu0 %2808
    %2810 = vrot.lane.b32.xlu0 %v2150, 80
    %v2811 = vpop.permute.xlu0 %2810
    %v2812 = vsel %vm312, %v2809, 0
    %v2814 = vsel %vm312, %v2811, 0
    %2816 = vmatprep.subr.mxu0 0.0
    %2817 = vmatpush1.xpose.msra.mxu0 %v2814
    %2818 = vmatprep.subr.mxu0 0.0
    %2819 = vmatpush1.xpose.msra.mxu0 0.0
    %2820 = vmatprep.subr.mxu0 0.0
    %2821 = vmatpush1.xpose.msra.mxu0 0.0
    %2822 = vmatprep.subr.mxu0 0.0
    %2823 = vmatpush1.xpose.msra.mxu0 0.0
    %2824 = vmatprep.subr.mxu0 0.0
    %2825 = vmatpush1.xpose.msra.mxu0 0.0
    %2826 = vmatprep.subr.mxu0 0.0
    %2827 = vmatpush1.xpose.msra.mxu0 0.0
    %2828 = vmatprep.subr.mxu0 0.0
    %2829 = vmatpush1.xpose.msra.mxu0 0.0
    %2830 = vmatprep.subr.mxu0 0.0
    %2831 = vmatpush1.xpose.msra.mxu0 0.0
    %2832 = vmatprep.subr.mxu0 0.0
    %2833 = vmatpush1.xpose.msra.mxu0 0.0
    %2834 = vmatprep.subr.mxu0 0.0
    %2835 = vmatpush1.xpose.msra.mxu0 0.0
    %2836 = vmatprep.subr.mxu0 0.0
    %2837 = vmatpush1.xpose.msra.mxu0 0.0
    %2838 = vmatprep.subr.mxu0 0.0
    %2839 = vmatpush1.xpose.msra.mxu0 0.0
    %2840 = vmatprep.subr.mxu0 0.0
    %2841 = vmatpush1.xpose.msra.mxu0 0.0
    %2842 = vmatprep.subr.mxu0 0.0
    %2843 = vmatpush1.xpose.msra.mxu0 0.0
    %2844 = vmatprep.subr.mxu0 0.0
    %2845 = vmatpush1.xpose.msra.mxu0 0.0
    %2846 = vmatprep.subr.mxu0 0.0
    %2847 = vmatpush1.xpose.msra.mxu0 0.0
    %2848 = vmatprep.subr.mxu0 0.0
    %2849 = vmatpush1.xpose.msra.mxu0 0.0
    %2850 = vmatprep.subr.mxu0 0.0
    %2851 = vmatpush1.xpose.msra.mxu0 0.0
    %2852 = vmatprep.subr.mxu0 0.0
    %2853 = vmatpush1.xpose.msra.mxu0 0.0
    %2854 = vmatprep.subr.mxu0 0.0
    %2855 = vmatpush1.xpose.msra.mxu0 0.0
    %2856 = vmatprep.subr.mxu0 0.0
    %2857 = vmatpush1.xpose.msra.mxu0 0.0
    %2858 = vmatprep.subr.mxu0 0.0
    %2859 = vmatpush1.xpose.msra.mxu0 0.0
    %2860 = vmatprep.subr.mxu0 0.0
    %2861 = vmatpush1.xpose.msra.mxu0 0.0
    %2862 = vmatprep.subr.mxu0 0.0
    %2863 = vmatpush1.xpose.msra.mxu0 0.0
    %2864 = vmatprep.subr.mxu0 0.0
    %2865 = vmatpush1.xpose.msra.mxu0 0.0
    %2866 = vmatprep.subr.mxu0 0.0
    %2867 = vmatpush1.xpose.msra.mxu0 0.0
    %2868 = vmatprep.subr.mxu0 0.0
    %2869 = vmatpush1.xpose.msra.mxu0 0.0
    %2870 = vmatprep.subr.mxu0 0.0
    %2871 = vmatpush1.xpose.msra.mxu0 0.0
    %2872 = vmatprep.subr.mxu0 0.0
    %2873 = vmatpush1.xpose.msra.mxu0 0.0
    %2874 = vmatprep.subr.mxu0 0.0
    %2875 = vmatpush1.xpose.msra.mxu0 0.0
    %2876 = vmatprep.subr.mxu0 0.0
    %2877 = vmatpush1.xpose.msra.mxu0 0.0
    %2878 = vmatprep.subr.mxu0 0.0
    %2879 = vmatpush1.xpose.msra.mxu0 0.0
    %2880 = vmatprep.mubr.f32.mxu0 0.0
    %2881 = vmatmul.mubr.f32.gmra.mrb[0].mxu0 %v2812
    %v2882 = vpop.f32.mrb[0].mxu0
    %v2883 = vadd.f32 0.0, %v2882
    %v2884 = vpop.f32.mrb[0].mxu0
    %2885 = vdwg.mxu0
    %2886 = vrot.lane.b32.xlu0 %v2155, 112
    %v2887 = vpop.permute.xlu0 %2886
    %2888 = vrot.lane.b32.xlu0 %v2155, 80
    %v2889 = vpop.permute.xlu0 %2888
    %v2890 = vsel %vm312, %v2887, 0
    %v2892 = vsel %vm312, %v2889, 0
    %2894 = vmatprep.subr.mxu0 0.0
    %2895 = vmatpush1.xpose.msra.mxu0 %v2892
    %2896 = vmatprep.subr.mxu0 0.0
    %2897 = vmatpush1.xpose.msra.mxu0 0.0
    %2898 = vmatprep.subr.mxu0 0.0
    %2899 = vmatpush1.xpose.msra.mxu0 0.0
    %2900 = vmatprep.subr.mxu0 0.0
    %2901 = vmatpush1.xpose.msra.mxu0 0.0
    %2902 = vmatprep.subr.mxu0 0.0
    %2903 = vmatpush1.xpose.msra.mxu0 0.0
    %2904 = vmatprep.subr.mxu0 0.0
    %2905 = vmatpush1.xpose.msra.mxu0 0.0
    %2906 = vmatprep.subr.mxu0 0.0
    %2907 = vmatpush1.xpose.msra.mxu0 0.0
    %2908 = vmatprep.subr.mxu0 0.0
    %2909 = vmatpush1.xpose.msra.mxu0 0.0
    %2910 = vmatprep.subr.mxu0 0.0
    %2911 = vmatpush1.xpose.msra.mxu0 0.0
    %2912 = vmatprep.subr.mxu0 0.0
    %2913 = vmatpush1.xpose.msra.mxu0 0.0
    %2914 = vmatprep.subr.mxu0 0.0
    %2915 = vmatpush1.xpose.msra.mxu0 0.0
    %2916 = vmatprep.subr.mxu0 0.0
    %2917 = vmatpush1.xpose.msra.mxu0 0.0
    %2918 = vmatprep.subr.mxu0 0.0
    %2919 = vmatpush1.xpose.msra.mxu0 0.0
    %2920 = vmatprep.subr.mxu0 0.0
    %2921 = vmatpush1.xpose.msra.mxu0 0.0
    %2922 = vmatprep.subr.mxu0 0.0
    %2923 = vmatpush1.xpose.msra.mxu0 0.0
    %2924 = vmatprep.subr.mxu0 0.0
    %2925 = vmatpush1.xpose.msra.mxu0 0.0
    %2926 = vmatprep.subr.mxu0 0.0
    %2927 = vmatpush1.xpose.msra.mxu0 0.0
    %2928 = vmatprep.subr.mxu0 0.0
    %2929 = vmatpush1.xpose.msra.mxu0 0.0
    %2930 = vmatprep.subr.mxu0 0.0
    %2931 = vmatpush1.xpose.msra.mxu0 0.0
    %2932 = vmatprep.subr.mxu0 0.0
    %2933 = vmatpush1.xpose.msra.mxu0 0.0
    %2934 = vmatprep.subr.mxu0 0.0
    %2935 = vmatpush1.xpose.msra.mxu0 0.0
    %2936 = vmatprep.subr.mxu0 0.0
    %2937 = vmatpush1.xpose.msra.mxu0 0.0
    %2938 = vmatprep.subr.mxu0 0.0
    %2939 = vmatpush1.xpose.msra.mxu0 0.0
    %2940 = vmatprep.subr.mxu0 0.0
    %2941 = vmatpush1.xpose.msra.mxu0 0.0
    %2942 = vmatprep.subr.mxu0 0.0
    %2943 = vmatpush1.xpose.msra.mxu0 0.0
    %2944 = vmatprep.subr.mxu0 0.0
    %2945 = vmatpush1.xpose.msra.mxu0 0.0
    %2946 = vmatprep.subr.mxu0 0.0
    %2947 = vmatpush1.xpose.msra.mxu0 0.0
    %2948 = vmatprep.subr.mxu0 0.0
    %2949 = vmatpush1.xpose.msra.mxu0 0.0
    %2950 = vmatprep.subr.mxu0 0.0
    %2951 = vmatpush1.xpose.msra.mxu0 0.0
    %2952 = vmatprep.subr.mxu0 0.0
    %2953 = vmatpush1.xpose.msra.mxu0 0.0
    %2954 = vmatprep.subr.mxu0 0.0
    %2955 = vmatpush1.xpose.msra.mxu0 0.0
    %2956 = vmatprep.subr.mxu0 0.0
    %2957 = vmatpush1.xpose.msra.mxu0 0.0
    %2958 = vmatprep.mubr.f32.mxu0 0.0
    %2959 = vmatmul.mubr.f32.gmra.mrb[0].mxu0 %v2890
    %v2960 = vpop.f32.mrb[0].mxu0
    %v2961 = vadd.f32 0.0, %v2960
    %v2962 = vpop.f32.mrb[0].mxu0
    %2963 = vdwg.mxu0
    %v2964 = vmul.f32 %v2883, 0.35355338
    %v2965 = vmul.f32 %v2961, 0.35355338
    %v2966 = vadd.f32 %v2964, %v469
    %v2967 = vadd.f32 %v2965, %v473
    %v2968 = vmul.f32 %v2966, 1.442695
    %v2969 = vpow.pop %v2968
    %v2970 = vmul.f32 %v2967, 1.442695
    %v2971 = vpow.pop %v2970
    %v2972 = vsel %vm312, %v2969, 0.0
    %2973 = vadd.xlane.f32.xlu0 %v2972
    %v2974 = vpop.xlane.xlu0 %2973
    %v2975 = vsel %vm312, %v2971, 0.0
    %2976 = vadd.xlane.f32.xlu0 %v2975
    %v2977 = vpop.xlane.xlu0 %2976
    %v2978 = vrcp.pop %v2974
    %v2979 = vrcp.pop %v2977
    %v2980 = vmul.f32 %v2969, %v2978
    %v2981 = vmul.f32 %v2971, %v2979
    %2982 = vrot.lane.b32.xlu0 %v2150, 48
    %v2983 = vpop.permute.xlu0 %2982
    %v2986 = vsel %vm312, %v2980, 0
    %2988 = vmatprep.subr.mxu0 0.0
    %2989 = vmatpush1.msra.mxu0 %v2983
    %2990 = vmatprep.subr.mxu0 0.0
    %2991 = vmatpush1.msra.mxu0 0.0
    %2992 = vmatprep.subr.mxu0 0.0
    %2993 = vmatpush1.msra.mxu0 0.0
    %2994 = vmatprep.subr.mxu0 0.0
    %2995 = vmatpush1.msra.mxu0 0.0
    %2996 = vmatprep.subr.mxu0 0.0
    %2997 = vmatpush1.msra.mxu0 0.0
    %2998 = vmatprep.subr.mxu0 0.0
    %2999 = vmatpush1.msra.mxu0 0.0
    %3000 = vmatprep.subr.mxu0 0.0
    %3001 = vmatpush1.msra.mxu0 0.0
    %3002 = vmatprep.subr.mxu0 0.0
    %3003 = vmatpush1.msra.mxu0 0.0
    %3004 = vmatprep.subr.mxu0 0.0
    %3005 = vmatpush1.msra.mxu0 0.0
    %3006 = vmatprep.subr.mxu0 0.0
    %3007 = vmatpush1.msra.mxu0 0.0
    %3008 = vmatprep.subr.mxu0 0.0
    %3009 = vmatpush1.msra.mxu0 0.0
    %3010 = vmatprep.subr.mxu0 0.0
    %3011 = vmatpush1.msra.mxu0 0.0
    %3012 = vmatprep.subr.mxu0 0.0
    %3013 = vmatpush1.msra.mxu0 0.0
    %3014 = vmatprep.subr.mxu0 0.0
    %3015 = vmatpush1.msra.mxu0 0.0
    %3016 = vmatprep.subr.mxu0 0.0
    %3017 = vmatpush1.msra.mxu0 0.0
    %3018 = vmatprep.subr.mxu0 0.0
    %3019 = vmatpush1.msra.mxu0 0.0
    %3020 = vmatprep.subr.mxu0 0.0
    %3021 = vmatpush1.msra.mxu0 0.0
    %3022 = vmatprep.subr.mxu0 0.0
    %3023 = vmatpush1.msra.mxu0 0.0
    %3024 = vmatprep.subr.mxu0 0.0
    %3025 = vmatpush1.msra.mxu0 0.0
    %3026 = vmatprep.subr.mxu0 0.0
    %3027 = vmatpush1.msra.mxu0 0.0
    %3028 = vmatprep.subr.mxu0 0.0
    %3029 = vmatpush1.msra.mxu0 0.0
    %3030 = vmatprep.subr.mxu0 0.0
    %3031 = vmatpush1.msra.mxu0 0.0
    %3032 = vmatprep.subr.mxu0 0.0
    %3033 = vmatpush1.msra.mxu0 0.0
    %3034 = vmatprep.subr.mxu0 0.0
    %3035 = vmatpush1.msra.mxu0 0.0
    %3036 = vmatprep.subr.mxu0 0.0
    %3037 = vmatpush1.msra.mxu0 0.0
    %3038 = vmatprep.subr.mxu0 0.0
    %3039 = vmatpush1.msra.mxu0 0.0
    %3040 = vmatprep.subr.mxu0 0.0
    %3041 = vmatpush1.msra.mxu0 0.0
    %3042 = vmatprep.subr.mxu0 0.0
    %3043 = vmatpush1.msra.mxu0 0.0
    %3044 = vmatprep.subr.mxu0 0.0
    %3045 = vmatpush1.msra.mxu0 0.0
    %3046 = vmatprep.subr.mxu0 0.0
    %3047 = vmatpush1.msra.mxu0 0.0
    %3048 = vmatprep.subr.mxu0 0.0
    %3049 = vmatpush1.msra.mxu0 0.0
    %3050 = vmatprep.subr.mxu0 0.0
    %3051 = vmatpush1.msra.mxu0 0.0
    %3052 = vmatprep.mubr.f32.mxu0 0.0
    %3053 = vmatmul.mubr.f32.gmra.mrb[0].mxu0 %v2986
    %v3054 = vpop.f32.mrb[0].mxu0
    %v3055 = vadd.f32 0.0, %v3054
    %v3056 = vpop.f32.mrb[0].mxu0
    %3057 = vdwg.mxu0
    %3058 = vrot.lane.b32.xlu0 %v2155, 48
    %v3059 = vpop.permute.xlu0 %3058
    %v3062 = vsel %vm312, %v2981, 0
    %3064 = vmatprep.subr.mxu0 0.0
    %3065 = vmatpush1.msra.mxu0 %v3059
    %3066 = vmatprep.subr.mxu0 0.0
    %3067 = vmatpush1.msra.mxu0 0.0
    %3068 = vmatprep.subr.mxu0 0.0
    %3069 = vmatpush1.msra.mxu0 0.0
    %3070 = vmatprep.subr.mxu0 0.0
    %3071 = vmatpush1.msra.mxu0 0.0
    %3072 = vmatprep.subr.mxu0 0.0
    %3073 = vmatpush1.msra.mxu0 0.0
    %3074 = vmatprep.subr.mxu0 0.0
    %3075 = vmatpush1.msra.mxu0 0.0
    %3076 = vmatprep.subr.mxu0 0.0
    %3077 = vmatpush1.msra.mxu0 0.0
    %3078 = vmatprep.subr.mxu0 0.0
    %3079 = vmatpush1.msra.mxu0 0.0
    %3080 = vmatprep.subr.mxu0 0.0
    %3081 = vmatpush1.msra.mxu0 0.0
    %3082 = vmatprep.subr.mxu0 0.0
    %3083 = vmatpush1.msra.mxu0 0.0
    %3084 = vmatprep.subr.mxu0 0.0
    %3085 = vmatpush1.msra.mxu0 0.0
    %3086 = vmatprep.subr.mxu0 0.0
    %3087 = vmatpush1.msra.mxu0 0.0
    %3088 = vmatprep.subr.mxu0 0.0
    %3089 = vmatpush1.msra.mxu0 0.0
    %3090 = vmatprep.subr.mxu0 0.0
    %3091 = vmatpush1.msra.mxu0 0.0
    %3092 = vmatprep.subr.mxu0 0.0
    %3093 = vmatpush1.msra.mxu0 0.0
    %3094 = vmatprep.subr.mxu0 0.0
    %3095 = vmatpush1.msra.mxu0 0.0
    %3096 = vmatprep.subr.mxu0 0.0
    %3097 = vmatpush1.msra.mxu0 0.0
    %3098 = vmatprep.subr.mxu0 0.0
    %3099 = vmatpush1.msra.mxu0 0.0
    %3100 = vmatprep.subr.mxu0 0.0
    %3101 = vmatpush1.msra.mxu0 0.0
    %3102 = vmatprep.subr.mxu0 0.0
    %3103 = vmatpush1.msra.mxu0 0.0
    %3104 = vmatprep.subr.mxu0 0.0
    %3105 = vmatpush1.msra.mxu0 0.0
    %3106 = vmatprep.subr.mxu0 0.0
    %3107 = vmatpush1.msra.mxu0 0.0
    %3108 = vmatprep.subr.mxu0 0.0
    %3109 = vmatpush1.msra.mxu0 0.0
    %3110 = vmatprep.subr.mxu0 0.0
    %3111 = vmatpush1.msra.mxu0 0.0
    %3112 = vmatprep.subr.mxu0 0.0
    %3113 = vmatpush1.msra.mxu0 0.0
    %3114 = vmatprep.subr.mxu0 0.0
    %3115 = vmatpush1.msra.mxu0 0.0
    %3116 = vmatprep.subr.mxu0 0.0
    %3117 = vmatpush1.msra.mxu0 0.0
    %3118 = vmatprep.subr.mxu0 0.0
    %3119 = vmatpush1.msra.mxu0 0.0
    %3120 = vmatprep.subr.mxu0 0.0
    %3121 = vmatpush1.msra.mxu0 0.0
    %3122 = vmatprep.subr.mxu0 0.0
    %3123 = vmatpush1.msra.mxu0 0.0
    %3124 = vmatprep.subr.mxu0 0.0
    %3125 = vmatpush1.msra.mxu0 0.0
    %3126 = vmatprep.subr.mxu0 0.0
    %3127 = vmatpush1.msra.mxu0 0.0
    %3128 = vmatprep.mubr.f32.mxu0 0.0
    %3129 = vmatmul.mubr.f32.gmra.mrb[0].mxu0 %v3062
    %v3130 = vpop.f32.mrb[0].mxu0
    %v3131 = vadd.f32 0.0, %v3130
    %v3132 = vpop.f32.mrb[0].mxu0
    %3133 = vdwg.mxu0
    %3134 = vrot.lane.b32.xlu0 %v2150, 104
    %v3135 = vpop.permute.xlu0 %3134
    %3136 = vrot.lane.b32.xlu0 %v2150, 72
    %v3137 = vpop.permute.xlu0 %3136
    %v3138 = vsel %vm312, %v3135, 0
    %v3140 = vsel %vm312, %v3137, 0
    %3142 = vmatprep.subr.mxu0 0.0
    %3143 = vmatpush1.xpose.msra.mxu0 %v3140
    %3144 = vmatprep.subr.mxu0 0.0
    %3145 = vmatpush1.xpose.msra.mxu0 0.0
    %3146 = vmatprep.subr.mxu0 0.0
    %3147 = vmatpush1.xpose.msra.mxu0 0.0
    %3148 = vmatprep.subr.mxu0 0.0
    %3149 = vmatpush1.xpose.msra.mxu0 0.0
    %3150 = vmatprep.subr.mxu0 0.0
    %3151 = vmatpush1.xpose.msra.mxu0 0.0
    %3152 = vmatprep.subr.mxu0 0.0
    %3153 = vmatpush1.xpose.msra.mxu0 0.0
    %3154 = vmatprep.subr.mxu0 0.0
    %3155 = vmatpush1.xpose.msra.mxu0 0.0
    %3156 = vmatprep.subr.mxu0 0.0
    %3157 = vmatpush1.xpose.msra.mxu0 0.0
    %3158 = vmatprep.subr.mxu0 0.0
    %3159 = vmatpush1.xpose.msra.mxu0 0.0
    %3160 = vmatprep.subr.mxu0 0.0
    %3161 = vmatpush1.xpose.msra.mxu0 0.0
    %3162 = vmatprep.subr.mxu0 0.0
    %3163 = vmatpush1.xpose.msra.mxu0 0.0
    %3164 = vmatprep.subr.mxu0 0.0
    %3165 = vmatpush1.xpose.msra.mxu0 0.0
    %3166 = vmatprep.subr.mxu0 0.0
    %3167 = vmatpush1.xpose.msra.mxu0 0.0
    %3168 = vmatprep.subr.mxu0 0.0
    %3169 = vmatpush1.xpose.msra.mxu0 0.0
    %3170 = vmatprep.subr.mxu0 0.0
    %3171 = vmatpush1.xpose.msra.mxu0 0.0
    %3172 = vmatprep.subr.mxu0 0.0
    %3173 = vmatpush1.xpose.msra.mxu0 0.0
    %3174 = vmatprep.subr.mxu0 0.0
    %3175 = vmatpush1.xpose.msra.mxu0 0.0
    %3176 = vmatprep.subr.mxu0 0.0
    %3177 = vmatpush1.xpose.msra.mxu0 0.0
    %3178 = vmatprep.subr.mxu0 0.0
    %3179 = vmatpush1.xpose.msra.mxu0 0.0
    %3180 = vmatprep.subr.mxu0 0.0
    %3181 = vmatpush1.xpose.msra.mxu0 0.0
    %3182 = vmatprep.subr.mxu0 0.0
    %3183 = vmatpush1.xpose.msra.mxu0 0.0
    %3184 = vmatprep.subr.mxu0 0.0
    %3185 = vmatpush1.xpose.msra.mxu0 0.0
    %3186 = vmatprep.subr.mxu0 0.0
    %3187 = vmatpush1.xpose.msra.mxu0 0.0
    %3188 = vmatprep.subr.mxu0 0.0
    %3189 = vmatpush1.xpose.msra.mxu0 0.0
    %3190 = vmatprep.subr.mxu0 0.0
    %3191 = vmatpush1.xpose.msra.mxu0 0.0
    %3192 = vmatprep.subr.mxu0 0.0
    %3193 = vmatpush1.xpose.msra.mxu0 0.0
    %3194 = vmatprep.subr.mxu0 0.0
    %3195 = vmatpush1.xpose.msra.mxu0 0.0
    %3196 = vmatprep.subr.mxu0 0.0
    %3197 = vmatpush1.xpose.msra.mxu0 0.0
    %3198 = vmatprep.subr.mxu0 0.0
    %3199 = vmatpush1.xpose.msra.mxu0 0.0
    %3200 = vmatprep.subr.mxu0 0.0
    %3201 = vmatpush1.xpose.msra.mxu0 0.0
    %3202 = vmatprep.subr.mxu0 0.0
    %3203 = vmatpush1.xpose.msra.mxu0 0.0
    %3204 = vmatprep.subr.mxu0 0.0
    %3205 = vmatpush1.xpose.msra.mxu0 0.0
    %3206 = vmatprep.mubr.f32.mxu0 0.0
    %3207 = vmatmul.mubr.f32.gmra.mrb[0].mxu0 %v3138
    %v3208 = vpop.f32.mrb[0].mxu0
    %v3209 = vadd.f32 0.0, %v3208
    %v3210 = vpop.f32.mrb[0].mxu0
    %3211 = vdwg.mxu0
    %3212 = vrot.lane.b32.xlu0 %v2155, 104
    %v3213 = vpop.permute.xlu0 %3212
    %3214 = vrot.lane.b32.xlu0 %v2155, 72
    %v3215 = vpop.permute.xlu0 %3214
    %v3216 = vsel %vm312, %v3213, 0
    %v3218 = vsel %vm312, %v3215, 0
    %3220 = vmatprep.subr.mxu0 0.0
    %3221 = vmatpush1.xpose.msra.mxu0 %v3218
    %3222 = vmatprep.subr.mxu0 0.0
    %3223 = vmatpush1.xpose.msra.mxu0 0.0
    %3224 = vmatprep.subr.mxu0 0.0
    %3225 = vmatpush1.xpose.msra.mxu0 0.0
    %3226 = vmatprep.subr.mxu0 0.0
    %3227 = vmatpush1.xpose.msra.mxu0 0.0
    %3228 = vmatprep.subr.mxu0 0.0
    %3229 = vmatpush1.xpose.msra.mxu0 0.0
    %3230 = vmatprep.subr.mxu0 0.0
    %3231 = vmatpush1.xpose.msra.mxu0 0.0
    %3232 = vmatprep.subr.mxu0 0.0
    %3233 = vmatpush1.xpose.msra.mxu0 0.0
    %3234 = vmatprep.subr.mxu0 0.0
    %3235 = vmatpush1.xpose.msra.mxu0 0.0
    %3236 = vmatprep.subr.mxu0 0.0
    %3237 = vmatpush1.xpose.msra.mxu0 0.0
    %3238 = vmatprep.subr.mxu0 0.0
    %3239 = vmatpush1.xpose.msra.mxu0 0.0
    %3240 = vmatprep.subr.mxu0 0.0
    %3241 = vmatpush1.xpose.msra.mxu0 0.0
    %3242 = vmatprep.subr.mxu0 0.0
    %3243 = vmatpush1.xpose.msra.mxu0 0.0
    %3244 = vmatprep.subr.mxu0 0.0
    %3245 = vmatpush1.xpose.msra.mxu0 0.0
    %3246 = vmatprep.subr.mxu0 0.0
    %3247 = vmatpush1.xpose.msra.mxu0 0.0
    %3248 = vmatprep.subr.mxu0 0.0
    %3249 = vmatpush1.xpose.msra.mxu0 0.0
    %3250 = vmatprep.subr.mxu0 0.0
    %3251 = vmatpush1.xpose.msra.mxu0 0.0
    %3252 = vmatprep.subr.mxu0 0.0
    %3253 = vmatpush1.xpose.msra.mxu0 0.0
    %3254 = vmatprep.subr.mxu0 0.0
    %3255 = vmatpush1.xpose.msra.mxu0 0.0
    %3256 = vmatprep.subr.mxu0 0.0
    %3257 = vmatpush1.xpose.msra.mxu0 0.0
    %3258 = vmatprep.subr.mxu0 0.0
    %3259 = vmatpush1.xpose.msra.mxu0 0.0
    %3260 = vmatprep.subr.mxu0 0.0
    %3261 = vmatpush1.xpose.msra.mxu0 0.0
    %3262 = vmatprep.subr.mxu0 0.0
    %3263 = vmatpush1.xpose.msra.mxu0 0.0
    %3264 = vmatprep.subr.mxu0 0.0
    %3265 = vmatpush1.xpose.msra.mxu0 0.0
    %3266 = vmatprep.subr.mxu0 0.0
    %3267 = vmatpush1.xpose.msra.mxu0 0.0
    %3268 = vmatprep.subr.mxu0 0.0
    %3269 = vmatpush1.xpose.msra.mxu0 0.0
    %3270 = vmatprep.subr.mxu0 0.0
    %3271 = vmatpush1.xpose.msra.mxu0 0.0
    %3272 = vmatprep.subr.mxu0 0.0
    %3273 = vmatpush1.xpose.msra.mxu0 0.0
    %3274 = vmatprep.subr.mxu0 0.0
    %3275 = vmatpush1.xpose.msra.mxu0 0.0
    %3276 = vmatprep.subr.mxu0 0.0
    %3277 = vmatpush1.xpose.msra.mxu0 0.0
    %3278 = vmatprep.subr.mxu0 0.0
    %3279 = vmatpush1.xpose.msra.mxu0 0.0
    %3280 = vmatprep.subr.mxu0 0.0
    %3281 = vmatpush1.xpose.msra.mxu0 0.0
    %3282 = vmatprep.subr.mxu0 0.0
    %3283 = vmatpush1.xpose.msra.mxu0 0.0
    %3284 = vmatprep.mubr.f32.mxu0 0.0
    %3285 = vmatmul.mubr.f32.gmra.mrb[0].mxu0 %v3216
    %v3286 = vpop.f32.mrb[0].mxu0
    %v3287 = vadd.f32 0.0, %v3286
    %v3288 = vpop.f32.mrb[0].mxu0
    %3289 = vdwg.mxu0
    %v3290 = vmul.f32 %v3209, 0.35355338
    %v3291 = vmul.f32 %v3287, 0.35355338
    %v3292 = vadd.f32 %v3290, %v469
    %v3293 = vadd.f32 %v3291, %v473
    %v3294 = vmul.f32 %v3292, 1.442695
    %v3295 = vpow.pop %v3294
    %v3296 = vmul.f32 %v3293, 1.442695
    %v3297 = vpow.pop %v3296
    %v3298 = vsel %vm312, %v3295, 0.0
    %3299 = vadd.xlane.f32.xlu0 %v3298
    %v3300 = vpop.xlane.xlu0 %3299
    %v3301 = vsel %vm312, %v3297, 0.0
    %3302 = vadd.xlane.f32.xlu0 %v3301
    %v3303 = vpop.xlane.xlu0 %3302
    %v3304 = vrcp.pop %v3300
    %v3305 = vrcp.pop %v3303
    %v3306 = vmul.f32 %v3295, %v3304
    %v3307 = vmul.f32 %v3297, %v3305
    %3308 = vrot.lane.b32.xlu0 %v2150, 40
    %v3309 = vpop.permute.xlu0 %3308
    %v3312 = vsel %vm312, %v3306, 0
    %3314 = vmatprep.subr.mxu0 0.0
    %3315 = vmatpush1.msra.mxu0 %v3309
    %3316 = vmatprep.subr.mxu0 0.0
    %3317 = vmatpush1.msra.mxu0 0.0
    %3318 = vmatprep.subr.mxu0 0.0
    %3319 = vmatpush1.msra.mxu0 0.0
    %3320 = vmatprep.subr.mxu0 0.0
    %3321 = vmatpush1.msra.mxu0 0.0
    %3322 = vmatprep.subr.mxu0 0.0
    %3323 = vmatpush1.msra.mxu0 0.0
    %3324 = vmatprep.subr.mxu0 0.0
    %3325 = vmatpush1.msra.mxu0 0.0
    %3326 = vmatprep.subr.mxu0 0.0
    %3327 = vmatpush1.msra.mxu0 0.0
    %3328 = vmatprep.subr.mxu0 0.0
    %3329 = vmatpush1.msra.mxu0 0.0
    %3330 = vmatprep.subr.mxu0 0.0
    %3331 = vmatpush1.msra.mxu0 0.0
    %3332 = vmatprep.subr.mxu0 0.0
    %3333 = vmatpush1.msra.mxu0 0.0
    %3334 = vmatprep.subr.mxu0 0.0
    %3335 = vmatpush1.msra.mxu0 0.0
    %3336 = vmatprep.subr.mxu0 0.0
    %3337 = vmatpush1.msra.mxu0 0.0
    %3338 = vmatprep.subr.mxu0 0.0
    %3339 = vmatpush1.msra.mxu0 0.0
    %3340 = vmatprep.subr.mxu0 0.0
    %3341 = vmatpush1.msra.mxu0 0.0
    %3342 = vmatprep.subr.mxu0 0.0
    %3343 = vmatpush1.msra.mxu0 0.0
    %3344 = vmatprep.subr.mxu0 0.0
    %3345 = vmatpush1.msra.mxu0 0.0
    %3346 = vmatprep.subr.mxu0 0.0
    %3347 = vmatpush1.msra.mxu0 0.0
    %3348 = vmatprep.subr.mxu0 0.0
    %3349 = vmatpush1.msra.mxu0 0.0
    %3350 = vmatprep.subr.mxu0 0.0
    %3351 = vmatpush1.msra.mxu0 0.0
    %3352 = vmatprep.subr.mxu0 0.0
    %3353 = vmatpush1.msra.mxu0 0.0
    %3354 = vmatprep.subr.mxu0 0.0
    %3355 = vmatpush1.msra.mxu0 0.0
    %3356 = vmatprep.subr.mxu0 0.0
    %3357 = vmatpush1.msra.mxu0 0.0
    %3358 = vmatprep.subr.mxu0 0.0
    %3359 = vmatpush1.msra.mxu0 0.0
    %3360 = vmatprep.subr.mxu0 0.0
    %3361 = vmatpush1.msra.mxu0 0.0
    %3362 = vmatprep.subr.mxu0 0.0
    %3363 = vmatpush1.msra.mxu0 0.0
    %3364 = vmatprep.subr.mxu0 0.0
    %3365 = vmatpush1.msra.mxu0 0.0
    %3366 = vmatprep.subr.mxu0 0.0
    %3367 = vmatpush1.msra.mxu0 0.0
    %3368 = vmatprep.subr.mxu0 0.0
    %3369 = vmatpush1.msra.mxu0 0.0
    %3370 = vmatprep.subr.mxu0 0.0
    %3371 = vmatpush1.msra.mxu0 0.0
    %3372 = vmatprep.subr.mxu0 0.0
    %3373 = vmatpush1.msra.mxu0 0.0
    %3374 = vmatprep.subr.mxu0 0.0
    %3375 = vmatpush1.msra.mxu0 0.0
    %3376 = vmatprep.subr.mxu0 0.0
    %3377 = vmatpush1.msra.mxu0 0.0
    %3378 = vmatprep.mubr.f32.mxu0 0.0
    %3379 = vmatmul.mubr.f32.gmra.mrb[0].mxu0 %v3312
    %v3380 = vpop.f32.mrb[0].mxu0
    %v3381 = vadd.f32 0.0, %v3380
    %v3382 = vpop.f32.mrb[0].mxu0
    %3383 = vdwg.mxu0
    %3384 = vrot.lane.b32.xlu0 %v2155, 40
    %v3385 = vpop.permute.xlu0 %3384
    %v3388 = vsel %vm312, %v3307, 0
    %3390 = vmatprep.subr.mxu0 0.0
    %3391 = vmatpush1.msra.mxu0 %v3385
    %3392 = vmatprep.subr.mxu0 0.0
    %3393 = vmatpush1.msra.mxu0 0.0
    %3394 = vmatprep.subr.mxu0 0.0
    %3395 = vmatpush1.msra.mxu0 0.0
    %3396 = vmatprep.subr.mxu0 0.0
    %3397 = vmatpush1.msra.mxu0 0.0
    %3398 = vmatprep.subr.mxu0 0.0
    %3399 = vmatpush1.msra.mxu0 0.0
    %3400 = vmatprep.subr.mxu0 0.0
    %3401 = vmatpush1.msra.mxu0 0.0
    %3402 = vmatprep.subr.mxu0 0.0
    %3403 = vmatpush1.msra.mxu0 0.0
    %3404 = vmatprep.subr.mxu0 0.0
    %3405 = vmatpush1.msra.mxu0 0.0
    %3406 = vmatprep.subr.mxu0 0.0
    %3407 = vmatpush1.msra.mxu0 0.0
    %3408 = vmatprep.subr.mxu0 0.0
    %3409 = vmatpush1.msra.mxu0 0.0
    %3410 = vmatprep.subr.mxu0 0.0
    %3411 = vmatpush1.msra.mxu0 0.0
    %3412 = vmatprep.subr.mxu0 0.0
    %3413 = vmatpush1.msra.mxu0 0.0
    %3414 = vmatprep.subr.mxu0 0.0
    %3415 = vmatpush1.msra.mxu0 0.0
    %3416 = vmatprep.subr.mxu0 0.0
    %3417 = vmatpush1.msra.mxu0 0.0
    %3418 = vmatprep.subr.mxu0 0.0
    %3419 = vmatpush1.msra.mxu0 0.0
    %3420 = vmatprep.subr.mxu0 0.0
    %3421 = vmatpush1.msra.mxu0 0.0
    %3422 = vmatprep.subr.mxu0 0.0
    %3423 = vmatpush1.msra.mxu0 0.0
    %3424 = vmatprep.subr.mxu0 0.0
    %3425 = vmatpush1.msra.mxu0 0.0
    %3426 = vmatprep.subr.mxu0 0.0
    %3427 = vmatpush1.msra.mxu0 0.0
    %3428 = vmatprep.subr.mxu0 0.0
    %3429 = vmatpush1.msra.mxu0 0.0
    %3430 = vmatprep.subr.mxu0 0.0
    %3431 = vmatpush1.msra.mxu0 0.0
    %3432 = vmatprep.subr.mxu0 0.0
    %3433 = vmatpush1.msra.mxu0 0.0
    %3434 = vmatprep.subr.mxu0 0.0
    %3435 = vmatpush1.msra.mxu0 0.0
    %3436 = vmatprep.subr.mxu0 0.0
    %3437 = vmatpush1.msra.mxu0 0.0
    %3438 = vmatprep.subr.mxu0 0.0
    %3439 = vmatpush1.msra.mxu0 0.0
    %3440 = vmatprep.subr.mxu0 0.0
    %3441 = vmatpush1.msra.mxu0 0.0
    %3442 = vmatprep.subr.mxu0 0.0
    %3443 = vmatpush1.msra.mxu0 0.0
    %3444 = vmatprep.subr.mxu0 0.0
    %3445 = vmatpush1.msra.mxu0 0.0
    %3446 = vmatprep.subr.mxu0 0.0
    %3447 = vmatpush1.msra.mxu0 0.0
    %3448 = vmatprep.subr.mxu0 0.0
    %3449 = vmatpush1.msra.mxu0 0.0
    %3450 = vmatprep.subr.mxu0 0.0
    %3451 = vmatpush1.msra.mxu0 0.0
    %3452 = vmatprep.subr.mxu0 0.0
    %3453 = vmatpush1.msra.mxu0 0.0
    %3454 = vmatprep.mubr.f32.mxu0 0.0
    %3455 = vmatmul.mubr.f32.gmra.mrb[0].mxu0 %v3388
    %v3456 = vpop.f32.mrb[0].mxu0
    %v3457 = vadd.f32 0.0, %v3456
    %v3458 = vpop.f32.mrb[0].mxu0
    %3459 = vdwg.mxu0
    %3462 = vrot.lane.b32.xlu0 %v2729, 8
    %v3463 = vpop.permute.xlu0 %3462
    %3464 = vrot.lane.b32.xlu0 %v2805, 8
    %v3465 = vpop.permute.xlu0 %3464
    %3470 = vrot.lane.b32.xlu0 %v3055, 16
    %v3471 = vpop.permute.xlu0 %3470
    %3472 = vrot.lane.b32.xlu0 %v3131, 16
    %v3473 = vpop.permute.xlu0 %3472
    %3478 = vrot.lane.b32.xlu0 %v3381, 24
    %v3479 = vpop.permute.xlu0 %3478
    %3480 = vrot.lane.b32.xlu0 %v3457, 24
    %v3481 = vpop.permute.xlu0 %3480
    %v3484 = vsel %vm312, %v2403, %v3463
    %v3485 = vsel %vm312, %v2479, %v3465
    %v3486 = vsel %vm1648, %v3484, %v3471
    %v3487 = vsel %vm1648, %v3485, %v3473
    %v3488 = vsel %vm1651, %v3486, %v3479
    %v3489 = vsel %vm1651, %v3487, %v3481
    %v3490 = vld [vmem:[%s2066 + $0x20] sm:$0xff]
    %v3491 = vld [vmem:[%s2066 + $0x28] sm:$0xff]
    %v3492 = vld [vmem:[%s2066 + $0x30] sm:$0xff]
    %v3493 = vld [vmem:[%s2066 + $0x38] sm:$0xff]
    %v3494 = vld [vmem:[%s2071 + $0x1] sm:$0x1]
    %v3495 = vlaneseq
    %v3496 = vshrl.u32 %v3495, 7
    %v3497 = vsub.s32 0, %v3496
    %v3498 = vrot.slane %v3494, %v3497
    %v3500 = vsel %vm154, %v3488, 0
    %v3503 = vsel %vm154, %v3489, 0
    %3505 = vmatprep.subr.mxu0 0.0
    %3506 = vmatpush1.msra.mxu0 %v3490
    %3507 = vmatprep.subr.mxu0 0.0
    %3508 = vmatpush1.msra.mxu0 %v3491
    %3509 = vmatprep.subr.mxu0 0.0
    %3510 = vmatpush1.msra.mxu0 %v3492
    %3511 = vmatprep.subr.mxu0 0.0
    %3512 = vmatpush1.msra.mxu0 %v3493
    %3513 = vmatprep.subr.mxu0 0.0
    %3514 = vmatpush1.msra.mxu0 0.0
    %3515 = vmatprep.subr.mxu0 0.0
    %3516 = vmatpush1.msra.mxu0 0.0
    %3517 = vmatprep.subr.mxu0 0.0
    %3518 = vmatpush1.msra.mxu0 0.0
    %3519 = vmatprep.subr.mxu0 0.0
    %3520 = vmatpush1.msra.mxu0 0.0
    %3521 = vmatprep.subr.mxu0 0.0
    %3522 = vmatpush1.msra.mxu0 0.0
    %3523 = vmatprep.subr.mxu0 0.0
    %3524 = vmatpush1.msra.mxu0 0.0
    %3525 = vmatprep.subr.mxu0 0.0
    %3526 = vmatpush1.msra.mxu0 0.0
    %3527 = vmatprep.subr.mxu0 0.0
    %3528 = vmatpush1.msra.mxu0 0.0
    %3529 = vmatprep.subr.mxu0 0.0
    %3530 = vmatpush1.msra.mxu0 0.0
    %3531 = vmatprep.subr.mxu0 0.0
    %3532 = vmatpush1.msra.mxu0 0.0
    %3533 = vmatprep.subr.mxu0 0.0
    %3534 = vmatpush1.msra.mxu0 0.0
    %3535 = vmatprep.subr.mxu0 0.0
    %3536 = vmatpush1.msra.mxu0 0.0
    %3537 = vmatprep.subr.mxu0 0.0
    %3538 = vmatpush1.msra.mxu0 0.0
    %3539 = vmatprep.subr.mxu0 0.0
    %3540 = vmatpush1.msra.mxu0 0.0
    %3541 = vmatprep.subr.mxu0 0.0
    %3542 = vmatpush1.msra.mxu0 0.0
    %3543 = vmatprep.subr.mxu0 0.0
    %3544 = vmatpush1.msra.mxu0 0.0
    %3545 = vmatprep.subr.mxu0 0.0
    %3546 = vmatpush1.msra.mxu0 0.0
    %3547 = vmatprep.subr.mxu0 0.0
    %3548 = vmatpush1.msra.mxu0 0.0
    %3549 = vmatprep.subr.mxu0 0.0
    %3550 = vmatpush1.msra.mxu0 0.0
    %3551 = vmatprep.subr.mxu0 0.0
    %3552 = vmatpush1.msra.mxu0 0.0
    %3553 = vmatprep.subr.mxu0 0.0
    %3554 = vmatpush1.msra.mxu0 0.0
    %3555 = vmatprep.subr.mxu0 0.0
    %3556 = vmatpush1.msra.mxu0 0.0
    %3557 = vmatprep.subr.mxu0 0.0
    %3558 = vmatpush1.msra.mxu0 0.0
    %3559 = vmatprep.subr.mxu0 0.0
    %3560 = vmatpush1.msra.mxu0 0.0
    %3561 = vmatprep.subr.mxu0 0.0
    %3562 = vmatpush1.msra.mxu0 0.0
    %3563 = vmatprep.subr.mxu0 0.0
    %3564 = vmatpush1.msra.mxu0 0.0
    %3565 = vmatprep.subr.mxu0 0.0
    %3566 = vmatpush1.msra.mxu0 0.0
    %3567 = vmatprep.subr.mxu0 0.0
    %3568 = vmatpush1.msra.mxu0 0.0
    %3569 = vmatprep.mubr.f32.mxu0 0.0
    %3570 = vmatmul.mubr.f32.gmra.mrb[0].mxu0 %v3500
    %v3571 = vpop.f32.mrb[0].mxu0
    %v3572 = vadd.f32 %v3498, %v3571
    %v3573 = vpop.f32.mrb[0].mxu0
    %3574 = vmatprep.mubr.f32.mxu0 0.0
    %3575 = vmatmul.mubr.f32.gmra.mrb[0].mxu0 %v3503
    %v3576 = vpop.f32.mrb[0].mxu0
    %v3577 = vadd.f32 %v3498, %v3576
    %v3578 = vpop.f32.mrb[0].mxu0
    %3579 = vdwg.mxu0
    %v3580 = vadd.f32 %v2064, %v3572
    %v3581 = vadd.f32 %v2065, %v3577
    %v3582 = vld [vmem:[%s2071 + $0x2] sm:$0x1]
    %v3583 = vld [vmem:[%s2071 + $0x3] sm:$0x1]
    %v3584 = vsel %vm154, %v3580, 0.0
    %3585 = vadd.xlane.f32.xlu0 %v3584
    %v3586 = vpop.xlane.xlu0 %3585
    %v3587 = vsel %vm154, %v3581, 0.0
    %3588 = vadd.xlane.f32.xlu0 %v3587
    %v3589 = vpop.xlane.xlu0 %3588
    %v3590 = vmul.f32 %v3586, %v161
    %v3591 = vmul.f32 %v3589, %v161
    %v3592 = vsub.f32 %v3580, %v3590
    %v3593 = vsub.f32 %v3581, %v3591
    %v3594 = vmul.f32 %v3592, %v3592
    %v3595 = vmul.f32 %v3593, %v3593
    %v3596 = vsel %vm154, %v3594, 0.0
    %3597 = vadd.xlane.f32.xlu0 %v3596
    %v3598 = vpop.xlane.xlu0 %3597
    %v3599 = vsel %vm154, %v3595, 0.0
    %3600 = vadd.xlane.f32.xlu0 %v3599
    %v3601 = vpop.xlane.xlu0 %3600
    %v3602 = vmul.f32 %v3598, %v161
    %v3603 = vmul.f32 %v3601, %v161
    %v3604 = vadd.f32 %v3602, 1e-12
    %v3605 = vadd.f32 %v3603, 1e-12
    %v3606 = vrsqrt.pop %v3604
    %v3607 = vrsqrt.pop %v3605
    %v3608 = vmul.f32 %v3592, %v3606
    %v3609 = vmul.f32 %v3593, %v3607
    %v3610 = vlaneseq
    %v3611 = vshrl.u32 %v3610, 7
    %v3612 = vsub.s32 0, %v3611
    %v3613 = vrot.slane %v3582, %v3612
    %v3614 = vmul.f32 %v3608, %v3613
    %v3615 = vmul.f32 %v3609, %v3613
    %v3616 = vlaneseq
    %v3617 = vshrl.u32 %v3616, 7
    %v3618 = vsub.s32 0, %v3617
    %v3619 = vrot.slane %v3583, %v3618
    %v3620 = vadd.f32 %v3614, %v3619
    %v3621 = vadd.f32 %v3615, %v3619
    %v3622 = vld [vmem:[%s2071 + $0x4] sm:$0x1]
    %v3623 = vlaneseq
    %v3624 = vshrl.u32 %v3623, 7
    %v3625 = vsub.s32 0, %v3624
    %v3626 = vrot.slane %v3622, %v3625
    %3631 = vrot.lane.b32.xlu0 %v3490, 96
    %v3632 = vpop.permute.xlu0 %3631
    %3633 = vrot.lane.b32.xlu0 %v3491, 96
    %v3634 = vpop.permute.xlu0 %3633
    %3635 = vrot.lane.b32.xlu0 %v3492, 96
    %v3636 = vpop.permute.xlu0 %3635
    %3637 = vrot.lane.b32.xlu0 %v3493, 96
    %v3638 = vpop.permute.xlu0 %3637
    %v3644 = vsel %vm154, %v3620, 0
    %v3647 = vsel %vm154, %v3621, 0
    %3649 = vmatprep.subr.mxu0 0.0
    %3650 = vmatpush1.msra.mxu0 %v3632
    %3651 = vmatprep.subr.mxu0 0.0
    %3652 = vmatpush1.msra.mxu0 %v3634
    %3653 = vmatprep.subr.mxu0 0.0
    %3654 = vmatpush1.msra.mxu0 %v3636
    %3655 = vmatprep.subr.mxu0 0.0
    %3656 = vmatpush1.msra.mxu0 %v3638
    %3657 = vmatprep.subr.mxu0 0.0
    %3658 = vmatpush1.msra.mxu0 0.0
    %3659 = vmatprep.subr.mxu0 0.0
    %3660 = vmatpush1.msra.mxu0 0.0
    %3661 = vmatprep.subr.mxu0 0.0
    %3662 = vmatpush1.msra.mxu0 0.0
    %3663 = vmatprep.subr.mxu0 0.0
    %3664 = vmatpush1.msra.mxu0 0.0
    %3665 = vmatprep.subr.mxu0 0.0
    %3666 = vmatpush1.msra.mxu0 0.0
    %3667 = vmatprep.subr.mxu0 0.0
    %3668 = vmatpush1.msra.mxu0 0.0
    %3669 = vmatprep.subr.mxu0 0.0
    %3670 = vmatpush1.msra.mxu0 0.0
    %3671 = vmatprep.subr.mxu0 0.0
    %3672 = vmatpush1.msra.mxu0 0.0
    %3673 = vmatprep.subr.mxu0 0.0
    %3674 = vmatpush1.msra.mxu0 0.0
    %3675 = vmatprep.subr.mxu0 0.0
    %3676 = vmatpush1.msra.mxu0 0.0
    %3677 = vmatprep.subr.mxu0 0.0
    %3678 = vmatpush1.msra.mxu0 0.0
    %3679 = vmatprep.subr.mxu0 0.0
    %3680 = vmatpush1.msra.mxu0 0.0
    %3681 = vmatprep.subr.mxu0 0.0
    %3682 = vmatpush1.msra.mxu0 0.0
    %3683 = vmatprep.subr.mxu0 0.0
    %3684 = vmatpush1.msra.mxu0 0.0
    %3685 = vmatprep.subr.mxu0 0.0
    %3686 = vmatpush1.msra.mxu0 0.0
    %3687 = vmatprep.subr.mxu0 0.0
    %3688 = vmatpush1.msra.mxu0 0.0
    %3689 = vmatprep.subr.mxu0 0.0
    %3690 = vmatpush1.msra.mxu0 0.0
    %3691 = vmatprep.subr.mxu0 0.0
    %3692 = vmatpush1.msra.mxu0 0.0
    %3693 = vmatprep.subr.mxu0 0.0
    %3694 = vmatpush1.msra.mxu0 0.0
    %3695 = vmatprep.subr.mxu0 0.0
    %3696 = vmatpush1.msra.mxu0 0.0
    %3697 = vmatprep.subr.mxu0 0.0
    %3698 = vmatpush1.msra.mxu0 0.0
    %3699 = vmatprep.subr.mxu0 0.0
    %3700 = vmatpush1.msra.mxu0 0.0
    %3701 = vmatprep.subr.mxu0 0.0
    %3702 = vmatpush1.msra.mxu0 0.0
    %3703 = vmatprep.subr.mxu0 0.0
    %3704 = vmatpush1.msra.mxu0 0.0
    %3705 = vmatprep.subr.mxu0 0.0
    %3706 = vmatpush1.msra.mxu0 0.0
    %3707 = vmatprep.subr.mxu0 0.0
    %3708 = vmatpush1.msra.mxu0 0.0
    %3709 = vmatprep.subr.mxu0 0.0
    %3710 = vmatpush1.msra.mxu0 0.0
    %3711 = vmatprep.subr.mxu0 0.0
    %3712 = vmatpush1.msra.mxu0 0.0
    %3713 = vmatprep.mubr.f32.mxu0 0.0
    %3714 = vmatmul.mubr.f32.gmra.mrb[0].mxu0 %v3644
    %v3715 = vpop.f32.mrb[0].mxu0
    %v3716 = vadd.f32 %v3626, %v3715
    %v3717 = vpop.f32.mrb[0].mxu0
    %3718 = vmatprep.mubr.f32.mxu0 0.0
    %3719 = vmatmul.mubr.f32.gmra.mrb[0].mxu0 %v3647
    %v3720 = vpop.f32.mrb[0].mxu0
    %v3721 = vadd.f32 %v3626, %v3720
    %v3722 = vpop.f32.mrb[0].mxu0
    %3723 = vdwg.mxu0
    %v3724 = vmul.f32 %v3716, 0.5
    %v3725 = vmul.f32 %v3721, 0.5
    %v3726 = vmul.f32 %v3716, 0.044715
    %v3727 = vmul.f32 %v3721, 0.044715
    %v3728 = vmul.f32 %v3726, %v3716
    %v3729 = vmul.f32 %v3727, %v3721
    %v3730 = vmul.f32 %v3728, %v3716
    %v3731 = vmul.f32 %v3729, %v3721
    %v3732 = vadd.f32 %v3716, %v3730
    %v3733 = vadd.f32 %v3721, %v3731
    %v3734 = vmul.f32 %v3732, 0.7978846
    %v3735 = vmul.f32 %v3733, 0.7978846
    %v3736 = vtanh.pop %v3734
    %v3737 = vtanh.pop %v3735
    %v3738 = vadd.f32 %v3736, 1.0
    %v3739 = vadd.f32 %v3737, 1.0
    %v3740 = vmul.f32 %v3724, %v3738
    %v3741 = vmul.f32 %v3725, %v3739
    %v3742 = vld [vmem:[%s2066] sm:$0xff]
    %v3743 = vld [vmem:[%s2066 + $0x8] sm:$0xff]
    %v3744 = vld [vmem:[%s2066 + $0x10] sm:$0xff]
    %v3745 = vld [vmem:[%s2066 + $0x18] sm:$0xff]
    %v3746 = vld [vmem:[%s2071 + $0x5] sm:$0x1]
    %v3747 = vlaneseq
    %v3748 = vshrl.u32 %v3747, 7
    %v3749 = vsub.s32 0, %v3748
    %v3750 = vrot.slane %v3746, %v3749
    %3755 = vrot.lane.b32.xlu0 %v3742, 32
    %v3756 = vpop.permute.xlu0 %3755
    %3757 = vrot.lane.b32.xlu0 %v3743, 32
    %v3758 = vpop.permute.xlu0 %3757
    %3759 = vrot.lane.b32.xlu0 %v3744, 32
    %v3760 = vpop.permute.xlu0 %3759
    %3761 = vrot.lane.b32.xlu0 %v3745, 32
    %v3762 = vpop.permute.xlu0 %3761
    %3763 = vrot.lane.b32.xlu0 %v3490, 32
    %v3764 = vpop.permute.xlu0 %3763
    %3765 = vrot.lane.b32.xlu0 %v3491, 32
    %v3766 = vpop.permute.xlu0 %3765
    %3767 = vrot.lane.b32.xlu0 %v3492, 32
    %v3768 = vpop.permute.xlu0 %3767
    %3769 = vrot.lane.b32.xlu0 %v3493, 32
    %v3770 = vpop.permute.xlu0 %3769
    %v3780 = vsel %vm70, %v3740, 0
    %v3783 = vsel %vm70, %v3741, 0
    %3785 = vmatprep.subr.mxu0 0.0
    %3786 = vmatpush1.msra.mxu0 %v3756
    %3787 = vmatprep.subr.mxu0 0.0
    %3788 = vmatpush1.msra.mxu0 %v3758
    %3789 = vmatprep.subr.mxu0 0.0
    %3790 = vmatpush1.msra.mxu0 %v3760
    %3791 = vmatprep.subr.mxu0 0.0
    %3792 = vmatpush1.msra.mxu0 %v3762
    %3793 = vmatprep.subr.mxu0 0.0
    %3794 = vmatpush1.msra.mxu0 %v3764
    %3795 = vmatprep.subr.mxu0 0.0
    %3796 = vmatpush1.msra.mxu0 %v3766
    %3797 = vmatprep.subr.mxu0 0.0
    %3798 = vmatpush1.msra.mxu0 %v3768
    %3799 = vmatprep.subr.mxu0 0.0
    %3800 = vmatpush1.msra.mxu0 %v3770
    %3801 = vmatprep.subr.mxu0 0.0
    %3802 = vmatpush1.msra.mxu0 0.0
    %3803 = vmatprep.subr.mxu0 0.0
    %3804 = vmatpush1.msra.mxu0 0.0
    %3805 = vmatprep.subr.mxu0 0.0
    %3806 = vmatpush1.msra.mxu0 0.0
    %3807 = vmatprep.subr.mxu0 0.0
    %3808 = vmatpush1.msra.mxu0 0.0
    %3809 = vmatprep.subr.mxu0 0.0
    %3810 = vmatpush1.msra.mxu0 0.0
    %3811 = vmatprep.subr.mxu0 0.0
    %3812 = vmatpush1.msra.mxu0 0.0
    %3813 = vmatprep.subr.mxu0 0.0
    %3814 = vmatpush1.msra.mxu0 0.0
    %3815 = vmatprep.subr.mxu0 0.0
    %3816 = vmatpush1.msra.mxu0 0.0
    %3817 = vmatprep.subr.mxu0 0.0
    %3818 = vmatpush1.msra.mxu0 0.0
    %3819 = vmatprep.subr.mxu0 0.0
    %3820 = vmatpush1.msra.mxu0 0.0
    %3821 = vmatprep.subr.mxu0 0.0
    %3822 = vmatpush1.msra.mxu0 0.0
    %3823 = vmatprep.subr.mxu0 0.0
    %3824 = vmatpush1.msra.mxu0 0.0
    %3825 = vmatprep.subr.mxu0 0.0
    %3826 = vmatpush1.msra.mxu0 0.0
    %3827 = vmatprep.subr.mxu0 0.0
    %3828 = vmatpush1.msra.mxu0 0.0
    %3829 = vmatprep.subr.mxu0 0.0
    %3830 = vmatpush1.msra.mxu0 0.0
    %3831 = vmatprep.subr.mxu0 0.0
    %3832 = vmatpush1.msra.mxu0 0.0
    %3833 = vmatprep.subr.mxu0 0.0
    %3834 = vmatpush1.msra.mxu0 0.0
    %3835 = vmatprep.subr.mxu0 0.0
    %3836 = vmatpush1.msra.mxu0 0.0
    %3837 = vmatprep.subr.mxu0 0.0
    %3838 = vmatpush1.msra.mxu0 0.0
    %3839 = vmatprep.subr.mxu0 0.0
    %3840 = vmatpush1.msra.mxu0 0.0
    %3841 = vmatprep.subr.mxu0 0.0
    %3842 = vmatpush1.msra.mxu0 0.0
    %3843 = vmatprep.subr.mxu0 0.0
    %3844 = vmatpush1.msra.mxu0 0.0
    %3845 = vmatprep.subr.mxu0 0.0
    %3846 = vmatpush1.msra.mxu0 0.0
    %3847 = vmatprep.subr.mxu0 0.0
    %3848 = vmatpush1.msra.mxu0 0.0
    %3849 = vmatprep.mubr.f32.mxu0 0.0
    %3850 = vmatmul.mubr.f32.gmra.mrb[0].mxu0 %v3780
    %v3851 = vpop.f32.mrb[0].mxu0
    %v3852 = vadd.f32 %v3750, %v3851
    %v3853 = vpop.f32.mrb[0].mxu0
    %3854 = vmatprep.mubr.f32.mxu0 0.0
    %3855 = vmatmul.mubr.f32.gmra.mrb[0].mxu0 %v3783
    %v3856 = vpop.f32.mrb[0].mxu0
    %v3857 = vadd.f32 %v3750, %v3856
    %v3858 = vpop.f32.mrb[0].mxu0
    %3859 = vdwg.mxu0
    %v3860 = vadd.f32 %v3620, %v3852
    %v3861 = vadd.f32 %v3621, %v3857
    %v3862 = vld [vmem:[%s2071 + $0x6] sm:$0x1]
    %v3863 = vld [vmem:[%s2071 + $0x7] sm:$0x1]
    %v3864 = vsel %vm154, %v3860, 0.0
    %3865 = vadd.xlane.f32.xlu0 %v3864
    %v3866 = vpop.xlane.xlu0 %3865
    %v3867 = vsel %vm154, %v3861, 0.0
    %3868 = vadd.xlane.f32.xlu0 %v3867
    %v3869 = vpop.xlane.xlu0 %3868
    %v3870 = vmul.f32 %v3866, %v161
    %v3871 = vmul.f32 %v3869, %v161
    %v3872 = vsub.f32 %v3860, %v3870
    %v3873 = vsub.f32 %v3861, %v3871
    %v3874 = vmul.f32 %v3872, %v3872
    %v3875 = vmul.f32 %v3873, %v3873
    %v3876 = vsel %vm154, %v3874, 0.0
    %3877 = vadd.xlane.f32.xlu0 %v3876
    %v3878 = vpop.xlane.xlu0 %3877
    %v3879 = vsel %vm154, %v3875, 0.0
    %3880 = vadd.xlane.f32.xlu0 %v3879
    %v3881 = vpop.xlane.xlu0 %3880
    %v3882 = vmul.f32 %v3878, %v161
    %v3883 = vmul.f32 %v3881, %v161
    %v3884 = vadd.f32 %v3882, 1e-12
    %v3885 = vadd.f32 %v3883, 1e-12
    %v3886 = vrsqrt.pop %v3884
    %v3887 = vrsqrt.pop %v3885
    %v3888 = vmul.f32 %v3872, %v3886
    %v3889 = vmul.f32 %v3873, %v3887
    %v3890 = vlaneseq
    %v3891 = vshrl.u32 %v3890, 7
    %v3892 = vsub.s32 0, %v3891
    %v3893 = vrot.slane %v3862, %v3892
    %v3894 = vmul.f32 %v3888, %v3893
    %v3895 = vmul.f32 %v3889, %v3893
    %v3896 = vlaneseq
    %v3897 = vshrl.u32 %v3896, 7
    %v3898 = vsub.s32 0, %v3897
    %v3899 = vrot.slane %v3863, %v3898
    %v3900 = vadd.f32 %v3894, %v3899
    %v3901 = vadd.f32 %v3895, %v3899
    %s3902 = scalar_lea.vmem [#allocation2], 128
    %v3903 = vld [vmem:[%s3902] sm:$0xff]
    %v3904 = vld [vmem:[%s3902 + $0x8] sm:$0xff]
    %v3905 = vld [vmem:[%s3902 + $0x10] sm:$0xff]
    %v3906 = vld [vmem:[%s3902 + $0x18] sm:$0xff]
    %s3907 = scalar_lea.vmem %s5, 16
    %v3908 = vld [vmem:[%s3907] sm:$0x1]
    %v3909 = vlaneseq
    %v3910 = vshrl.u32 %v3909, 7
    %v3911 = vsub.s32 0, %v3910
    %v3912 = vrot.slane %v3908, %v3911
    %v3914 = vsel %vm154, %v3900, 0
    %v3917 = vsel %vm154, %v3901, 0
    %3919 = vmatprep.subr.mxu0 0.0
    %3920 = vmatpush1.msra.mxu0 %v3903
    %3921 = vmatprep.subr.mxu0 0.0
    %3922 = vmatpush1.msra.mxu0 %v3904
    %3923 = vmatprep.subr.mxu0 0.0
    %3924 = vmatpush1.msra.mxu0 %v3905
    %3925 = vmatprep.subr.mxu0 0.0
    %3926 = vmatpush1.msra.mxu0 %v3906
    %3927 = vmatprep.subr.mxu0 0.0
    %3928 = vmatpush1.msra.mxu0 0.0
    %3929 = vmatprep.subr.mxu0 0.0
    %3930 = vmatpush1.msra.mxu0 0.0
    %3931 = vmatprep.subr.mxu0 0.0
    %3932 = vmatpush1.msra.mxu0 0.0
    %3933 = vmatprep.subr.mxu0 0.0
    %3934 = vmatpush1.msra.mxu0 0.0
    %3935 = vmatprep.subr.mxu0 0.0
    %3936 = vmatpush1.msra.mxu0 0.0
    %3937 = vmatprep.subr.mxu0 0.0
    %3938 = vmatpush1.msra.mxu0 0.0
    %3939 = vmatprep.subr.mxu0 0.0
    %3940 = vmatpush1.msra.mxu0 0.0
    %3941 = vmatprep.subr.mxu0 0.0
    %3942 = vmatpush1.msra.mxu0 0.0
    %3943 = vmatprep.subr.mxu0 0.0
    %3944 = vmatpush1.msra.mxu0 0.0
    %3945 = vmatprep.subr.mxu0 0.0
    %3946 = vmatpush1.msra.mxu0 0.0
    %3947 = vmatprep.subr.mxu0 0.0
    %3948 = vmatpush1.msra.mxu0 0.0
    %3949 = vmatprep.subr.mxu0 0.0
    %3950 = vmatpush1.msra.mxu0 0.0
    %3951 = vmatprep.subr.mxu0 0.0
    %3952 = vmatpush1.msra.mxu0 0.0
    %3953 = vmatprep.subr.mxu0 0.0
    %3954 = vmatpush1.msra.mxu0 0.0
    %3955 = vmatprep.subr.mxu0 0.0
    %3956 = vmatpush1.msra.mxu0 0.0
    %3957 = vmatprep.subr.mxu0 0.0
    %3958 = vmatpush1.msra.mxu0 0.0
    %3959 = vmatprep.subr.mxu0 0.0
    %3960 = vmatpush1.msra.mxu0 0.0
    %3961 = vmatprep.subr.mxu0 0.0
    %3962 = vmatpush1.msra.mxu0 0.0
    %3963 = vmatprep.subr.mxu0 0.0
    %3964 = vmatpush1.msra.mxu0 0.0
    %3965 = vmatprep.subr.mxu0 0.0
    %3966 = vmatpush1.msra.mxu0 0.0
    %3967 = vmatprep.subr.mxu0 0.0
    %3968 = vmatpush1.msra.mxu0 0.0
    %3969 = vmatprep.subr.mxu0 0.0
    %3970 = vmatpush1.msra.mxu0 0.0
    %3971 = vmatprep.subr.mxu0 0.0
    %3972 = vmatpush1.msra.mxu0 0.0
    %3973 = vmatprep.subr.mxu0 0.0
    %3974 = vmatpush1.msra.mxu0 0.0
    %3975 = vmatprep.subr.mxu0 0.0
    %3976 = vmatpush1.msra.mxu0 0.0
    %3977 = vmatprep.subr.mxu0 0.0
    %3978 = vmatpush1.msra.mxu0 0.0
    %3979 = vmatprep.subr.mxu0 0.0
    %3980 = vmatpush1.msra.mxu0 0.0
    %3981 = vmatprep.subr.mxu0 0.0
    %3982 = vmatpush1.msra.mxu0 0.0
    %3983 = vmatprep.mubr.f32.mxu0 0.0
    %3984 = vmatmul.mubr.f32.gmra.mrb[0].mxu0 %v3914
    %v3985 = vpop.f32.mrb[0].mxu0
    %v3986 = vadd.f32 %v3912, %v3985
    %v3987 = vpop.f32.mrb[0].mxu0
    %3988 = vmatprep.mubr.f32.mxu0 0.0
    %3989 = vmatmul.mubr.f32.gmra.mrb[0].mxu0 %v3917
    %v3990 = vpop.f32.mrb[0].mxu0
    %v3991 = vadd.f32 %v3912, %v3990
    %v3992 = vpop.f32.mrb[0].mxu0
    %3993 = vdwg.mxu0
    %3995 = vrot.lane.b32.xlu0 %v3986, 96
    %v3996 = vpop.permute.xlu0 %3995
    %v3997 = vsel %vm312, %v3986, 0
    %v3999 = vsel %vm312, %v3996, 0
    %4001 = vmatprep.subr.mxu0 0.0
    %4002 = vmatpush1.xpose.msra.mxu0 %v3999
    %4003 = vmatprep.subr.mxu0 0.0
    %4004 = vmatpush1.xpose.msra.mxu0 0.0
    %4005 = vmatprep.subr.mxu0 0.0
    %4006 = vmatpush1.xpose.msra.mxu0 0.0
    %4007 = vmatprep.subr.mxu0 0.0
    %4008 = vmatpush1.xpose.msra.mxu0 0.0
    %4009 = vmatprep.subr.mxu0 0.0
    %4010 = vmatpush1.xpose.msra.mxu0 0.0
    %4011 = vmatprep.subr.mxu0 0.0
    %4012 = vmatpush1.xpose.msra.mxu0 0.0
    %4013 = vmatprep.subr.mxu0 0.0
    %4014 = vmatpush1.xpose.msra.mxu0 0.0
    %4015 = vmatprep.subr.mxu0 0.0
    %4016 = vmatpush1.xpose.msra.mxu0 0.0
    %4017 = vmatprep.subr.mxu0 0.0
    %4018 = vmatpush1.xpose.msra.mxu0 0.0
    %4019 = vmatprep.subr.mxu0 0.0
    %4020 = vmatpush1.xpose.msra.mxu0 0.0
    %4021 = vmatprep.subr.mxu0 0.0
    %4022 = vmatpush1.xpose.msra.mxu0 0.0
    %4023 = vmatprep.subr.mxu0 0.0
    %4024 = vmatpush1.xpose.msra.mxu0 0.0
    %4025 = vmatprep.subr.mxu0 0.0
    %4026 = vmatpush1.xpose.msra.mxu0 0.0
    %4027 = vmatprep.subr.mxu0 0.0
    %4028 = vmatpush1.xpose.msra.mxu0 0.0
    %4029 = vmatprep.subr.mxu0 0.0
    %4030 = vmatpush1.xpose.msra.mxu0 0.0
    %4031 = vmatprep.subr.mxu0 0.0
    %4032 = vmatpush1.xpose.msra.mxu0 0.0
    %4033 = vmatprep.subr.mxu0 0.0
    %4034 = vmatpush1.xpose.msra.mxu0 0.0
    %4035 = vmatprep.subr.mxu0 0.0
    %4036 = vmatpush1.xpose.msra.mxu0 0.0
    %4037 = vmatprep.subr.mxu0 0.0
    %4038 = vmatpush1.xpose.msra.mxu0 0.0
    %4039 = vmatprep.subr.mxu0 0.0
    %4040 = vmatpush1.xpose.msra.mxu0 0.0
    %4041 = vmatprep.subr.mxu0 0.0
    %4042 = vmatpush1.xpose.msra.mxu0 0.0
    %4043 = vmatprep.subr.mxu0 0.0
    %4044 = vmatpush1.xpose.msra.mxu0 0.0
    %4045 = vmatprep.subr.mxu0 0.0
    %4046 = vmatpush1.xpose.msra.mxu0 0.0
    %4047 = vmatprep.subr.mxu0 0.0
    %4048 = vmatpush1.xpose.msra.mxu0 0.0
    %4049 = vmatprep.subr.mxu0 0.0
    %4050 = vmatpush1.xpose.msra.mxu0 0.0
    %4051 = vmatprep.subr.mxu0 0.0
    %4052 = vmatpush1.xpose.msra.mxu0 0.0
    %4053 = vmatprep.subr.mxu0 0.0
    %4054 = vmatpush1.xpose.msra.mxu0 0.0
    %4055 = vmatprep.subr.mxu0 0.0
    %4056 = vmatpush1.xpose.msra.mxu0 0.0
    %4057 = vmatprep.subr.mxu0 0.0
    %4058 = vmatpush1.xpose.msra.mxu0 0.0
    %4059 = vmatprep.subr.mxu0 0.0
    %4060 = vmatpush1.xpose.msra.mxu0 0.0
    %4061 = vmatprep.subr.mxu0 0.0
    %4062 = vmatpush1.xpose.msra.mxu0 0.0
    %4063 = vmatprep.subr.mxu0 0.0
    %4064 = vmatpush1.xpose.msra.mxu0 0.0
    %4065 = vmatprep.mubr.f32.mxu0 0.0
    %4066 = vmatmul.mubr.f32.gmra.mrb[0].mxu0 %v3997
    %v4067 = vpop.f32.mrb[0].mxu0
    %v4068 = vadd.f32 0.0, %v4067
    %v4069 = vpop.f32.mrb[0].mxu0
    %4070 = vdwg.mxu0
    %4072 = vrot.lane.b32.xlu0 %v3991, 96
    %v4073 = vpop.permute.xlu0 %4072
    %v4074 = vsel %vm312, %v3991, 0
    %v4076 = vsel %vm312, %v4073, 0
    %4078 = vmatprep.subr.mxu0 0.0
    %4079 = vmatpush1.xpose.msra.mxu0 %v4076
    %4080 = vmatprep.subr.mxu0 0.0
    %4081 = vmatpush1.xpose.msra.mxu0 0.0
    %4082 = vmatprep.subr.mxu0 0.0
    %4083 = vmatpush1.xpose.msra.mxu0 0.0
    %4084 = vmatprep.subr.mxu0 0.0
    %4085 = vmatpush1.xpose.msra.mxu0 0.0
    %4086 = vmatprep.subr.mxu0 0.0
    %4087 = vmatpush1.xpose.msra.mxu0 0.0
    %4088 = vmatprep.subr.mxu0 0.0
    %4089 = vmatpush1.xpose.msra.mxu0 0.0
    %4090 = vmatprep.subr.mxu0 0.0
    %4091 = vmatpush1.xpose.msra.mxu0 0.0
    %4092 = vmatprep.subr.mxu0 0.0
    %4093 = vmatpush1.xpose.msra.mxu0 0.0
    %4094 = vmatprep.subr.mxu0 0.0
    %4095 = vmatpush1.xpose.msra.mxu0 0.0
    %4096 = vmatprep.subr.mxu0 0.0
    %4097 = vmatpush1.xpose.msra.mxu0 0.0
    %4098 = vmatprep.subr.mxu0 0.0
    %4099 = vmatpush1.xpose.msra.mxu0 0.0
    %4100 = vmatprep.subr.mxu0 0.0
    %4101 = vmatpush1.xpose.msra.mxu0 0.0
    %4102 = vmatprep.subr.mxu0 0.0
    %4103 = vmatpush1.xpose.msra.mxu0 0.0
    %4104 = vmatprep.subr.mxu0 0.0
    %4105 = vmatpush1.xpose.msra.mxu0 0.0
    %4106 = vmatprep.subr.mxu0 0.0
    %4107 = vmatpush1.xpose.msra.mxu0 0.0
    %4108 = vmatprep.subr.mxu0 0.0
    %4109 = vmatpush1.xpose.msra.mxu0 0.0
    %4110 = vmatprep.subr.mxu0 0.0
    %4111 = vmatpush1.xpose.msra.mxu0 0.0
    %4112 = vmatprep.subr.mxu0 0.0
    %4113 = vmatpush1.xpose.msra.mxu0 0.0
    %4114 = vmatprep.subr.mxu0 0.0
    %4115 = vmatpush1.xpose.msra.mxu0 0.0
    %4116 = vmatprep.subr.mxu0 0.0
    %4117 = vmatpush1.xpose.msra.mxu0 0.0
    %4118 = vmatprep.subr.mxu0 0.0
    %4119 = vmatpush1.xpose.msra.mxu0 0.0
    %4120 = vmatprep.subr.mxu0 0.0
    %4121 = vmatpush1.xpose.msra.mxu0 0.0
    %4122 = vmatprep.subr.mxu0 0.0
    %4123 = vmatpush1.xpose.msra.mxu0 0.0
    %4124 = vmatprep.subr.mxu0 0.0
    %4125 = vmatpush1.xpose.msra.mxu0 0.0
    %4126 = vmatprep.subr.mxu0 0.0
    %4127 = vmatpush1.xpose.msra.mxu0 0.0
    %4128 = vmatprep.subr.mxu0 0.0
    %4129 = vmatpush1.xpose.msra.mxu0 0.0
    %4130 = vmatprep.subr.mxu0 0.0
    %4131 = vmatpush1.xpose.msra.mxu0 0.0
    %4132 = vmatprep.subr.mxu0 0.0
    %4133 = vmatpush1.xpose.msra.mxu0 0.0
    %4134 = vmatprep.subr.mxu0 0.0
    %4135 = vmatpush1.xpose.msra.mxu0 0.0
    %4136 = vmatprep.subr.mxu0 0.0
    %4137 = vmatpush1.xpose.msra.mxu0 0.0
    %4138 = vmatprep.subr.mxu0 0.0
    %4139 = vmatpush1.xpose.msra.mxu0 0.0
    %4140 = vmatprep.subr.mxu0 0.0
    %4141 = vmatpush1.xpose.msra.mxu0 0.0
    %4142 = vmatprep.mubr.f32.mxu0 0.0
    %4143 = vmatmul.mubr.f32.gmra.mrb[0].mxu0 %v4074
    %v4144 = vpop.f32.mrb[0].mxu0
    %v4145 = vadd.f32 0.0, %v4144
    %v4146 = vpop.f32.mrb[0].mxu0
    %4147 = vdwg.mxu0
    %v4148 = vmul.f32 %v4068, 0.35355338
    %v4149 = vmul.f32 %v4145, 0.35355338
    %v4150 = vadd.f32 %v4148, %v469
    %v4151 = vadd.f32 %v4149, %v473
    %v4152 = vmul.f32 %v4150, 1.442695
    %v4153 = vpow.pop %v4152
    %v4154 = vmul.f32 %v4151, 1.442695
    %v4155 = vpow.pop %v4154
    %v4156 = vsel %vm312, %v4153, 0.0
    %4157 = vadd.xlane.f32.xlu0 %v4156
    %v4158 = vpop.xlane.xlu0 %4157
    %v4159 = vsel %vm312, %v4155, 0.0
    %4160 = vadd.xlane.f32.xlu0 %v4159
    %v4161 = vpop.xlane.xlu0 %4160
    %v4162 = vrcp.pop %v4158
    %v4163 = vrcp.pop %v4161
    %v4164 = vmul.f32 %v4153, %v4162
    %v4165 = vmul.f32 %v4155, %v4163
    %4166 = vrot.lane.b32.xlu0 %v3986, 64
    %v4167 = vpop.permute.xlu0 %4166
    %v4170 = vsel %vm312, %v4164, 0
    %4172 = vmatprep.subr.mxu0 0.0
    %4173 = vmatpush1.msra.mxu0 %v4167
    %4174 = vmatprep.subr.mxu0 0.0
    %4175 = vmatpush1.msra.mxu0 0.0
    %4176 = vmatprep.subr.mxu0 0.0
    %4177 = vmatpush1.msra.mxu0 0.0
    %4178 = vmatprep.subr.mxu0 0.0
    %4179 = vmatpush1.msra.mxu0 0.0
    %4180 = vmatprep.subr.mxu0 0.0
    %4181 = vmatpush1.msra.mxu0 0.0
    %4182 = vmatprep.subr.mxu0 0.0
    %4183 = vmatpush1.msra.mxu0 0.0
    %4184 = vmatprep.subr.mxu0 0.0
    %4185 = vmatpush1.msra.mxu0 0.0
    %4186 = vmatprep.subr.mxu0 0.0
    %4187 = vmatpush1.msra.mxu0 0.0
    %4188 = vmatprep.subr.mxu0 0.0
    %4189 = vmatpush1.msra.mxu0 0.0
    %4190 = vmatprep.subr.mxu0 0.0
    %4191 = vmatpush1.msra.mxu0 0.0
    %4192 = vmatprep.subr.mxu0 0.0
    %4193 = vmatpush1.msra.mxu0 0.0
    %4194 = vmatprep.subr.mxu0 0.0
    %4195 = vmatpush1.msra.mxu0 0.0
    %4196 = vmatprep.subr.mxu0 0.0
    %4197 = vmatpush1.msra.mxu0 0.0
    %4198 = vmatprep.subr.mxu0 0.0
    %4199 = vmatpush1.msra.mxu0 0.0
    %4200 = vmatprep.subr.mxu0 0.0
    %4201 = vmatpush1.msra.mxu0 0.0
    %4202 = vmatprep.subr.mxu0 0.0
    %4203 = vmatpush1.msra.mxu0 0.0
    %4204 = vmatprep.subr.mxu0 0.0
    %4205 = vmatpush1.msra.mxu0 0.0
    %4206 = vmatprep.subr.mxu0 0.0
    %4207 = vmatpush1.msra.mxu0 0.0
    %4208 = vmatprep.subr.mxu0 0.0
    %4209 = vmatpush1.msra.mxu0 0.0
    %4210 = vmatprep.subr.mxu0 0.0
    %4211 = vmatpush1.msra.mxu0 0.0
    %4212 = vmatprep.subr.mxu0 0.0
    %4213 = vmatpush1.msra.mxu0 0.0
    %4214 = vmatprep.subr.mxu0 0.0
    %4215 = vmatpush1.msra.mxu0 0.0
    %4216 = vmatprep.subr.mxu0 0.0
    %4217 = vmatpush1.msra.mxu0 0.0
    %4218 = vmatprep.subr.mxu0 0.0
    %4219 = vmatpush1.msra.mxu0 0.0
    %4220 = vmatprep.subr.mxu0 0.0
    %4221 = vmatpush1.msra.mxu0 0.0
    %4222 = vmatprep.subr.mxu0 0.0
    %4223 = vmatpush1.msra.mxu0 0.0
    %4224 = vmatprep.subr.mxu0 0.0
    %4225 = vmatpush1.msra.mxu0 0.0
    %4226 = vmatprep.subr.mxu0 0.0
    %4227 = vmatpush1.msra.mxu0 0.0
    %4228 = vmatprep.subr.mxu0 0.0
    %4229 = vmatpush1.msra.mxu0 0.0
    %4230 = vmatprep.subr.mxu0 0.0
    %4231 = vmatpush1.msra.mxu0 0.0
    %4232 = vmatprep.subr.mxu0 0.0
    %4233 = vmatpush1.msra.mxu0 0.0
    %4234 = vmatprep.subr.mxu0 0.0
    %4235 = vmatpush1.msra.mxu0 0.0
    %4236 = vmatprep.mubr.f32.mxu0 0.0
    %4237 = vmatmul.mubr.f32.gmra.mrb[0].mxu0 %v4170
    %v4238 = vpop.f32.mrb[0].mxu0
    %v4239 = vadd.f32 0.0, %v4238
    %v4240 = vpop.f32.mrb[0].mxu0
    %4241 = vdwg.mxu0
    %4242 = vrot.lane.b32.xlu0 %v3991, 64
    %v4243 = vpop.permute.xlu0 %4242
    %v4246 = vsel %vm312, %v4165, 0
    %4248 = vmatprep.subr.mxu0 0.0
    %4249 = vmatpush1.msra.mxu0 %v4243
    %4250 = vmatprep.subr.mxu0 0.0
    %4251 = vmatpush1.msra.mxu0 0.0
    %4252 = vmatprep.subr.mxu0 0.0
    %4253 = vmatpush1.msra.mxu0 0.0
    %4254 = vmatprep.subr.mxu0 0.0
    %4255 = vmatpush1.msra.mxu0 0.0
    %4256 = vmatprep.subr.mxu0 0.0
    %4257 = vmatpush1.msra.mxu0 0.0
    %4258 = vmatprep.subr.mxu0 0.0
    %4259 = vmatpush1.msra.mxu0 0.0
    %4260 = vmatprep.subr.mxu0 0.0
    %4261 = vmatpush1.msra.mxu0 0.0
    %4262 = vmatprep.subr.mxu0 0.0
    %4263 = vmatpush1.msra.mxu0 0.0
    %4264 = vmatprep.subr.mxu0 0.0
    %4265 = vmatpush1.msra.mxu0 0.0
    %4266 = vmatprep.subr.mxu0 0.0
    %4267 = vmatpush1.msra.mxu0 0.0
    %4268 = vmatprep.subr.mxu0 0.0
    %4269 = vmatpush1.msra.mxu0 0.0
    %4270 = vmatprep.subr.mxu0 0.0
    %4271 = vmatpush1.msra.mxu0 0.0
    %4272 = vmatprep.subr.mxu0 0.0
    %4273 = vmatpush1.msra.mxu0 0.0
    %4274 = vmatprep.subr.mxu0 0.0
    %4275 = vmatpush1.msra.mxu0 0.0
    %4276 = vmatprep.subr.mxu0 0.0
    %4277 = vmatpush1.msra.mxu0 0.0
    %4278 = vmatprep.subr.mxu0 0.0
    %4279 = vmatpush1.msra.mxu0 0.0
    %4280 = vmatprep.subr.mxu0 0.0
    %4281 = vmatpush1.msra.mxu0 0.0
    %4282 = vmatprep.subr.mxu0 0.0
    %4283 = vmatpush1.msra.mxu0 0.0
    %4284 = vmatprep.subr.mxu0 0.0
    %4285 = vmatpush1.msra.mxu0 0.0
    %4286 = vmatprep.subr.mxu0 0.0
    %4287 = vmatpush1.msra.mxu0 0.0
    %4288 = vmatprep.subr.mxu0 0.0
    %4289 = vmatpush1.msra.mxu0 0.0
    %4290 = vmatprep.subr.mxu0 0.0
    %4291 = vmatpush1.msra.mxu0 0.0
    %4292 = vmatprep.subr.mxu0 0.0
    %4293 = vmatpush1.msra.mxu0 0.0
    %4294 = vmatprep.subr.mxu0 0.0
    %4295 = vmatpush1.msra.mxu0 0.0
    %4296 = vmatprep.subr.mxu0 0.0
    %4297 = vmatpush1.msra.mxu0 0.0
    %4298 = vmatprep.subr.mxu0 0.0
    %4299 = vmatpush1.msra.mxu0 0.0
    %4300 = vmatprep.subr.mxu0 0.0
    %4301 = vmatpush1.msra.mxu0 0.0
    %4302 = vmatprep.subr.mxu0 0.0
    %4303 = vmatpush1.msra.mxu0 0.0
    %4304 = vmatprep.subr.mxu0 0.0
    %4305 = vmatpush1.msra.mxu0 0.0
    %4306 = vmatprep.subr.mxu0 0.0
    %4307 = vmatpush1.msra.mxu0 0.0
    %4308 = vmatprep.subr.mxu0 0.0
    %4309 = vmatpush1.msra.mxu0 0.0
    %4310 = vmatprep.subr.mxu0 0.0
    %4311 = vmatpush1.msra.mxu0 0.0
    %4312 = vmatprep.mubr.f32.mxu0 0.0
    %4313 = vmatmul.mubr.f32.gmra.mrb[0].mxu0 %v4246
    %v4314 = vpop.f32.mrb[0].mxu0
    %v4315 = vadd.f32 0.0, %v4314
    %v4316 = vpop.f32.mrb[0].mxu0
    %4317 = vdwg.mxu0
    %4318 = vrot.lane.b32.xlu0 %v3986, 120
    %v4319 = vpop.permute.xlu0 %4318
    %4320 = vrot.lane.b32.xlu0 %v3986, 88
    %v4321 = vpop.permute.xlu0 %4320
    %v4322 = vsel %vm312, %v4319, 0
    %v4324 = vsel %vm312, %v4321, 0
    %4326 = vmatprep.subr.mxu0 0.0
    %4327 = vmatpush1.xpose.msra.mxu0 %v4324
    %4328 = vmatprep.subr.mxu0 0.0
    %4329 = vmatpush1.xpose.msra.mxu0 0.0
    %4330 = vmatprep.subr.mxu0 0.0
    %4331 = vmatpush1.xpose.msra.mxu0 0.0
    %4332 = vmatprep.subr.mxu0 0.0
    %4333 = vmatpush1.xpose.msra.mxu0 0.0
    %4334 = vmatprep.subr.mxu0 0.0
    %4335 = vmatpush1.xpose.msra.mxu0 0.0
    %4336 = vmatprep.subr.mxu0 0.0
    %4337 = vmatpush1.xpose.msra.mxu0 0.0
    %4338 = vmatprep.subr.mxu0 0.0
    %4339 = vmatpush1.xpose.msra.mxu0 0.0
    %4340 = vmatprep.subr.mxu0 0.0
    %4341 = vmatpush1.xpose.msra.mxu0 0.0
    %4342 = vmatprep.subr.mxu0 0.0
    %4343 = vmatpush1.xpose.msra.mxu0 0.0
    %4344 = vmatprep.subr.mxu0 0.0
    %4345 = vmatpush1.xpose.msra.mxu0 0.0
    %4346 = vmatprep.subr.mxu0 0.0
    %4347 = vmatpush1.xpose.msra.mxu0 0.0
    %4348 = vmatprep.subr.mxu0 0.0
    %4349 = vmatpush1.xpose.msra.mxu0 0.0
    %4350 = vmatprep.subr.mxu0 0.0
    %4351 = vmatpush1.xpose.msra.mxu0 0.0
    %4352 = vmatprep.subr.mxu0 0.0
    %4353 = vmatpush1.xpose.msra.mxu0 0.0
    %4354 = vmatprep.subr.mxu0 0.0
    %4355 = vmatpush1.xpose.msra.mxu0 0.0
    %4356 = vmatprep.subr.mxu0 0.0
    %4357 = vmatpush1.xpose.msra.mxu0 0.0
    %4358 = vmatprep.subr.mxu0 0.0
    %4359 = vmatpush1.xpose.msra.mxu0 0.0
    %4360 = vmatprep.subr.mxu0 0.0
    %4361 = vmatpush1.xpose.msra.mxu0 0.0
    %4362 = vmatprep.subr.mxu0 0.0
    %4363 = vmatpush1.xpose.msra.mxu0 0.0
    %4364 = vmatprep.subr.mxu0 0.0
    %4365 = vmatpush1.xpose.msra.mxu0 0.0
    %4366 = vmatprep.subr.mxu0 0.0
    %4367 = vmatpush1.xpose.msra.mxu0 0.0
    %4368 = vmatprep.subr.mxu0 0.0
    %4369 = vmatpush1.xpose.msra.mxu0 0.0
    %4370 = vmatprep.subr.mxu0 0.0
    %4371 = vmatpush1.xpose.msra.mxu0 0.0
    %4372 = vmatprep.subr.mxu0 0.0
    %4373 = vmatpush1.xpose.msra.mxu0 0.0
    %4374 = vmatprep.subr.mxu0 0.0
    %4375 = vmatpush1.xpose.msra.mxu0 0.0
    %4376 = vmatprep.subr.mxu0 0.0
    %4377 = vmatpush1.xpose.msra.mxu0 0.0
    %4378 = vmatprep.subr.mxu0 0.0
    %4379 = vmatpush1.xpose.msra.mxu0 0.0
    %4380 = vmatprep.subr.mxu0 0.0
    %4381 = vmatpush1.xpose.msra.mxu0 0.0
    %4382 = vmatprep.subr.mxu0 0.0
    %4383 = vmatpush1.xpose.msra.mxu0 0.0
    %4384 = vmatprep.subr.mxu0 0.0
    %4385 = vmatpush1.xpose.msra.mxu0 0.0
    %4386 = vmatprep.subr.mxu0 0.0
    %4387 = vmatpush1.xpose.msra.mxu0 0.0
    %4388 = vmatprep.subr.mxu0 0.0
    %4389 = vmatpush1.xpose.msra.mxu0 0.0
    %4390 = vmatprep.mubr.f32.mxu0 0.0
    %4391 = vmatmul.mubr.f32.gmra.mrb[0].mxu0 %v4322
    %v4392 = vpop.f32.mrb[0].mxu0
    %v4393 = vadd.f32 0.0, %v4392
    %v4394 = vpop.f32.mrb[0].mxu0
    %4395 = vdwg.mxu0
    %4396 = vrot.lane.b32.xlu0 %v3991, 120
    %v4397 = vpop.permute.xlu0 %4396
    %4398 = vrot.lane.b32.xlu0 %v3991, 88
    %v4399 = vpop.permute.xlu0 %4398
    %v4400 = vsel %vm312, %v4397, 0
    %v4402 = vsel %vm312, %v4399, 0
    %4404 = vmatprep.subr.mxu0 0.0
    %4405 = vmatpush1.xpose.msra.mxu0 %v4402
    %4406 = vmatprep.subr.mxu0 0.0
    %4407 = vmatpush1.xpose.msra.mxu0 0.0
    %4408 = vmatprep.subr.mxu0 0.0
    %4409 = vmatpush1.xpose.msra.mxu0 0.0
    %4410 = vmatprep.subr.mxu0 0.0
    %4411 = vmatpush1.xpose.msra.mxu0 0.0
    %4412 = vmatprep.subr.mxu0 0.0
    %4413 = vmatpush1.xpose.msra.mxu0 0.0
    %4414 = vmatprep.subr.mxu0 0.0
    %4415 = vmatpush1.xpose.msra.mxu0 0.0
    %4416 = vmatprep.subr.mxu0 0.0
    %4417 = vmatpush1.xpose.msra.mxu0 0.0
    %4418 = vmatprep.subr.mxu0 0.0
    %4419 = vmatpush1.xpose.msra.mxu0 0.0
    %4420 = vmatprep.subr.mxu0 0.0
    %4421 = vmatpush1.xpose.msra.mxu0 0.0
    %4422 = vmatprep.subr.mxu0 0.0
    %4423 = vmatpush1.xpose.msra.mxu0 0.0
    %4424 = vmatprep.subr.mxu0 0.0
    %4425 = vmatpush1.xpose.msra.mxu0 0.0
    %4426 = vmatprep.subr.mxu0 0.0
    %4427 = vmatpush1.xpose.msra.mxu0 0.0
    %4428 = vmatprep.subr.mxu0 0.0
    %4429 = vmatpush1.xpose.msra.mxu0 0.0
    %4430 = vmatprep.subr.mxu0 0.0
    %4431 = vmatpush1.xpose.msra.mxu0 0.0
    %4432 = vmatprep.subr.mxu0 0.0
    %4433 = vmatpush1.xpose.msra.mxu0 0.0
    %4434 = vmatprep.subr.mxu0 0.0
    %4435 = vmatpush1.xpose.msra.mxu0 0.0
    %4436 = vmatprep.subr.mxu0 0.0
    %4437 = vmatpush1.xpose.msra.mxu0 0.0
    %4438 = vmatprep.subr.mxu0 0.0
    %4439 = vmatpush1.xpose.msra.mxu0 0.0
    %4440 = vmatprep.subr.mxu0 0.0
    %4441 = vmatpush1.xpose.msra.mxu0 0.0
    %4442 = vmatprep.subr.mxu0 0.0
    %4443 = vmatpush1.xpose.msra.mxu0 0.0
    %4444 = vmatprep.subr.mxu0 0.0
    %4445 = vmatpush1.xpose.msra.mxu0 0.0
    %4446 = vmatprep.subr.mxu0 0.0
    %4447 = vmatpush1.xpose.msra.mxu0 0.0
    %4448 = vmatprep.subr.mxu0 0.0
    %4449 = vmatpush1.xpose.msra.mxu0 0.0
    %4450 = vmatprep.subr.mxu0 0.0
    %4451 = vmatpush1.xpose.msra.mxu0 0.0
    %4452 = vmatprep.subr.mxu0 0.0
    %4453 = vmatpush1.xpose.msra.mxu0 0.0
    %4454 = vmatprep.subr.mxu0 0.0
    %4455 = vmatpush1.xpose.msra.mxu0 0.0
    %4456 = vmatprep.subr.mxu0 0.0
    %4457 = vmatpush1.xpose.msra.mxu0 0.0
    %4458 = vmatprep.subr.mxu0 0.0
    %4459 = vmatpush1.xpose.msra.mxu0 0.0
    %4460 = vmatprep.subr.mxu0 0.0
    %4461 = vmatpush1.xpose.msra.mxu0 0.0
    %4462 = vmatprep.subr.mxu0 0.0
    %4463 = vmatpush1.xpose.msra.mxu0 0.0
    %4464 = vmatprep.subr.mxu0 0.0
    %4465 = vmatpush1.xpose.msra.mxu0 0.0
    %4466 = vmatprep.subr.mxu0 0.0
    %4467 = vmatpush1.xpose.msra.mxu0 0.0
    %4468 = vmatprep.mubr.f32.mxu0 0.0
    %4469 = vmatmul.mubr.f32.gmra.mrb[0].mxu0 %v4400
    %v4470 = vpop.f32.mrb[0].mxu0
    %v4471 = vadd.f32 0.0, %v4470
    %v4472 = vpop.f32.mrb[0].mxu0
    %4473 = vdwg.mxu0
    %v4474 = vmul.f32 %v4393, 0.35355338
    %v4475 = vmul.f32 %v4471, 0.35355338
    %v4476 = vadd.f32 %v4474, %v469
    %v4477 = vadd.f32 %v4475, %v473
    %v4478 = vmul.f32 %v4476, 1.442695
    %v4479 = vpow.pop %v4478
    %v4480 = vmul.f32 %v4477, 1.442695
    %v4481 = vpow.pop %v4480
    %v4482 = vsel %vm312, %v4479, 0.0
    %4483 = vadd.xlane.f32.xlu0 %v4482
    %v4484 = vpop.xlane.xlu0 %4483
    %v4485 = vsel %vm312, %v4481, 0.0
    %4486 = vadd.xlane.f32.xlu0 %v4485
    %v4487 = vpop.xlane.xlu0 %4486
    %v4488 = vrcp.pop %v4484
    %v4489 = vrcp.pop %v4487
    %v4490 = vmul.f32 %v4479, %v4488
    %v4491 = vmul.f32 %v4481, %v4489
    %4492 = vrot.lane.b32.xlu0 %v3986, 56
    %v4493 = vpop.permute.xlu0 %4492
    %v4496 = vsel %vm312, %v4490, 0
    %4498 = vmatprep.subr.mxu0 0.0
    %4499 = vmatpush1.msra.mxu0 %v4493
    %4500 = vmatprep.subr.mxu0 0.0
    %4501 = vmatpush1.msra.mxu0 0.0
    %4502 = vmatprep.subr.mxu0 0.0
    %4503 = vmatpush1.msra.mxu0 0.0
    %4504 = vmatprep.subr.mxu0 0.0
    %4505 = vmatpush1.msra.mxu0 0.0
    %4506 = vmatprep.subr.mxu0 0.0
    %4507 = vmatpush1.msra.mxu0 0.0
    %4508 = vmatprep.subr.mxu0 0.0
    %4509 = vmatpush1.msra.mxu0 0.0
    %4510 = vmatprep.subr.mxu0 0.0
    %4511 = vmatpush1.msra.mxu0 0.0
    %4512 = vmatprep.subr.mxu0 0.0
    %4513 = vmatpush1.msra.mxu0 0.0
    %4514 = vmatprep.subr.mxu0 0.0
    %4515 = vmatpush1.msra.mxu0 0.0
    %4516 = vmatprep.subr.mxu0 0.0
    %4517 = vmatpush1.msra.mxu0 0.0
    %4518 = vmatprep.subr.mxu0 0.0
    %4519 = vmatpush1.msra.mxu0 0.0
    %4520 = vmatprep.subr.mxu0 0.0
    %4521 = vmatpush1.msra.mxu0 0.0
    %4522 = vmatprep.subr.mxu0 0.0
    %4523 = vmatpush1.msra.mxu0 0.0
    %4524 = vmatprep.subr.mxu0 0.0
    %4525 = vmatpush1.msra.mxu0 0.0
    %4526 = vmatprep.subr.mxu0 0.0
    %4527 = vmatpush1.msra.mxu0 0.0
    %4528 = vmatprep.subr.mxu0 0.0
    %4529 = vmatpush1.msra.mxu0 0.0
    %4530 = vmatprep.subr.mxu0 0.0
    %4531 = vmatpush1.msra.mxu0 0.0
    %4532 = vmatprep.subr.mxu0 0.0
    %4533 = vmatpush1.msra.mxu0 0.0
    %4534 = vmatprep.subr.mxu0 0.0
    %4535 = vmatpush1.msra.mxu0 0.0
    %4536 = vmatprep.subr.mxu0 0.0
    %4537 = vmatpush1.msra.mxu0 0.0
    %4538 = vmatprep.subr.mxu0 0.0
    %4539 = vmatpush1.msra.mxu0 0.0
    %4540 = vmatprep.subr.mxu0 0.0
    %4541 = vmatpush1.msra.mxu0 0.0
    %4542 = vmatprep.subr.mxu0 0.0
    %4543 = vmatpush1.msra.mxu0 0.0
    %4544 = vmatprep.subr.mxu0 0.0
    %4545 = vmatpush1.msra.mxu0 0.0
    %4546 = vmatprep.subr.mxu0 0.0
    %4547 = vmatpush1.msra.mxu0 0.0
    %4548 = vmatprep.subr.mxu0 0.0
    %4549 = vmatpush1.msra.mxu0 0.0
    %4550 = vmatprep.subr.mxu0 0.0
    %4551 = vmatpush1.msra.mxu0 0.0
    %4552 = vmatprep.subr.mxu0 0.0
    %4553 = vmatpush1.msra.mxu0 0.0
    %4554 = vmatprep.subr.mxu0 0.0
    %4555 = vmatpush1.msra.mxu0 0.0
    %4556 = vmatprep.subr.mxu0 0.0
    %4557 = vmatpush1.msra.mxu0 0.0
    %4558 = vmatprep.subr.mxu0 0.0
    %4559 = vmatpush1.msra.mxu0 0.0
    %4560 = vmatprep.subr.mxu0 0.0
    %4561 = vmatpush1.msra.mxu0 0.0
    %4562 = vmatprep.mubr.f32.mxu0 0.0
    %4563 = vmatmul.mubr.f32.gmra.mrb[0].mxu0 %v4496
    %v4564 = vpop.f32.mrb[0].mxu0
    %v4565 = vadd.f32 0.0, %v4564
    %v4566 = vpop.f32.mrb[0].mxu0
    %4567 = vdwg.mxu0
    %4568 = vrot.lane.b32.xlu0 %v3991, 56
    %v4569 = vpop.permute.xlu0 %4568
    %v4572 = vsel %vm312, %v4491, 0
    %4574 = vmatprep.subr.mxu0 0.0
    %4575 = vmatpush1.msra.mxu0 %v4569
    %4576 = vmatprep.subr.mxu0 0.0
    %4577 = vmatpush1.msra.mxu0 0.0
    %4578 = vmatprep.subr.mxu0 0.0
    %4579 = vmatpush1.msra.mxu0 0.0
    %4580 = vmatprep.subr.mxu0 0.0
    %4581 = vmatpush1.msra.mxu0 0.0
    %4582 = vmatprep.subr.mxu0 0.0
    %4583 = vmatpush1.msra.mxu0 0.0
    %4584 = vmatprep.subr.mxu0 0.0
    %4585 = vmatpush1.msra.mxu0 0.0
    %4586 = vmatprep.subr.mxu0 0.0
    %4587 = vmatpush1.msra.mxu0 0.0
    %4588 = vmatprep.subr.mxu0 0.0
    %4589 = vmatpush1.msra.mxu0 0.0
    %4590 = vmatprep.subr.mxu0 0.0
    %4591 = vmatpush1.msra.mxu0 0.0
    %4592 = vmatprep.subr.mxu0 0.0
    %4593 = vmatpush1.msra.mxu0 0.0
    %4594 = vmatprep.subr.mxu0 0.0
    %4595 = vmatpush1.msra.mxu0 0.0
    %4596 = vmatprep.subr.mxu0 0.0
    %4597 = vmatpush1.msra.mxu0 0.0
    %4598 = vmatprep.subr.mxu0 0.0
    %4599 = vmatpush1.msra.mxu0 0.0
    %4600 = vmatprep.subr.mxu0 0.0
    %4601 = vmatpush1.msra.mxu0 0.0
    %4602 = vmatprep.subr.mxu0 0.0
    %4603 = vmatpush1.msra.mxu0 0.0
    %4604 = vmatprep.subr.mxu0 0.0
    %4605 = vmatpush1.msra.mxu0 0.0
    %4606 = vmatprep.subr.mxu0 0.0
    %4607 = vmatpush1.msra.mxu0 0.0
    %4608 = vmatprep.subr.mxu0 0.0
    %4609 = vmatpush1.msra.mxu0 0.0
    %4610 = vmatprep.subr.mxu0 0.0
    %4611 = vmatpush1.msra.mxu0 0.0
    %4612 = vmatprep.subr.mxu0 0.0
    %4613 = vmatpush1.msra.mxu0 0.0
    %4614 = vmatprep.subr.mxu0 0.0
    %4615 = vmatpush1.msra.mxu0 0.0
    %4616 = vmatprep.subr.mxu0 0.0
    %4617 = vmatpush1.msra.mxu0 0.0
    %4618 = vmatprep.subr.mxu0 0.0
    %4619 = vmatpush1.msra.mxu0 0.0
    %4620 = vmatprep.subr.mxu0 0.0
    %4621 = vmatpush1.msra.mxu0 0.0
    %4622 = vmatprep.subr.mxu0 0.0
    %4623 = vmatpush1.msra.mxu0 0.0
    %4624 = vmatprep.subr.mxu0 0.0
    %4625 = vmatpush1.msra.mxu0 0.0
    %4626 = vmatprep.subr.mxu0 0.0
    %4627 = vmatpush1.msra.mxu0 0.0
    %4628 = vmatprep.subr.mxu0 0.0
    %4629 = vmatpush1.msra.mxu0 0.0
    %4630 = vmatprep.subr.mxu0 0.0
    %4631 = vmatpush1.msra.mxu0 0.0
    %4632 = vmatprep.subr.mxu0 0.0
    %4633 = vmatpush1.msra.mxu0 0.0
    %4634 = vmatprep.subr.mxu0 0.0
    %4635 = vmatpush1.msra.mxu0 0.0
    %4636 = vmatprep.subr.mxu0 0.0
    %4637 = vmatpush1.msra.mxu0 0.0
    %4638 = vmatprep.mubr.f32.mxu0 0.0
    %4639 = vmatmul.mubr.f32.gmra.mrb[0].mxu0 %v4572
    %v4640 = vpop.f32.mrb[0].mxu0
    %v4641 = vadd.f32 0.0, %v4640
    %v4642 = vpop.f32.mrb[0].mxu0
    %4643 = vdwg.mxu0
    %4644 = vrot.lane.b32.xlu0 %v3986, 112
    %v4645 = vpop.permute.xlu0 %4644
    %4646 = vrot.lane.b32.xlu0 %v3986, 80
    %v4647 = vpop.permute.xlu0 %4646
    %v4648 = vsel %vm312, %v4645, 0
    %v4650 = vsel %vm312, %v4647, 0
    %4652 = vmatprep.subr.mxu0 0.0
    %4653 = vmatpush1.xpose.msra.mxu0 %v4650
    %4654 = vmatprep.subr.mxu0 0.0
    %4655 = vmatpush1.xpose.msra.mxu0 0.0
    %4656 = vmatprep.subr.mxu0 0.0
    %4657 = vmatpush1.xpose.msra.mxu0 0.0
    %4658 = vmatprep.subr.mxu0 0.0
    %4659 = vmatpush1.xpose.msra.mxu0 0.0
    %4660 = vmatprep.subr.mxu0 0.0
    %4661 = vmatpush1.xpose.msra.mxu0 0.0
    %4662 = vmatprep.subr.mxu0 0.0
    %4663 = vmatpush1.xpose.msra.mxu0 0.0
    %4664 = vmatprep.subr.mxu0 0.0
    %4665 = vmatpush1.xpose.msra.mxu0 0.0
    %4666 = vmatprep.subr.mxu0 0.0
    %4667 = vmatpush1.xpose.msra.mxu0 0.0
    %4668 = vmatprep.subr.mxu0 0.0
    %4669 = vmatpush1.xpose.msra.mxu0 0.0
    %4670 = vmatprep.subr.mxu0 0.0
    %4671 = vmatpush1.xpose.msra.mxu0 0.0
    %4672 = vmatprep.subr.mxu0 0.0
    %4673 = vmatpush1.xpose.msra.mxu0 0.0
    %4674 = vmatprep.subr.mxu0 0.0
    %4675 = vmatpush1.xpose.msra.mxu0 0.0
    %4676 = vmatprep.subr.mxu0 0.0
    %4677 = vmatpush1.xpose.msra.mxu0 0.0
    %4678 = vmatprep.subr.mxu0 0.0
    %4679 = vmatpush1.xpose.msra.mxu0 0.0
    %4680 = vmatprep.subr.mxu0 0.0
    %4681 = vmatpush1.xpose.msra.mxu0 0.0
    %4682 = vmatprep.subr.mxu0 0.0
    %4683 = vmatpush1.xpose.msra.mxu0 0.0
    %4684 = vmatprep.subr.mxu0 0.0
    %4685 = vmatpush1.xpose.msra.mxu0 0.0
    %4686 = vmatprep.subr.mxu0 0.0
    %4687 = vmatpush1.xpose.msra.mxu0 0.0
    %4688 = vmatprep.subr.mxu0 0.0
    %4689 = vmatpush1.xpose.msra.mxu0 0.0
    %4690 = vmatprep.subr.mxu0 0.0
    %4691 = vmatpush1.xpose.msra.mxu0 0.0
    %4692 = vmatprep.subr.mxu0 0.0
    %4693 = vmatpush1.xpose.msra.mxu0 0.0
    %4694 = vmatprep.subr.mxu0 0.0
    %4695 = vmatpush1.xpose.msra.mxu0 0.0
    %4696 = vmatprep.subr.mxu0 0.0
    %4697 = vmatpush1.xpose.msra.mxu0 0.0
    %4698 = vmatprep.subr.mxu0 0.0
    %4699 = vmatpush1.xpose.msra.mxu0 0.0
    %4700 = vmatprep.subr.mxu0 0.0
    %4701 = vmatpush1.xpose.msra.mxu0 0.0
    %4702 = vmatprep.subr.mxu0 0.0
    %4703 = vmatpush1.xpose.msra.mxu0 0.0
    %4704 = vmatprep.subr.mxu0 0.0
    %4705 = vmatpush1.xpose.msra.mxu0 0.0
    %4706 = vmatprep.subr.mxu0 0.0
    %4707 = vmatpush1.xpose.msra.mxu0 0.0
    %4708 = vmatprep.subr.mxu0 0.0
    %4709 = vmatpush1.xpose.msra.mxu0 0.0
    %4710 = vmatprep.subr.mxu0 0.0
    %4711 = vmatpush1.xpose.msra.mxu0 0.0
    %4712 = vmatprep.subr.mxu0 0.0
    %4713 = vmatpush1.xpose.msra.mxu0 0.0
    %4714 = vmatprep.subr.mxu0 0.0
    %4715 = vmatpush1.xpose.msra.mxu0 0.0
    %4716 = vmatprep.mubr.f32.mxu0 0.0
    %4717 = vmatmul.mubr.f32.gmra.mrb[0].mxu0 %v4648
    %v4718 = vpop.f32.mrb[0].mxu0
    %v4719 = vadd.f32 0.0, %v4718
    %v4720 = vpop.f32.mrb[0].mxu0
    %4721 = vdwg.mxu0
    %4722 = vrot.lane.b32.xlu0 %v3991, 112
    %v4723 = vpop.permute.xlu0 %4722
    %4724 = vrot.lane.b32.xlu0 %v3991, 80
    %v4725 = vpop.permute.xlu0 %4724
    %v4726 = vsel %vm312, %v4723, 0
    %v4728 = vsel %vm312, %v4725, 0
    %4730 = vmatprep.subr.mxu0 0.0
    %4731 = vmatpush1.xpose.msra.mxu0 %v4728
    %4732 = vmatprep.subr.mxu0 0.0
    %4733 = vmatpush1.xpose.msra.mxu0 0.0
    %4734 = vmatprep.subr.mxu0 0.0
    %4735 = vmatpush1.xpose.msra.mxu0 0.0
    %4736 = vmatprep.subr.mxu0 0.0
    %4737 = vmatpush1.xpose.msra.mxu0 0.0
    %4738 = vmatprep.subr.mxu0 0.0
    %4739 = vmatpush1.xpose.msra.mxu0 0.0
    %4740 = vmatprep.subr.mxu0 0.0
    %4741 = vmatpush1.xpose.msra.mxu0 0.0
    %4742 = vmatprep.subr.mxu0 0.0
    %4743 = vmatpush1.xpose.msra.mxu0 0.0
    %4744 = vmatprep.subr.mxu0 0.0
    %4745 = vmatpush1.xpose.msra.mxu0 0.0
    %4746 = vmatprep.subr.mxu0 0.0
    %4747 = vmatpush1.xpose.msra.mxu0 0.0
    %4748 = vmatprep.subr.mxu0 0.0
    %4749 = vmatpush1.xpose.msra.mxu0 0.0
    %4750 = vmatprep.subr.mxu0 0.0
    %4751 = vmatpush1.xpose.msra.mxu0 0.0
    %4752 = vmatprep.subr.mxu0 0.0
    %4753 = vmatpush1.xpose.msra.mxu0 0.0
    %4754 = vmatprep.subr.mxu0 0.0
    %4755 = vmatpush1.xpose.msra.mxu0 0.0
    %4756 = vmatprep.subr.mxu0 0.0
    %4757 = vmatpush1.xpose.msra.mxu0 0.0
    %4758 = vmatprep.subr.mxu0 0.0
    %4759 = vmatpush1.xpose.msra.mxu0 0.0
    %4760 = vmatprep.subr.mxu0 0.0
    %4761 = vmatpush1.xpose.msra.mxu0 0.0
    %4762 = vmatprep.subr.mxu0 0.0
    %4763 = vmatpush1.xpose.msra.mxu0 0.0
    %4764 = vmatprep.subr.mxu0 0.0
    %4765 = vmatpush1.xpose.msra.mxu0 0.0
    %4766 = vmatprep.subr.mxu0 0.0
    %4767 = vmatpush1.xpose.msra.mxu0 0.0
    %4768 = vmatprep.subr.mxu0 0.0
    %4769 = vmatpush1.xpose.msra.mxu0 0.0
    %4770 = vmatprep.subr.mxu0 0.0
    %4771 = vmatpush1.xpose.msra.mxu0 0.0
    %4772 = vmatprep.subr.mxu0 0.0
    %4773 = vmatpush1.xpose.msra.mxu0 0.0
    %4774 = vmatprep.subr.mxu0 0.0
    %4775 = vmatpush1.xpose.msra.mxu0 0.0
    %4776 = vmatprep.subr.mxu0 0.0
    %4777 = vmatpush1.xpose.msra.mxu0 0.0
    %4778 = vmatprep.subr.mxu0 0.0
    %4779 = vmatpush1.xpose.msra.mxu0 0.0
    %4780 = vmatprep.subr.mxu0 0.0
    %4781 = vmatpush1.xpose.msra.mxu0 0.0
    %4782 = vmatprep.subr.mxu0 0.0
    %4783 = vmatpush1.xpose.msra.mxu0 0.0
    %4784 = vmatprep.subr.mxu0 0.0
    %4785 = vmatpush1.xpose.msra.mxu0 0.0
    %4786 = vmatprep.subr.mxu0 0.0
    %4787 = vmatpush1.xpose.msra.mxu0 0.0
    %4788 = vmatprep.subr.mxu0 0.0
    %4789 = vmatpush1.xpose.msra.mxu0 0.0
    %4790 = vmatprep.subr.mxu0 0.0
    %4791 = vmatpush1.xpose.msra.mxu0 0.0
    %4792 = vmatprep.subr.mxu0 0.0
    %4793 = vmatpush1.xpose.msra.mxu0 0.0
    %4794 = vmatprep.mubr.f32.mxu0 0.0
    %4795 = vmatmul.mubr.f32.gmra.mrb[0].mxu0 %v4726
    %v4796 = vpop.f32.mrb[0].mxu0
    %v4797 = vadd.f32 0.0, %v4796
    %v4798 = vpop.f32.mrb[0].mxu0
    %4799 = vdwg.mxu0
    %v4800 = vmul.f32 %v4719, 0.35355338
    %v4801 = vmul.f32 %v4797, 0.35355338
    %v4802 = vadd.f32 %v4800, %v469
    %v4803 = vadd.f32 %v4801, %v473
    %v4804 = vmul.f32 %v4802, 1.442695
    %v4805 = vpow.pop %v4804
    %v4806 = vmul.f32 %v4803, 1.442695
    %v4807 = vpow.pop %v4806
    %v4808 = vsel %vm312, %v4805, 0.0
    %4809 = vadd.xlane.f32.xlu0 %v4808
    %v4810 = vpop.xlane.xlu0 %4809
    %v4811 = vsel %vm312, %v4807, 0.0
    %4812 = vadd.xlane.f32.xlu0 %v4811
    %v4813 = vpop.xlane.xlu0 %4812
    %v4814 = vrcp.pop %v4810
    %v4815 = vrcp.pop %v4813
    %v4816 = vmul.f32 %v4805, %v4814
    %v4817 = vmul.f32 %v4807, %v4815
    %4818 = vrot.lane.b32.xlu0 %v3986, 48
    %v4819 = vpop.permute.xlu0 %4818
    %v4822 = vsel %vm312, %v4816, 0
    %4824 = vmatprep.subr.mxu0 0.0
    %4825 = vmatpush1.msra.mxu0 %v4819
    %4826 = vmatprep.subr.mxu0 0.0
    %4827 = vmatpush1.msra.mxu0 0.0
    %4828 = vmatprep.subr.mxu0 0.0
    %4829 = vmatpush1.msra.mxu0 0.0
    %4830 = vmatprep.subr.mxu0 0.0
    %4831 = vmatpush1.msra.mxu0 0.0
    %4832 = vmatprep.subr.mxu0 0.0
    %4833 = vmatpush1.msra.mxu0 0.0
    %4834 = vmatprep.subr.mxu0 0.0
    %4835 = vmatpush1.msra.mxu0 0.0
    %4836 = vmatprep.subr.mxu0 0.0
    %4837 = vmatpush1.msra.mxu0 0.0
    %4838 = vmatprep.subr.mxu0 0.0
    %4839 = vmatpush1.msra.mxu0 0.0
    %4840 = vmatprep.subr.mxu0 0.0
    %4841 = vmatpush1.msra.mxu0 0.0
    %4842 = vmatprep.subr.mxu0 0.0
    %4843 = vmatpush1.msra.mxu0 0.0
    %4844 = vmatprep.subr.mxu0 0.0
    %4845 = vmatpush1.msra.mxu0 0.0
    %4846 = vmatprep.subr.mxu0 0.0
    %4847 = vmatpush1.msra.mxu0 0.0
    %4848 = vmatprep.subr.mxu0 0.0
    %4849 = vmatpush1.msra.mxu0 0.0
    %4850 = vmatprep.subr.mxu0 0.0
    %4851 = vmatpush1.msra.mxu0 0.0
    %4852 = vmatprep.subr.mxu0 0.0
    %4853 = vmatpush1.msra.mxu0 0.0
    %4854 = vmatprep.subr.mxu0 0.0
    %4855 = vmatpush1.msra.mxu0 0.0
    %4856 = vmatprep.subr.mxu0 0.0
    %4857 = vmatpush1.msra.mxu0 0.0
    %4858 = vmatprep.subr.mxu0 0.0
    %4859 = vmatpush1.msra.mxu0 0.0
    %4860 = vmatprep.subr.mxu0 0.0
    %4861 = vmatpush1.msra.mxu0 0.0
    %4862 = vmatprep.subr.mxu0 0.0
    %4863 = vmatpush1.msra.mxu0 0.0
    %4864 = vmatprep.subr.mxu0 0.0
    %4865 = vmatpush1.msra.mxu0 0.0
    %4866 = vmatprep.subr.mxu0 0.0
    %4867 = vmatpush1.msra.mxu0 0.0
    %4868 = vmatprep.subr.mxu0 0.0
    %4869 = vmatpush1.msra.mxu0 0.0
    %4870 = vmatprep.subr.mxu0 0.0
    %4871 = vmatpush1.msra.mxu0 0.0
    %4872 = vmatprep.subr.mxu0 0.0
    %4873 = vmatpush1.msra.mxu0 0.0
    %4874 = vmatprep.subr.mxu0 0.0
    %4875 = vmatpush1.msra.mxu0 0.0
    %4876 = vmatprep.subr.mxu0 0.0
    %4877 = vmatpush1.msra.mxu0 0.0
    %4878 = vmatprep.subr.mxu0 0.0
    %4879 = vmatpush1.msra.mxu0 0.0
    %4880 = vmatprep.subr.mxu0 0.0
    %4881 = vmatpush1.msra.mxu0 0.0
    %4882 = vmatprep.subr.mxu0 0.0
    %4883 = vmatpush1.msra.mxu0 0.0
    %4884 = vmatprep.subr.mxu0 0.0
    %4885 = vmatpush1.msra.mxu0 0.0
    %4886 = vmatprep.subr.mxu0 0.0
    %4887 = vmatpush1.msra.mxu0 0.0
    %4888 = vmatprep.mubr.f32.mxu0 0.0
    %4889 = vmatmul.mubr.f32.gmra.mrb[0].mxu0 %v4822
    %v4890 = vpop.f32.mrb[0].mxu0
    %v4891 = vadd.f32 0.0, %v4890
    %v4892 = vpop.f32.mrb[0].mxu0
    %4893 = vdwg.mxu0
    %4894 = vrot.lane.b32.xlu0 %v3991, 48
    %v4895 = vpop.permute.xlu0 %4894
    %v4898 = vsel %vm312, %v4817, 0
    %4900 = vmatprep.subr.mxu0 0.0
    %4901 = vmatpush1.msra.mxu0 %v4895
    %4902 = vmatprep.subr.mxu0 0.0
    %4903 = vmatpush1.msra.mxu0 0.0
    %4904 = vmatprep.subr.mxu0 0.0
    %4905 = vmatpush1.msra.mxu0 0.0
    %4906 = vmatprep.subr.mxu0 0.0
    %4907 = vmatpush1.msra.mxu0 0.0
    %4908 = vmatprep.subr.mxu0 0.0
    %4909 = vmatpush1.msra.mxu0 0.0
    %4910 = vmatprep.subr.mxu0 0.0
    %4911 = vmatpush1.msra.mxu0 0.0
    %4912 = vmatprep.subr.mxu0 0.0
    %4913 = vmatpush1.msra.mxu0 0.0
    %4914 = vmatprep.subr.mxu0 0.0
    %4915 = vmatpush1.msra.mxu0 0.0
    %4916 = vmatprep.subr.mxu0 0.0
    %4917 = vmatpush1.msra.mxu0 0.0
    %4918 = vmatprep.subr.mxu0 0.0
    %4919 = vmatpush1.msra.mxu0 0.0
    %4920 = vmatprep.subr.mxu0 0.0
    %4921 = vmatpush1.msra.mxu0 0.0
    %4922 = vmatprep.subr.mxu0 0.0
    %4923 = vmatpush1.msra.mxu0 0.0
    %4924 = vmatprep.subr.mxu0 0.0
    %4925 = vmatpush1.msra.mxu0 0.0
    %4926 = vmatprep.subr.mxu0 0.0
    %4927 = vmatpush1.msra.mxu0 0.0
    %4928 = vmatprep.subr.mxu0 0.0
    %4929 = vmatpush1.msra.mxu0 0.0
    %4930 = vmatprep.subr.mxu0 0.0
    %4931 = vmatpush1.msra.mxu0 0.0
    %4932 = vmatprep.subr.mxu0 0.0
    %4933 = vmatpush1.msra.mxu0 0.0
    %4934 = vmatprep.subr.mxu0 0.0
    %4935 = vmatpush1.msra.mxu0 0.0
    %4936 = vmatprep.subr.mxu0 0.0
    %4937 = vmatpush1.msra.mxu0 0.0
    %4938 = vmatprep.subr.mxu0 0.0
    %4939 = vmatpush1.msra.mxu0 0.0
    %4940 = vmatprep.subr.mxu0 0.0
    %4941 = vmatpush1.msra.mxu0 0.0
    %4942 = vmatprep.subr.mxu0 0.0
    %4943 = vmatpush1.msra.mxu0 0.0
    %4944 = vmatprep.subr.mxu0 0.0
    %4945 = vmatpush1.msra.mxu0 0.0
    %4946 = vmatprep.subr.mxu0 0.0
    %4947 = vmatpush1.msra.mxu0 0.0
    %4948 = vmatprep.subr.mxu0 0.0
    %4949 = vmatpush1.msra.mxu0 0.0
    %4950 = vmatprep.subr.mxu0 0.0
    %4951 = vmatpush1.msra.mxu0 0.0
    %4952 = vmatprep.subr.mxu0 0.0
    %4953 = vmatpush1.msra.mxu0 0.0
    %4954 = vmatprep.subr.mxu0 0.0
    %4955 = vmatpush1.msra.mxu0 0.0
    %4956 = vmatprep.subr.mxu0 0.0
    %4957 = vmatpush1.msra.mxu0 0.0
    %4958 = vmatprep.subr.mxu0 0.0
    %4959 = vmatpush1.msra.mxu0 0.0
    %4960 = vmatprep.subr.mxu0 0.0
    %4961 = vmatpush1.msra.mxu0 0.0
    %4962 = vmatprep.subr.mxu0 0.0
    %4963 = vmatpush1.msra.mxu0 0.0
    %4964 = vmatprep.mubr.f32.mxu0 0.0
    %4965 = vmatmul.mubr.f32.gmra.mrb[0].mxu0 %v4898
    %v4966 = vpop.f32.mrb[0].mxu0
    %v4967 = vadd.f32 0.0, %v4966
    %v4968 = vpop.f32.mrb[0].mxu0
    %4969 = vdwg.mxu0
    %4970 = vrot.lane.b32.xlu0 %v3986, 104
    %v4971 = vpop.permute.xlu0 %4970
    %4972 = vrot.lane.b32.xlu0 %v3986, 72
    %v4973 = vpop.permute.xlu0 %4972
    %v4974 = vsel %vm312, %v4971, 0
    %v4976 = vsel %vm312, %v4973, 0
    %4978 = vmatprep.subr.mxu0 0.0
    %4979 = vmatpush1.xpose.msra.mxu0 %v4976
    %4980 = vmatprep.subr.mxu0 0.0
    %4981 = vmatpush1.xpose.msra.mxu0 0.0
    %4982 = vmatprep.subr.mxu0 0.0
    %4983 = vmatpush1.xpose.msra.mxu0 0.0
    %4984 = vmatprep.subr.mxu0 0.0
    %4985 = vmatpush1.xpose.msra.mxu0 0.0
    %4986 = vmatprep.subr.mxu0 0.0
    %4987 = vmatpush1.xpose.msra.mxu0 0.0
    %4988 = vmatprep.subr.mxu0 0.0
    %4989 = vmatpush1.xpose.msra.mxu0 0.0
    %4990 = vmatprep.subr.mxu0 0.0
    %4991 = vmatpush1.xpose.msra.mxu0 0.0
    %4992 = vmatprep.subr.mxu0 0.0
    %4993 = vmatpush1.xpose.msra.mxu0 0.0
    %4994 = vmatprep.subr.mxu0 0.0
    %4995 = vmatpush1.xpose.msra.mxu0 0.0
    %4996 = vmatprep.subr.mxu0 0.0
    %4997 = vmatpush1.xpose.msra.mxu0 0.0
    %4998 = vmatprep.subr.mxu0 0.0
    %4999 = vmatpush1.xpose.msra.mxu0 0.0
    %5000 = vmatprep.subr.mxu0 0.0
    %5001 = vmatpush1.xpose.msra.mxu0 0.0
    %5002 = vmatprep.subr.mxu0 0.0
    %5003 = vmatpush1.xpose.msra.mxu0 0.0
    %5004 = vmatprep.subr.mxu0 0.0
    %5005 = vmatpush1.xpose.msra.mxu0 0.0
    %5006 = vmatprep.subr.mxu0 0.0
    %5007 = vmatpush1.xpose.msra.mxu0 0.0
    %5008 = vmatprep.subr.mxu0 0.0
    %5009 = vmatpush1.xpose.msra.mxu0 0.0
    %5010 = vmatprep.subr.mxu0 0.0
    %5011 = vmatpush1.xpose.msra.mxu0 0.0
    %5012 = vmatprep.subr.mxu0 0.0
    %5013 = vmatpush1.xpose.msra.mxu0 0.0
    %5014 = vmatprep.subr.mxu0 0.0
    %5015 = vmatpush1.xpose.msra.mxu0 0.0
    %5016 = vmatprep.subr.mxu0 0.0
    %5017 = vmatpush1.xpose.msra.mxu0 0.0
    %5018 = vmatprep.subr.mxu0 0.0
    %5019 = vmatpush1.xpose.msra.mxu0 0.0
    %5020 = vmatprep.subr.mxu0 0.0
    %5021 = vmatpush1.xpose.msra.mxu0 0.0
    %5022 = vmatprep.subr.mxu0 0.0
    %5023 = vmatpush1.xpose.msra.mxu0 0.0
    %5024 = vmatprep.subr.mxu0 0.0
    %5025 = vmatpush1.xpose.msra.mxu0 0.0
    %5026 = vmatprep.subr.mxu0 0.0
    %5027 = vmatpush1.xpose.msra.mxu0 0.0
    %5028 = vmatprep.subr.mxu0 0.0
    %5029 = vmatpush1.xpose.msra.mxu0 0.0
    %5030 = vmatprep.subr.mxu0 0.0
    %5031 = vmatpush1.xpose.msra.mxu0 0.0
    %5032 = vmatprep.subr.mxu0 0.0
    %5033 = vmatpush1.xpose.msra.mxu0 0.0
    %5034 = vmatprep.subr.mxu0 0.0
    %5035 = vmatpush1.xpose.msra.mxu0 0.0
    %5036 = vmatprep.subr.mxu0 0.0
    %5037 = vmatpush1.xpose.msra.mxu0 0.0
    %5038 = vmatprep.subr.mxu0 0.0
    %5039 = vmatpush1.xpose.msra.mxu0 0.0
    %5040 = vmatprep.subr.mxu0 0.0
    %5041 = vmatpush1.xpose.msra.mxu0 0.0
    %5042 = vmatprep.mubr.f32.mxu0 0.0
    %5043 = vmatmul.mubr.f32.gmra.mrb[0].mxu0 %v4974
    %v5044 = vpop.f32.mrb[0].mxu0
    %v5045 = vadd.f32 0.0, %v5044
    %v5046 = vpop.f32.mrb[0].mxu0
    %5047 = vdwg.mxu0
    %5048 = vrot.lane.b32.xlu0 %v3991, 104
    %v5049 = vpop.permute.xlu0 %5048
    %5050 = vrot.lane.b32.xlu0 %v3991, 72
    %v5051 = vpop.permute.xlu0 %5050
    %v5052 = vsel %vm312, %v5049, 0
    %v5054 = vsel %vm312, %v5051, 0
    %5056 = vmatprep.subr.mxu0 0.0
    %5057 = vmatpush1.xpose.msra.mxu0 %v5054
    %5058 = vmatprep.subr.mxu0 0.0
    %5059 = vmatpush1.xpose.msra.mxu0 0.0
    %5060 = vmatprep.subr.mxu0 0.0
    %5061 = vmatpush1.xpose.msra.mxu0 0.0
    %5062 = vmatprep.subr.mxu0 0.0
    %5063 = vmatpush1.xpose.msra.mxu0 0.0
    %5064 = vmatprep.subr.mxu0 0.0
    %5065 = vmatpush1.xpose.msra.mxu0 0.0
    %5066 = vmatprep.subr.mxu0 0.0
    %5067 = vmatpush1.xpose.msra.mxu0 0.0
    %5068 = vmatprep.subr.mxu0 0.0
    %5069 = vmatpush1.xpose.msra.mxu0 0.0
    %5070 = vmatprep.subr.mxu0 0.0
    %5071 = vmatpush1.xpose.msra.mxu0 0.0
    %5072 = vmatprep.subr.mxu0 0.0
    %5073 = vmatpush1.xpose.msra.mxu0 0.0
    %5074 = vmatprep.subr.mxu0 0.0
    %5075 = vmatpush1.xpose.msra.mxu0 0.0
    %5076 = vmatprep.subr.mxu0 0.0
    %5077 = vmatpush1.xpose.msra.mxu0 0.0
    %5078 = vmatprep.subr.mxu0 0.0
    %5079 = vmatpush1.xpose.msra.mxu0 0.0
    %5080 = vmatprep.subr.mxu0 0.0
    %5081 = vmatpush1.xpose.msra.mxu0 0.0
    %5082 = vmatprep.subr.mxu0 0.0
    %5083 = vmatpush1.xpose.msra.mxu0 0.0
    %5084 = vmatprep.subr.mxu0 0.0
    %5085 = vmatpush1.xpose.msra.mxu0 0.0
    %5086 = vmatprep.subr.mxu0 0.0
    %5087 = vmatpush1.xpose.msra.mxu0 0.0
    %5088 = vmatprep.subr.mxu0 0.0
    %5089 = vmatpush1.xpose.msra.mxu0 0.0
    %5090 = vmatprep.subr.mxu0 0.0
    %5091 = vmatpush1.xpose.msra.mxu0 0.0
    %5092 = vmatprep.subr.mxu0 0.0
    %5093 = vmatpush1.xpose.msra.mxu0 0.0
    %5094 = vmatprep.subr.mxu0 0.0
    %5095 = vmatpush1.xpose.msra.mxu0 0.0
    %5096 = vmatprep.subr.mxu0 0.0
    %5097 = vmatpush1.xpose.msra.mxu0 0.0
    %5098 = vmatprep.subr.mxu0 0.0
    %5099 = vmatpush1.xpose.msra.mxu0 0.0
    %5100 = vmatprep.subr.mxu0 0.0
    %5101 = vmatpush1.xpose.msra.mxu0 0.0
    %5102 = vmatprep.subr.mxu0 0.0
    %5103 = vmatpush1.xpose.msra.mxu0 0.0
    %5104 = vmatprep.subr.mxu0 0.0
    %5105 = vmatpush1.xpose.msra.mxu0 0.0
    %5106 = vmatprep.subr.mxu0 0.0
    %5107 = vmatpush1.xpose.msra.mxu0 0.0
    %5108 = vmatprep.subr.mxu0 0.0
    %5109 = vmatpush1.xpose.msra.mxu0 0.0
    %5110 = vmatprep.subr.mxu0 0.0
    %5111 = vmatpush1.xpose.msra.mxu0 0.0
    %5112 = vmatprep.subr.mxu0 0.0
    %5113 = vmatpush1.xpose.msra.mxu0 0.0
    %5114 = vmatprep.subr.mxu0 0.0
    %5115 = vmatpush1.xpose.msra.mxu0 0.0
    %5116 = vmatprep.subr.mxu0 0.0
    %5117 = vmatpush1.xpose.msra.mxu0 0.0
    %5118 = vmatprep.subr.mxu0 0.0
    %5119 = vmatpush1.xpose.msra.mxu0 0.0
    %5120 = vmatprep.mubr.f32.mxu0 0.0
    %5121 = vmatmul.mubr.f32.gmra.mrb[0].mxu0 %v5052
    %v5122 = vpop.f32.mrb[0].mxu0
    %v5123 = vadd.f32 0.0, %v5122
    %v5124 = vpop.f32.mrb[0].mxu0
    %5125 = vdwg.mxu0
    %v5126 = vmul.f32 %v5045, 0.35355338
    %v5127 = vmul.f32 %v5123, 0.35355338
    %v5128 = vadd.f32 %v5126, %v469
    %v5129 = vadd.f32 %v5127, %v473
    %v5130 = vmul.f32 %v5128, 1.442695
    %v5131 = vpow.pop %v5130
    %v5132 = vmul.f32 %v5129, 1.442695
    %v5133 = vpow.pop %v5132
    %v5134 = vsel %vm312, %v5131, 0.0
    %5135 = vadd.xlane.f32.xlu0 %v5134
    %v5136 = vpop.xlane.xlu0 %5135
    %v5137 = vsel %vm312, %v5133, 0.0
    %5138 = vadd.xlane.f32.xlu0 %v5137
    %v5139 = vpop.xlane.xlu0 %5138
    %v5140 = vrcp.pop %v5136
    %v5141 = vrcp.pop %v5139
    %v5142 = vmul.f32 %v5131, %v5140
    %v5143 = vmul.f32 %v5133, %v5141
    %5144 = vrot.lane.b32.xlu0 %v3986, 40
    %v5145 = vpop.permute.xlu0 %5144
    %v5148 = vsel %vm312, %v5142, 0
    %5150 = vmatprep.subr.mxu0 0.0
    %5151 = vmatpush1.msra.mxu0 %v5145
    %5152 = vmatprep.subr.mxu0 0.0
    %5153 = vmatpush1.msra.mxu0 0.0
    %5154 = vmatprep.subr.mxu0 0.0
    %5155 = vmatpush1.msra.mxu0 0.0
    %5156 = vmatprep.subr.mxu0 0.0
    %5157 = vmatpush1.msra.mxu0 0.0
    %5158 = vmatprep.subr.mxu0 0.0
    %5159 = vmatpush1.msra.mxu0 0.0
    %5160 = vmatprep.subr.mxu0 0.0
    %5161 = vmatpush1.msra.mxu0 0.0
    %5162 = vmatprep.subr.mxu0 0.0
    %5163 = vmatpush1.msra.mxu0 0.0
    %5164 = vmatprep.subr.mxu0 0.0
    %5165 = vmatpush1.msra.mxu0 0.0
    %5166 = vmatprep.subr.mxu0 0.0
    %5167 = vmatpush1.msra.mxu0 0.0
    %5168 = vmatprep.subr.mxu0 0.0
    %5169 = vmatpush1.msra.mxu0 0.0
    %5170 = vmatprep.subr.mxu0 0.0
    %5171 = vmatpush1.msra.mxu0 0.0
    %5172 = vmatprep.subr.mxu0 0.0
    %5173 = vmatpush1.msra.mxu0 0.0
    %5174 = vmatprep.subr.mxu0 0.0
    %5175 = vmatpush1.msra.mxu0 0.0
    %5176 = vmatprep.subr.mxu0 0.0
    %5177 = vmatpush1.msra.mxu0 0.0
    %5178 = vmatprep.subr.mxu0 0.0
    %5179 = vmatpush1.msra.mxu0 0.0
    %5180 = vmatprep.subr.mxu0 0.0
    %5181 = vmatpush1.msra.mxu0 0.0
    %5182 = vmatprep.subr.mxu0 0.0
    %5183 = vmatpush1.msra.mxu0 0.0
    %5184 = vmatprep.subr.mxu0 0.0
    %5185 = vmatpush1.msra.mxu0 0.0
    %5186 = vmatprep.subr.mxu0 0.0
    %5187 = vmatpush1.msra.mxu0 0.0
    %5188 = vmatprep.subr.mxu0 0.0
    %5189 = vmatpush1.msra.mxu0 0.0
    %5190 = vmatprep.subr.mxu0 0.0
    %5191 = vmatpush1.msra.mxu0 0.0
    %5192 = vmatprep.subr.mxu0 0.0
    %5193 = vmatpush1.msra.mxu0 0.0
    %5194 = vmatprep.subr.mxu0 0.0
    %5195 = vmatpush1.msra.mxu0 0.0
    %5196 = vmatprep.subr.mxu0 0.0
    %5197 = vmatpush1.msra.mxu0 0.0
    %5198 = vmatprep.subr.mxu0 0.0
    %5199 = vmatpush1.msra.mxu0 0.0
    %5200 = vmatprep.subr.mxu0 0.0
    %5201 = vmatpush1.msra.mxu0 0.0
    %5202 = vmatprep.subr.mxu0 0.0
    %5203 = vmatpush1.msra.mxu0 0.0
    %5204 = vmatprep.subr.mxu0 0.0
    %5205 = vmatpush1.msra.mxu0 0.0
    %5206 = vmatprep.subr.mxu0 0.0
    %5207 = vmatpush1.msra.mxu0 0.0
    %5208 = vmatprep.subr.mxu0 0.0
    %5209 = vmatpush1.msra.mxu0 0.0
    %5210 = vmatprep.subr.mxu0 0.0
    %5211 = vmatpush1.msra.mxu0 0.0
    %5212 = vmatprep.subr.mxu0 0.0
    %5213 = vmatpush1.msra.mxu0 0.0
    %5214 = vmatprep.mubr.f32.mxu0 0.0
    %5215 = vmatmul.mubr.f32.gmra.mrb[0].mxu0 %v5148
    %v5216 = vpop.f32.mrb[0].mxu0
    %v5217 = vadd.f32 0.0, %v5216
    %v5218 = vpop.f32.mrb[0].mxu0
    %5219 = vdwg.mxu0
    %5220 = vrot.lane.b32.xlu0 %v3991, 40
    %v5221 = vpop.permute.xlu0 %5220
    %v5224 = vsel %vm312, %v5143, 0
    %5226 = vmatprep.subr.mxu0 0.0
    %5227 = vmatpush1.msra.mxu0 %v5221
    %5228 = vmatprep.subr.mxu0 0.0
    %5229 = vmatpush1.msra.mxu0 0.0
    %5230 = vmatprep.subr.mxu0 0.0
    %5231 = vmatpush1.msra.mxu0 0.0
    %5232 = vmatprep.subr.mxu0 0.0
    %5233 = vmatpush1.msra.mxu0 0.0
    %5234 = vmatprep.subr.mxu0 0.0
    %5235 = vmatpush1.msra.mxu0 0.0
    %5236 = vmatprep.subr.mxu0 0.0
    %5237 = vmatpush1.msra.mxu0 0.0
    %5238 = vmatprep.subr.mxu0 0.0
    %5239 = vmatpush1.msra.mxu0 0.0
    %5240 = vmatprep.subr.mxu0 0.0
    %5241 = vmatpush1.msra.mxu0 0.0
    %5242 = vmatprep.subr.mxu0 0.0
    %5243 = vmatpush1.msra.mxu0 0.0
    %5244 = vmatprep.subr.mxu0 0.0
    %5245 = vmatpush1.msra.mxu0 0.0
    %5246 = vmatprep.subr.mxu0 0.0
    %5247 = vmatpush1.msra.mxu0 0.0
    %5248 = vmatprep.subr.mxu0 0.0
    %5249 = vmatpush1.msra.mxu0 0.0
    %5250 = vmatprep.subr.mxu0 0.0
    %5251 = vmatpush1.msra.mxu0 0.0
    %5252 = vmatprep.subr.mxu0 0.0
    %5253 = vmatpush1.msra.mxu0 0.0
    %5254 = vmatprep.subr.mxu0 0.0
    %5255 = vmatpush1.msra.mxu0 0.0
    %5256 = vmatprep.subr.mxu0 0.0
    %5257 = vmatpush1.msra.mxu0 0.0
    %5258 = vmatprep.subr.mxu0 0.0
    %5259 = vmatpush1.msra.mxu0 0.0
    %5260 = vmatprep.subr.mxu0 0.0
    %5261 = vmatpush1.msra.mxu0 0.0
    %5262 = vmatprep.subr.mxu0 0.0
    %5263 = vmatpush1.msra.mxu0 0.0
    %5264 = vmatprep.subr.mxu0 0.0
    %5265 = vmatpush1.msra.mxu0 0.0
    %5266 = vmatprep.subr.mxu0 0.0
    %5267 = vmatpush1.msra.mxu0 0.0
    %5268 = vmatprep.subr.mxu0 0.0
    %5269 = vmatpush1.msra.mxu0 0.0
    %5270 = vmatprep.subr.mxu0 0.0
    %5271 = vmatpush1.msra.mxu0 0.0
    %5272 = vmatprep.subr.mxu0 0.0
    %5273 = vmatpush1.msra.mxu0 0.0
    %5274 = vmatprep.subr.mxu0 0.0
    %5275 = vmatpush1.msra.mxu0 0.0
    %5276 = vmatprep.subr.mxu0 0.0
    %5277 = vmatpush1.msra.mxu0 0.0
    %5278 = vmatprep.subr.mxu0 0.0
    %5279 = vmatpush1.msra.mxu0 0.0
    %5280 = vmatprep.subr.mxu0 0.0
    %5281 = vmatpush1.msra.mxu0 0.0
    %5282 = vmatprep.subr.mxu0 0.0
    %5283 = vmatpush1.msra.mxu0 0.0
    %5284 = vmatprep.subr.mxu0 0.0
    %5285 = vmatpush1.msra.mxu0 0.0
    %5286 = vmatprep.subr.mxu0 0.0
    %5287 = vmatpush1.msra.mxu0 0.0
    %5288 = vmatprep.subr.mxu0 0.0
    %5289 = vmatpush1.msra.mxu0 0.0
    %5290 = vmatprep.mubr.f32.mxu0 0.0
    %5291 = vmatmul.mubr.f32.gmra.mrb[0].mxu0 %v5224
    %v5292 = vpop.f32.mrb[0].mxu0
    %v5293 = vadd.f32 0.0, %v5292
    %v5294 = vpop.f32.mrb[0].mxu0
    %5295 = vdwg.mxu0
    %5298 = vrot.lane.b32.xlu0 %v4565, 8
    %v5299 = vpop.permute.xlu0 %5298
    %5300 = vrot.lane.b32.xlu0 %v4641, 8
    %v5301 = vpop.permute.xlu0 %5300
    %5306 = vrot.lane.b32.xlu0 %v4891, 16
    %v5307 = vpop.permute.xlu0 %5306
    %5308 = vrot.lane.b32.xlu0 %v4967, 16
    %v5309 = vpop.permute.xlu0 %5308
    %5314 = vrot.lane.b32.xlu0 %v5217, 24
    %v5315 = vpop.permute.xlu0 %5314
    %5316 = vrot.lane.b32.xlu0 %v5293, 24
    %v5317 = vpop.permute.xlu0 %5316
    %v5320 = vsel %vm312, %v4239, %v5299
    %v5321 = vsel %vm312, %v4315, %v5301
    %v5322 = vsel %vm1648, %v5320, %v5307
    %v5323 = vsel %vm1648, %v5321, %v5309
    %v5324 = vsel %vm1651, %v5322, %v5315
    %v5325 = vsel %vm1651, %v5323, %v5317
    %v5326 = vld [vmem:[%s3902 + $0x20] sm:$0xff]
    %v5327 = vld [vmem:[%s3902 + $0x28] sm:$0xff]
    %v5328 = vld [vmem:[%s3902 + $0x30] sm:$0xff]
    %v5329 = vld [vmem:[%s3902 + $0x38] sm:$0xff]
    %v5330 = vld [vmem:[%s3907 + $0x1] sm:$0x1]
    %v5331 = vlaneseq
    %v5332 = vshrl.u32 %v5331, 7
    %v5333 = vsub.s32 0, %v5332
    %v5334 = vrot.slane %v5330, %v5333
    %v5336 = vsel %vm154, %v5324, 0
    %v5339 = vsel %vm154, %v5325, 0
    %5341 = vmatprep.subr.mxu0 0.0
    %5342 = vmatpush1.msra.mxu0 %v5326
    %5343 = vmatprep.subr.mxu0 0.0
    %5344 = vmatpush1.msra.mxu0 %v5327
    %5345 = vmatprep.subr.mxu0 0.0
    %5346 = vmatpush1.msra.mxu0 %v5328
    %5347 = vmatprep.subr.mxu0 0.0
    %5348 = vmatpush1.msra.mxu0 %v5329
    %5349 = vmatprep.subr.mxu0 0.0
    %5350 = vmatpush1.msra.mxu0 0.0
    %5351 = vmatprep.subr.mxu0 0.0
    %5352 = vmatpush1.msra.mxu0 0.0
    %5353 = vmatprep.subr.mxu0 0.0
    %5354 = vmatpush1.msra.mxu0 0.0
    %5355 = vmatprep.subr.mxu0 0.0
    %5356 = vmatpush1.msra.mxu0 0.0
    %5357 = vmatprep.subr.mxu0 0.0
    %5358 = vmatpush1.msra.mxu0 0.0
    %5359 = vmatprep.subr.mxu0 0.0
    %5360 = vmatpush1.msra.mxu0 0.0
    %5361 = vmatprep.subr.mxu0 0.0
    %5362 = vmatpush1.msra.mxu0 0.0
    %5363 = vmatprep.subr.mxu0 0.0
    %5364 = vmatpush1.msra.mxu0 0.0
    %5365 = vmatprep.subr.mxu0 0.0
    %5366 = vmatpush1.msra.mxu0 0.0
    %5367 = vmatprep.subr.mxu0 0.0
    %5368 = vmatpush1.msra.mxu0 0.0
    %5369 = vmatprep.subr.mxu0 0.0
    %5370 = vmatpush1.msra.mxu0 0.0
    %5371 = vmatprep.subr.mxu0 0.0
    %5372 = vmatpush1.msra.mxu0 0.0
    %5373 = vmatprep.subr.mxu0 0.0
    %5374 = vmatpush1.msra.mxu0 0.0
    %5375 = vmatprep.subr.mxu0 0.0
    %5376 = vmatpush1.msra.mxu0 0.0
    %5377 = vmatprep.subr.mxu0 0.0
    %5378 = vmatpush1.msra.mxu0 0.0
    %5379 = vmatprep.subr.mxu0 0.0
    %5380 = vmatpush1.msra.mxu0 0.0
    %5381 = vmatprep.subr.mxu0 0.0
    %5382 = vmatpush1.msra.mxu0 0.0
    %5383 = vmatprep.subr.mxu0 0.0
    %5384 = vmatpush1.msra.mxu0 0.0
    %5385 = vmatprep.subr.mxu0 0.0
    %5386 = vmatpush1.msra.mxu0 0.0
    %5387 = vmatprep.subr.mxu0 0.0
    %5388 = vmatpush1.msra.mxu0 0.0
    %5389 = vmatprep.subr.mxu0 0.0
    %5390 = vmatpush1.msra.mxu0 0.0
    %5391 = vmatprep.subr.mxu0 0.0
    %5392 = vmatpush1.msra.mxu0 0.0
    %5393 = vmatprep.subr.mxu0 0.0
    %5394 = vmatpush1.msra.mxu0 0.0
    %5395 = vmatprep.subr.mxu0 0.0
    %5396 = vmatpush1.msra.mxu0 0.0
    %5397 = vmatprep.subr.mxu0 0.0
    %5398 = vmatpush1.msra.mxu0 0.0
    %5399 = vmatprep.subr.mxu0 0.0
    %5400 = vmatpush1.msra.mxu0 0.0
    %5401 = vmatprep.subr.mxu0 0.0
    %5402 = vmatpush1.msra.mxu0 0.0
    %5403 = vmatprep.subr.mxu0 0.0
    %5404 = vmatpush1.msra.mxu0 0.0
    %5405 = vmatprep.mubr.f32.mxu0 0.0
    %5406 = vmatmul.mubr.f32.gmra.mrb[0].mxu0 %v5336
    %v5407 = vpop.f32.mrb[0].mxu0
    %v5408 = vadd.f32 %v5334, %v5407
    %v5409 = vpop.f32.mrb[0].mxu0
    %5410 = vmatprep.mubr.f32.mxu0 0.0
    %5411 = vmatmul.mubr.f32.gmra.mrb[0].mxu0 %v5339
    %v5412 = vpop.f32.mrb[0].mxu0
    %v5413 = vadd.f32 %v5334, %v5412
    %v5414 = vpop.f32.mrb[0].mxu0
    %5415 = vdwg.mxu0
    %v5416 = vadd.f32 %v3900, %v5408
    %v5417 = vadd.f32 %v3901, %v5413
    %v5418 = vld [vmem:[%s3907 + $0x2] sm:$0x1]
    %v5419 = vld [vmem:[%s3907 + $0x3] sm:$0x1]
    %v5420 = vsel %vm154, %v5416, 0.0
    %5421 = vadd.xlane.f32.xlu0 %v5420
    %v5422 = vpop.xlane.xlu0 %5421
    %v5423 = vsel %vm154, %v5417, 0.0
    %5424 = vadd.xlane.f32.xlu0 %v5423
    %v5425 = vpop.xlane.xlu0 %5424
    %v5426 = vmul.f32 %v5422, %v161
    %v5427 = vmul.f32 %v5425, %v161
    %v5428 = vsub.f32 %v5416, %v5426
    %v5429 = vsub.f32 %v5417, %v5427
    %v5430 = vmul.f32 %v5428, %v5428
    %v5431 = vmul.f32 %v5429, %v5429
    %v5432 = vsel %vm154, %v5430, 0.0
    %5433 = vadd.xlane.f32.xlu0 %v5432
    %v5434 = vpop.xlane.xlu0 %5433
    %v5435 = vsel %vm154, %v5431, 0.0
    %5436 = vadd.xlane.f32.xlu0 %v5435
    %v5437 = vpop.xlane.xlu0 %5436
    %v5438 = vmul.f32 %v5434, %v161
    %v5439 = vmul.f32 %v5437, %v161
    %v5440 = vadd.f32 %v5438, 1e-12
    %v5441 = vadd.f32 %v5439, 1e-12
    %v5442 = vrsqrt.pop %v5440
    %v5443 = vrsqrt.pop %v5441
    %v5444 = vmul.f32 %v5428, %v5442
    %v5445 = vmul.f32 %v5429, %v5443
    %v5446 = vlaneseq
    %v5447 = vshrl.u32 %v5446, 7
    %v5448 = vsub.s32 0, %v5447
    %v5449 = vrot.slane %v5418, %v5448
    %v5450 = vmul.f32 %v5444, %v5449
    %v5451 = vmul.f32 %v5445, %v5449
    %v5452 = vlaneseq
    %v5453 = vshrl.u32 %v5452, 7
    %v5454 = vsub.s32 0, %v5453
    %v5455 = vrot.slane %v5419, %v5454
    %v5456 = vadd.f32 %v5450, %v5455
    %v5457 = vadd.f32 %v5451, %v5455
    %v5458 = vld [vmem:[%s3907 + $0x4] sm:$0x1]
    %v5459 = vlaneseq
    %v5460 = vshrl.u32 %v5459, 7
    %v5461 = vsub.s32 0, %v5460
    %v5462 = vrot.slane %v5458, %v5461
    %5467 = vrot.lane.b32.xlu0 %v5326, 96
    %v5468 = vpop.permute.xlu0 %5467
    %5469 = vrot.lane.b32.xlu0 %v5327, 96
    %v5470 = vpop.permute.xlu0 %5469
    %5471 = vrot.lane.b32.xlu0 %v5328, 96
    %v5472 = vpop.permute.xlu0 %5471
    %5473 = vrot.lane.b32.xlu0 %v5329, 96
    %v5474 = vpop.permute.xlu0 %5473
    %v5480 = vsel %vm154, %v5456, 0
    %v5483 = vsel %vm154, %v5457, 0
    %5485 = vmatprep.subr.mxu0 0.0
    %5486 = vmatpush1.msra.mxu0 %v5468
    %5487 = vmatprep.subr.mxu0 0.0
    %5488 = vmatpush1.msra.mxu0 %v5470
    %5489 = vmatprep.subr.mxu0 0.0
    %5490 = vmatpush1.msra.mxu0 %v5472
    %5491 = vmatprep.subr.mxu0 0.0
    %5492 = vmatpush1.msra.mxu0 %v5474
    %5493 = vmatprep.subr.mxu0 0.0
    %5494 = vmatpush1.msra.mxu0 0.0
    %5495 = vmatprep.subr.mxu0 0.0
    %5496 = vmatpush1.msra.mxu0 0.0
    %5497 = vmatprep.subr.mxu0 0.0
    %5498 = vmatpush1.msra.mxu0 0.0
    %5499 = vmatprep.subr.mxu0 0.0
    %5500 = vmatpush1.msra.mxu0 0.0
    %5501 = vmatprep.subr.mxu0 0.0
    %5502 = vmatpush1.msra.mxu0 0.0
    %5503 = vmatprep.subr.mxu0 0.0
    %5504 = vmatpush1.msra.mxu0 0.0
    %5505 = vmatprep.subr.mxu0 0.0
    %5506 = vmatpush1.msra.mxu0 0.0
    %5507 = vmatprep.subr.mxu0 0.0
    %5508 = vmatpush1.msra.mxu0 0.0
    %5509 = vmatprep.subr.mxu0 0.0
    %5510 = vmatpush1.msra.mxu0 0.0
    %5511 = vmatprep.subr.mxu0 0.0
    %5512 = vmatpush1.msra.mxu0 0.0
    %5513 = vmatprep.subr.mxu0 0.0
    %5514 = vmatpush1.msra.mxu0 0.0
    %5515 = vmatprep.subr.mxu0 0.0
    %5516 = vmatpush1.msra.mxu0 0.0
    %5517 = vmatprep.subr.mxu0 0.0
    %5518 = vmatpush1.msra.mxu0 0.0
    %5519 = vmatprep.subr.mxu0 0.0
    %5520 = vmatpush1.msra.mxu0 0.0
    %5521 = vmatprep.subr.mxu0 0.0
    %5522 = vmatpush1.msra.mxu0 0.0
    %5523 = vmatprep.subr.mxu0 0.0
    %5524 = vmatpush1.msra.mxu0 0.0
    %5525 = vmatprep.subr.mxu0 0.0
    %5526 = vmatpush1.msra.mxu0 0.0
    %5527 = vmatprep.subr.mxu0 0.0
    %5528 = vmatpush1.msra.mxu0 0.0
    %5529 = vmatprep.subr.mxu0 0.0
    %5530 = vmatpush1.msra.mxu0 0.0
    %5531 = vmatprep.subr.mxu0 0.0
    %5532 = vmatpush1.msra.mxu0 0.0
    %5533 = vmatprep.subr.mxu0 0.0
    %5534 = vmatpush1.msra.mxu0 0.0
    %5535 = vmatprep.subr.mxu0 0.0
    %5536 = vmatpush1.msra.mxu0 0.0
    %5537 = vmatprep.subr.mxu0 0.0
    %5538 = vmatpush1.msra.mxu0 0.0
    %5539 = vmatprep.subr.mxu0 0.0
    %5540 = vmatpush1.msra.mxu0 0.0
    %5541 = vmatprep.subr.mxu0 0.0
    %5542 = vmatpush1.msra.mxu0 0.0
    %5543 = vmatprep.subr.mxu0 0.0
    %5544 = vmatpush1.msra.mxu0 0.0
    %5545 = vmatprep.subr.mxu0 0.0
    %5546 = vmatpush1.msra.mxu0 0.0
    %5547 = vmatprep.subr.mxu0 0.0
    %5548 = vmatpush1.msra.mxu0 0.0
    %5549 = vmatprep.mubr.f32.mxu0 0.0
    %5550 = vmatmul.mubr.f32.gmra.mrb[0].mxu0 %v5480
    %v5551 = vpop.f32.mrb[0].mxu0
    %v5552 = vadd.f32 %v5462, %v5551
    %v5553 = vpop.f32.mrb[0].mxu0
    %5554 = vmatprep.mubr.f32.mxu0 0.0
    %5555 = vmatmul.mubr.f32.gmra.mrb[0].mxu0 %v5483
    %v5556 = vpop.f32.mrb[0].mxu0
    %v5557 = vadd.f32 %v5462, %v5556
    %v5558 = vpop.f32.mrb[0].mxu0
    %5559 = vdwg.mxu0
    %v5560 = vmul.f32 %v5552, 0.5
    %v5561 = vmul.f32 %v5557, 0.5
    %v5562 = vmul.f32 %v5552, 0.044715
    %v5563 = vmul.f32 %v5557, 0.044715
    %v5564 = vmul.f32 %v5562, %v5552
    %v5565 = vmul.f32 %v5563, %v5557
    %v5566 = vmul.f32 %v5564, %v5552
    %v5567 = vmul.f32 %v5565, %v5557
    %v5568 = vadd.f32 %v5552, %v5566
    %v5569 = vadd.f32 %v5557, %v5567
    %v5570 = vmul.f32 %v5568, 0.7978846
    %v5571 = vmul.f32 %v5569, 0.7978846
    %v5572 = vtanh.pop %v5570
    %v5573 = vtanh.pop %v5571
    %v5574 = vadd.f32 %v5572, 1.0
    %v5575 = vadd.f32 %v5573, 1.0
    %v5576 = vmul.f32 %v5560, %v5574
    %v5577 = vmul.f32 %v5561, %v5575
    %v5578 = vld [vmem:[%s3902] sm:$0xff]
    %v5579 = vld [vmem:[%s3902 + $0x8] sm:$0xff]
    %v5580 = vld [vmem:[%s3902 + $0x10] sm:$0xff]
    %v5581 = vld [vmem:[%s3902 + $0x18] sm:$0xff]
    %v5582 = vld [vmem:[%s3907 + $0x5] sm:$0x1]
    %v5583 = vlaneseq
    %v5584 = vshrl.u32 %v5583, 7
    %v5585 = vsub.s32 0, %v5584
    %v5586 = vrot.slane %v5582, %v5585
    %5591 = vrot.lane.b32.xlu0 %v5578, 32
    %v5592 = vpop.permute.xlu0 %5591
    %5593 = vrot.lane.b32.xlu0 %v5579, 32
    %v5594 = vpop.permute.xlu0 %5593
    %5595 = vrot.lane.b32.xlu0 %v5580, 32
    %v5596 = vpop.permute.xlu0 %5595
    %5597 = vrot.lane.b32.xlu0 %v5581, 32
    %v5598 = vpop.permute.xlu0 %5597
    %5599 = vrot.lane.b32.xlu0 %v5326, 32
    %v5600 = vpop.permute.xlu0 %5599
    %5601 = vrot.lane.b32.xlu0 %v5327, 32
    %v5602 = vpop.permute.xlu0 %5601
    %5603 = vrot.lane.b32.xlu0 %v5328, 32
    %v5604 = vpop.permute.xlu0 %5603
    %5605 = vrot.lane.b32.xlu0 %v5329, 32
    %v5606 = vpop.permute.xlu0 %5605
    %v5616 = vsel %vm70, %v5576, 0
    %v5619 = vsel %vm70, %v5577, 0
    %5621 = vmatprep.subr.mxu0 0.0
    %5622 = vmatpush1.msra.mxu0 %v5592
    %5623 = vmatprep.subr.mxu0 0.0
    %5624 = vmatpush1.msra.mxu0 %v5594
    %5625 = vmatprep.subr.mxu0 0.0
    %5626 = vmatpush1.msra.mxu0 %v5596
    %5627 = vmatprep.subr.mxu0 0.0
    %5628 = vmatpush1.msra.mxu0 %v5598
    %5629 = vmatprep.subr.mxu0 0.0
    %5630 = vmatpush1.msra.mxu0 %v5600
    %5631 = vmatprep.subr.mxu0 0.0
    %5632 = vmatpush1.msra.mxu0 %v5602
    %5633 = vmatprep.subr.mxu0 0.0
    %5634 = vmatpush1.msra.mxu0 %v5604
    %5635 = vmatprep.subr.mxu0 0.0
    %5636 = vmatpush1.msra.mxu0 %v5606
    %5637 = vmatprep.subr.mxu0 0.0
    %5638 = vmatpush1.msra.mxu0 0.0
    %5639 = vmatprep.subr.mxu0 0.0
    %5640 = vmatpush1.msra.mxu0 0.0
    %5641 = vmatprep.subr.mxu0 0.0
    %5642 = vmatpush1.msra.mxu0 0.0
    %5643 = vmatprep.subr.mxu0 0.0
    %5644 = vmatpush1.msra.mxu0 0.0
    %5645 = vmatprep.subr.mxu0 0.0
    %5646 = vmatpush1.msra.mxu0 0.0
    %5647 = vmatprep.subr.mxu0 0.0
    %5648 = vmatpush1.msra.mxu0 0.0
    %5649 = vmatprep.subr.mxu0 0.0
    %5650 = vmatpush1.msra.mxu0 0.0
    %5651 = vmatprep.subr.mxu0 0.0
    %5652 = vmatpush1.msra.mxu0 0.0
    %5653 = vmatprep.subr.mxu0 0.0
    %5654 = vmatpush1.msra.mxu0 0.0
    %5655 = vmatprep.subr.mxu0 0.0
    %5656 = vmatpush1.msra.mxu0 0.0
    %5657 = vmatprep.subr.mxu0 0.0
    %5658 = vmatpush1.msra.mxu0 0.0
    %5659 = vmatprep.subr.mxu0 0.0
    %5660 = vmatpush1.msra.mxu0 0.0
    %5661 = vmatprep.subr.mxu0 0.0
    %5662 = vmatpush1.msra.mxu0 0.0
    %5663 = vmatprep.subr.mxu0 0.0
    %5664 = vmatpush1.msra.mxu0 0.0
    %5665 = vmatprep.subr.mxu0 0.0
    %5666 = vmatpush1.msra.mxu0 0.0
    %5667 = vmatprep.subr.mxu0 0.0
    %5668 = vmatpush1.msra.mxu0 0.0
    %5669 = vmatprep.subr.mxu0 0.0
    %5670 = vmatpush1.msra.mxu0 0.0
    %5671 = vmatprep.subr.mxu0 0.0
    %5672 = vmatpush1.msra.mxu0 0.0
    %5673 = vmatprep.subr.mxu0 0.0
    %5674 = vmatpush1.msra.mxu0 0.0
    %5675 = vmatprep.subr.mxu0 0.0
    %5676 = vmatpush1.msra.mxu0 0.0
    %5677 = vmatprep.subr.mxu0 0.0
    %5678 = vmatpush1.msra.mxu0 0.0
    %5679 = vmatprep.subr.mxu0 0.0
    %5680 = vmatpush1.msra.mxu0 0.0
    %5681 = vmatprep.subr.mxu0 0.0
    %5682 = vmatpush1.msra.mxu0 0.0
    %5683 = vmatprep.subr.mxu0 0.0
    %5684 = vmatpush1.msra.mxu0 0.0
    %5685 = vmatprep.mubr.f32.mxu0 0.0
    %5686 = vmatmul.mubr.f32.gmra.mrb[0].mxu0 %v5616
    %v5687 = vpop.f32.mrb[0].mxu0
    %v5688 = vadd.f32 %v5586, %v5687
    %v5689 = vpop.f32.mrb[0].mxu0
    %5690 = vmatprep.mubr.f32.mxu0 0.0
    %5691 = vmatmul.mubr.f32.gmra.mrb[0].mxu0 %v5619
    %v5692 = vpop.f32.mrb[0].mxu0
    %v5693 = vadd.f32 %v5586, %v5692
    %v5694 = vpop.f32.mrb[0].mxu0
    %5695 = vdwg.mxu0
    %v5696 = vadd.f32 %v5456, %v5688
    %v5697 = vadd.f32 %v5457, %v5693
    %v5698 = vld [vmem:[%s3907 + $0x6] sm:$0x1]
    %v5699 = vld [vmem:[%s3907 + $0x7] sm:$0x1]
    %v5700 = vsel %vm154, %v5696, 0.0
    %5701 = vadd.xlane.f32.xlu0 %v5700
    %v5702 = vpop.xlane.xlu0 %5701
    %v5703 = vsel %vm154, %v5697, 0.0
    %5704 = vadd.xlane.f32.xlu0 %v5703
    %v5705 = vpop.xlane.xlu0 %5704
    %v5706 = vmul.f32 %v5702, %v161
    %v5707 = vmul.f32 %v5705, %v161
    %v5708 = vsub.f32 %v5696, %v5706
    %v5709 = vsub.f32 %v5697, %v5707
    %v5710 = vmul.f32 %v5708, %v5708
    %v5711 = vmul.f32 %v5709, %v5709
    %v5712 = vsel %vm154, %v5710, 0.0
    %5713 = vadd.xlane.f32.xlu0 %v5712
    %v5714 = vpop.xlane.xlu0 %5713
    %v5715 = vsel %vm154, %v5711, 0.0
    %5716 = vadd.xlane.f32.xlu0 %v5715
    %v5717 = vpop.xlane.xlu0 %5716
    %v5718 = vmul.f32 %v5714, %v161
    %v5719 = vmul.f32 %v5717, %v161
    %v5720 = vadd.f32 %v5718, 1e-12
    %v5721 = vadd.f32 %v5719, 1e-12
    %v5722 = vrsqrt.pop %v5720
    %v5723 = vrsqrt.pop %v5721
    %v5724 = vmul.f32 %v5708, %v5722
    %v5725 = vmul.f32 %v5709, %v5723
    %v5726 = vlaneseq
    %v5727 = vshrl.u32 %v5726, 7
    %v5728 = vsub.s32 0, %v5727
    %v5729 = vrot.slane %v5698, %v5728
    %v5730 = vmul.f32 %v5724, %v5729
    %v5731 = vmul.f32 %v5725, %v5729
    %v5732 = vlaneseq
    %v5733 = vshrl.u32 %v5732, 7
    %v5734 = vsub.s32 0, %v5733
    %v5735 = vrot.slane %v5699, %v5734
    %v5736 = vadd.f32 %v5730, %v5735
    %v5737 = vadd.f32 %v5731, %v5735
    %v5738 = vld [vmem:[%s3] sm:$0xff]
    %v5739 = vld [vmem:[%s3 + $0x8] sm:$0xff]
    %v5740 = vld [vmem:[%s3 + $0x10] sm:$0xff]
    %v5741 = vld [vmem:[%s3 + $0x18] sm:$0xff]
    %v5742 = vld [vmem:[%s3 + $0x22] sm:$0x1]
    %v5743 = vlaneseq
    %v5744 = vshrl.u32 %v5743, 7
    %v5745 = vsub.s32 0, %v5744
    %v5746 = vrot.slane %v5742, %v5745
    %v5748 = vsel %vm154, %v5736, 0
    %v5751 = vsel %vm154, %v5737, 0
    %5753 = vmatprep.subr.mxu0 0.0
    %5754 = vmatpush1.msra.mxu0 %v5738
    %5755 = vmatprep.subr.mxu0 0.0
    %5756 = vmatpush1.msra.mxu0 %v5739
    %5757 = vmatprep.subr.mxu0 0.0
    %5758 = vmatpush1.msra.mxu0 %v5740
    %5759 = vmatprep.subr.mxu0 0.0
    %5760 = vmatpush1.msra.mxu0 %v5741
    %5761 = vmatprep.subr.mxu0 0.0
    %5762 = vmatpush1.msra.mxu0 0.0
    %5763 = vmatprep.subr.mxu0 0.0
    %5764 = vmatpush1.msra.mxu0 0.0
    %5765 = vmatprep.subr.mxu0 0.0
    %5766 = vmatpush1.msra.mxu0 0.0
    %5767 = vmatprep.subr.mxu0 0.0
    %5768 = vmatpush1.msra.mxu0 0.0
    %5769 = vmatprep.subr.mxu0 0.0
    %5770 = vmatpush1.msra.mxu0 0.0
    %5771 = vmatprep.subr.mxu0 0.0
    %5772 = vmatpush1.msra.mxu0 0.0
    %5773 = vmatprep.subr.mxu0 0.0
    %5774 = vmatpush1.msra.mxu0 0.0
    %5775 = vmatprep.subr.mxu0 0.0
    %5776 = vmatpush1.msra.mxu0 0.0
    %5777 = vmatprep.subr.mxu0 0.0
    %5778 = vmatpush1.msra.mxu0 0.0
    %5779 = vmatprep.subr.mxu0 0.0
    %5780 = vmatpush1.msra.mxu0 0.0
    %5781 = vmatprep.subr.mxu0 0.0
    %5782 = vmatpush1.msra.mxu0 0.0
    %5783 = vmatprep.subr.mxu0 0.0
    %5784 = vmatpush1.msra.mxu0 0.0
    %5785 = vmatprep.subr.mxu0 0.0
    %5786 = vmatpush1.msra.mxu0 0.0
    %5787 = vmatprep.subr.mxu0 0.0
    %5788 = vmatpush1.msra.mxu0 0.0
    %5789 = vmatprep.subr.mxu0 0.0
    %5790 = vmatpush1.msra.mxu0 0.0
    %5791 = vmatprep.subr.mxu0 0.0
    %5792 = vmatpush1.msra.mxu0 0.0
    %5793 = vmatprep.subr.mxu0 0.0
    %5794 = vmatpush1.msra.mxu0 0.0
    %5795 = vmatprep.subr.mxu0 0.0
    %5796 = vmatpush1.msra.mxu0 0.0
    %5797 = vmatprep.subr.mxu0 0.0
    %5798 = vmatpush1.msra.mxu0 0.0
    %5799 = vmatprep.subr.mxu0 0.0
    %5800 = vmatpush1.msra.mxu0 0.0
    %5801 = vmatprep.subr.mxu0 0.0
    %5802 = vmatpush1.msra.mxu0 0.0
    %5803 = vmatprep.subr.mxu0 0.0
    %5804 = vmatpush1.msra.mxu0 0.0
    %5805 = vmatprep.subr.mxu0 0.0
    %5806 = vmatpush1.msra.mxu0 0.0
    %5807 = vmatprep.subr.mxu0 0.0
    %5808 = vmatpush1.msra.mxu0 0.0
    %5809 = vmatprep.subr.mxu0 0.0
    %5810 = vmatpush1.msra.mxu0 0.0
    %5811 = vmatprep.subr.mxu0 0.0
    %5812 = vmatpush1.msra.mxu0 0.0
    %5813 = vmatprep.subr.mxu0 0.0
    %5814 = vmatpush1.msra.mxu0 0.0
    %5815 = vmatprep.subr.mxu0 0.0
    %5816 = vmatpush1.msra.mxu0 0.0
    %5817 = vmatprep.mubr.f32.mxu0 0.0
    %5818 = vmatmul.mubr.f32.gmra.mrb[0].mxu0 %v5748
    %v5819 = vpop.f32.mrb[0].mxu0
    %v5820 = vadd.f32 %v5746, %v5819
    %v5821 = vpop.f32.mrb[0].mxu0
    %5822 = vmatprep.mubr.f32.mxu0 0.0
    %5823 = vmatmul.mubr.f32.gmra.mrb[0].mxu0 %v5751
    %v5824 = vpop.f32.mrb[0].mxu0
    %v5825 = vadd.f32 %v5746, %v5824
    %v5826 = vpop.f32.mrb[0].mxu0
    %5827 = vdwg.mxu0
    %v5828 = vsub.f32 0.0, %v5820
    %v5829 = vsub.f32 0.0, %v5825
    %v5830 = vmul.f32 %v5828, 1.442695
    %v5831 = vpow.pop %v5830
    %v5832 = vmul.f32 %v5829, 1.442695
    %v5833 = vpow.pop %v5832
    %v5834 = vadd.f32 %v5831, 1.0
    %v5835 = vadd.f32 %v5833, 1.0
    %v5836 = vrcp.pop %v5834
    %v5837 = vmul.f32 1.0, %v5836
    %v5838 = vrcp.pop %v5835
    %v5839 = vmul.f32 1.0, %v5838
    %5840 = vst [vmem:[%s6] sm:$0xff] %v5837
    %5841 = vst [vmem:[%s6 + $0x8] sm:$0xff] %v5839
    // Predicated region
    $region30: #{bert_sentiment_forward.1} parent=1 // pred_check
      _
    $region31: #{bert_sentiment_forward.1} parent=1 // pred_check_branch
      %5843 = sbr.rel (0) target = $region33
    $region32: #{bert_sentiment_forward.1} parent=1 // pred_region
      _
    $region33: #{bert_sentiment_forward.1} parent=1 // pred_fallthru
      _
    // Predicated region
    $region34: #{bert_sentiment_forward.1} parent=1 // pred_check
      _
    $region35: #{bert_sentiment_forward.1} parent=1 // pred_check_branch
      %5845 = sbr.rel (0) target = $region37
    $region36: #{bert_sentiment_forward.1} parent=1 // pred_region
      _
    $region37: #{bert_sentiment_forward.1} parent=1 // pred_fallthru
      _
    %5846 = vsyncpa [#allocation3], 1

</llo_original>
